<compile_context>
chip_gen: v6e
topology: v6e:2x2x1
jax: 0.10.0
libtpu: 0.0.40
codegen_flags: <defaults>
</compile_context>

<pallas_src>
import functools

import jax
import jax.numpy as jnp
from jax import lax
from jax.experimental import pallas as pl
from jax.experimental.pallas import tpu as pltpu


# --------------------------------------------------------------------------
# Fused kernel: BiLSTM stack + biaffine scorer (+ loss-augmented inference)
# --------------------------------------------------------------------------

def make_parser_kernel(num_layers, augment, H, Hd):
    """Builds the fused kernel body.

    Ref order (all full-array VMEM blocks):
      inputs : x (S, Din), [true_heads (S, 1) int32 if augment],
               per layer: wih (In, 8H)  = [W_ih^f | W_ih^b], gate cols [i|f|o|g]
                          whh_f (H, 4H), whh_b (H, 4H)
                          b (1, 8H)     = [b^f | b^b]  (b_ih + b_hh combined)
               scorer  : w_hm (2H, 2*Hd) = [W_head | W_mod], b_hm (1, 2*Hd),
                         w_t (Hd, Hd), b_row (1, Hd)  (= b.T)
      output : scores (S, S)   rows = modifier, cols = head
      scratch: none (everything lives in vregs at these sizes)
    """
    G = 4 * H

    def kernel(*refs):
        it = iter(refs)
        x_ref = next(it)
        th_ref = next(it) if augment else None
        lstm_refs = [next(it) for _ in range(4 * num_layers)]
        whm_ref, bhm_ref, wt_ref, brow_ref = (next(it) for _ in range(4))
        out_ref = next(it)

        S = x_ref.shape[0]
        row_ids = lax.broadcasted_iota(jnp.int32, (S, 1), 0)   # hoisted once

        def run_layer(act_f, act_b, wih_ref, whh_f_ref, whh_b_ref, b_ref):
            # Hoisted whole-sequence input projection, BOTH directions in one
            # matmul -> (S, 8H) (128 lanes wide at H=16).
            if act_f is None:                                   # layer 0
                gx = jnp.dot(x_ref[...], wih_ref[...],
                             preferred_element_type=jnp.float32) + b_ref[...]
            else:
                # x_cat @ W == x_f @ W[:H] + x_b @ W[H:]  (no concat built)
                gx = (jnp.dot(act_f, wih_ref[pl.ds(0, H), :],
                              preferred_element_type=jnp.float32)
                      + jnp.dot(act_b, wih_ref[pl.ds(H, H), :],
                                preferred_element_type=jnp.float32)
                      + b_ref[...])
            whh_f = whh_f_ref[...]
            whh_b = whh_b_ref[...]

            h_f = jnp.zeros((1, H), jnp.float32)
            c_f = jnp.zeros((1, H), jnp.float32)
            h_b = jnp.zeros((1, H), jnp.float32)
            c_b = jnp.zeros((1, H), jnp.float32)
            new_f = jnp.zeros((S, H), jnp.float32)
            new_b = jnp.zeros((S, H), jnp.float32)

            # Interleaved fwd/bwd recurrence.  S is small & static -> full
            # Python unroll gives the scheduler full visibility.
            # TODO(synk): for S beyond ~32 switch to lax.fori_loop(unroll=4..8).
            for i in range(S):
                tf, tb = i, S - 1 - i                    # in-kernel time reversal
                g_f = gx[tf:tf + 1, 0:G] + jnp.dot(
                    h_f, whh_f, preferred_element_type=jnp.float32)
                g_b = gx[tb:tb + 1, G:2 * G] + jnp.dot(
                    h_b, whh_b, preferred_element_type=jnp.float32)
                # Grouped activations (gate cols permuted host-side to [i|f|o|g]):
                # one sigmoid on (1,3H), one tanh on (1,H) per direction.
                s_f = jax.nn.sigmoid(g_f[:, 0:3 * H])
                s_b = jax.nn.sigmoid(g_b[:, 0:3 * H])
                t_f = jnp.tanh(g_f[:, 3 * H:4 * H])
                t_b = jnp.tanh(g_b[:, 3 * H:4 * H])
                c_f = s_f[:, H:2 * H] * c_f + s_f[:, 0:H] * t_f
                c_b = s_b[:, H:2 * H] * c_b + s_b[:, 0:H] * t_b
                h_f = s_f[:, 2 * H:3 * H] * jnp.tanh(c_f)
                h_b = s_b[:, 2 * H:3 * H] * jnp.tanh(c_b)
                # Blend the new rows into vreg-resident (S,H) accumulators
                # (off the recurrent critical path; no masked VMEM row stores).
                new_f = jnp.where(row_ids == tf, h_f, new_f)
                new_b = jnp.where(row_ids == tb, h_b, new_b)
            return new_f, new_b

        act_f = act_b = None
        for layer in range(num_layers):
            wih, whh_f, whh_b, b = lstm_refs[4 * layer: 4 * layer + 4]
            act_f, act_b = run_layer(act_f, act_b, wih, whh_f, whh_b, b)

        # ------------- biaffine edge scorer (dropout = identity in eval) ----
        # Head + modifier MLPs fused into one (2H, 2*Hd) matmul.
        mlp_both = jnp.maximum(
            jnp.dot(act_f, whm_ref[pl.ds(0, H), :],
                    preferred_element_type=jnp.float32)
            + jnp.dot(act_b, whm_ref[pl.ds(H, H), :],
                      preferred_element_type=jnp.float32)
            + bhm_ref[...], 0.0)                                   # (S, 2*Hd)
        mlp_head = mlp_both[:, 0:Hd]
        mlp_mod = mlp_both[:, Hd:2 * Hd]

        proj_head = jnp.dot(mlp_head, wt_ref[...],
                            preferred_element_type=jnp.float32)    # (S, Hd)
        # scores[m, h] = mlp_mod[m] . proj_head[h]   (NT-form, no transpose)
        scores = lax.dot_general(mlp_mod, proj_head,
                                 (((1,), (1,)), ((), ())),
                                 preferred_element_type=jnp.float32)  # (S, S)
        # Head bias as a clean (1, S) row (no ragged Hd+1 lane width).
        bias_row = lax.dot_general(brow_ref[...], mlp_head,
                                   (((1,), (1,)), ((), ())),
                                   preferred_element_type=jnp.float32)  # (1, S)
        scores = scores + bias_row

        if augment:   # lossAugmentedInference: +1 except at the true head col
            col_ids = lax.broadcasted_iota(jnp.int32, (S, S), 1)
            scores = scores + jnp.where(col_ids == th_ref[...], 0.0, 1.0)

        out_ref[...] = scores

    return kernel


# --------------------------------------------------------------------------
# Parameter helpers (host-side weight prep)
# --------------------------------------------------------------------------

def _permute_gates(w):
    """PyTorch gate order [i|f|g|o] -> grouped [i|f|o|g] along the 4H axis."""
    Hh = w.shape[-1] // 4
    return jnp.concatenate(
        [w[:, :2 * Hh], w[:, 3 * Hh:], w[:, 2 * Hh:3 * Hh]], axis=-1)


def _prep_lstm_params(params):
    flat = []
    for lp in params["lstm"]:
        wih = jnp.concatenate(
            [_permute_gates(lp["wih_f"]), _permute_gates(lp["wih_b"])], axis=1)
        b = jnp.concatenate(
            [_permute_gates(lp["b_f"]), _permute_gates(lp["b_b"])], axis=1)
        flat += [wih, _permute_gates(lp["whh_f"]),
                 _permute_gates(lp["whh_b"]), b]
    return flat


def _prep_scorer_params(sp):
    w_hm = jnp.concatenate([sp["wh_t"], sp["wm_t"]], axis=1)   # (2H, 2*Hd)
    b_hm = jnp.concatenate([sp["bh"], sp["bm"]], axis=1)       # (1, 2*Hd)
    return [w_hm, b_hm, sp["w_t"], sp["b_t"].T]                # b as (1, Hd) row


def init_params(key, *, word_vocab, tag_vocab, word_dim, tag_dim,
                bilstm_size, bilstm_layers, hidden_dim):
    keys = iter(jax.random.split(key, 64))
    scale = 0.1

    def rnd(shape):
        return scale * jax.random.normal(next(keys), shape, dtype=jnp.float32)

    params = {
        "word_emb": rnd((word_vocab, word_dim)),
        "pos_emb": rnd((tag_vocab, tag_dim)),
        "lstm": [],
    }
    blstm_in = word_dim + tag_dim
    H = bilstm_size
    for layer in range(bilstm_layers):
        in_dim = blstm_in if layer == 0 else 2 * H
        layer_p = {}
        for d in ("f", "b"):
            layer_p[f"wih_{d}"] = rnd((in_dim, 4 * H))   # == W_ih.T, [i|f|g|o]
            layer_p[f"whh_{d}"] = rnd((H, 4 * H))        # == W_hh.T, [i|f|g|o]
            layer_p[f"b_{d}"] = rnd((1, 4 * H))          # b_ih + b_hh combined
        params["lstm"].append(layer_p)

    D = 2 * H
    params["scorer"] = {
        "wh_t": rnd((D, hidden_dim)), "bh": rnd((1, hidden_dim)),
        "wm_t": rnd((D, hidden_dim)), "bm": rnd((1, hidden_dim)),
        "w_t": rnd((hidden_dim, hidden_dim)),
        "b_t": rnd((hidden_dim, 1)),
    }
    return params


# --------------------------------------------------------------------------
# Full forward (single fused pallas_call)
# --------------------------------------------------------------------------

def parser_forward(params, word_idx, pos_idx, pre_trained_embeds=None,
                   true_heads=None):
    # word_idx / pos_idx: (1, S) int32 (batch=1, batch_first like PyTorch).
    word_idx = word_idx.reshape(-1)
    pos_idx = pos_idx.reshape(-1)

    # TODO(synk): embedding gathers stay as plain-JAX jnp.take glue (a Pallas
    # DMA gather buys nothing at this size).
    w_emb = jnp.take(params["word_emb"], word_idx, axis=0)           # (S, Dw)
    if pre_trained_embeds is not None:
        w_emb = w_emb + pre_trained_embeds
    t_emb = jnp.take(params["pos_emb"], pos_idx, axis=0)             # (S, Dt)
    x0 = jnp.concatenate([w_emb, t_emb], axis=-1).astype(jnp.float32)

    S = x0.shape[0]
    H = params["lstm"][0]["whh_f"].shape[0]
    Hd = params["scorer"]["wh_t"].shape[1]
    num_layers = len(params["lstm"])
    augment = true_heads is not None

    args = [x0]
    if augment:
        args.append(true_heads.reshape(S, 1).astype(jnp.int32))
    args += _prep_lstm_params(params)
    args += _prep_scorer_params(params["scorer"])

    kernel = make_parser_kernel(num_layers, augment, H, Hd)

    return pl.pallas_call(
        kernel,
        out_shape=jax.ShapeDtypeStruct((S, S), jnp.float32),
        grid=(1,),
        in_specs=[pl.BlockSpec(a.shape, lambda i: (0, 0)) for a in args],
        out_specs=pl.BlockSpec((S, S), lambda i: (0, 0)),
        compiler_params=pltpu.CompilerParams(
            dimension_semantics=("arbitrary",)),
    )(*args)


# --------------------------------------------------------------------------
# Pure-JAX reference (PyTorch semantics, standard [i|f|g|o] gate order)
# --------------------------------------------------------------------------

def parser_forward_ref(params, word_idx, pos_idx, true_heads=None):
    word_idx = word_idx.reshape(-1)
    pos_idx = pos_idx.reshape(-1)
    w_emb = jnp.take(params["word_emb"], word_idx, axis=0)
    t_emb = jnp.take(params["pos_emb"], pos_idx, axis=0)
    h = jnp.concatenate([w_emb, t_emb], axis=-1)

    def lstm_dir(x, wih, whh, b):
        Hh = whh.shape[0]

        def step(carry, x_t):
            hp, cp = carry
            g = x_t @ wih + hp @ whh + b[0]
            i = jax.nn.sigmoid(g[0 * Hh:1 * Hh])
            f = jax.nn.sigmoid(g[1 * Hh:2 * Hh])
            gg = jnp.tanh(g[2 * Hh:3 * Hh])
            o = jax.nn.sigmoid(g[3 * Hh:4 * Hh])
            c = f * cp + i * gg
            hn = o * jnp.tanh(c)
            return (hn, c), hn

        init = (jnp.zeros(Hh, jnp.float32), jnp.zeros(Hh, jnp.float32))
        _, hs = lax.scan(step, init, x)
        return hs

    for lp in params["lstm"]:
        hf = lstm_dir(h, lp["wih_f"], lp["whh_f"], lp["b_f"])
        hb = lstm_dir(h[::-1], lp["wih_b"], lp["whh_b"], lp["b_b"])[::-1]
        h = jnp.concatenate([hf, hb], axis=-1)

    sp = params["scorer"]
    mh = jax.nn.relu(h @ sp["wh_t"] + sp["bh"])
    mm = jax.nn.relu(h @ sp["wm_t"] + sp["bm"])
    scores = mm @ (mh @ sp["w_t"]).T + (mh @ sp["b_t"]).T
    if true_heads is not None:
        n = true_heads.shape[0]
        ones = jnp.ones((n, n), jnp.float32).at[
            jnp.arange(n), true_heads].set(0.0)
        scores = scores + ones
    return scores


# --------------------------------------------------------------------------
# main
# --------------------------------------------------------------------------

if __name__ == "__main__":
    WORD_VOCAB, TAG_VOCAB = 50, 20
    WORD_DIM, TAG_DIM = 16, 16
    BILSTM_SIZE, BILSTM_LAYERS = 16, 3
    HIDDEN_DIM = 32
    SEQ = 8

    root = jax.random.PRNGKey(0)
    k_param, k_w, k_p, k_h = jax.random.split(root, 4)

    params = init_params(
        k_param,
        word_vocab=WORD_VOCAB, tag_vocab=TAG_VOCAB,
        word_dim=WORD_DIM, tag_dim=TAG_DIM,
        bilstm_size=BILSTM_SIZE, bilstm_layers=BILSTM_LAYERS,
        hidden_dim=HIDDEN_DIM,
    )

    word_idx = jax.random.randint(k_w, (1, SEQ), 0, WORD_VOCAB, dtype=jnp.int32)
    pos_idx = jax.random.randint(k_p, (1, SEQ), 0, TAG_VOCAB, dtype=jnp.int32)
    true_heads = jax.random.randint(k_h, (SEQ,), 0, SEQ, dtype=jnp.int32)

    fwd = jax.jit(functools.partial(parser_forward, params))
    scores = fwd(word_idx, pos_idx)                              # (S, S)
    scores_aug = jax.jit(
        lambda w, p, t: parser_forward(params, w, p, true_heads=t)
    )(word_idx, pos_idx, true_heads)                             # loss-augmented

    jax.block_until_ready(scores)
    jax.block_until_ready(scores_aug)

    assert scores.shape == (SEQ, SEQ)
    assert scores_aug.shape == (SEQ, SEQ)
    assert jnp.all(jnp.isfinite(scores))
    assert jnp.all(jnp.isfinite(scores_aug))

    # Validate against a pure-JAX reference of the PyTorch module (eval mode).
    ref = parser_forward_ref(params, word_idx, pos_idx)
    ref_aug = parser_forward_ref(params, word_idx, pos_idx, true_heads)
    assert jnp.allclose(scores, ref, atol=1e-2, rtol=1e-2)
    assert jnp.allclose(scores_aug, ref_aug, atol=1e-2, rtol=1e-2)

    print("KERNEL_OK")
</pallas_src>

<mosaic_0001>
module attributes {stable_mosaic.version = 11 : i64} {
  func.func @kernel(%arg0: i32, %arg1: memref<8x32xf32, #tpu.memory_space<vmem>>, %arg2: memref<32x128xf32, #tpu.memory_space<vmem>>, %arg3: memref<16x64xf32, #tpu.memory_space<vmem>>, %arg4: memref<16x64xf32, #tpu.memory_space<vmem>>, %arg5: memref<1x128xf32, #tpu.memory_space<vmem>>, %arg6: memref<32x128xf32, #tpu.memory_space<vmem>>, %arg7: memref<16x64xf32, #tpu.memory_space<vmem>>, %arg8: memref<16x64xf32, #tpu.memory_space<vmem>>, %arg9: memref<1x128xf32, #tpu.memory_space<vmem>>, %arg10: memref<32x128xf32, #tpu.memory_space<vmem>>, %arg11: memref<16x64xf32, #tpu.memory_space<vmem>>, %arg12: memref<16x64xf32, #tpu.memory_space<vmem>>, %arg13: memref<1x128xf32, #tpu.memory_space<vmem>>, %arg14: memref<32x64xf32, #tpu.memory_space<vmem>>, %arg15: memref<1x64xf32, #tpu.memory_space<vmem>>, %arg16: memref<32x32xf32, #tpu.memory_space<vmem>>, %arg17: memref<1x32xf32, #tpu.memory_space<vmem>>, %arg18: memref<8x8xf32, #tpu.memory_space<vmem>>) attributes {dimension_semantics = [#tpu.dimension_semantics<arbitrary>], iteration_bounds = array<i64: 1>, scalar_prefetch = 0 : i64, scratch_operands = 0 : i64, tpu.core_type = #tpu.core_type<tc>, window_params = [{pipeline_mode = #tpu.pipeline_mode<synchronous>, transform_indices = @transform_0, window_bounds = array<i64: 8, 32>}, {pipeline_mode = #tpu.pipeline_mode<synchronous>, transform_indices = @transform_1, window_bounds = array<i64: 32, 128>}, {pipeline_mode = #tpu.pipeline_mode<synchronous>, transform_indices = @transform_2, window_bounds = array<i64: 16, 64>}, {pipeline_mode = #tpu.pipeline_mode<synchronous>, transform_indices = @transform_3, window_bounds = array<i64: 16, 64>}, {pipeline_mode = #tpu.pipeline_mode<synchronous>, transform_indices = @transform_4, window_bounds = array<i64: 1, 128>}, {pipeline_mode = #tpu.pipeline_mode<synchronous>, transform_indices = @transform_5, window_bounds = array<i64: 32, 128>}, {pipeline_mode = #tpu.pipeline_mode<synchronous>, transform_indices = @transform_6, window_bounds = array<i64: 16, 64>}, {pipeline_mode = #tpu.pipeline_mode<synchronous>, transform_indices = @transform_7, window_bounds = array<i64: 16, 64>}, {pipeline_mode = #tpu.pipeline_mode<synchronous>, transform_indices = @transform_8, window_bounds = array<i64: 1, 128>}, {pipeline_mode = #tpu.pipeline_mode<synchronous>, transform_indices = @transform_9, window_bounds = array<i64: 32, 128>}, {pipeline_mode = #tpu.pipeline_mode<synchronous>, transform_indices = @transform_10, window_bounds = array<i64: 16, 64>}, {pipeline_mode = #tpu.pipeline_mode<synchronous>, transform_indices = @transform_11, window_bounds = array<i64: 16, 64>}, {pipeline_mode = #tpu.pipeline_mode<synchronous>, transform_indices = @transform_12, window_bounds = array<i64: 1, 128>}, {pipeline_mode = #tpu.pipeline_mode<synchronous>, transform_indices = @transform_13, window_bounds = array<i64: 32, 64>}, {pipeline_mode = #tpu.pipeline_mode<synchronous>, transform_indices = @transform_14, window_bounds = array<i64: 1, 64>}, {pipeline_mode = #tpu.pipeline_mode<synchronous>, transform_indices = @transform_15, window_bounds = array<i64: 32, 32>}, {pipeline_mode = #tpu.pipeline_mode<synchronous>, transform_indices = @transform_16, window_bounds = array<i64: 1, 32>}, {pipeline_mode = #tpu.pipeline_mode<synchronous>, transform_indices = @transform_17, window_bounds = array<i64: 8, 8>}]} {
    %0 = tpu.iota {dimensions = array<i32: 0>} : vector<8x1xi32>
    %c0 = arith.constant 0 : index
    %c0_0 = arith.constant 0 : index
    %1 = vector.load %arg1[%c0, %c0_0] : memref<8x32xf32, #tpu.memory_space<vmem>>, vector<8x32xf32>
    %c0_1 = arith.constant 0 : index
    %c0_2 = arith.constant 0 : index
    %2 = vector.load %arg2[%c0_1, %c0_2] : memref<32x128xf32, #tpu.memory_space<vmem>>, vector<32x128xf32>
    %cst = arith.constant dense<0.000000e+00> : vector<8x128xf32>
    %3 = tpu.matmul %1, %2, %cst {dimension_numbers = #tpu.dot_dimension_numbers<[1], [0], [0], [1], [0, 0, 1, 1], [], []>} : vector<8x32xf32>, vector<32x128xf32>, vector<8x128xf32> -> vector<8x128xf32>
    %c0_3 = arith.constant 0 : index
    %c0_4 = arith.constant 0 : index
    %4 = vector.load %arg5[%c0_3, %c0_4] : memref<1x128xf32, #tpu.memory_space<vmem>>, vector<1x128xf32>
    %5 = vector.broadcast %4 : vector<1x128xf32> to vector<8x128xf32>
    %6 = arith.addf %3, %5 : vector<8x128xf32>
    %c0_5 = arith.constant 0 : index
    %c0_6 = arith.constant 0 : index
    %7 = vector.load %arg3[%c0_5, %c0_6] : memref<16x64xf32, #tpu.memory_space<vmem>>, vector<16x64xf32>
    %c0_7 = arith.constant 0 : index
    %c0_8 = arith.constant 0 : index
    %8 = vector.load %arg4[%c0_7, %c0_8] : memref<16x64xf32, #tpu.memory_space<vmem>>, vector<16x64xf32>
    %cst_9 = arith.constant 0.000000e+00 : f32
    %9 = vector.broadcast %cst_9 : f32 to vector<1x16xf32>
    %cst_10 = arith.constant 0.000000e+00 : f32
    %10 = vector.broadcast %cst_10 : f32 to vector<1x16xf32>
    %cst_11 = arith.constant 0.000000e+00 : f32
    %11 = vector.broadcast %cst_11 : f32 to vector<1x16xf32>
    %cst_12 = arith.constant 0.000000e+00 : f32
    %12 = vector.broadcast %cst_12 : f32 to vector<1x16xf32>
    %cst_13 = arith.constant 0.000000e+00 : f32
    %13 = vector.broadcast %cst_13 : f32 to vector<8x16xf32>
    %cst_14 = arith.constant 0.000000e+00 : f32
    %14 = vector.broadcast %cst_14 : f32 to vector<8x16xf32>
    %15 = vector.extract_strided_slice %6 {offsets = [0, 0], sizes = [1, 64], strides = [1, 1]} : vector<8x128xf32> to vector<1x64xf32>
    %cst_15 = arith.constant dense<0.000000e+00> : vector<1x64xf32>
    %16 = tpu.matmul %9, %7, %cst_15 {dimension_numbers = #tpu.dot_dimension_numbers<[1], [0], [0], [1], [0, 0, 1, 1], [], []>} : vector<1x16xf32>, vector<16x64xf32>, vector<1x64xf32> -> vector<1x64xf32>
    %17 = arith.addf %15, %16 : vector<1x64xf32>
    %18 = vector.extract_strided_slice %6 {offsets = [7, 64], sizes = [1, 64], strides = [1, 1]} : vector<8x128xf32> to vector<1x64xf32>
    %cst_16 = arith.constant dense<0.000000e+00> : vector<1x64xf32>
    %19 = tpu.matmul %11, %8, %cst_16 {dimension_numbers = #tpu.dot_dimension_numbers<[1], [0], [0], [1], [0, 0, 1, 1], [], []>} : vector<1x16xf32>, vector<16x64xf32>, vector<1x64xf32> -> vector<1x64xf32>
    %20 = arith.addf %18, %19 : vector<1x64xf32>
    %21 = vector.extract_strided_slice %17 {offsets = [0, 0], sizes = [1, 48], strides = [1, 1]} : vector<1x64xf32> to vector<1x48xf32>
    %22 = arith.negf %21 : vector<1x48xf32>
    %23 = math.exp %22 : vector<1x48xf32>
    %cst_17 = arith.constant 1.000000e+00 : f32
    %24 = vector.broadcast %cst_17 : f32 to vector<1x48xf32>
    %25 = arith.addf %24, %23 : vector<1x48xf32>
    %26 = arith.divf %24, %25 : vector<1x48xf32>
    %27 = vector.extract_strided_slice %20 {offsets = [0, 0], sizes = [1, 48], strides = [1, 1]} : vector<1x64xf32> to vector<1x48xf32>
    %28 = arith.negf %27 : vector<1x48xf32>
    %29 = math.exp %28 : vector<1x48xf32>
    %cst_18 = arith.constant 1.000000e+00 : f32
    %30 = vector.broadcast %cst_18 : f32 to vector<1x48xf32>
    %31 = arith.addf %30, %29 : vector<1x48xf32>
    %32 = arith.divf %30, %31 : vector<1x48xf32>
    %33 = vector.extract_strided_slice %17 {offsets = [0, 48], sizes = [1, 16], strides = [1, 1]} : vector<1x64xf32> to vector<1x16xf32>
    %34 = math.tanh %33 : vector<1x16xf32>
    %35 = vector.extract_strided_slice %20 {offsets = [0, 48], sizes = [1, 16], strides = [1, 1]} : vector<1x64xf32> to vector<1x16xf32>
    %36 = math.tanh %35 : vector<1x16xf32>
    %37 = vector.extract_strided_slice %26 {offsets = [0, 16], sizes = [1, 16], strides = [1, 1]} : vector<1x48xf32> to vector<1x16xf32>
    %38 = arith.mulf %37, %10 : vector<1x16xf32>
    %39 = vector.extract_strided_slice %26 {offsets = [0, 0], sizes = [1, 16], strides = [1, 1]} : vector<1x48xf32> to vector<1x16xf32>
    %40 = arith.mulf %39, %34 : vector<1x16xf32>
    %41 = arith.addf %38, %40 : vector<1x16xf32>
    %42 = vector.extract_strided_slice %32 {offsets = [0, 16], sizes = [1, 16], strides = [1, 1]} : vector<1x48xf32> to vector<1x16xf32>
    %43 = arith.mulf %42, %12 : vector<1x16xf32>
    %44 = vector.extract_strided_slice %32 {offsets = [0, 0], sizes = [1, 16], strides = [1, 1]} : vector<1x48xf32> to vector<1x16xf32>
    %45 = arith.mulf %44, %36 : vector<1x16xf32>
    %46 = arith.addf %43, %45 : vector<1x16xf32>
    %47 = vector.extract_strided_slice %26 {offsets = [0, 32], sizes = [1, 16], strides = [1, 1]} : vector<1x48xf32> to vector<1x16xf32>
    %48 = math.tanh %41 : vector<1x16xf32>
    %49 = arith.mulf %47, %48 : vector<1x16xf32>
    %50 = vector.extract_strided_slice %32 {offsets = [0, 32], sizes = [1, 16], strides = [1, 1]} : vector<1x48xf32> to vector<1x16xf32>
    %51 = math.tanh %46 : vector<1x16xf32>
    %52 = arith.mulf %50, %51 : vector<1x16xf32>
    %c0_i32 = arith.constant 0 : i32
    %53 = vector.broadcast %c0_i32 : i32 to vector<8x1xi32>
    %54 = arith.cmpi eq, %0, %53 : vector<8x1xi32>
    %55 = vector.shape_cast %54 : vector<8x1xi1> to vector<8x1xi1>
    %56 = vector.broadcast %55 : vector<8x1xi1> to vector<8x16xi1>
    %57 = vector.shape_cast %49 : vector<1x16xf32> to vector<1x16xf32>
    %58 = vector.broadcast %57 : vector<1x16xf32> to vector<8x16xf32>
    %59 = arith.select %56, %58, %13 : vector<8x16xi1>, vector<8x16xf32>
    %c7_i32 = arith.constant 7 : i32
    %60 = vector.broadcast %c7_i32 : i32 to vector<8x1xi32>
    %61 = arith.cmpi eq, %0, %60 : vector<8x1xi32>
    %62 = vector.shape_cast %61 : vector<8x1xi1> to vector<8x1xi1>
    %63 = vector.broadcast %62 : vector<8x1xi1> to vector<8x16xi1>
    %64 = vector.shape_cast %52 : vector<1x16xf32> to vector<1x16xf32>
    %65 = vector.broadcast %64 : vector<1x16xf32> to vector<8x16xf32>
    %66 = arith.select %63, %65, %14 : vector<8x16xi1>, vector<8x16xf32>
    %67 = vector.extract_strided_slice %6 {offsets = [1, 0], sizes = [1, 64], strides = [1, 1]} : vector<8x128xf32> to vector<1x64xf32>
    %cst_19 = arith.constant dense<0.000000e+00> : vector<1x64xf32>
    %68 = tpu.matmul %49, %7, %cst_19 {dimension_numbers = #tpu.dot_dimension_numbers<[1], [0], [0], [1], [0, 0, 1, 1], [], []>} : vector<1x16xf32>, vector<16x64xf32>, vector<1x64xf32> -> vector<1x64xf32>
    %69 = arith.addf %67, %68 : vector<1x64xf32>
    %70 = vector.extract_strided_slice %6 {offsets = [6, 64], sizes = [1, 64], strides = [1, 1]} : vector<8x128xf32> to vector<1x64xf32>
    %cst_20 = arith.constant dense<0.000000e+00> : vector<1x64xf32>
    %71 = tpu.matmul %52, %8, %cst_20 {dimension_numbers = #tpu.dot_dimension_numbers<[1], [0], [0], [1], [0, 0, 1, 1], [], []>} : vector<1x16xf32>, vector<16x64xf32>, vector<1x64xf32> -> vector<1x64xf32>
    %72 = arith.addf %70, %71 : vector<1x64xf32>
    %73 = vector.extract_strided_slice %69 {offsets = [0, 0], sizes = [1, 48], strides = [1, 1]} : vector<1x64xf32> to vector<1x48xf32>
    %74 = arith.negf %73 : vector<1x48xf32>
    %75 = math.exp %74 : vector<1x48xf32>
    %cst_21 = arith.constant 1.000000e+00 : f32
    %76 = vector.broadcast %cst_21 : f32 to vector<1x48xf32>
    %77 = arith.addf %76, %75 : vector<1x48xf32>
    %78 = arith.divf %76, %77 : vector<1x48xf32>
    %79 = vector.extract_strided_slice %72 {offsets = [0, 0], sizes = [1, 48], strides = [1, 1]} : vector<1x64xf32> to vector<1x48xf32>
    %80 = arith.negf %79 : vector<1x48xf32>
    %81 = math.exp %80 : vector<1x48xf32>
    %cst_22 = arith.constant 1.000000e+00 : f32
    %82 = vector.broadcast %cst_22 : f32 to vector<1x48xf32>
    %83 = arith.addf %82, %81 : vector<1x48xf32>
    %84 = arith.divf %82, %83 : vector<1x48xf32>
    %85 = vector.extract_strided_slice %69 {offsets = [0, 48], sizes = [1, 16], strides = [1, 1]} : vector<1x64xf32> to vector<1x16xf32>
    %86 = math.tanh %85 : vector<1x16xf32>
    %87 = vector.extract_strided_slice %72 {offsets = [0, 48], sizes = [1, 16], strides = [1, 1]} : vector<1x64xf32> to vector<1x16xf32>
    %88 = math.tanh %87 : vector<1x16xf32>
    %89 = vector.extract_strided_slice %78 {offsets = [0, 16], sizes = [1, 16], strides = [1, 1]} : vector<1x48xf32> to vector<1x16xf32>
    %90 = arith.mulf %89, %41 : vector<1x16xf32>
    %91 = vector.extract_strided_slice %78 {offsets = [0, 0], sizes = [1, 16], strides = [1, 1]} : vector<1x48xf32> to vector<1x16xf32>
    %92 = arith.mulf %91, %86 : vector<1x16xf32>
    %93 = arith.addf %90, %92 : vector<1x16xf32>
    %94 = vector.extract_strided_slice %84 {offsets = [0, 16], sizes = [1, 16], strides = [1, 1]} : vector<1x48xf32> to vector<1x16xf32>
    %95 = arith.mulf %94, %46 : vector<1x16xf32>
    %96 = vector.extract_strided_slice %84 {offsets = [0, 0], sizes = [1, 16], strides = [1, 1]} : vector<1x48xf32> to vector<1x16xf32>
    %97 = arith.mulf %96, %88 : vector<1x16xf32>
    %98 = arith.addf %95, %97 : vector<1x16xf32>
    %99 = vector.extract_strided_slice %78 {offsets = [0, 32], sizes = [1, 16], strides = [1, 1]} : vector<1x48xf32> to vector<1x16xf32>
    %100 = math.tanh %93 : vector<1x16xf32>
    %101 = arith.mulf %99, %100 : vector<1x16xf32>
    %102 = vector.extract_strided_slice %84 {offsets = [0, 32], sizes = [1, 16], strides = [1, 1]} : vector<1x48xf32> to vector<1x16xf32>
    %103 = math.tanh %98 : vector<1x16xf32>
    %104 = arith.mulf %102, %103 : vector<1x16xf32>
    %c1_i32 = arith.constant 1 : i32
    %105 = vector.broadcast %c1_i32 : i32 to vector<8x1xi32>
    %106 = arith.cmpi eq, %0, %105 : vector<8x1xi32>
    %107 = vector.shape_cast %106 : vector<8x1xi1> to vector<8x1xi1>
    %108 = vector.broadcast %107 : vector<8x1xi1> to vector<8x16xi1>
    %109 = vector.shape_cast %101 : vector<1x16xf32> to vector<1x16xf32>
    %110 = vector.broadcast %109 : vector<1x16xf32> to vector<8x16xf32>
    %111 = arith.select %108, %110, %59 : vector<8x16xi1>, vector<8x16xf32>
    %c6_i32 = arith.constant 6 : i32
    %112 = vector.broadcast %c6_i32 : i32 to vector<8x1xi32>
    %113 = arith.cmpi eq, %0, %112 : vector<8x1xi32>
    %114 = vector.shape_cast %113 : vector<8x1xi1> to vector<8x1xi1>
    %115 = vector.broadcast %114 : vector<8x1xi1> to vector<8x16xi1>
    %116 = vector.shape_cast %104 : vector<1x16xf32> to vector<1x16xf32>
    %117 = vector.broadcast %116 : vector<1x16xf32> to vector<8x16xf32>
    %118 = arith.select %115, %117, %66 : vector<8x16xi1>, vector<8x16xf32>
    %119 = vector.extract_strided_slice %6 {offsets = [2, 0], sizes = [1, 64], strides = [1, 1]} : vector<8x128xf32> to vector<1x64xf32>
    %cst_23 = arith.constant dense<0.000000e+00> : vector<1x64xf32>
    %120 = tpu.matmul %101, %7, %cst_23 {dimension_numbers = #tpu.dot_dimension_numbers<[1], [0], [0], [1], [0, 0, 1, 1], [], []>} : vector<1x16xf32>, vector<16x64xf32>, vector<1x64xf32> -> vector<1x64xf32>
    %121 = arith.addf %119, %120 : vector<1x64xf32>
    %122 = vector.extract_strided_slice %6 {offsets = [5, 64], sizes = [1, 64], strides = [1, 1]} : vector<8x128xf32> to vector<1x64xf32>
    %cst_24 = arith.constant dense<0.000000e+00> : vector<1x64xf32>
    %123 = tpu.matmul %104, %8, %cst_24 {dimension_numbers = #tpu.dot_dimension_numbers<[1], [0], [0], [1], [0, 0, 1, 1], [], []>} : vector<1x16xf32>, vector<16x64xf32>, vector<1x64xf32> -> vector<1x64xf32>
    %124 = arith.addf %122, %123 : vector<1x64xf32>
    %125 = vector.extract_strided_slice %121 {offsets = [0, 0], sizes = [1, 48], strides = [1, 1]} : vector<1x64xf32> to vector<1x48xf32>
    %126 = arith.negf %125 : vector<1x48xf32>
    %127 = math.exp %126 : vector<1x48xf32>
    %cst_25 = arith.constant 1.000000e+00 : f32
    %128 = vector.broadcast %cst_25 : f32 to vector<1x48xf32>
    %129 = arith.addf %128, %127 : vector<1x48xf32>
    %130 = arith.divf %128, %129 : vector<1x48xf32>
    %131 = vector.extract_strided_slice %124 {offsets = [0, 0], sizes = [1, 48], strides = [1, 1]} : vector<1x64xf32> to vector<1x48xf32>
    %132 = arith.negf %131 : vector<1x48xf32>
    %133 = math.exp %132 : vector<1x48xf32>
    %cst_26 = arith.constant 1.000000e+00 : f32
    %134 = vector.broadcast %cst_26 : f32 to vector<1x48xf32>
    %135 = arith.addf %134, %133 : vector<1x48xf32>
    %136 = arith.divf %134, %135 : vector<1x48xf32>
    %137 = vector.extract_strided_slice %121 {offsets = [0, 48], sizes = [1, 16], strides = [1, 1]} : vector<1x64xf32> to vector<1x16xf32>
    %138 = math.tanh %137 : vector<1x16xf32>
    %139 = vector.extract_strided_slice %124 {offsets = [0, 48], sizes = [1, 16], strides = [1, 1]} : vector<1x64xf32> to vector<1x16xf32>
    %140 = math.tanh %139 : vector<1x16xf32>
    %141 = vector.extract_strided_slice %130 {offsets = [0, 16], sizes = [1, 16], strides = [1, 1]} : vector<1x48xf32> to vector<1x16xf32>
    %142 = arith.mulf %141, %93 : vector<1x16xf32>
    %143 = vector.extract_strided_slice %130 {offsets = [0, 0], sizes = [1, 16], strides = [1, 1]} : vector<1x48xf32> to vector<1x16xf32>
    %144 = arith.mulf %143, %138 : vector<1x16xf32>
    %145 = arith.addf %142, %144 : vector<1x16xf32>
    %146 = vector.extract_strided_slice %136 {offsets = [0, 16], sizes = [1, 16], strides = [1, 1]} : vector<1x48xf32> to vector<1x16xf32>
    %147 = arith.mulf %146, %98 : vector<1x16xf32>
    %148 = vector.extract_strided_slice %136 {offsets = [0, 0], sizes = [1, 16], strides = [1, 1]} : vector<1x48xf32> to vector<1x16xf32>
    %149 = arith.mulf %148, %140 : vector<1x16xf32>
    %150 = arith.addf %147, %149 : vector<1x16xf32>
    %151 = vector.extract_strided_slice %130 {offsets = [0, 32], sizes = [1, 16], strides = [1, 1]} : vector<1x48xf32> to vector<1x16xf32>
    %152 = math.tanh %145 : vector<1x16xf32>
    %153 = arith.mulf %151, %152 : vector<1x16xf32>
    %154 = vector.extract_strided_slice %136 {offsets = [0, 32], sizes = [1, 16], strides = [1, 1]} : vector<1x48xf32> to vector<1x16xf32>
    %155 = math.tanh %150 : vector<1x16xf32>
    %156 = arith.mulf %154, %155 : vector<1x16xf32>
    %c2_i32 = arith.constant 2 : i32
    %157 = vector.broadcast %c2_i32 : i32 to vector<8x1xi32>
    %158 = arith.cmpi eq, %0, %157 : vector<8x1xi32>
    %159 = vector.shape_cast %158 : vector<8x1xi1> to vector<8x1xi1>
    %160 = vector.broadcast %159 : vector<8x1xi1> to vector<8x16xi1>
    %161 = vector.shape_cast %153 : vector<1x16xf32> to vector<1x16xf32>
    %162 = vector.broadcast %161 : vector<1x16xf32> to vector<8x16xf32>
    %163 = arith.select %160, %162, %111 : vector<8x16xi1>, vector<8x16xf32>
    %c5_i32 = arith.constant 5 : i32
    %164 = vector.broadcast %c5_i32 : i32 to vector<8x1xi32>
    %165 = arith.cmpi eq, %0, %164 : vector<8x1xi32>
    %166 = vector.shape_cast %165 : vector<8x1xi1> to vector<8x1xi1>
    %167 = vector.broadcast %166 : vector<8x1xi1> to vector<8x16xi1>
    %168 = vector.shape_cast %156 : vector<1x16xf32> to vector<1x16xf32>
    %169 = vector.broadcast %168 : vector<1x16xf32> to vector<8x16xf32>
    %170 = arith.select %167, %169, %118 : vector<8x16xi1>, vector<8x16xf32>
    %171 = vector.extract_strided_slice %6 {offsets = [3, 0], sizes = [1, 64], strides = [1, 1]} : vector<8x128xf32> to vector<1x64xf32>
    %cst_27 = arith.constant dense<0.000000e+00> : vector<1x64xf32>
    %172 = tpu.matmul %153, %7, %cst_27 {dimension_numbers = #tpu.dot_dimension_numbers<[1], [0], [0], [1], [0, 0, 1, 1], [], []>} : vector<1x16xf32>, vector<16x64xf32>, vector<1x64xf32> -> vector<1x64xf32>
    %173 = arith.addf %171, %172 : vector<1x64xf32>
    %174 = vector.extract_strided_slice %6 {offsets = [4, 64], sizes = [1, 64], strides = [1, 1]} : vector<8x128xf32> to vector<1x64xf32>
    %cst_28 = arith.constant dense<0.000000e+00> : vector<1x64xf32>
    %175 = tpu.matmul %156, %8, %cst_28 {dimension_numbers = #tpu.dot_dimension_numbers<[1], [0], [0], [1], [0, 0, 1, 1], [], []>} : vector<1x16xf32>, vector<16x64xf32>, vector<1x64xf32> -> vector<1x64xf32>
    %176 = arith.addf %174, %175 : vector<1x64xf32>
    %177 = vector.extract_strided_slice %173 {offsets = [0, 0], sizes = [1, 48], strides = [1, 1]} : vector<1x64xf32> to vector<1x48xf32>
    %178 = arith.negf %177 : vector<1x48xf32>
    %179 = math.exp %178 : vector<1x48xf32>
    %cst_29 = arith.constant 1.000000e+00 : f32
    %180 = vector.broadcast %cst_29 : f32 to vector<1x48xf32>
    %181 = arith.addf %180, %179 : vector<1x48xf32>
    %182 = arith.divf %180, %181 : vector<1x48xf32>
    %183 = vector.extract_strided_slice %176 {offsets = [0, 0], sizes = [1, 48], strides = [1, 1]} : vector<1x64xf32> to vector<1x48xf32>
    %184 = arith.negf %183 : vector<1x48xf32>
    %185 = math.exp %184 : vector<1x48xf32>
    %cst_30 = arith.constant 1.000000e+00 : f32
    %186 = vector.broadcast %cst_30 : f32 to vector<1x48xf32>
    %187 = arith.addf %186, %185 : vector<1x48xf32>
    %188 = arith.divf %186, %187 : vector<1x48xf32>
    %189 = vector.extract_strided_slice %173 {offsets = [0, 48], sizes = [1, 16], strides = [1, 1]} : vector<1x64xf32> to vector<1x16xf32>
    %190 = math.tanh %189 : vector<1x16xf32>
    %191 = vector.extract_strided_slice %176 {offsets = [0, 48], sizes = [1, 16], strides = [1, 1]} : vector<1x64xf32> to vector<1x16xf32>
    %192 = math.tanh %191 : vector<1x16xf32>
    %193 = vector.extract_strided_slice %182 {offsets = [0, 16], sizes = [1, 16], strides = [1, 1]} : vector<1x48xf32> to vector<1x16xf32>
    %194 = arith.mulf %193, %145 : vector<1x16xf32>
    %195 = vector.extract_strided_slice %182 {offsets = [0, 0], sizes = [1, 16], strides = [1, 1]} : vector<1x48xf32> to vector<1x16xf32>
    %196 = arith.mulf %195, %190 : vector<1x16xf32>
    %197 = arith.addf %194, %196 : vector<1x16xf32>
    %198 = vector.extract_strided_slice %188 {offsets = [0, 16], sizes = [1, 16], strides = [1, 1]} : vector<1x48xf32> to vector<1x16xf32>
    %199 = arith.mulf %198, %150 : vector<1x16xf32>
    %200 = vector.extract_strided_slice %188 {offsets = [0, 0], sizes = [1, 16], strides = [1, 1]} : vector<1x48xf32> to vector<1x16xf32>
    %201 = arith.mulf %200, %192 : vector<1x16xf32>
    %202 = arith.addf %199, %201 : vector<1x16xf32>
    %203 = vector.extract_strided_slice %182 {offsets = [0, 32], sizes = [1, 16], strides = [1, 1]} : vector<1x48xf32> to vector<1x16xf32>
    %204 = math.tanh %197 : vector<1x16xf32>
    %205 = arith.mulf %203, %204 : vector<1x16xf32>
    %206 = vector.extract_strided_slice %188 {offsets = [0, 32], sizes = [1, 16], strides = [1, 1]} : vector<1x48xf32> to vector<1x16xf32>
    %207 = math.tanh %202 : vector<1x16xf32>
    %208 = arith.mulf %206, %207 : vector<1x16xf32>
    %c3_i32 = arith.constant 3 : i32
    %209 = vector.broadcast %c3_i32 : i32 to vector<8x1xi32>
    %210 = arith.cmpi eq, %0, %209 : vector<8x1xi32>
    %211 = vector.shape_cast %210 : vector<8x1xi1> to vector<8x1xi1>
    %212 = vector.broadcast %211 : vector<8x1xi1> to vector<8x16xi1>
    %213 = vector.shape_cast %205 : vector<1x16xf32> to vector<1x16xf32>
    %214 = vector.broadcast %213 : vector<1x16xf32> to vector<8x16xf32>
    %215 = arith.select %212, %214, %163 : vector<8x16xi1>, vector<8x16xf32>
    %c4_i32 = arith.constant 4 : i32
    %216 = vector.broadcast %c4_i32 : i32 to vector<8x1xi32>
    %217 = arith.cmpi eq, %0, %216 : vector<8x1xi32>
    %218 = vector.shape_cast %217 : vector<8x1xi1> to vector<8x1xi1>
    %219 = vector.broadcast %218 : vector<8x1xi1> to vector<8x16xi1>
    %220 = vector.shape_cast %208 : vector<1x16xf32> to vector<1x16xf32>
    %221 = vector.broadcast %220 : vector<1x16xf32> to vector<8x16xf32>
    %222 = arith.select %219, %221, %170 : vector<8x16xi1>, vector<8x16xf32>
    %223 = vector.extract_strided_slice %6 {offsets = [4, 0], sizes = [1, 64], strides = [1, 1]} : vector<8x128xf32> to vector<1x64xf32>
    %cst_31 = arith.constant dense<0.000000e+00> : vector<1x64xf32>
    %224 = tpu.matmul %205, %7, %cst_31 {dimension_numbers = #tpu.dot_dimension_numbers<[1], [0], [0], [1], [0, 0, 1, 1], [], []>} : vector<1x16xf32>, vector<16x64xf32>, vector<1x64xf32> -> vector<1x64xf32>
    %225 = arith.addf %223, %224 : vector<1x64xf32>
    %226 = vector.extract_strided_slice %6 {offsets = [3, 64], sizes = [1, 64], strides = [1, 1]} : vector<8x128xf32> to vector<1x64xf32>
    %cst_32 = arith.constant dense<0.000000e+00> : vector<1x64xf32>
    %227 = tpu.matmul %208, %8, %cst_32 {dimension_numbers = #tpu.dot_dimension_numbers<[1], [0], [0], [1], [0, 0, 1, 1], [], []>} : vector<1x16xf32>, vector<16x64xf32>, vector<1x64xf32> -> vector<1x64xf32>
    %228 = arith.addf %226, %227 : vector<1x64xf32>
    %229 = vector.extract_strided_slice %225 {offsets = [0, 0], sizes = [1, 48], strides = [1, 1]} : vector<1x64xf32> to vector<1x48xf32>
    %230 = arith.negf %229 : vector<1x48xf32>
    %231 = math.exp %230 : vector<1x48xf32>
    %cst_33 = arith.constant 1.000000e+00 : f32
    %232 = vector.broadcast %cst_33 : f32 to vector<1x48xf32>
    %233 = arith.addf %232, %231 : vector<1x48xf32>
    %234 = arith.divf %232, %233 : vector<1x48xf32>
    %235 = vector.extract_strided_slice %228 {offsets = [0, 0], sizes = [1, 48], strides = [1, 1]} : vector<1x64xf32> to vector<1x48xf32>
    %236 = arith.negf %235 : vector<1x48xf32>
    %237 = math.exp %236 : vector<1x48xf32>
    %cst_34 = arith.constant 1.000000e+00 : f32
    %238 = vector.broadcast %cst_34 : f32 to vector<1x48xf32>
    %239 = arith.addf %238, %237 : vector<1x48xf32>
    %240 = arith.divf %238, %239 : vector<1x48xf32>
    %241 = vector.extract_strided_slice %225 {offsets = [0, 48], sizes = [1, 16], strides = [1, 1]} : vector<1x64xf32> to vector<1x16xf32>
    %242 = math.tanh %241 : vector<1x16xf32>
    %243 = vector.extract_strided_slice %228 {offsets = [0, 48], sizes = [1, 16], strides = [1, 1]} : vector<1x64xf32> to vector<1x16xf32>
    %244 = math.tanh %243 : vector<1x16xf32>
    %245 = vector.extract_strided_slice %234 {offsets = [0, 16], sizes = [1, 16], strides = [1, 1]} : vector<1x48xf32> to vector<1x16xf32>
    %246 = arith.mulf %245, %197 : vector<1x16xf32>
    %247 = vector.extract_strided_slice %234 {offsets = [0, 0], sizes = [1, 16], strides = [1, 1]} : vector<1x48xf32> to vector<1x16xf32>
    %248 = arith.mulf %247, %242 : vector<1x16xf32>
    %249 = arith.addf %246, %248 : vector<1x16xf32>
    %250 = vector.extract_strided_slice %240 {offsets = [0, 16], sizes = [1, 16], strides = [1, 1]} : vector<1x48xf32> to vector<1x16xf32>
    %251 = arith.mulf %250, %202 : vector<1x16xf32>
    %252 = vector.extract_strided_slice %240 {offsets = [0, 0], sizes = [1, 16], strides = [1, 1]} : vector<1x48xf32> to vector<1x16xf32>
    %253 = arith.mulf %252, %244 : vector<1x16xf32>
    %254 = arith.addf %251, %253 : vector<1x16xf32>
    %255 = vector.extract_strided_slice %234 {offsets = [0, 32], sizes = [1, 16], strides = [1, 1]} : vector<1x48xf32> to vector<1x16xf32>
    %256 = math.tanh %249 : vector<1x16xf32>
    %257 = arith.mulf %255, %256 : vector<1x16xf32>
    %258 = vector.extract_strided_slice %240 {offsets = [0, 32], sizes = [1, 16], strides = [1, 1]} : vector<1x48xf32> to vector<1x16xf32>
    %259 = math.tanh %254 : vector<1x16xf32>
    %260 = arith.mulf %258, %259 : vector<1x16xf32>
    %c4_i32_35 = arith.constant 4 : i32
    %261 = vector.broadcast %c4_i32_35 : i32 to vector<8x1xi32>
    %262 = arith.cmpi eq, %0, %261 : vector<8x1xi32>
    %263 = vector.shape_cast %262 : vector<8x1xi1> to vector<8x1xi1>
    %264 = vector.broadcast %263 : vector<8x1xi1> to vector<8x16xi1>
    %265 = vector.shape_cast %257 : vector<1x16xf32> to vector<1x16xf32>
    %266 = vector.broadcast %265 : vector<1x16xf32> to vector<8x16xf32>
    %267 = arith.select %264, %266, %215 : vector<8x16xi1>, vector<8x16xf32>
    %c3_i32_36 = arith.constant 3 : i32
    %268 = vector.broadcast %c3_i32_36 : i32 to vector<8x1xi32>
    %269 = arith.cmpi eq, %0, %268 : vector<8x1xi32>
    %270 = vector.shape_cast %269 : vector<8x1xi1> to vector<8x1xi1>
    %271 = vector.broadcast %270 : vector<8x1xi1> to vector<8x16xi1>
    %272 = vector.shape_cast %260 : vector<1x16xf32> to vector<1x16xf32>
    %273 = vector.broadcast %272 : vector<1x16xf32> to vector<8x16xf32>
    %274 = arith.select %271, %273, %222 : vector<8x16xi1>, vector<8x16xf32>
    %275 = vector.extract_strided_slice %6 {offsets = [5, 0], sizes = [1, 64], strides = [1, 1]} : vector<8x128xf32> to vector<1x64xf32>
    %cst_37 = arith.constant dense<0.000000e+00> : vector<1x64xf32>
    %276 = tpu.matmul %257, %7, %cst_37 {dimension_numbers = #tpu.dot_dimension_numbers<[1], [0], [0], [1], [0, 0, 1, 1], [], []>} : vector<1x16xf32>, vector<16x64xf32>, vector<1x64xf32> -> vector<1x64xf32>
    %277 = arith.addf %275, %276 : vector<1x64xf32>
    %278 = vector.extract_strided_slice %6 {offsets = [2, 64], sizes = [1, 64], strides = [1, 1]} : vector<8x128xf32> to vector<1x64xf32>
    %cst_38 = arith.constant dense<0.000000e+00> : vector<1x64xf32>
    %279 = tpu.matmul %260, %8, %cst_38 {dimension_numbers = #tpu.dot_dimension_numbers<[1], [0], [0], [1], [0, 0, 1, 1], [], []>} : vector<1x16xf32>, vector<16x64xf32>, vector<1x64xf32> -> vector<1x64xf32>
    %280 = arith.addf %278, %279 : vector<1x64xf32>
    %281 = vector.extract_strided_slice %277 {offsets = [0, 0], sizes = [1, 48], strides = [1, 1]} : vector<1x64xf32> to vector<1x48xf32>
    %282 = arith.negf %281 : vector<1x48xf32>
    %283 = math.exp %282 : vector<1x48xf32>
    %cst_39 = arith.constant 1.000000e+00 : f32
    %284 = vector.broadcast %cst_39 : f32 to vector<1x48xf32>
    %285 = arith.addf %284, %283 : vector<1x48xf32>
    %286 = arith.divf %284, %285 : vector<1x48xf32>
    %287 = vector.extract_strided_slice %280 {offsets = [0, 0], sizes = [1, 48], strides = [1, 1]} : vector<1x64xf32> to vector<1x48xf32>
    %288 = arith.negf %287 : vector<1x48xf32>
    %289 = math.exp %288 : vector<1x48xf32>
    %cst_40 = arith.constant 1.000000e+00 : f32
    %290 = vector.broadcast %cst_40 : f32 to vector<1x48xf32>
    %291 = arith.addf %290, %289 : vector<1x48xf32>
    %292 = arith.divf %290, %291 : vector<1x48xf32>
    %293 = vector.extract_strided_slice %277 {offsets = [0, 48], sizes = [1, 16], strides = [1, 1]} : vector<1x64xf32> to vector<1x16xf32>
    %294 = math.tanh %293 : vector<1x16xf32>
    %295 = vector.extract_strided_slice %280 {offsets = [0, 48], sizes = [1, 16], strides = [1, 1]} : vector<1x64xf32> to vector<1x16xf32>
    %296 = math.tanh %295 : vector<1x16xf32>
    %297 = vector.extract_strided_slice %286 {offsets = [0, 16], sizes = [1, 16], strides = [1, 1]} : vector<1x48xf32> to vector<1x16xf32>
    %298 = arith.mulf %297, %249 : vector<1x16xf32>
    %299 = vector.extract_strided_slice %286 {offsets = [0, 0], sizes = [1, 16], strides = [1, 1]} : vector<1x48xf32> to vector<1x16xf32>
    %300 = arith.mulf %299, %294 : vector<1x16xf32>
    %301 = arith.addf %298, %300 : vector<1x16xf32>
    %302 = vector.extract_strided_slice %292 {offsets = [0, 16], sizes = [1, 16], strides = [1, 1]} : vector<1x48xf32> to vector<1x16xf32>
    %303 = arith.mulf %302, %254 : vector<1x16xf32>
    %304 = vector.extract_strided_slice %292 {offsets = [0, 0], sizes = [1, 16], strides = [1, 1]} : vector<1x48xf32> to vector<1x16xf32>
    %305 = arith.mulf %304, %296 : vector<1x16xf32>
    %306 = arith.addf %303, %305 : vector<1x16xf32>
    %307 = vector.extract_strided_slice %286 {offsets = [0, 32], sizes = [1, 16], strides = [1, 1]} : vector<1x48xf32> to vector<1x16xf32>
    %308 = math.tanh %301 : vector<1x16xf32>
    %309 = arith.mulf %307, %308 : vector<1x16xf32>
    %310 = vector.extract_strided_slice %292 {offsets = [0, 32], sizes = [1, 16], strides = [1, 1]} : vector<1x48xf32> to vector<1x16xf32>
    %311 = math.tanh %306 : vector<1x16xf32>
    %312 = arith.mulf %310, %311 : vector<1x16xf32>
    %c5_i32_41 = arith.constant 5 : i32
    %313 = vector.broadcast %c5_i32_41 : i32 to vector<8x1xi32>
    %314 = arith.cmpi eq, %0, %313 : vector<8x1xi32>
    %315 = vector.shape_cast %314 : vector<8x1xi1> to vector<8x1xi1>
    %316 = vector.broadcast %315 : vector<8x1xi1> to vector<8x16xi1>
    %317 = vector.shape_cast %309 : vector<1x16xf32> to vector<1x16xf32>
    %318 = vector.broadcast %317 : vector<1x16xf32> to vector<8x16xf32>
    %319 = arith.select %316, %318, %267 : vector<8x16xi1>, vector<8x16xf32>
    %c2_i32_42 = arith.constant 2 : i32
    %320 = vector.broadcast %c2_i32_42 : i32 to vector<8x1xi32>
    %321 = arith.cmpi eq, %0, %320 : vector<8x1xi32>
    %322 = vector.shape_cast %321 : vector<8x1xi1> to vector<8x1xi1>
    %323 = vector.broadcast %322 : vector<8x1xi1> to vector<8x16xi1>
    %324 = vector.shape_cast %312 : vector<1x16xf32> to vector<1x16xf32>
    %325 = vector.broadcast %324 : vector<1x16xf32> to vector<8x16xf32>
    %326 = arith.select %323, %325, %274 : vector<8x16xi1>, vector<8x16xf32>
    %327 = vector.extract_strided_slice %6 {offsets = [6, 0], sizes = [1, 64], strides = [1, 1]} : vector<8x128xf32> to vector<1x64xf32>
    %cst_43 = arith.constant dense<0.000000e+00> : vector<1x64xf32>
    %328 = tpu.matmul %309, %7, %cst_43 {dimension_numbers = #tpu.dot_dimension_numbers<[1], [0], [0], [1], [0, 0, 1, 1], [], []>} : vector<1x16xf32>, vector<16x64xf32>, vector<1x64xf32> -> vector<1x64xf32>
    %329 = arith.addf %327, %328 : vector<1x64xf32>
    %330 = vector.extract_strided_slice %6 {offsets = [1, 64], sizes = [1, 64], strides = [1, 1]} : vector<8x128xf32> to vector<1x64xf32>
    %cst_44 = arith.constant dense<0.000000e+00> : vector<1x64xf32>
    %331 = tpu.matmul %312, %8, %cst_44 {dimension_numbers = #tpu.dot_dimension_numbers<[1], [0], [0], [1], [0, 0, 1, 1], [], []>} : vector<1x16xf32>, vector<16x64xf32>, vector<1x64xf32> -> vector<1x64xf32>
    %332 = arith.addf %330, %331 : vector<1x64xf32>
    %333 = vector.extract_strided_slice %329 {offsets = [0, 0], sizes = [1, 48], strides = [1, 1]} : vector<1x64xf32> to vector<1x48xf32>
    %334 = arith.negf %333 : vector<1x48xf32>
    %335 = math.exp %334 : vector<1x48xf32>
    %cst_45 = arith.constant 1.000000e+00 : f32
    %336 = vector.broadcast %cst_45 : f32 to vector<1x48xf32>
    %337 = arith.addf %336, %335 : vector<1x48xf32>
    %338 = arith.divf %336, %337 : vector<1x48xf32>
    %339 = vector.extract_strided_slice %332 {offsets = [0, 0], sizes = [1, 48], strides = [1, 1]} : vector<1x64xf32> to vector<1x48xf32>
    %340 = arith.negf %339 : vector<1x48xf32>
    %341 = math.exp %340 : vector<1x48xf32>
    %cst_46 = arith.constant 1.000000e+00 : f32
    %342 = vector.broadcast %cst_46 : f32 to vector<1x48xf32>
    %343 = arith.addf %342, %341 : vector<1x48xf32>
    %344 = arith.divf %342, %343 : vector<1x48xf32>
    %345 = vector.extract_strided_slice %329 {offsets = [0, 48], sizes = [1, 16], strides = [1, 1]} : vector<1x64xf32> to vector<1x16xf32>
    %346 = math.tanh %345 : vector<1x16xf32>
    %347 = vector.extract_strided_slice %332 {offsets = [0, 48], sizes = [1, 16], strides = [1, 1]} : vector<1x64xf32> to vector<1x16xf32>
    %348 = math.tanh %347 : vector<1x16xf32>
    %349 = vector.extract_strided_slice %338 {offsets = [0, 16], sizes = [1, 16], strides = [1, 1]} : vector<1x48xf32> to vector<1x16xf32>
    %350 = arith.mulf %349, %301 : vector<1x16xf32>
    %351 = vector.extract_strided_slice %338 {offsets = [0, 0], sizes = [1, 16], strides = [1, 1]} : vector<1x48xf32> to vector<1x16xf32>
    %352 = arith.mulf %351, %346 : vector<1x16xf32>
    %353 = arith.addf %350, %352 : vector<1x16xf32>
    %354 = vector.extract_strided_slice %344 {offsets = [0, 16], sizes = [1, 16], strides = [1, 1]} : vector<1x48xf32> to vector<1x16xf32>
    %355 = arith.mulf %354, %306 : vector<1x16xf32>
    %356 = vector.extract_strided_slice %344 {offsets = [0, 0], sizes = [1, 16], strides = [1, 1]} : vector<1x48xf32> to vector<1x16xf32>
    %357 = arith.mulf %356, %348 : vector<1x16xf32>
    %358 = arith.addf %355, %357 : vector<1x16xf32>
    %359 = vector.extract_strided_slice %338 {offsets = [0, 32], sizes = [1, 16], strides = [1, 1]} : vector<1x48xf32> to vector<1x16xf32>
    %360 = math.tanh %353 : vector<1x16xf32>
    %361 = arith.mulf %359, %360 : vector<1x16xf32>
    %362 = vector.extract_strided_slice %344 {offsets = [0, 32], sizes = [1, 16], strides = [1, 1]} : vector<1x48xf32> to vector<1x16xf32>
    %363 = math.tanh %358 : vector<1x16xf32>
    %364 = arith.mulf %362, %363 : vector<1x16xf32>
    %c6_i32_47 = arith.constant 6 : i32
    %365 = vector.broadcast %c6_i32_47 : i32 to vector<8x1xi32>
    %366 = arith.cmpi eq, %0, %365 : vector<8x1xi32>
    %367 = vector.shape_cast %366 : vector<8x1xi1> to vector<8x1xi1>
    %368 = vector.broadcast %367 : vector<8x1xi1> to vector<8x16xi1>
    %369 = vector.shape_cast %361 : vector<1x16xf32> to vector<1x16xf32>
    %370 = vector.broadcast %369 : vector<1x16xf32> to vector<8x16xf32>
    %371 = arith.select %368, %370, %319 : vector<8x16xi1>, vector<8x16xf32>
    %c1_i32_48 = arith.constant 1 : i32
    %372 = vector.broadcast %c1_i32_48 : i32 to vector<8x1xi32>
    %373 = arith.cmpi eq, %0, %372 : vector<8x1xi32>
    %374 = vector.shape_cast %373 : vector<8x1xi1> to vector<8x1xi1>
    %375 = vector.broadcast %374 : vector<8x1xi1> to vector<8x16xi1>
    %376 = vector.shape_cast %364 : vector<1x16xf32> to vector<1x16xf32>
    %377 = vector.broadcast %376 : vector<1x16xf32> to vector<8x16xf32>
    %378 = arith.select %375, %377, %326 : vector<8x16xi1>, vector<8x16xf32>
    %379 = vector.extract_strided_slice %6 {offsets = [7, 0], sizes = [1, 64], strides = [1, 1]} : vector<8x128xf32> to vector<1x64xf32>
    %cst_49 = arith.constant dense<0.000000e+00> : vector<1x64xf32>
    %380 = tpu.matmul %361, %7, %cst_49 {dimension_numbers = #tpu.dot_dimension_numbers<[1], [0], [0], [1], [0, 0, 1, 1], [], []>} : vector<1x16xf32>, vector<16x64xf32>, vector<1x64xf32> -> vector<1x64xf32>
    %381 = arith.addf %379, %380 : vector<1x64xf32>
    %382 = vector.extract_strided_slice %6 {offsets = [0, 64], sizes = [1, 64], strides = [1, 1]} : vector<8x128xf32> to vector<1x64xf32>
    %cst_50 = arith.constant dense<0.000000e+00> : vector<1x64xf32>
    %383 = tpu.matmul %364, %8, %cst_50 {dimension_numbers = #tpu.dot_dimension_numbers<[1], [0], [0], [1], [0, 0, 1, 1], [], []>} : vector<1x16xf32>, vector<16x64xf32>, vector<1x64xf32> -> vector<1x64xf32>
    %384 = arith.addf %382, %383 : vector<1x64xf32>
    %385 = vector.extract_strided_slice %381 {offsets = [0, 0], sizes = [1, 48], strides = [1, 1]} : vector<1x64xf32> to vector<1x48xf32>
    %386 = arith.negf %385 : vector<1x48xf32>
    %387 = math.exp %386 : vector<1x48xf32>
    %cst_51 = arith.constant 1.000000e+00 : f32
    %388 = vector.broadcast %cst_51 : f32 to vector<1x48xf32>
    %389 = arith.addf %388, %387 : vector<1x48xf32>
    %390 = arith.divf %388, %389 : vector<1x48xf32>
    %391 = vector.extract_strided_slice %384 {offsets = [0, 0], sizes = [1, 48], strides = [1, 1]} : vector<1x64xf32> to vector<1x48xf32>
    %392 = arith.negf %391 : vector<1x48xf32>
    %393 = math.exp %392 : vector<1x48xf32>
    %cst_52 = arith.constant 1.000000e+00 : f32
    %394 = vector.broadcast %cst_52 : f32 to vector<1x48xf32>
    %395 = arith.addf %394, %393 : vector<1x48xf32>
    %396 = arith.divf %394, %395 : vector<1x48xf32>
    %397 = vector.extract_strided_slice %381 {offsets = [0, 48], sizes = [1, 16], strides = [1, 1]} : vector<1x64xf32> to vector<1x16xf32>
    %398 = math.tanh %397 : vector<1x16xf32>
    %399 = vector.extract_strided_slice %384 {offsets = [0, 48], sizes = [1, 16], strides = [1, 1]} : vector<1x64xf32> to vector<1x16xf32>
    %400 = math.tanh %399 : vector<1x16xf32>
    %401 = vector.extract_strided_slice %390 {offsets = [0, 16], sizes = [1, 16], strides = [1, 1]} : vector<1x48xf32> to vector<1x16xf32>
    %402 = arith.mulf %401, %353 : vector<1x16xf32>
    %403 = vector.extract_strided_slice %390 {offsets = [0, 0], sizes = [1, 16], strides = [1, 1]} : vector<1x48xf32> to vector<1x16xf32>
    %404 = arith.mulf %403, %398 : vector<1x16xf32>
    %405 = arith.addf %402, %404 : vector<1x16xf32>
    %406 = vector.extract_strided_slice %396 {offsets = [0, 16], sizes = [1, 16], strides = [1, 1]} : vector<1x48xf32> to vector<1x16xf32>
    %407 = arith.mulf %406, %358 : vector<1x16xf32>
    %408 = vector.extract_strided_slice %396 {offsets = [0, 0], sizes = [1, 16], strides = [1, 1]} : vector<1x48xf32> to vector<1x16xf32>
    %409 = arith.mulf %408, %400 : vector<1x16xf32>
    %410 = arith.addf %407, %409 : vector<1x16xf32>
    %411 = vector.extract_strided_slice %390 {offsets = [0, 32], sizes = [1, 16], strides = [1, 1]} : vector<1x48xf32> to vector<1x16xf32>
    %412 = math.tanh %405 : vector<1x16xf32>
    %413 = arith.mulf %411, %412 : vector<1x16xf32>
    %414 = vector.extract_strided_slice %396 {offsets = [0, 32], sizes = [1, 16], strides = [1, 1]} : vector<1x48xf32> to vector<1x16xf32>
    %415 = math.tanh %410 : vector<1x16xf32>
    %416 = arith.mulf %414, %415 : vector<1x16xf32>
    %c7_i32_53 = arith.constant 7 : i32
    %417 = vector.broadcast %c7_i32_53 : i32 to vector<8x1xi32>
    %418 = arith.cmpi eq, %0, %417 : vector<8x1xi32>
    %419 = vector.shape_cast %418 : vector<8x1xi1> to vector<8x1xi1>
    %420 = vector.broadcast %419 : vector<8x1xi1> to vector<8x16xi1>
    %421 = vector.shape_cast %413 : vector<1x16xf32> to vector<1x16xf32>
    %422 = vector.broadcast %421 : vector<1x16xf32> to vector<8x16xf32>
    %423 = arith.select %420, %422, %371 : vector<8x16xi1>, vector<8x16xf32>
    %c0_i32_54 = arith.constant 0 : i32
    %424 = vector.broadcast %c0_i32_54 : i32 to vector<8x1xi32>
    %425 = arith.cmpi eq, %0, %424 : vector<8x1xi32>
    %426 = vector.shape_cast %425 : vector<8x1xi1> to vector<8x1xi1>
    %427 = vector.broadcast %426 : vector<8x1xi1> to vector<8x16xi1>
    %428 = vector.shape_cast %416 : vector<1x16xf32> to vector<1x16xf32>
    %429 = vector.broadcast %428 : vector<1x16xf32> to vector<8x16xf32>
    %430 = arith.select %427, %429, %378 : vector<8x16xi1>, vector<8x16xf32>
    %c0_55 = arith.constant 0 : index
    %c0_56 = arith.constant 0 : index
    %431 = vector.load %arg6[%c0_55, %c0_56] : memref<32x128xf32, #tpu.memory_space<vmem>>, vector<16x128xf32>
    %cst_57 = arith.constant dense<0.000000e+00> : vector<8x128xf32>
    %432 = tpu.matmul %423, %431, %cst_57 {dimension_numbers = #tpu.dot_dimension_numbers<[1], [0], [0], [1], [0, 0, 1, 1], [], []>} : vector<8x16xf32>, vector<16x128xf32>, vector<8x128xf32> -> vector<8x128xf32>
    %c16 = arith.constant 16 : index
    %c0_58 = arith.constant 0 : index
    %433 = vector.load %arg6[%c16, %c0_58] : memref<32x128xf32, #tpu.memory_space<vmem>>, vector<16x128xf32>
    %cst_59 = arith.constant dense<0.000000e+00> : vector<8x128xf32>
    %434 = tpu.matmul %430, %433, %cst_59 {dimension_numbers = #tpu.dot_dimension_numbers<[1], [0], [0], [1], [0, 0, 1, 1], [], []>} : vector<8x16xf32>, vector<16x128xf32>, vector<8x128xf32> -> vector<8x128xf32>
    %435 = arith.addf %432, %434 : vector<8x128xf32>
    %c0_60 = arith.constant 0 : index
    %c0_61 = arith.constant 0 : index
    %436 = vector.load %arg9[%c0_60, %c0_61] : memref<1x128xf32, #tpu.memory_space<vmem>>, vector<1x128xf32>
    %437 = vector.broadcast %436 : vector<1x128xf32> to vector<8x128xf32>
    %438 = arith.addf %435, %437 : vector<8x128xf32>
    %c0_62 = arith.constant 0 : index
    %c0_63 = arith.constant 0 : index
    %439 = vector.load %arg7[%c0_62, %c0_63] : memref<16x64xf32, #tpu.memory_space<vmem>>, vector<16x64xf32>
    %c0_64 = arith.constant 0 : index
    %c0_65 = arith.constant 0 : index
    %440 = vector.load %arg8[%c0_64, %c0_65] : memref<16x64xf32, #tpu.memory_space<vmem>>, vector<16x64xf32>
    %cst_66 = arith.constant 0.000000e+00 : f32
    %441 = vector.broadcast %cst_66 : f32 to vector<1x16xf32>
    %cst_67 = arith.constant 0.000000e+00 : f32
    %442 = vector.broadcast %cst_67 : f32 to vector<1x16xf32>
    %cst_68 = arith.constant 0.000000e+00 : f32
    %443 = vector.broadcast %cst_68 : f32 to vector<1x16xf32>
    %cst_69 = arith.constant 0.000000e+00 : f32
    %444 = vector.broadcast %cst_69 : f32 to vector<1x16xf32>
    %cst_70 = arith.constant 0.000000e+00 : f32
    %445 = vector.broadcast %cst_70 : f32 to vector<8x16xf32>
    %cst_71 = arith.constant 0.000000e+00 : f32
    %446 = vector.broadcast %cst_71 : f32 to vector<8x16xf32>
    %447 = vector.extract_strided_slice %438 {offsets = [0, 0], sizes = [1, 64], strides = [1, 1]} : vector<8x128xf32> to vector<1x64xf32>
    %cst_72 = arith.constant dense<0.000000e+00> : vector<1x64xf32>
    %448 = tpu.matmul %441, %439, %cst_72 {dimension_numbers = #tpu.dot_dimension_numbers<[1], [0], [0], [1], [0, 0, 1, 1], [], []>} : vector<1x16xf32>, vector<16x64xf32>, vector<1x64xf32> -> vector<1x64xf32>
    %449 = arith.addf %447, %448 : vector<1x64xf32>
    %450 = vector.extract_strided_slice %438 {offsets = [7, 64], sizes = [1, 64], strides = [1, 1]} : vector<8x128xf32> to vector<1x64xf32>
    %cst_73 = arith.constant dense<0.000000e+00> : vector<1x64xf32>
    %451 = tpu.matmul %443, %440, %cst_73 {dimension_numbers = #tpu.dot_dimension_numbers<[1], [0], [0], [1], [0, 0, 1, 1], [], []>} : vector<1x16xf32>, vector<16x64xf32>, vector<1x64xf32> -> vector<1x64xf32>
    %452 = arith.addf %450, %451 : vector<1x64xf32>
    %453 = vector.extract_strided_slice %449 {offsets = [0, 0], sizes = [1, 48], strides = [1, 1]} : vector<1x64xf32> to vector<1x48xf32>
    %454 = arith.negf %453 : vector<1x48xf32>
    %455 = math.exp %454 : vector<1x48xf32>
    %cst_74 = arith.constant 1.000000e+00 : f32
    %456 = vector.broadcast %cst_74 : f32 to vector<1x48xf32>
    %457 = arith.addf %456, %455 : vector<1x48xf32>
    %458 = arith.divf %456, %457 : vector<1x48xf32>
    %459 = vector.extract_strided_slice %452 {offsets = [0, 0], sizes = [1, 48], strides = [1, 1]} : vector<1x64xf32> to vector<1x48xf32>
    %460 = arith.negf %459 : vector<1x48xf32>
    %461 = math.exp %460 : vector<1x48xf32>
    %cst_75 = arith.constant 1.000000e+00 : f32
    %462 = vector.broadcast %cst_75 : f32 to vector<1x48xf32>
    %463 = arith.addf %462, %461 : vector<1x48xf32>
    %464 = arith.divf %462, %463 : vector<1x48xf32>
    %465 = vector.extract_strided_slice %449 {offsets = [0, 48], sizes = [1, 16], strides = [1, 1]} : vector<1x64xf32> to vector<1x16xf32>
    %466 = math.tanh %465 : vector<1x16xf32>
    %467 = vector.extract_strided_slice %452 {offsets = [0, 48], sizes = [1, 16], strides = [1, 1]} : vector<1x64xf32> to vector<1x16xf32>
    %468 = math.tanh %467 : vector<1x16xf32>
    %469 = vector.extract_strided_slice %458 {offsets = [0, 16], sizes = [1, 16], strides = [1, 1]} : vector<1x48xf32> to vector<1x16xf32>
    %470 = arith.mulf %469, %442 : vector<1x16xf32>
    %471 = vector.extract_strided_slice %458 {offsets = [0, 0], sizes = [1, 16], strides = [1, 1]} : vector<1x48xf32> to vector<1x16xf32>
    %472 = arith.mulf %471, %466 : vector<1x16xf32>
    %473 = arith.addf %470, %472 : vector<1x16xf32>
    %474 = vector.extract_strided_slice %464 {offsets = [0, 16], sizes = [1, 16], strides = [1, 1]} : vector<1x48xf32> to vector<1x16xf32>
    %475 = arith.mulf %474, %444 : vector<1x16xf32>
    %476 = vector.extract_strided_slice %464 {offsets = [0, 0], sizes = [1, 16], strides = [1, 1]} : vector<1x48xf32> to vector<1x16xf32>
    %477 = arith.mulf %476, %468 : vector<1x16xf32>
    %478 = arith.addf %475, %477 : vector<1x16xf32>
    %479 = vector.extract_strided_slice %458 {offsets = [0, 32], sizes = [1, 16], strides = [1, 1]} : vector<1x48xf32> to vector<1x16xf32>
    %480 = math.tanh %473 : vector<1x16xf32>
    %481 = arith.mulf %479, %480 : vector<1x16xf32>
    %482 = vector.extract_strided_slice %464 {offsets = [0, 32], sizes = [1, 16], strides = [1, 1]} : vector<1x48xf32> to vector<1x16xf32>
    %483 = math.tanh %478 : vector<1x16xf32>
    %484 = arith.mulf %482, %483 : vector<1x16xf32>
    %c0_i32_76 = arith.constant 0 : i32
    %485 = vector.broadcast %c0_i32_76 : i32 to vector<8x1xi32>
    %486 = arith.cmpi eq, %0, %485 : vector<8x1xi32>
    %487 = vector.shape_cast %486 : vector<8x1xi1> to vector<8x1xi1>
    %488 = vector.broadcast %487 : vector<8x1xi1> to vector<8x16xi1>
    %489 = vector.shape_cast %481 : vector<1x16xf32> to vector<1x16xf32>
    %490 = vector.broadcast %489 : vector<1x16xf32> to vector<8x16xf32>
    %491 = arith.select %488, %490, %445 : vector<8x16xi1>, vector<8x16xf32>
    %c7_i32_77 = arith.constant 7 : i32
    %492 = vector.broadcast %c7_i32_77 : i32 to vector<8x1xi32>
    %493 = arith.cmpi eq, %0, %492 : vector<8x1xi32>
    %494 = vector.shape_cast %493 : vector<8x1xi1> to vector<8x1xi1>
    %495 = vector.broadcast %494 : vector<8x1xi1> to vector<8x16xi1>
    %496 = vector.shape_cast %484 : vector<1x16xf32> to vector<1x16xf32>
    %497 = vector.broadcast %496 : vector<1x16xf32> to vector<8x16xf32>
    %498 = arith.select %495, %497, %446 : vector<8x16xi1>, vector<8x16xf32>
    %499 = vector.extract_strided_slice %438 {offsets = [1, 0], sizes = [1, 64], strides = [1, 1]} : vector<8x128xf32> to vector<1x64xf32>
    %cst_78 = arith.constant dense<0.000000e+00> : vector<1x64xf32>
    %500 = tpu.matmul %481, %439, %cst_78 {dimension_numbers = #tpu.dot_dimension_numbers<[1], [0], [0], [1], [0, 0, 1, 1], [], []>} : vector<1x16xf32>, vector<16x64xf32>, vector<1x64xf32> -> vector<1x64xf32>
    %501 = arith.addf %499, %500 : vector<1x64xf32>
    %502 = vector.extract_strided_slice %438 {offsets = [6, 64], sizes = [1, 64], strides = [1, 1]} : vector<8x128xf32> to vector<1x64xf32>
    %cst_79 = arith.constant dense<0.000000e+00> : vector<1x64xf32>
    %503 = tpu.matmul %484, %440, %cst_79 {dimension_numbers = #tpu.dot_dimension_numbers<[1], [0], [0], [1], [0, 0, 1, 1], [], []>} : vector<1x16xf32>, vector<16x64xf32>, vector<1x64xf32> -> vector<1x64xf32>
    %504 = arith.addf %502, %503 : vector<1x64xf32>
    %505 = vector.extract_strided_slice %501 {offsets = [0, 0], sizes = [1, 48], strides = [1, 1]} : vector<1x64xf32> to vector<1x48xf32>
    %506 = arith.negf %505 : vector<1x48xf32>
    %507 = math.exp %506 : vector<1x48xf32>
    %cst_80 = arith.constant 1.000000e+00 : f32
    %508 = vector.broadcast %cst_80 : f32 to vector<1x48xf32>
    %509 = arith.addf %508, %507 : vector<1x48xf32>
    %510 = arith.divf %508, %509 : vector<1x48xf32>
    %511 = vector.extract_strided_slice %504 {offsets = [0, 0], sizes = [1, 48], strides = [1, 1]} : vector<1x64xf32> to vector<1x48xf32>
    %512 = arith.negf %511 : vector<1x48xf32>
    %513 = math.exp %512 : vector<1x48xf32>
    %cst_81 = arith.constant 1.000000e+00 : f32
    %514 = vector.broadcast %cst_81 : f32 to vector<1x48xf32>
    %515 = arith.addf %514, %513 : vector<1x48xf32>
    %516 = arith.divf %514, %515 : vector<1x48xf32>
    %517 = vector.extract_strided_slice %501 {offsets = [0, 48], sizes = [1, 16], strides = [1, 1]} : vector<1x64xf32> to vector<1x16xf32>
    %518 = math.tanh %517 : vector<1x16xf32>
    %519 = vector.extract_strided_slice %504 {offsets = [0, 48], sizes = [1, 16], strides = [1, 1]} : vector<1x64xf32> to vector<1x16xf32>
    %520 = math.tanh %519 : vector<1x16xf32>
    %521 = vector.extract_strided_slice %510 {offsets = [0, 16], sizes = [1, 16], strides = [1, 1]} : vector<1x48xf32> to vector<1x16xf32>
    %522 = arith.mulf %521, %473 : vector<1x16xf32>
    %523 = vector.extract_strided_slice %510 {offsets = [0, 0], sizes = [1, 16], strides = [1, 1]} : vector<1x48xf32> to vector<1x16xf32>
    %524 = arith.mulf %523, %518 : vector<1x16xf32>
    %525 = arith.addf %522, %524 : vector<1x16xf32>
    %526 = vector.extract_strided_slice %516 {offsets = [0, 16], sizes = [1, 16], strides = [1, 1]} : vector<1x48xf32> to vector<1x16xf32>
    %527 = arith.mulf %526, %478 : vector<1x16xf32>
    %528 = vector.extract_strided_slice %516 {offsets = [0, 0], sizes = [1, 16], strides = [1, 1]} : vector<1x48xf32> to vector<1x16xf32>
    %529 = arith.mulf %528, %520 : vector<1x16xf32>
    %530 = arith.addf %527, %529 : vector<1x16xf32>
    %531 = vector.extract_strided_slice %510 {offsets = [0, 32], sizes = [1, 16], strides = [1, 1]} : vector<1x48xf32> to vector<1x16xf32>
    %532 = math.tanh %525 : vector<1x16xf32>
    %533 = arith.mulf %531, %532 : vector<1x16xf32>
    %534 = vector.extract_strided_slice %516 {offsets = [0, 32], sizes = [1, 16], strides = [1, 1]} : vector<1x48xf32> to vector<1x16xf32>
    %535 = math.tanh %530 : vector<1x16xf32>
    %536 = arith.mulf %534, %535 : vector<1x16xf32>
    %c1_i32_82 = arith.constant 1 : i32
    %537 = vector.broadcast %c1_i32_82 : i32 to vector<8x1xi32>
    %538 = arith.cmpi eq, %0, %537 : vector<8x1xi32>
    %539 = vector.shape_cast %538 : vector<8x1xi1> to vector<8x1xi1>
    %540 = vector.broadcast %539 : vector<8x1xi1> to vector<8x16xi1>
    %541 = vector.shape_cast %533 : vector<1x16xf32> to vector<1x16xf32>
    %542 = vector.broadcast %541 : vector<1x16xf32> to vector<8x16xf32>
    %543 = arith.select %540, %542, %491 : vector<8x16xi1>, vector<8x16xf32>
    %c6_i32_83 = arith.constant 6 : i32
    %544 = vector.broadcast %c6_i32_83 : i32 to vector<8x1xi32>
    %545 = arith.cmpi eq, %0, %544 : vector<8x1xi32>
    %546 = vector.shape_cast %545 : vector<8x1xi1> to vector<8x1xi1>
    %547 = vector.broadcast %546 : vector<8x1xi1> to vector<8x16xi1>
    %548 = vector.shape_cast %536 : vector<1x16xf32> to vector<1x16xf32>
    %549 = vector.broadcast %548 : vector<1x16xf32> to vector<8x16xf32>
    %550 = arith.select %547, %549, %498 : vector<8x16xi1>, vector<8x16xf32>
    %551 = vector.extract_strided_slice %438 {offsets = [2, 0], sizes = [1, 64], strides = [1, 1]} : vector<8x128xf32> to vector<1x64xf32>
    %cst_84 = arith.constant dense<0.000000e+00> : vector<1x64xf32>
    %552 = tpu.matmul %533, %439, %cst_84 {dimension_numbers = #tpu.dot_dimension_numbers<[1], [0], [0], [1], [0, 0, 1, 1], [], []>} : vector<1x16xf32>, vector<16x64xf32>, vector<1x64xf32> -> vector<1x64xf32>
    %553 = arith.addf %551, %552 : vector<1x64xf32>
    %554 = vector.extract_strided_slice %438 {offsets = [5, 64], sizes = [1, 64], strides = [1, 1]} : vector<8x128xf32> to vector<1x64xf32>
    %cst_85 = arith.constant dense<0.000000e+00> : vector<1x64xf32>
    %555 = tpu.matmul %536, %440, %cst_85 {dimension_numbers = #tpu.dot_dimension_numbers<[1], [0], [0], [1], [0, 0, 1, 1], [], []>} : vector<1x16xf32>, vector<16x64xf32>, vector<1x64xf32> -> vector<1x64xf32>
    %556 = arith.addf %554, %555 : vector<1x64xf32>
    %557 = vector.extract_strided_slice %553 {offsets = [0, 0], sizes = [1, 48], strides = [1, 1]} : vector<1x64xf32> to vector<1x48xf32>
    %558 = arith.negf %557 : vector<1x48xf32>
    %559 = math.exp %558 : vector<1x48xf32>
    %cst_86 = arith.constant 1.000000e+00 : f32
    %560 = vector.broadcast %cst_86 : f32 to vector<1x48xf32>
    %561 = arith.addf %560, %559 : vector<1x48xf32>
    %562 = arith.divf %560, %561 : vector<1x48xf32>
    %563 = vector.extract_strided_slice %556 {offsets = [0, 0], sizes = [1, 48], strides = [1, 1]} : vector<1x64xf32> to vector<1x48xf32>
    %564 = arith.negf %563 : vector<1x48xf32>
    %565 = math.exp %564 : vector<1x48xf32>
    %cst_87 = arith.constant 1.000000e+00 : f32
    %566 = vector.broadcast %cst_87 : f32 to vector<1x48xf32>
    %567 = arith.addf %566, %565 : vector<1x48xf32>
    %568 = arith.divf %566, %567 : vector<1x48xf32>
    %569 = vector.extract_strided_slice %553 {offsets = [0, 48], sizes = [1, 16], strides = [1, 1]} : vector<1x64xf32> to vector<1x16xf32>
    %570 = math.tanh %569 : vector<1x16xf32>
    %571 = vector.extract_strided_slice %556 {offsets = [0, 48], sizes = [1, 16], strides = [1, 1]} : vector<1x64xf32> to vector<1x16xf32>
    %572 = math.tanh %571 : vector<1x16xf32>
    %573 = vector.extract_strided_slice %562 {offsets = [0, 16], sizes = [1, 16], strides = [1, 1]} : vector<1x48xf32> to vector<1x16xf32>
    %574 = arith.mulf %573, %525 : vector<1x16xf32>
    %575 = vector.extract_strided_slice %562 {offsets = [0, 0], sizes = [1, 16], strides = [1, 1]} : vector<1x48xf32> to vector<1x16xf32>
    %576 = arith.mulf %575, %570 : vector<1x16xf32>
    %577 = arith.addf %574, %576 : vector<1x16xf32>
    %578 = vector.extract_strided_slice %568 {offsets = [0, 16], sizes = [1, 16], strides = [1, 1]} : vector<1x48xf32> to vector<1x16xf32>
    %579 = arith.mulf %578, %530 : vector<1x16xf32>
    %580 = vector.extract_strided_slice %568 {offsets = [0, 0], sizes = [1, 16], strides = [1, 1]} : vector<1x48xf32> to vector<1x16xf32>
    %581 = arith.mulf %580, %572 : vector<1x16xf32>
    %582 = arith.addf %579, %581 : vector<1x16xf32>
    %583 = vector.extract_strided_slice %562 {offsets = [0, 32], sizes = [1, 16], strides = [1, 1]} : vector<1x48xf32> to vector<1x16xf32>
    %584 = math.tanh %577 : vector<1x16xf32>
    %585 = arith.mulf %583, %584 : vector<1x16xf32>
    %586 = vector.extract_strided_slice %568 {offsets = [0, 32], sizes = [1, 16], strides = [1, 1]} : vector<1x48xf32> to vector<1x16xf32>
    %587 = math.tanh %582 : vector<1x16xf32>
    %588 = arith.mulf %586, %587 : vector<1x16xf32>
    %c2_i32_88 = arith.constant 2 : i32
    %589 = vector.broadcast %c2_i32_88 : i32 to vector<8x1xi32>
    %590 = arith.cmpi eq, %0, %589 : vector<8x1xi32>
    %591 = vector.shape_cast %590 : vector<8x1xi1> to vector<8x1xi1>
    %592 = vector.broadcast %591 : vector<8x1xi1> to vector<8x16xi1>
    %593 = vector.shape_cast %585 : vector<1x16xf32> to vector<1x16xf32>
    %594 = vector.broadcast %593 : vector<1x16xf32> to vector<8x16xf32>
    %595 = arith.select %592, %594, %543 : vector<8x16xi1>, vector<8x16xf32>
    %c5_i32_89 = arith.constant 5 : i32
    %596 = vector.broadcast %c5_i32_89 : i32 to vector<8x1xi32>
    %597 = arith.cmpi eq, %0, %596 : vector<8x1xi32>
    %598 = vector.shape_cast %597 : vector<8x1xi1> to vector<8x1xi1>
    %599 = vector.broadcast %598 : vector<8x1xi1> to vector<8x16xi1>
    %600 = vector.shape_cast %588 : vector<1x16xf32> to vector<1x16xf32>
    %601 = vector.broadcast %600 : vector<1x16xf32> to vector<8x16xf32>
    %602 = arith.select %599, %601, %550 : vector<8x16xi1>, vector<8x16xf32>
    %603 = vector.extract_strided_slice %438 {offsets = [3, 0], sizes = [1, 64], strides = [1, 1]} : vector<8x128xf32> to vector<1x64xf32>
    %cst_90 = arith.constant dense<0.000000e+00> : vector<1x64xf32>
    %604 = tpu.matmul %585, %439, %cst_90 {dimension_numbers = #tpu.dot_dimension_numbers<[1], [0], [0], [1], [0, 0, 1, 1], [], []>} : vector<1x16xf32>, vector<16x64xf32>, vector<1x64xf32> -> vector<1x64xf32>
    %605 = arith.addf %603, %604 : vector<1x64xf32>
    %606 = vector.extract_strided_slice %438 {offsets = [4, 64], sizes = [1, 64], strides = [1, 1]} : vector<8x128xf32> to vector<1x64xf32>
    %cst_91 = arith.constant dense<0.000000e+00> : vector<1x64xf32>
    %607 = tpu.matmul %588, %440, %cst_91 {dimension_numbers = #tpu.dot_dimension_numbers<[1], [0], [0], [1], [0, 0, 1, 1], [], []>} : vector<1x16xf32>, vector<16x64xf32>, vector<1x64xf32> -> vector<1x64xf32>
    %608 = arith.addf %606, %607 : vector<1x64xf32>
    %609 = vector.extract_strided_slice %605 {offsets = [0, 0], sizes = [1, 48], strides = [1, 1]} : vector<1x64xf32> to vector<1x48xf32>
    %610 = arith.negf %609 : vector<1x48xf32>
    %611 = math.exp %610 : vector<1x48xf32>
    %cst_92 = arith.constant 1.000000e+00 : f32
    %612 = vector.broadcast %cst_92 : f32 to vector<1x48xf32>
    %613 = arith.addf %612, %611 : vector<1x48xf32>
    %614 = arith.divf %612, %613 : vector<1x48xf32>
    %615 = vector.extract_strided_slice %608 {offsets = [0, 0], sizes = [1, 48], strides = [1, 1]} : vector<1x64xf32> to vector<1x48xf32>
    %616 = arith.negf %615 : vector<1x48xf32>
    %617 = math.exp %616 : vector<1x48xf32>
    %cst_93 = arith.constant 1.000000e+00 : f32
    %618 = vector.broadcast %cst_93 : f32 to vector<1x48xf32>
    %619 = arith.addf %618, %617 : vector<1x48xf32>
    %620 = arith.divf %618, %619 : vector<1x48xf32>
    %621 = vector.extract_strided_slice %605 {offsets = [0, 48], sizes = [1, 16], strides = [1, 1]} : vector<1x64xf32> to vector<1x16xf32>
    %622 = math.tanh %621 : vector<1x16xf32>
    %623 = vector.extract_strided_slice %608 {offsets = [0, 48], sizes = [1, 16], strides = [1, 1]} : vector<1x64xf32> to vector<1x16xf32>
    %624 = math.tanh %623 : vector<1x16xf32>
    %625 = vector.extract_strided_slice %614 {offsets = [0, 16], sizes = [1, 16], strides = [1, 1]} : vector<1x48xf32> to vector<1x16xf32>
    %626 = arith.mulf %625, %577 : vector<1x16xf32>
    %627 = vector.extract_strided_slice %614 {offsets = [0, 0], sizes = [1, 16], strides = [1, 1]} : vector<1x48xf32> to vector<1x16xf32>
    %628 = arith.mulf %627, %622 : vector<1x16xf32>
    %629 = arith.addf %626, %628 : vector<1x16xf32>
    %630 = vector.extract_strided_slice %620 {offsets = [0, 16], sizes = [1, 16], strides = [1, 1]} : vector<1x48xf32> to vector<1x16xf32>
    %631 = arith.mulf %630, %582 : vector<1x16xf32>
    %632 = vector.extract_strided_slice %620 {offsets = [0, 0], sizes = [1, 16], strides = [1, 1]} : vector<1x48xf32> to vector<1x16xf32>
    %633 = arith.mulf %632, %624 : vector<1x16xf32>
    %634 = arith.addf %631, %633 : vector<1x16xf32>
    %635 = vector.extract_strided_slice %614 {offsets = [0, 32], sizes = [1, 16], strides = [1, 1]} : vector<1x48xf32> to vector<1x16xf32>
    %636 = math.tanh %629 : vector<1x16xf32>
    %637 = arith.mulf %635, %636 : vector<1x16xf32>
    %638 = vector.extract_strided_slice %620 {offsets = [0, 32], sizes = [1, 16], strides = [1, 1]} : vector<1x48xf32> to vector<1x16xf32>
    %639 = math.tanh %634 : vector<1x16xf32>
    %640 = arith.mulf %638, %639 : vector<1x16xf32>
    %c3_i32_94 = arith.constant 3 : i32
    %641 = vector.broadcast %c3_i32_94 : i32 to vector<8x1xi32>
    %642 = arith.cmpi eq, %0, %641 : vector<8x1xi32>
    %643 = vector.shape_cast %642 : vector<8x1xi1> to vector<8x1xi1>
    %644 = vector.broadcast %643 : vector<8x1xi1> to vector<8x16xi1>
    %645 = vector.shape_cast %637 : vector<1x16xf32> to vector<1x16xf32>
    %646 = vector.broadcast %645 : vector<1x16xf32> to vector<8x16xf32>
    %647 = arith.select %644, %646, %595 : vector<8x16xi1>, vector<8x16xf32>
    %c4_i32_95 = arith.constant 4 : i32
    %648 = vector.broadcast %c4_i32_95 : i32 to vector<8x1xi32>
    %649 = arith.cmpi eq, %0, %648 : vector<8x1xi32>
    %650 = vector.shape_cast %649 : vector<8x1xi1> to vector<8x1xi1>
    %651 = vector.broadcast %650 : vector<8x1xi1> to vector<8x16xi1>
    %652 = vector.shape_cast %640 : vector<1x16xf32> to vector<1x16xf32>
    %653 = vector.broadcast %652 : vector<1x16xf32> to vector<8x16xf32>
    %654 = arith.select %651, %653, %602 : vector<8x16xi1>, vector<8x16xf32>
    %655 = vector.extract_strided_slice %438 {offsets = [4, 0], sizes = [1, 64], strides = [1, 1]} : vector<8x128xf32> to vector<1x64xf32>
    %cst_96 = arith.constant dense<0.000000e+00> : vector<1x64xf32>
    %656 = tpu.matmul %637, %439, %cst_96 {dimension_numbers = #tpu.dot_dimension_numbers<[1], [0], [0], [1], [0, 0, 1, 1], [], []>} : vector<1x16xf32>, vector<16x64xf32>, vector<1x64xf32> -> vector<1x64xf32>
    %657 = arith.addf %655, %656 : vector<1x64xf32>
    %658 = vector.extract_strided_slice %438 {offsets = [3, 64], sizes = [1, 64], strides = [1, 1]} : vector<8x128xf32> to vector<1x64xf32>
    %cst_97 = arith.constant dense<0.000000e+00> : vector<1x64xf32>
    %659 = tpu.matmul %640, %440, %cst_97 {dimension_numbers = #tpu.dot_dimension_numbers<[1], [0], [0], [1], [0, 0, 1, 1], [], []>} : vector<1x16xf32>, vector<16x64xf32>, vector<1x64xf32> -> vector<1x64xf32>
    %660 = arith.addf %658, %659 : vector<1x64xf32>
    %661 = vector.extract_strided_slice %657 {offsets = [0, 0], sizes = [1, 48], strides = [1, 1]} : vector<1x64xf32> to vector<1x48xf32>
    %662 = arith.negf %661 : vector<1x48xf32>
    %663 = math.exp %662 : vector<1x48xf32>
    %cst_98 = arith.constant 1.000000e+00 : f32
    %664 = vector.broadcast %cst_98 : f32 to vector<1x48xf32>
    %665 = arith.addf %664, %663 : vector<1x48xf32>
    %666 = arith.divf %664, %665 : vector<1x48xf32>
    %667 = vector.extract_strided_slice %660 {offsets = [0, 0], sizes = [1, 48], strides = [1, 1]} : vector<1x64xf32> to vector<1x48xf32>
    %668 = arith.negf %667 : vector<1x48xf32>
    %669 = math.exp %668 : vector<1x48xf32>
    %cst_99 = arith.constant 1.000000e+00 : f32
    %670 = vector.broadcast %cst_99 : f32 to vector<1x48xf32>
    %671 = arith.addf %670, %669 : vector<1x48xf32>
    %672 = arith.divf %670, %671 : vector<1x48xf32>
    %673 = vector.extract_strided_slice %657 {offsets = [0, 48], sizes = [1, 16], strides = [1, 1]} : vector<1x64xf32> to vector<1x16xf32>
    %674 = math.tanh %673 : vector<1x16xf32>
    %675 = vector.extract_strided_slice %660 {offsets = [0, 48], sizes = [1, 16], strides = [1, 1]} : vector<1x64xf32> to vector<1x16xf32>
    %676 = math.tanh %675 : vector<1x16xf32>
    %677 = vector.extract_strided_slice %666 {offsets = [0, 16], sizes = [1, 16], strides = [1, 1]} : vector<1x48xf32> to vector<1x16xf32>
    %678 = arith.mulf %677, %629 : vector<1x16xf32>
    %679 = vector.extract_strided_slice %666 {offsets = [0, 0], sizes = [1, 16], strides = [1, 1]} : vector<1x48xf32> to vector<1x16xf32>
    %680 = arith.mulf %679, %674 : vector<1x16xf32>
    %681 = arith.addf %678, %680 : vector<1x16xf32>
    %682 = vector.extract_strided_slice %672 {offsets = [0, 16], sizes = [1, 16], strides = [1, 1]} : vector<1x48xf32> to vector<1x16xf32>
    %683 = arith.mulf %682, %634 : vector<1x16xf32>
    %684 = vector.extract_strided_slice %672 {offsets = [0, 0], sizes = [1, 16], strides = [1, 1]} : vector<1x48xf32> to vector<1x16xf32>
    %685 = arith.mulf %684, %676 : vector<1x16xf32>
    %686 = arith.addf %683, %685 : vector<1x16xf32>
    %687 = vector.extract_strided_slice %666 {offsets = [0, 32], sizes = [1, 16], strides = [1, 1]} : vector<1x48xf32> to vector<1x16xf32>
    %688 = math.tanh %681 : vector<1x16xf32>
    %689 = arith.mulf %687, %688 : vector<1x16xf32>
    %690 = vector.extract_strided_slice %672 {offsets = [0, 32], sizes = [1, 16], strides = [1, 1]} : vector<1x48xf32> to vector<1x16xf32>
    %691 = math.tanh %686 : vector<1x16xf32>
    %692 = arith.mulf %690, %691 : vector<1x16xf32>
    %c4_i32_100 = arith.constant 4 : i32
    %693 = vector.broadcast %c4_i32_100 : i32 to vector<8x1xi32>
    %694 = arith.cmpi eq, %0, %693 : vector<8x1xi32>
    %695 = vector.shape_cast %694 : vector<8x1xi1> to vector<8x1xi1>
    %696 = vector.broadcast %695 : vector<8x1xi1> to vector<8x16xi1>
    %697 = vector.shape_cast %689 : vector<1x16xf32> to vector<1x16xf32>
    %698 = vector.broadcast %697 : vector<1x16xf32> to vector<8x16xf32>
    %699 = arith.select %696, %698, %647 : vector<8x16xi1>, vector<8x16xf32>
    %c3_i32_101 = arith.constant 3 : i32
    %700 = vector.broadcast %c3_i32_101 : i32 to vector<8x1xi32>
    %701 = arith.cmpi eq, %0, %700 : vector<8x1xi32>
    %702 = vector.shape_cast %701 : vector<8x1xi1> to vector<8x1xi1>
    %703 = vector.broadcast %702 : vector<8x1xi1> to vector<8x16xi1>
    %704 = vector.shape_cast %692 : vector<1x16xf32> to vector<1x16xf32>
    %705 = vector.broadcast %704 : vector<1x16xf32> to vector<8x16xf32>
    %706 = arith.select %703, %705, %654 : vector<8x16xi1>, vector<8x16xf32>
    %707 = vector.extract_strided_slice %438 {offsets = [5, 0], sizes = [1, 64], strides = [1, 1]} : vector<8x128xf32> to vector<1x64xf32>
    %cst_102 = arith.constant dense<0.000000e+00> : vector<1x64xf32>
    %708 = tpu.matmul %689, %439, %cst_102 {dimension_numbers = #tpu.dot_dimension_numbers<[1], [0], [0], [1], [0, 0, 1, 1], [], []>} : vector<1x16xf32>, vector<16x64xf32>, vector<1x64xf32> -> vector<1x64xf32>
    %709 = arith.addf %707, %708 : vector<1x64xf32>
    %710 = vector.extract_strided_slice %438 {offsets = [2, 64], sizes = [1, 64], strides = [1, 1]} : vector<8x128xf32> to vector<1x64xf32>
    %cst_103 = arith.constant dense<0.000000e+00> : vector<1x64xf32>
    %711 = tpu.matmul %692, %440, %cst_103 {dimension_numbers = #tpu.dot_dimension_numbers<[1], [0], [0], [1], [0, 0, 1, 1], [], []>} : vector<1x16xf32>, vector<16x64xf32>, vector<1x64xf32> -> vector<1x64xf32>
    %712 = arith.addf %710, %711 : vector<1x64xf32>
    %713 = vector.extract_strided_slice %709 {offsets = [0, 0], sizes = [1, 48], strides = [1, 1]} : vector<1x64xf32> to vector<1x48xf32>
    %714 = arith.negf %713 : vector<1x48xf32>
    %715 = math.exp %714 : vector<1x48xf32>
    %cst_104 = arith.constant 1.000000e+00 : f32
    %716 = vector.broadcast %cst_104 : f32 to vector<1x48xf32>
    %717 = arith.addf %716, %715 : vector<1x48xf32>
    %718 = arith.divf %716, %717 : vector<1x48xf32>
    %719 = vector.extract_strided_slice %712 {offsets = [0, 0], sizes = [1, 48], strides = [1, 1]} : vector<1x64xf32> to vector<1x48xf32>
    %720 = arith.negf %719 : vector<1x48xf32>
    %721 = math.exp %720 : vector<1x48xf32>
    %cst_105 = arith.constant 1.000000e+00 : f32
    %722 = vector.broadcast %cst_105 : f32 to vector<1x48xf32>
    %723 = arith.addf %722, %721 : vector<1x48xf32>
    %724 = arith.divf %722, %723 : vector<1x48xf32>
    %725 = vector.extract_strided_slice %709 {offsets = [0, 48], sizes = [1, 16], strides = [1, 1]} : vector<1x64xf32> to vector<1x16xf32>
    %726 = math.tanh %725 : vector<1x16xf32>
    %727 = vector.extract_strided_slice %712 {offsets = [0, 48], sizes = [1, 16], strides = [1, 1]} : vector<1x64xf32> to vector<1x16xf32>
    %728 = math.tanh %727 : vector<1x16xf32>
    %729 = vector.extract_strided_slice %718 {offsets = [0, 16], sizes = [1, 16], strides = [1, 1]} : vector<1x48xf32> to vector<1x16xf32>
    %730 = arith.mulf %729, %681 : vector<1x16xf32>
    %731 = vector.extract_strided_slice %718 {offsets = [0, 0], sizes = [1, 16], strides = [1, 1]} : vector<1x48xf32> to vector<1x16xf32>
    %732 = arith.mulf %731, %726 : vector<1x16xf32>
    %733 = arith.addf %730, %732 : vector<1x16xf32>
    %734 = vector.extract_strided_slice %724 {offsets = [0, 16], sizes = [1, 16], strides = [1, 1]} : vector<1x48xf32> to vector<1x16xf32>
    %735 = arith.mulf %734, %686 : vector<1x16xf32>
    %736 = vector.extract_strided_slice %724 {offsets = [0, 0], sizes = [1, 16], strides = [1, 1]} : vector<1x48xf32> to vector<1x16xf32>
    %737 = arith.mulf %736, %728 : vector<1x16xf32>
    %738 = arith.addf %735, %737 : vector<1x16xf32>
    %739 = vector.extract_strided_slice %718 {offsets = [0, 32], sizes = [1, 16], strides = [1, 1]} : vector<1x48xf32> to vector<1x16xf32>
    %740 = math.tanh %733 : vector<1x16xf32>
    %741 = arith.mulf %739, %740 : vector<1x16xf32>
    %742 = vector.extract_strided_slice %724 {offsets = [0, 32], sizes = [1, 16], strides = [1, 1]} : vector<1x48xf32> to vector<1x16xf32>
    %743 = math.tanh %738 : vector<1x16xf32>
    %744 = arith.mulf %742, %743 : vector<1x16xf32>
    %c5_i32_106 = arith.constant 5 : i32
    %745 = vector.broadcast %c5_i32_106 : i32 to vector<8x1xi32>
    %746 = arith.cmpi eq, %0, %745 : vector<8x1xi32>
    %747 = vector.shape_cast %746 : vector<8x1xi1> to vector<8x1xi1>
    %748 = vector.broadcast %747 : vector<8x1xi1> to vector<8x16xi1>
    %749 = vector.shape_cast %741 : vector<1x16xf32> to vector<1x16xf32>
    %750 = vector.broadcast %749 : vector<1x16xf32> to vector<8x16xf32>
    %751 = arith.select %748, %750, %699 : vector<8x16xi1>, vector<8x16xf32>
    %c2_i32_107 = arith.constant 2 : i32
    %752 = vector.broadcast %c2_i32_107 : i32 to vector<8x1xi32>
    %753 = arith.cmpi eq, %0, %752 : vector<8x1xi32>
    %754 = vector.shape_cast %753 : vector<8x1xi1> to vector<8x1xi1>
    %755 = vector.broadcast %754 : vector<8x1xi1> to vector<8x16xi1>
    %756 = vector.shape_cast %744 : vector<1x16xf32> to vector<1x16xf32>
    %757 = vector.broadcast %756 : vector<1x16xf32> to vector<8x16xf32>
    %758 = arith.select %755, %757, %706 : vector<8x16xi1>, vector<8x16xf32>
    %759 = vector.extract_strided_slice %438 {offsets = [6, 0], sizes = [1, 64], strides = [1, 1]} : vector<8x128xf32> to vector<1x64xf32>
    %cst_108 = arith.constant dense<0.000000e+00> : vector<1x64xf32>
    %760 = tpu.matmul %741, %439, %cst_108 {dimension_numbers = #tpu.dot_dimension_numbers<[1], [0], [0], [1], [0, 0, 1, 1], [], []>} : vector<1x16xf32>, vector<16x64xf32>, vector<1x64xf32> -> vector<1x64xf32>
    %761 = arith.addf %759, %760 : vector<1x64xf32>
    %762 = vector.extract_strided_slice %438 {offsets = [1, 64], sizes = [1, 64], strides = [1, 1]} : vector<8x128xf32> to vector<1x64xf32>
    %cst_109 = arith.constant dense<0.000000e+00> : vector<1x64xf32>
    %763 = tpu.matmul %744, %440, %cst_109 {dimension_numbers = #tpu.dot_dimension_numbers<[1], [0], [0], [1], [0, 0, 1, 1], [], []>} : vector<1x16xf32>, vector<16x64xf32>, vector<1x64xf32> -> vector<1x64xf32>
    %764 = arith.addf %762, %763 : vector<1x64xf32>
    %765 = vector.extract_strided_slice %761 {offsets = [0, 0], sizes = [1, 48], strides = [1, 1]} : vector<1x64xf32> to vector<1x48xf32>
    %766 = arith.negf %765 : vector<1x48xf32>
    %767 = math.exp %766 : vector<1x48xf32>
    %cst_110 = arith.constant 1.000000e+00 : f32
    %768 = vector.broadcast %cst_110 : f32 to vector<1x48xf32>
    %769 = arith.addf %768, %767 : vector<1x48xf32>
    %770 = arith.divf %768, %769 : vector<1x48xf32>
    %771 = vector.extract_strided_slice %764 {offsets = [0, 0], sizes = [1, 48], strides = [1, 1]} : vector<1x64xf32> to vector<1x48xf32>
    %772 = arith.negf %771 : vector<1x48xf32>
    %773 = math.exp %772 : vector<1x48xf32>
    %cst_111 = arith.constant 1.000000e+00 : f32
    %774 = vector.broadcast %cst_111 : f32 to vector<1x48xf32>
    %775 = arith.addf %774, %773 : vector<1x48xf32>
    %776 = arith.divf %774, %775 : vector<1x48xf32>
    %777 = vector.extract_strided_slice %761 {offsets = [0, 48], sizes = [1, 16], strides = [1, 1]} : vector<1x64xf32> to vector<1x16xf32>
    %778 = math.tanh %777 : vector<1x16xf32>
    %779 = vector.extract_strided_slice %764 {offsets = [0, 48], sizes = [1, 16], strides = [1, 1]} : vector<1x64xf32> to vector<1x16xf32>
    %780 = math.tanh %779 : vector<1x16xf32>
    %781 = vector.extract_strided_slice %770 {offsets = [0, 16], sizes = [1, 16], strides = [1, 1]} : vector<1x48xf32> to vector<1x16xf32>
    %782 = arith.mulf %781, %733 : vector<1x16xf32>
    %783 = vector.extract_strided_slice %770 {offsets = [0, 0], sizes = [1, 16], strides = [1, 1]} : vector<1x48xf32> to vector<1x16xf32>
    %784 = arith.mulf %783, %778 : vector<1x16xf32>
    %785 = arith.addf %782, %784 : vector<1x16xf32>
    %786 = vector.extract_strided_slice %776 {offsets = [0, 16], sizes = [1, 16], strides = [1, 1]} : vector<1x48xf32> to vector<1x16xf32>
    %787 = arith.mulf %786, %738 : vector<1x16xf32>
    %788 = vector.extract_strided_slice %776 {offsets = [0, 0], sizes = [1, 16], strides = [1, 1]} : vector<1x48xf32> to vector<1x16xf32>
    %789 = arith.mulf %788, %780 : vector<1x16xf32>
    %790 = arith.addf %787, %789 : vector<1x16xf32>
    %791 = vector.extract_strided_slice %770 {offsets = [0, 32], sizes = [1, 16], strides = [1, 1]} : vector<1x48xf32> to vector<1x16xf32>
    %792 = math.tanh %785 : vector<1x16xf32>
    %793 = arith.mulf %791, %792 : vector<1x16xf32>
    %794 = vector.extract_strided_slice %776 {offsets = [0, 32], sizes = [1, 16], strides = [1, 1]} : vector<1x48xf32> to vector<1x16xf32>
    %795 = math.tanh %790 : vector<1x16xf32>
    %796 = arith.mulf %794, %795 : vector<1x16xf32>
    %c6_i32_112 = arith.constant 6 : i32
    %797 = vector.broadcast %c6_i32_112 : i32 to vector<8x1xi32>
    %798 = arith.cmpi eq, %0, %797 : vector<8x1xi32>
    %799 = vector.shape_cast %798 : vector<8x1xi1> to vector<8x1xi1>
    %800 = vector.broadcast %799 : vector<8x1xi1> to vector<8x16xi1>
    %801 = vector.shape_cast %793 : vector<1x16xf32> to vector<1x16xf32>
    %802 = vector.broadcast %801 : vector<1x16xf32> to vector<8x16xf32>
    %803 = arith.select %800, %802, %751 : vector<8x16xi1>, vector<8x16xf32>
    %c1_i32_113 = arith.constant 1 : i32
    %804 = vector.broadcast %c1_i32_113 : i32 to vector<8x1xi32>
    %805 = arith.cmpi eq, %0, %804 : vector<8x1xi32>
    %806 = vector.shape_cast %805 : vector<8x1xi1> to vector<8x1xi1>
    %807 = vector.broadcast %806 : vector<8x1xi1> to vector<8x16xi1>
    %808 = vector.shape_cast %796 : vector<1x16xf32> to vector<1x16xf32>
    %809 = vector.broadcast %808 : vector<1x16xf32> to vector<8x16xf32>
    %810 = arith.select %807, %809, %758 : vector<8x16xi1>, vector<8x16xf32>
    %811 = vector.extract_strided_slice %438 {offsets = [7, 0], sizes = [1, 64], strides = [1, 1]} : vector<8x128xf32> to vector<1x64xf32>
    %cst_114 = arith.constant dense<0.000000e+00> : vector<1x64xf32>
    %812 = tpu.matmul %793, %439, %cst_114 {dimension_numbers = #tpu.dot_dimension_numbers<[1], [0], [0], [1], [0, 0, 1, 1], [], []>} : vector<1x16xf32>, vector<16x64xf32>, vector<1x64xf32> -> vector<1x64xf32>
    %813 = arith.addf %811, %812 : vector<1x64xf32>
    %814 = vector.extract_strided_slice %438 {offsets = [0, 64], sizes = [1, 64], strides = [1, 1]} : vector<8x128xf32> to vector<1x64xf32>
    %cst_115 = arith.constant dense<0.000000e+00> : vector<1x64xf32>
    %815 = tpu.matmul %796, %440, %cst_115 {dimension_numbers = #tpu.dot_dimension_numbers<[1], [0], [0], [1], [0, 0, 1, 1], [], []>} : vector<1x16xf32>, vector<16x64xf32>, vector<1x64xf32> -> vector<1x64xf32>
    %816 = arith.addf %814, %815 : vector<1x64xf32>
    %817 = vector.extract_strided_slice %813 {offsets = [0, 0], sizes = [1, 48], strides = [1, 1]} : vector<1x64xf32> to vector<1x48xf32>
    %818 = arith.negf %817 : vector<1x48xf32>
    %819 = math.exp %818 : vector<1x48xf32>
    %cst_116 = arith.constant 1.000000e+00 : f32
    %820 = vector.broadcast %cst_116 : f32 to vector<1x48xf32>
    %821 = arith.addf %820, %819 : vector<1x48xf32>
    %822 = arith.divf %820, %821 : vector<1x48xf32>
    %823 = vector.extract_strided_slice %816 {offsets = [0, 0], sizes = [1, 48], strides = [1, 1]} : vector<1x64xf32> to vector<1x48xf32>
    %824 = arith.negf %823 : vector<1x48xf32>
    %825 = math.exp %824 : vector<1x48xf32>
    %cst_117 = arith.constant 1.000000e+00 : f32
    %826 = vector.broadcast %cst_117 : f32 to vector<1x48xf32>
    %827 = arith.addf %826, %825 : vector<1x48xf32>
    %828 = arith.divf %826, %827 : vector<1x48xf32>
    %829 = vector.extract_strided_slice %813 {offsets = [0, 48], sizes = [1, 16], strides = [1, 1]} : vector<1x64xf32> to vector<1x16xf32>
    %830 = math.tanh %829 : vector<1x16xf32>
    %831 = vector.extract_strided_slice %816 {offsets = [0, 48], sizes = [1, 16], strides = [1, 1]} : vector<1x64xf32> to vector<1x16xf32>
    %832 = math.tanh %831 : vector<1x16xf32>
    %833 = vector.extract_strided_slice %822 {offsets = [0, 16], sizes = [1, 16], strides = [1, 1]} : vector<1x48xf32> to vector<1x16xf32>
    %834 = arith.mulf %833, %785 : vector<1x16xf32>
    %835 = vector.extract_strided_slice %822 {offsets = [0, 0], sizes = [1, 16], strides = [1, 1]} : vector<1x48xf32> to vector<1x16xf32>
    %836 = arith.mulf %835, %830 : vector<1x16xf32>
    %837 = arith.addf %834, %836 : vector<1x16xf32>
    %838 = vector.extract_strided_slice %828 {offsets = [0, 16], sizes = [1, 16], strides = [1, 1]} : vector<1x48xf32> to vector<1x16xf32>
    %839 = arith.mulf %838, %790 : vector<1x16xf32>
    %840 = vector.extract_strided_slice %828 {offsets = [0, 0], sizes = [1, 16], strides = [1, 1]} : vector<1x48xf32> to vector<1x16xf32>
    %841 = arith.mulf %840, %832 : vector<1x16xf32>
    %842 = arith.addf %839, %841 : vector<1x16xf32>
    %843 = vector.extract_strided_slice %822 {offsets = [0, 32], sizes = [1, 16], strides = [1, 1]} : vector<1x48xf32> to vector<1x16xf32>
    %844 = math.tanh %837 : vector<1x16xf32>
    %845 = arith.mulf %843, %844 : vector<1x16xf32>
    %846 = vector.extract_strided_slice %828 {offsets = [0, 32], sizes = [1, 16], strides = [1, 1]} : vector<1x48xf32> to vector<1x16xf32>
    %847 = math.tanh %842 : vector<1x16xf32>
    %848 = arith.mulf %846, %847 : vector<1x16xf32>
    %c7_i32_118 = arith.constant 7 : i32
    %849 = vector.broadcast %c7_i32_118 : i32 to vector<8x1xi32>
    %850 = arith.cmpi eq, %0, %849 : vector<8x1xi32>
    %851 = vector.shape_cast %850 : vector<8x1xi1> to vector<8x1xi1>
    %852 = vector.broadcast %851 : vector<8x1xi1> to vector<8x16xi1>
    %853 = vector.shape_cast %845 : vector<1x16xf32> to vector<1x16xf32>
    %854 = vector.broadcast %853 : vector<1x16xf32> to vector<8x16xf32>
    %855 = arith.select %852, %854, %803 : vector<8x16xi1>, vector<8x16xf32>
    %c0_i32_119 = arith.constant 0 : i32
    %856 = vector.broadcast %c0_i32_119 : i32 to vector<8x1xi32>
    %857 = arith.cmpi eq, %0, %856 : vector<8x1xi32>
    %858 = vector.shape_cast %857 : vector<8x1xi1> to vector<8x1xi1>
    %859 = vector.broadcast %858 : vector<8x1xi1> to vector<8x16xi1>
    %860 = vector.shape_cast %848 : vector<1x16xf32> to vector<1x16xf32>
    %861 = vector.broadcast %860 : vector<1x16xf32> to vector<8x16xf32>
    %862 = arith.select %859, %861, %810 : vector<8x16xi1>, vector<8x16xf32>
    %c0_120 = arith.constant 0 : index
    %c0_121 = arith.constant 0 : index
    %863 = vector.load %arg10[%c0_120, %c0_121] : memref<32x128xf32, #tpu.memory_space<vmem>>, vector<16x128xf32>
    %cst_122 = arith.constant dense<0.000000e+00> : vector<8x128xf32>
    %864 = tpu.matmul %855, %863, %cst_122 {dimension_numbers = #tpu.dot_dimension_numbers<[1], [0], [0], [1], [0, 0, 1, 1], [], []>} : vector<8x16xf32>, vector<16x128xf32>, vector<8x128xf32> -> vector<8x128xf32>
    %c16_123 = arith.constant 16 : index
    %c0_124 = arith.constant 0 : index
    %865 = vector.load %arg10[%c16_123, %c0_124] : memref<32x128xf32, #tpu.memory_space<vmem>>, vector<16x128xf32>
    %cst_125 = arith.constant dense<0.000000e+00> : vector<8x128xf32>
    %866 = tpu.matmul %862, %865, %cst_125 {dimension_numbers = #tpu.dot_dimension_numbers<[1], [0], [0], [1], [0, 0, 1, 1], [], []>} : vector<8x16xf32>, vector<16x128xf32>, vector<8x128xf32> -> vector<8x128xf32>
    %867 = arith.addf %864, %866 : vector<8x128xf32>
    %c0_126 = arith.constant 0 : index
    %c0_127 = arith.constant 0 : index
    %868 = vector.load %arg13[%c0_126, %c0_127] : memref<1x128xf32, #tpu.memory_space<vmem>>, vector<1x128xf32>
    %869 = vector.broadcast %868 : vector<1x128xf32> to vector<8x128xf32>
    %870 = arith.addf %867, %869 : vector<8x128xf32>
    %c0_128 = arith.constant 0 : index
    %c0_129 = arith.constant 0 : index
    %871 = vector.load %arg11[%c0_128, %c0_129] : memref<16x64xf32, #tpu.memory_space<vmem>>, vector<16x64xf32>
    %c0_130 = arith.constant 0 : index
    %c0_131 = arith.constant 0 : index
    %872 = vector.load %arg12[%c0_130, %c0_131] : memref<16x64xf32, #tpu.memory_space<vmem>>, vector<16x64xf32>
    %cst_132 = arith.constant 0.000000e+00 : f32
    %873 = vector.broadcast %cst_132 : f32 to vector<1x16xf32>
    %cst_133 = arith.constant 0.000000e+00 : f32
    %874 = vector.broadcast %cst_133 : f32 to vector<1x16xf32>
    %cst_134 = arith.constant 0.000000e+00 : f32
    %875 = vector.broadcast %cst_134 : f32 to vector<1x16xf32>
    %cst_135 = arith.constant 0.000000e+00 : f32
    %876 = vector.broadcast %cst_135 : f32 to vector<1x16xf32>
    %cst_136 = arith.constant 0.000000e+00 : f32
    %877 = vector.broadcast %cst_136 : f32 to vector<8x16xf32>
    %cst_137 = arith.constant 0.000000e+00 : f32
    %878 = vector.broadcast %cst_137 : f32 to vector<8x16xf32>
    %879 = vector.extract_strided_slice %870 {offsets = [0, 0], sizes = [1, 64], strides = [1, 1]} : vector<8x128xf32> to vector<1x64xf32>
    %cst_138 = arith.constant dense<0.000000e+00> : vector<1x64xf32>
    %880 = tpu.matmul %873, %871, %cst_138 {dimension_numbers = #tpu.dot_dimension_numbers<[1], [0], [0], [1], [0, 0, 1, 1], [], []>} : vector<1x16xf32>, vector<16x64xf32>, vector<1x64xf32> -> vector<1x64xf32>
    %881 = arith.addf %879, %880 : vector<1x64xf32>
    %882 = vector.extract_strided_slice %870 {offsets = [7, 64], sizes = [1, 64], strides = [1, 1]} : vector<8x128xf32> to vector<1x64xf32>
    %cst_139 = arith.constant dense<0.000000e+00> : vector<1x64xf32>
    %883 = tpu.matmul %875, %872, %cst_139 {dimension_numbers = #tpu.dot_dimension_numbers<[1], [0], [0], [1], [0, 0, 1, 1], [], []>} : vector<1x16xf32>, vector<16x64xf32>, vector<1x64xf32> -> vector<1x64xf32>
    %884 = arith.addf %882, %883 : vector<1x64xf32>
    %885 = vector.extract_strided_slice %881 {offsets = [0, 0], sizes = [1, 48], strides = [1, 1]} : vector<1x64xf32> to vector<1x48xf32>
    %886 = arith.negf %885 : vector<1x48xf32>
    %887 = math.exp %886 : vector<1x48xf32>
    %cst_140 = arith.constant 1.000000e+00 : f32
    %888 = vector.broadcast %cst_140 : f32 to vector<1x48xf32>
    %889 = arith.addf %888, %887 : vector<1x48xf32>
    %890 = arith.divf %888, %889 : vector<1x48xf32>
    %891 = vector.extract_strided_slice %884 {offsets = [0, 0], sizes = [1, 48], strides = [1, 1]} : vector<1x64xf32> to vector<1x48xf32>
    %892 = arith.negf %891 : vector<1x48xf32>
    %893 = math.exp %892 : vector<1x48xf32>
    %cst_141 = arith.constant 1.000000e+00 : f32
    %894 = vector.broadcast %cst_141 : f32 to vector<1x48xf32>
    %895 = arith.addf %894, %893 : vector<1x48xf32>
    %896 = arith.divf %894, %895 : vector<1x48xf32>
    %897 = vector.extract_strided_slice %881 {offsets = [0, 48], sizes = [1, 16], strides = [1, 1]} : vector<1x64xf32> to vector<1x16xf32>
    %898 = math.tanh %897 : vector<1x16xf32>
    %899 = vector.extract_strided_slice %884 {offsets = [0, 48], sizes = [1, 16], strides = [1, 1]} : vector<1x64xf32> to vector<1x16xf32>
    %900 = math.tanh %899 : vector<1x16xf32>
    %901 = vector.extract_strided_slice %890 {offsets = [0, 16], sizes = [1, 16], strides = [1, 1]} : vector<1x48xf32> to vector<1x16xf32>
    %902 = arith.mulf %901, %874 : vector<1x16xf32>
    %903 = vector.extract_strided_slice %890 {offsets = [0, 0], sizes = [1, 16], strides = [1, 1]} : vector<1x48xf32> to vector<1x16xf32>
    %904 = arith.mulf %903, %898 : vector<1x16xf32>
    %905 = arith.addf %902, %904 : vector<1x16xf32>
    %906 = vector.extract_strided_slice %896 {offsets = [0, 16], sizes = [1, 16], strides = [1, 1]} : vector<1x48xf32> to vector<1x16xf32>
    %907 = arith.mulf %906, %876 : vector<1x16xf32>
    %908 = vector.extract_strided_slice %896 {offsets = [0, 0], sizes = [1, 16], strides = [1, 1]} : vector<1x48xf32> to vector<1x16xf32>
    %909 = arith.mulf %908, %900 : vector<1x16xf32>
    %910 = arith.addf %907, %909 : vector<1x16xf32>
    %911 = vector.extract_strided_slice %890 {offsets = [0, 32], sizes = [1, 16], strides = [1, 1]} : vector<1x48xf32> to vector<1x16xf32>
    %912 = math.tanh %905 : vector<1x16xf32>
    %913 = arith.mulf %911, %912 : vector<1x16xf32>
    %914 = vector.extract_strided_slice %896 {offsets = [0, 32], sizes = [1, 16], strides = [1, 1]} : vector<1x48xf32> to vector<1x16xf32>
    %915 = math.tanh %910 : vector<1x16xf32>
    %916 = arith.mulf %914, %915 : vector<1x16xf32>
    %c0_i32_142 = arith.constant 0 : i32
    %917 = vector.broadcast %c0_i32_142 : i32 to vector<8x1xi32>
    %918 = arith.cmpi eq, %0, %917 : vector<8x1xi32>
    %919 = vector.shape_cast %918 : vector<8x1xi1> to vector<8x1xi1>
    %920 = vector.broadcast %919 : vector<8x1xi1> to vector<8x16xi1>
    %921 = vector.shape_cast %913 : vector<1x16xf32> to vector<1x16xf32>
    %922 = vector.broadcast %921 : vector<1x16xf32> to vector<8x16xf32>
    %923 = arith.select %920, %922, %877 : vector<8x16xi1>, vector<8x16xf32>
    %c7_i32_143 = arith.constant 7 : i32
    %924 = vector.broadcast %c7_i32_143 : i32 to vector<8x1xi32>
    %925 = arith.cmpi eq, %0, %924 : vector<8x1xi32>
    %926 = vector.shape_cast %925 : vector<8x1xi1> to vector<8x1xi1>
    %927 = vector.broadcast %926 : vector<8x1xi1> to vector<8x16xi1>
    %928 = vector.shape_cast %916 : vector<1x16xf32> to vector<1x16xf32>
    %929 = vector.broadcast %928 : vector<1x16xf32> to vector<8x16xf32>
    %930 = arith.select %927, %929, %878 : vector<8x16xi1>, vector<8x16xf32>
    %931 = vector.extract_strided_slice %870 {offsets = [1, 0], sizes = [1, 64], strides = [1, 1]} : vector<8x128xf32> to vector<1x64xf32>
    %cst_144 = arith.constant dense<0.000000e+00> : vector<1x64xf32>
    %932 = tpu.matmul %913, %871, %cst_144 {dimension_numbers = #tpu.dot_dimension_numbers<[1], [0], [0], [1], [0, 0, 1, 1], [], []>} : vector<1x16xf32>, vector<16x64xf32>, vector<1x64xf32> -> vector<1x64xf32>
    %933 = arith.addf %931, %932 : vector<1x64xf32>
    %934 = vector.extract_strided_slice %870 {offsets = [6, 64], sizes = [1, 64], strides = [1, 1]} : vector<8x128xf32> to vector<1x64xf32>
    %cst_145 = arith.constant dense<0.000000e+00> : vector<1x64xf32>
    %935 = tpu.matmul %916, %872, %cst_145 {dimension_numbers = #tpu.dot_dimension_numbers<[1], [0], [0], [1], [0, 0, 1, 1], [], []>} : vector<1x16xf32>, vector<16x64xf32>, vector<1x64xf32> -> vector<1x64xf32>
    %936 = arith.addf %934, %935 : vector<1x64xf32>
    %937 = vector.extract_strided_slice %933 {offsets = [0, 0], sizes = [1, 48], strides = [1, 1]} : vector<1x64xf32> to vector<1x48xf32>
    %938 = arith.negf %937 : vector<1x48xf32>
    %939 = math.exp %938 : vector<1x48xf32>
    %cst_146 = arith.constant 1.000000e+00 : f32
    %940 = vector.broadcast %cst_146 : f32 to vector<1x48xf32>
    %941 = arith.addf %940, %939 : vector<1x48xf32>
    %942 = arith.divf %940, %941 : vector<1x48xf32>
    %943 = vector.extract_strided_slice %936 {offsets = [0, 0], sizes = [1, 48], strides = [1, 1]} : vector<1x64xf32> to vector<1x48xf32>
    %944 = arith.negf %943 : vector<1x48xf32>
    %945 = math.exp %944 : vector<1x48xf32>
    %cst_147 = arith.constant 1.000000e+00 : f32
    %946 = vector.broadcast %cst_147 : f32 to vector<1x48xf32>
    %947 = arith.addf %946, %945 : vector<1x48xf32>
    %948 = arith.divf %946, %947 : vector<1x48xf32>
    %949 = vector.extract_strided_slice %933 {offsets = [0, 48], sizes = [1, 16], strides = [1, 1]} : vector<1x64xf32> to vector<1x16xf32>
    %950 = math.tanh %949 : vector<1x16xf32>
    %951 = vector.extract_strided_slice %936 {offsets = [0, 48], sizes = [1, 16], strides = [1, 1]} : vector<1x64xf32> to vector<1x16xf32>
    %952 = math.tanh %951 : vector<1x16xf32>
    %953 = vector.extract_strided_slice %942 {offsets = [0, 16], sizes = [1, 16], strides = [1, 1]} : vector<1x48xf32> to vector<1x16xf32>
    %954 = arith.mulf %953, %905 : vector<1x16xf32>
    %955 = vector.extract_strided_slice %942 {offsets = [0, 0], sizes = [1, 16], strides = [1, 1]} : vector<1x48xf32> to vector<1x16xf32>
    %956 = arith.mulf %955, %950 : vector<1x16xf32>
    %957 = arith.addf %954, %956 : vector<1x16xf32>
    %958 = vector.extract_strided_slice %948 {offsets = [0, 16], sizes = [1, 16], strides = [1, 1]} : vector<1x48xf32> to vector<1x16xf32>
    %959 = arith.mulf %958, %910 : vector<1x16xf32>
    %960 = vector.extract_strided_slice %948 {offsets = [0, 0], sizes = [1, 16], strides = [1, 1]} : vector<1x48xf32> to vector<1x16xf32>
    %961 = arith.mulf %960, %952 : vector<1x16xf32>
    %962 = arith.addf %959, %961 : vector<1x16xf32>
    %963 = vector.extract_strided_slice %942 {offsets = [0, 32], sizes = [1, 16], strides = [1, 1]} : vector<1x48xf32> to vector<1x16xf32>
    %964 = math.tanh %957 : vector<1x16xf32>
    %965 = arith.mulf %963, %964 : vector<1x16xf32>
    %966 = vector.extract_strided_slice %948 {offsets = [0, 32], sizes = [1, 16], strides = [1, 1]} : vector<1x48xf32> to vector<1x16xf32>
    %967 = math.tanh %962 : vector<1x16xf32>
    %968 = arith.mulf %966, %967 : vector<1x16xf32>
    %c1_i32_148 = arith.constant 1 : i32
    %969 = vector.broadcast %c1_i32_148 : i32 to vector<8x1xi32>
    %970 = arith.cmpi eq, %0, %969 : vector<8x1xi32>
    %971 = vector.shape_cast %970 : vector<8x1xi1> to vector<8x1xi1>
    %972 = vector.broadcast %971 : vector<8x1xi1> to vector<8x16xi1>
    %973 = vector.shape_cast %965 : vector<1x16xf32> to vector<1x16xf32>
    %974 = vector.broadcast %973 : vector<1x16xf32> to vector<8x16xf32>
    %975 = arith.select %972, %974, %923 : vector<8x16xi1>, vector<8x16xf32>
    %c6_i32_149 = arith.constant 6 : i32
    %976 = vector.broadcast %c6_i32_149 : i32 to vector<8x1xi32>
    %977 = arith.cmpi eq, %0, %976 : vector<8x1xi32>
    %978 = vector.shape_cast %977 : vector<8x1xi1> to vector<8x1xi1>
    %979 = vector.broadcast %978 : vector<8x1xi1> to vector<8x16xi1>
    %980 = vector.shape_cast %968 : vector<1x16xf32> to vector<1x16xf32>
    %981 = vector.broadcast %980 : vector<1x16xf32> to vector<8x16xf32>
    %982 = arith.select %979, %981, %930 : vector<8x16xi1>, vector<8x16xf32>
    %983 = vector.extract_strided_slice %870 {offsets = [2, 0], sizes = [1, 64], strides = [1, 1]} : vector<8x128xf32> to vector<1x64xf32>
    %cst_150 = arith.constant dense<0.000000e+00> : vector<1x64xf32>
    %984 = tpu.matmul %965, %871, %cst_150 {dimension_numbers = #tpu.dot_dimension_numbers<[1], [0], [0], [1], [0, 0, 1, 1], [], []>} : vector<1x16xf32>, vector<16x64xf32>, vector<1x64xf32> -> vector<1x64xf32>
    %985 = arith.addf %983, %984 : vector<1x64xf32>
    %986 = vector.extract_strided_slice %870 {offsets = [5, 64], sizes = [1, 64], strides = [1, 1]} : vector<8x128xf32> to vector<1x64xf32>
    %cst_151 = arith.constant dense<0.000000e+00> : vector<1x64xf32>
    %987 = tpu.matmul %968, %872, %cst_151 {dimension_numbers = #tpu.dot_dimension_numbers<[1], [0], [0], [1], [0, 0, 1, 1], [], []>} : vector<1x16xf32>, vector<16x64xf32>, vector<1x64xf32> -> vector<1x64xf32>
    %988 = arith.addf %986, %987 : vector<1x64xf32>
    %989 = vector.extract_strided_slice %985 {offsets = [0, 0], sizes = [1, 48], strides = [1, 1]} : vector<1x64xf32> to vector<1x48xf32>
    %990 = arith.negf %989 : vector<1x48xf32>
    %991 = math.exp %990 : vector<1x48xf32>
    %cst_152 = arith.constant 1.000000e+00 : f32
    %992 = vector.broadcast %cst_152 : f32 to vector<1x48xf32>
    %993 = arith.addf %992, %991 : vector<1x48xf32>
    %994 = arith.divf %992, %993 : vector<1x48xf32>
    %995 = vector.extract_strided_slice %988 {offsets = [0, 0], sizes = [1, 48], strides = [1, 1]} : vector<1x64xf32> to vector<1x48xf32>
    %996 = arith.negf %995 : vector<1x48xf32>
    %997 = math.exp %996 : vector<1x48xf32>
    %cst_153 = arith.constant 1.000000e+00 : f32
    %998 = vector.broadcast %cst_153 : f32 to vector<1x48xf32>
    %999 = arith.addf %998, %997 : vector<1x48xf32>
    %1000 = arith.divf %998, %999 : vector<1x48xf32>
    %1001 = vector.extract_strided_slice %985 {offsets = [0, 48], sizes = [1, 16], strides = [1, 1]} : vector<1x64xf32> to vector<1x16xf32>
    %1002 = math.tanh %1001 : vector<1x16xf32>
    %1003 = vector.extract_strided_slice %988 {offsets = [0, 48], sizes = [1, 16], strides = [1, 1]} : vector<1x64xf32> to vector<1x16xf32>
    %1004 = math.tanh %1003 : vector<1x16xf32>
    %1005 = vector.extract_strided_slice %994 {offsets = [0, 16], sizes = [1, 16], strides = [1, 1]} : vector<1x48xf32> to vector<1x16xf32>
    %1006 = arith.mulf %1005, %957 : vector<1x16xf32>
    %1007 = vector.extract_strided_slice %994 {offsets = [0, 0], sizes = [1, 16], strides = [1, 1]} : vector<1x48xf32> to vector<1x16xf32>
    %1008 = arith.mulf %1007, %1002 : vector<1x16xf32>
    %1009 = arith.addf %1006, %1008 : vector<1x16xf32>
    %1010 = vector.extract_strided_slice %1000 {offsets = [0, 16], sizes = [1, 16], strides = [1, 1]} : vector<1x48xf32> to vector<1x16xf32>
    %1011 = arith.mulf %1010, %962 : vector<1x16xf32>
    %1012 = vector.extract_strided_slice %1000 {offsets = [0, 0], sizes = [1, 16], strides = [1, 1]} : vector<1x48xf32> to vector<1x16xf32>
    %1013 = arith.mulf %1012, %1004 : vector<1x16xf32>
    %1014 = arith.addf %1011, %1013 : vector<1x16xf32>
    %1015 = vector.extract_strided_slice %994 {offsets = [0, 32], sizes = [1, 16], strides = [1, 1]} : vector<1x48xf32> to vector<1x16xf32>
    %1016 = math.tanh %1009 : vector<1x16xf32>
    %1017 = arith.mulf %1015, %1016 : vector<1x16xf32>
    %1018 = vector.extract_strided_slice %1000 {offsets = [0, 32], sizes = [1, 16], strides = [1, 1]} : vector<1x48xf32> to vector<1x16xf32>
    %1019 = math.tanh %1014 : vector<1x16xf32>
    %1020 = arith.mulf %1018, %1019 : vector<1x16xf32>
    %c2_i32_154 = arith.constant 2 : i32
    %1021 = vector.broadcast %c2_i32_154 : i32 to vector<8x1xi32>
    %1022 = arith.cmpi eq, %0, %1021 : vector<8x1xi32>
    %1023 = vector.shape_cast %1022 : vector<8x1xi1> to vector<8x1xi1>
    %1024 = vector.broadcast %1023 : vector<8x1xi1> to vector<8x16xi1>
    %1025 = vector.shape_cast %1017 : vector<1x16xf32> to vector<1x16xf32>
    %1026 = vector.broadcast %1025 : vector<1x16xf32> to vector<8x16xf32>
    %1027 = arith.select %1024, %1026, %975 : vector<8x16xi1>, vector<8x16xf32>
    %c5_i32_155 = arith.constant 5 : i32
    %1028 = vector.broadcast %c5_i32_155 : i32 to vector<8x1xi32>
    %1029 = arith.cmpi eq, %0, %1028 : vector<8x1xi32>
    %1030 = vector.shape_cast %1029 : vector<8x1xi1> to vector<8x1xi1>
    %1031 = vector.broadcast %1030 : vector<8x1xi1> to vector<8x16xi1>
    %1032 = vector.shape_cast %1020 : vector<1x16xf32> to vector<1x16xf32>
    %1033 = vector.broadcast %1032 : vector<1x16xf32> to vector<8x16xf32>
    %1034 = arith.select %1031, %1033, %982 : vector<8x16xi1>, vector<8x16xf32>
    %1035 = vector.extract_strided_slice %870 {offsets = [3, 0], sizes = [1, 64], strides = [1, 1]} : vector<8x128xf32> to vector<1x64xf32>
    %cst_156 = arith.constant dense<0.000000e+00> : vector<1x64xf32>
    %1036 = tpu.matmul %1017, %871, %cst_156 {dimension_numbers = #tpu.dot_dimension_numbers<[1], [0], [0], [1], [0, 0, 1, 1], [], []>} : vector<1x16xf32>, vector<16x64xf32>, vector<1x64xf32> -> vector<1x64xf32>
    %1037 = arith.addf %1035, %1036 : vector<1x64xf32>
    %1038 = vector.extract_strided_slice %870 {offsets = [4, 64], sizes = [1, 64], strides = [1, 1]} : vector<8x128xf32> to vector<1x64xf32>
    %cst_157 = arith.constant dense<0.000000e+00> : vector<1x64xf32>
    %1039 = tpu.matmul %1020, %872, %cst_157 {dimension_numbers = #tpu.dot_dimension_numbers<[1], [0], [0], [1], [0, 0, 1, 1], [], []>} : vector<1x16xf32>, vector<16x64xf32>, vector<1x64xf32> -> vector<1x64xf32>
    %1040 = arith.addf %1038, %1039 : vector<1x64xf32>
    %1041 = vector.extract_strided_slice %1037 {offsets = [0, 0], sizes = [1, 48], strides = [1, 1]} : vector<1x64xf32> to vector<1x48xf32>
    %1042 = arith.negf %1041 : vector<1x48xf32>
    %1043 = math.exp %1042 : vector<1x48xf32>
    %cst_158 = arith.constant 1.000000e+00 : f32
    %1044 = vector.broadcast %cst_158 : f32 to vector<1x48xf32>
    %1045 = arith.addf %1044, %1043 : vector<1x48xf32>
    %1046 = arith.divf %1044, %1045 : vector<1x48xf32>
    %1047 = vector.extract_strided_slice %1040 {offsets = [0, 0], sizes = [1, 48], strides = [1, 1]} : vector<1x64xf32> to vector<1x48xf32>
    %1048 = arith.negf %1047 : vector<1x48xf32>
    %1049 = math.exp %1048 : vector<1x48xf32>
    %cst_159 = arith.constant 1.000000e+00 : f32
    %1050 = vector.broadcast %cst_159 : f32 to vector<1x48xf32>
    %1051 = arith.addf %1050, %1049 : vector<1x48xf32>
    %1052 = arith.divf %1050, %1051 : vector<1x48xf32>
    %1053 = vector.extract_strided_slice %1037 {offsets = [0, 48], sizes = [1, 16], strides = [1, 1]} : vector<1x64xf32> to vector<1x16xf32>
    %1054 = math.tanh %1053 : vector<1x16xf32>
    %1055 = vector.extract_strided_slice %1040 {offsets = [0, 48], sizes = [1, 16], strides = [1, 1]} : vector<1x64xf32> to vector<1x16xf32>
    %1056 = math.tanh %1055 : vector<1x16xf32>
    %1057 = vector.extract_strided_slice %1046 {offsets = [0, 16], sizes = [1, 16], strides = [1, 1]} : vector<1x48xf32> to vector<1x16xf32>
    %1058 = arith.mulf %1057, %1009 : vector<1x16xf32>
    %1059 = vector.extract_strided_slice %1046 {offsets = [0, 0], sizes = [1, 16], strides = [1, 1]} : vector<1x48xf32> to vector<1x16xf32>
    %1060 = arith.mulf %1059, %1054 : vector<1x16xf32>
    %1061 = arith.addf %1058, %1060 : vector<1x16xf32>
    %1062 = vector.extract_strided_slice %1052 {offsets = [0, 16], sizes = [1, 16], strides = [1, 1]} : vector<1x48xf32> to vector<1x16xf32>
    %1063 = arith.mulf %1062, %1014 : vector<1x16xf32>
    %1064 = vector.extract_strided_slice %1052 {offsets = [0, 0], sizes = [1, 16], strides = [1, 1]} : vector<1x48xf32> to vector<1x16xf32>
    %1065 = arith.mulf %1064, %1056 : vector<1x16xf32>
    %1066 = arith.addf %1063, %1065 : vector<1x16xf32>
    %1067 = vector.extract_strided_slice %1046 {offsets = [0, 32], sizes = [1, 16], strides = [1, 1]} : vector<1x48xf32> to vector<1x16xf32>
    %1068 = math.tanh %1061 : vector<1x16xf32>
    %1069 = arith.mulf %1067, %1068 : vector<1x16xf32>
    %1070 = vector.extract_strided_slice %1052 {offsets = [0, 32], sizes = [1, 16], strides = [1, 1]} : vector<1x48xf32> to vector<1x16xf32>
    %1071 = math.tanh %1066 : vector<1x16xf32>
    %1072 = arith.mulf %1070, %1071 : vector<1x16xf32>
    %c3_i32_160 = arith.constant 3 : i32
    %1073 = vector.broadcast %c3_i32_160 : i32 to vector<8x1xi32>
    %1074 = arith.cmpi eq, %0, %1073 : vector<8x1xi32>
    %1075 = vector.shape_cast %1074 : vector<8x1xi1> to vector<8x1xi1>
    %1076 = vector.broadcast %1075 : vector<8x1xi1> to vector<8x16xi1>
    %1077 = vector.shape_cast %1069 : vector<1x16xf32> to vector<1x16xf32>
    %1078 = vector.broadcast %1077 : vector<1x16xf32> to vector<8x16xf32>
    %1079 = arith.select %1076, %1078, %1027 : vector<8x16xi1>, vector<8x16xf32>
    %c4_i32_161 = arith.constant 4 : i32
    %1080 = vector.broadcast %c4_i32_161 : i32 to vector<8x1xi32>
    %1081 = arith.cmpi eq, %0, %1080 : vector<8x1xi32>
    %1082 = vector.shape_cast %1081 : vector<8x1xi1> to vector<8x1xi1>
    %1083 = vector.broadcast %1082 : vector<8x1xi1> to vector<8x16xi1>
    %1084 = vector.shape_cast %1072 : vector<1x16xf32> to vector<1x16xf32>
    %1085 = vector.broadcast %1084 : vector<1x16xf32> to vector<8x16xf32>
    %1086 = arith.select %1083, %1085, %1034 : vector<8x16xi1>, vector<8x16xf32>
    %1087 = vector.extract_strided_slice %870 {offsets = [4, 0], sizes = [1, 64], strides = [1, 1]} : vector<8x128xf32> to vector<1x64xf32>
    %cst_162 = arith.constant dense<0.000000e+00> : vector<1x64xf32>
    %1088 = tpu.matmul %1069, %871, %cst_162 {dimension_numbers = #tpu.dot_dimension_numbers<[1], [0], [0], [1], [0, 0, 1, 1], [], []>} : vector<1x16xf32>, vector<16x64xf32>, vector<1x64xf32> -> vector<1x64xf32>
    %1089 = arith.addf %1087, %1088 : vector<1x64xf32>
    %1090 = vector.extract_strided_slice %870 {offsets = [3, 64], sizes = [1, 64], strides = [1, 1]} : vector<8x128xf32> to vector<1x64xf32>
    %cst_163 = arith.constant dense<0.000000e+00> : vector<1x64xf32>
    %1091 = tpu.matmul %1072, %872, %cst_163 {dimension_numbers = #tpu.dot_dimension_numbers<[1], [0], [0], [1], [0, 0, 1, 1], [], []>} : vector<1x16xf32>, vector<16x64xf32>, vector<1x64xf32> -> vector<1x64xf32>
    %1092 = arith.addf %1090, %1091 : vector<1x64xf32>
    %1093 = vector.extract_strided_slice %1089 {offsets = [0, 0], sizes = [1, 48], strides = [1, 1]} : vector<1x64xf32> to vector<1x48xf32>
    %1094 = arith.negf %1093 : vector<1x48xf32>
    %1095 = math.exp %1094 : vector<1x48xf32>
    %cst_164 = arith.constant 1.000000e+00 : f32
    %1096 = vector.broadcast %cst_164 : f32 to vector<1x48xf32>
    %1097 = arith.addf %1096, %1095 : vector<1x48xf32>
    %1098 = arith.divf %1096, %1097 : vector<1x48xf32>
    %1099 = vector.extract_strided_slice %1092 {offsets = [0, 0], sizes = [1, 48], strides = [1, 1]} : vector<1x64xf32> to vector<1x48xf32>
    %1100 = arith.negf %1099 : vector<1x48xf32>
    %1101 = math.exp %1100 : vector<1x48xf32>
    %cst_165 = arith.constant 1.000000e+00 : f32
    %1102 = vector.broadcast %cst_165 : f32 to vector<1x48xf32>
    %1103 = arith.addf %1102, %1101 : vector<1x48xf32>
    %1104 = arith.divf %1102, %1103 : vector<1x48xf32>
    %1105 = vector.extract_strided_slice %1089 {offsets = [0, 48], sizes = [1, 16], strides = [1, 1]} : vector<1x64xf32> to vector<1x16xf32>
    %1106 = math.tanh %1105 : vector<1x16xf32>
    %1107 = vector.extract_strided_slice %1092 {offsets = [0, 48], sizes = [1, 16], strides = [1, 1]} : vector<1x64xf32> to vector<1x16xf32>
    %1108 = math.tanh %1107 : vector<1x16xf32>
    %1109 = vector.extract_strided_slice %1098 {offsets = [0, 16], sizes = [1, 16], strides = [1, 1]} : vector<1x48xf32> to vector<1x16xf32>
    %1110 = arith.mulf %1109, %1061 : vector<1x16xf32>
    %1111 = vector.extract_strided_slice %1098 {offsets = [0, 0], sizes = [1, 16], strides = [1, 1]} : vector<1x48xf32> to vector<1x16xf32>
    %1112 = arith.mulf %1111, %1106 : vector<1x16xf32>
    %1113 = arith.addf %1110, %1112 : vector<1x16xf32>
    %1114 = vector.extract_strided_slice %1104 {offsets = [0, 16], sizes = [1, 16], strides = [1, 1]} : vector<1x48xf32> to vector<1x16xf32>
    %1115 = arith.mulf %1114, %1066 : vector<1x16xf32>
    %1116 = vector.extract_strided_slice %1104 {offsets = [0, 0], sizes = [1, 16], strides = [1, 1]} : vector<1x48xf32> to vector<1x16xf32>
    %1117 = arith.mulf %1116, %1108 : vector<1x16xf32>
    %1118 = arith.addf %1115, %1117 : vector<1x16xf32>
    %1119 = vector.extract_strided_slice %1098 {offsets = [0, 32], sizes = [1, 16], strides = [1, 1]} : vector<1x48xf32> to vector<1x16xf32>
    %1120 = math.tanh %1113 : vector<1x16xf32>
    %1121 = arith.mulf %1119, %1120 : vector<1x16xf32>
    %1122 = vector.extract_strided_slice %1104 {offsets = [0, 32], sizes = [1, 16], strides = [1, 1]} : vector<1x48xf32> to vector<1x16xf32>
    %1123 = math.tanh %1118 : vector<1x16xf32>
    %1124 = arith.mulf %1122, %1123 : vector<1x16xf32>
    %c4_i32_166 = arith.constant 4 : i32
    %1125 = vector.broadcast %c4_i32_166 : i32 to vector<8x1xi32>
    %1126 = arith.cmpi eq, %0, %1125 : vector<8x1xi32>
    %1127 = vector.shape_cast %1126 : vector<8x1xi1> to vector<8x1xi1>
    %1128 = vector.broadcast %1127 : vector<8x1xi1> to vector<8x16xi1>
    %1129 = vector.shape_cast %1121 : vector<1x16xf32> to vector<1x16xf32>
    %1130 = vector.broadcast %1129 : vector<1x16xf32> to vector<8x16xf32>
    %1131 = arith.select %1128, %1130, %1079 : vector<8x16xi1>, vector<8x16xf32>
    %c3_i32_167 = arith.constant 3 : i32
    %1132 = vector.broadcast %c3_i32_167 : i32 to vector<8x1xi32>
    %1133 = arith.cmpi eq, %0, %1132 : vector<8x1xi32>
    %1134 = vector.shape_cast %1133 : vector<8x1xi1> to vector<8x1xi1>
    %1135 = vector.broadcast %1134 : vector<8x1xi1> to vector<8x16xi1>
    %1136 = vector.shape_cast %1124 : vector<1x16xf32> to vector<1x16xf32>
    %1137 = vector.broadcast %1136 : vector<1x16xf32> to vector<8x16xf32>
    %1138 = arith.select %1135, %1137, %1086 : vector<8x16xi1>, vector<8x16xf32>
    %1139 = vector.extract_strided_slice %870 {offsets = [5, 0], sizes = [1, 64], strides = [1, 1]} : vector<8x128xf32> to vector<1x64xf32>
    %cst_168 = arith.constant dense<0.000000e+00> : vector<1x64xf32>
    %1140 = tpu.matmul %1121, %871, %cst_168 {dimension_numbers = #tpu.dot_dimension_numbers<[1], [0], [0], [1], [0, 0, 1, 1], [], []>} : vector<1x16xf32>, vector<16x64xf32>, vector<1x64xf32> -> vector<1x64xf32>
    %1141 = arith.addf %1139, %1140 : vector<1x64xf32>
    %1142 = vector.extract_strided_slice %870 {offsets = [2, 64], sizes = [1, 64], strides = [1, 1]} : vector<8x128xf32> to vector<1x64xf32>
    %cst_169 = arith.constant dense<0.000000e+00> : vector<1x64xf32>
    %1143 = tpu.matmul %1124, %872, %cst_169 {dimension_numbers = #tpu.dot_dimension_numbers<[1], [0], [0], [1], [0, 0, 1, 1], [], []>} : vector<1x16xf32>, vector<16x64xf32>, vector<1x64xf32> -> vector<1x64xf32>
    %1144 = arith.addf %1142, %1143 : vector<1x64xf32>
    %1145 = vector.extract_strided_slice %1141 {offsets = [0, 0], sizes = [1, 48], strides = [1, 1]} : vector<1x64xf32> to vector<1x48xf32>
    %1146 = arith.negf %1145 : vector<1x48xf32>
    %1147 = math.exp %1146 : vector<1x48xf32>
    %cst_170 = arith.constant 1.000000e+00 : f32
    %1148 = vector.broadcast %cst_170 : f32 to vector<1x48xf32>
    %1149 = arith.addf %1148, %1147 : vector<1x48xf32>
    %1150 = arith.divf %1148, %1149 : vector<1x48xf32>
    %1151 = vector.extract_strided_slice %1144 {offsets = [0, 0], sizes = [1, 48], strides = [1, 1]} : vector<1x64xf32> to vector<1x48xf32>
    %1152 = arith.negf %1151 : vector<1x48xf32>
    %1153 = math.exp %1152 : vector<1x48xf32>
    %cst_171 = arith.constant 1.000000e+00 : f32
    %1154 = vector.broadcast %cst_171 : f32 to vector<1x48xf32>
    %1155 = arith.addf %1154, %1153 : vector<1x48xf32>
    %1156 = arith.divf %1154, %1155 : vector<1x48xf32>
    %1157 = vector.extract_strided_slice %1141 {offsets = [0, 48], sizes = [1, 16], strides = [1, 1]} : vector<1x64xf32> to vector<1x16xf32>
    %1158 = math.tanh %1157 : vector<1x16xf32>
    %1159 = vector.extract_strided_slice %1144 {offsets = [0, 48], sizes = [1, 16], strides = [1, 1]} : vector<1x64xf32> to vector<1x16xf32>
    %1160 = math.tanh %1159 : vector<1x16xf32>
    %1161 = vector.extract_strided_slice %1150 {offsets = [0, 16], sizes = [1, 16], strides = [1, 1]} : vector<1x48xf32> to vector<1x16xf32>
    %1162 = arith.mulf %1161, %1113 : vector<1x16xf32>
    %1163 = vector.extract_strided_slice %1150 {offsets = [0, 0], sizes = [1, 16], strides = [1, 1]} : vector<1x48xf32> to vector<1x16xf32>
    %1164 = arith.mulf %1163, %1158 : vector<1x16xf32>
    %1165 = arith.addf %1162, %1164 : vector<1x16xf32>
    %1166 = vector.extract_strided_slice %1156 {offsets = [0, 16], sizes = [1, 16], strides = [1, 1]} : vector<1x48xf32> to vector<1x16xf32>
    %1167 = arith.mulf %1166, %1118 : vector<1x16xf32>
    %1168 = vector.extract_strided_slice %1156 {offsets = [0, 0], sizes = [1, 16], strides = [1, 1]} : vector<1x48xf32> to vector<1x16xf32>
    %1169 = arith.mulf %1168, %1160 : vector<1x16xf32>
    %1170 = arith.addf %1167, %1169 : vector<1x16xf32>
    %1171 = vector.extract_strided_slice %1150 {offsets = [0, 32], sizes = [1, 16], strides = [1, 1]} : vector<1x48xf32> to vector<1x16xf32>
    %1172 = math.tanh %1165 : vector<1x16xf32>
    %1173 = arith.mulf %1171, %1172 : vector<1x16xf32>
    %1174 = vector.extract_strided_slice %1156 {offsets = [0, 32], sizes = [1, 16], strides = [1, 1]} : vector<1x48xf32> to vector<1x16xf32>
    %1175 = math.tanh %1170 : vector<1x16xf32>
    %1176 = arith.mulf %1174, %1175 : vector<1x16xf32>
    %c5_i32_172 = arith.constant 5 : i32
    %1177 = vector.broadcast %c5_i32_172 : i32 to vector<8x1xi32>
    %1178 = arith.cmpi eq, %0, %1177 : vector<8x1xi32>
    %1179 = vector.shape_cast %1178 : vector<8x1xi1> to vector<8x1xi1>
    %1180 = vector.broadcast %1179 : vector<8x1xi1> to vector<8x16xi1>
    %1181 = vector.shape_cast %1173 : vector<1x16xf32> to vector<1x16xf32>
    %1182 = vector.broadcast %1181 : vector<1x16xf32> to vector<8x16xf32>
    %1183 = arith.select %1180, %1182, %1131 : vector<8x16xi1>, vector<8x16xf32>
    %c2_i32_173 = arith.constant 2 : i32
    %1184 = vector.broadcast %c2_i32_173 : i32 to vector<8x1xi32>
    %1185 = arith.cmpi eq, %0, %1184 : vector<8x1xi32>
    %1186 = vector.shape_cast %1185 : vector<8x1xi1> to vector<8x1xi1>
    %1187 = vector.broadcast %1186 : vector<8x1xi1> to vector<8x16xi1>
    %1188 = vector.shape_cast %1176 : vector<1x16xf32> to vector<1x16xf32>
    %1189 = vector.broadcast %1188 : vector<1x16xf32> to vector<8x16xf32>
    %1190 = arith.select %1187, %1189, %1138 : vector<8x16xi1>, vector<8x16xf32>
    %1191 = vector.extract_strided_slice %870 {offsets = [6, 0], sizes = [1, 64], strides = [1, 1]} : vector<8x128xf32> to vector<1x64xf32>
    %cst_174 = arith.constant dense<0.000000e+00> : vector<1x64xf32>
    %1192 = tpu.matmul %1173, %871, %cst_174 {dimension_numbers = #tpu.dot_dimension_numbers<[1], [0], [0], [1], [0, 0, 1, 1], [], []>} : vector<1x16xf32>, vector<16x64xf32>, vector<1x64xf32> -> vector<1x64xf32>
    %1193 = arith.addf %1191, %1192 : vector<1x64xf32>
    %1194 = vector.extract_strided_slice %870 {offsets = [1, 64], sizes = [1, 64], strides = [1, 1]} : vector<8x128xf32> to vector<1x64xf32>
    %cst_175 = arith.constant dense<0.000000e+00> : vector<1x64xf32>
    %1195 = tpu.matmul %1176, %872, %cst_175 {dimension_numbers = #tpu.dot_dimension_numbers<[1], [0], [0], [1], [0, 0, 1, 1], [], []>} : vector<1x16xf32>, vector<16x64xf32>, vector<1x64xf32> -> vector<1x64xf32>
    %1196 = arith.addf %1194, %1195 : vector<1x64xf32>
    %1197 = vector.extract_strided_slice %1193 {offsets = [0, 0], sizes = [1, 48], strides = [1, 1]} : vector<1x64xf32> to vector<1x48xf32>
    %1198 = arith.negf %1197 : vector<1x48xf32>
    %1199 = math.exp %1198 : vector<1x48xf32>
    %cst_176 = arith.constant 1.000000e+00 : f32
    %1200 = vector.broadcast %cst_176 : f32 to vector<1x48xf32>
    %1201 = arith.addf %1200, %1199 : vector<1x48xf32>
    %1202 = arith.divf %1200, %1201 : vector<1x48xf32>
    %1203 = vector.extract_strided_slice %1196 {offsets = [0, 0], sizes = [1, 48], strides = [1, 1]} : vector<1x64xf32> to vector<1x48xf32>
    %1204 = arith.negf %1203 : vector<1x48xf32>
    %1205 = math.exp %1204 : vector<1x48xf32>
    %cst_177 = arith.constant 1.000000e+00 : f32
    %1206 = vector.broadcast %cst_177 : f32 to vector<1x48xf32>
    %1207 = arith.addf %1206, %1205 : vector<1x48xf32>
    %1208 = arith.divf %1206, %1207 : vector<1x48xf32>
    %1209 = vector.extract_strided_slice %1193 {offsets = [0, 48], sizes = [1, 16], strides = [1, 1]} : vector<1x64xf32> to vector<1x16xf32>
    %1210 = math.tanh %1209 : vector<1x16xf32>
    %1211 = vector.extract_strided_slice %1196 {offsets = [0, 48], sizes = [1, 16], strides = [1, 1]} : vector<1x64xf32> to vector<1x16xf32>
    %1212 = math.tanh %1211 : vector<1x16xf32>
    %1213 = vector.extract_strided_slice %1202 {offsets = [0, 16], sizes = [1, 16], strides = [1, 1]} : vector<1x48xf32> to vector<1x16xf32>
    %1214 = arith.mulf %1213, %1165 : vector<1x16xf32>
    %1215 = vector.extract_strided_slice %1202 {offsets = [0, 0], sizes = [1, 16], strides = [1, 1]} : vector<1x48xf32> to vector<1x16xf32>
    %1216 = arith.mulf %1215, %1210 : vector<1x16xf32>
    %1217 = arith.addf %1214, %1216 : vector<1x16xf32>
    %1218 = vector.extract_strided_slice %1208 {offsets = [0, 16], sizes = [1, 16], strides = [1, 1]} : vector<1x48xf32> to vector<1x16xf32>
    %1219 = arith.mulf %1218, %1170 : vector<1x16xf32>
    %1220 = vector.extract_strided_slice %1208 {offsets = [0, 0], sizes = [1, 16], strides = [1, 1]} : vector<1x48xf32> to vector<1x16xf32>
    %1221 = arith.mulf %1220, %1212 : vector<1x16xf32>
    %1222 = arith.addf %1219, %1221 : vector<1x16xf32>
    %1223 = vector.extract_strided_slice %1202 {offsets = [0, 32], sizes = [1, 16], strides = [1, 1]} : vector<1x48xf32> to vector<1x16xf32>
    %1224 = math.tanh %1217 : vector<1x16xf32>
    %1225 = arith.mulf %1223, %1224 : vector<1x16xf32>
    %1226 = vector.extract_strided_slice %1208 {offsets = [0, 32], sizes = [1, 16], strides = [1, 1]} : vector<1x48xf32> to vector<1x16xf32>
    %1227 = math.tanh %1222 : vector<1x16xf32>
    %1228 = arith.mulf %1226, %1227 : vector<1x16xf32>
    %c6_i32_178 = arith.constant 6 : i32
    %1229 = vector.broadcast %c6_i32_178 : i32 to vector<8x1xi32>
    %1230 = arith.cmpi eq, %0, %1229 : vector<8x1xi32>
    %1231 = vector.shape_cast %1230 : vector<8x1xi1> to vector<8x1xi1>
    %1232 = vector.broadcast %1231 : vector<8x1xi1> to vector<8x16xi1>
    %1233 = vector.shape_cast %1225 : vector<1x16xf32> to vector<1x16xf32>
    %1234 = vector.broadcast %1233 : vector<1x16xf32> to vector<8x16xf32>
    %1235 = arith.select %1232, %1234, %1183 : vector<8x16xi1>, vector<8x16xf32>
    %c1_i32_179 = arith.constant 1 : i32
    %1236 = vector.broadcast %c1_i32_179 : i32 to vector<8x1xi32>
    %1237 = arith.cmpi eq, %0, %1236 : vector<8x1xi32>
    %1238 = vector.shape_cast %1237 : vector<8x1xi1> to vector<8x1xi1>
    %1239 = vector.broadcast %1238 : vector<8x1xi1> to vector<8x16xi1>
    %1240 = vector.shape_cast %1228 : vector<1x16xf32> to vector<1x16xf32>
    %1241 = vector.broadcast %1240 : vector<1x16xf32> to vector<8x16xf32>
    %1242 = arith.select %1239, %1241, %1190 : vector<8x16xi1>, vector<8x16xf32>
    %1243 = vector.extract_strided_slice %870 {offsets = [7, 0], sizes = [1, 64], strides = [1, 1]} : vector<8x128xf32> to vector<1x64xf32>
    %cst_180 = arith.constant dense<0.000000e+00> : vector<1x64xf32>
    %1244 = tpu.matmul %1225, %871, %cst_180 {dimension_numbers = #tpu.dot_dimension_numbers<[1], [0], [0], [1], [0, 0, 1, 1], [], []>} : vector<1x16xf32>, vector<16x64xf32>, vector<1x64xf32> -> vector<1x64xf32>
    %1245 = arith.addf %1243, %1244 : vector<1x64xf32>
    %1246 = vector.extract_strided_slice %870 {offsets = [0, 64], sizes = [1, 64], strides = [1, 1]} : vector<8x128xf32> to vector<1x64xf32>
    %cst_181 = arith.constant dense<0.000000e+00> : vector<1x64xf32>
    %1247 = tpu.matmul %1228, %872, %cst_181 {dimension_numbers = #tpu.dot_dimension_numbers<[1], [0], [0], [1], [0, 0, 1, 1], [], []>} : vector<1x16xf32>, vector<16x64xf32>, vector<1x64xf32> -> vector<1x64xf32>
    %1248 = arith.addf %1246, %1247 : vector<1x64xf32>
    %1249 = vector.extract_strided_slice %1245 {offsets = [0, 0], sizes = [1, 48], strides = [1, 1]} : vector<1x64xf32> to vector<1x48xf32>
    %1250 = arith.negf %1249 : vector<1x48xf32>
    %1251 = math.exp %1250 : vector<1x48xf32>
    %cst_182 = arith.constant 1.000000e+00 : f32
    %1252 = vector.broadcast %cst_182 : f32 to vector<1x48xf32>
    %1253 = arith.addf %1252, %1251 : vector<1x48xf32>
    %1254 = arith.divf %1252, %1253 : vector<1x48xf32>
    %1255 = vector.extract_strided_slice %1248 {offsets = [0, 0], sizes = [1, 48], strides = [1, 1]} : vector<1x64xf32> to vector<1x48xf32>
    %1256 = arith.negf %1255 : vector<1x48xf32>
    %1257 = math.exp %1256 : vector<1x48xf32>
    %cst_183 = arith.constant 1.000000e+00 : f32
    %1258 = vector.broadcast %cst_183 : f32 to vector<1x48xf32>
    %1259 = arith.addf %1258, %1257 : vector<1x48xf32>
    %1260 = arith.divf %1258, %1259 : vector<1x48xf32>
    %1261 = vector.extract_strided_slice %1245 {offsets = [0, 48], sizes = [1, 16], strides = [1, 1]} : vector<1x64xf32> to vector<1x16xf32>
    %1262 = math.tanh %1261 : vector<1x16xf32>
    %1263 = vector.extract_strided_slice %1248 {offsets = [0, 48], sizes = [1, 16], strides = [1, 1]} : vector<1x64xf32> to vector<1x16xf32>
    %1264 = math.tanh %1263 : vector<1x16xf32>
    %1265 = vector.extract_strided_slice %1254 {offsets = [0, 16], sizes = [1, 16], strides = [1, 1]} : vector<1x48xf32> to vector<1x16xf32>
    %1266 = arith.mulf %1265, %1217 : vector<1x16xf32>
    %1267 = vector.extract_strided_slice %1254 {offsets = [0, 0], sizes = [1, 16], strides = [1, 1]} : vector<1x48xf32> to vector<1x16xf32>
    %1268 = arith.mulf %1267, %1262 : vector<1x16xf32>
    %1269 = arith.addf %1266, %1268 : vector<1x16xf32>
    %1270 = vector.extract_strided_slice %1260 {offsets = [0, 16], sizes = [1, 16], strides = [1, 1]} : vector<1x48xf32> to vector<1x16xf32>
    %1271 = arith.mulf %1270, %1222 : vector<1x16xf32>
    %1272 = vector.extract_strided_slice %1260 {offsets = [0, 0], sizes = [1, 16], strides = [1, 1]} : vector<1x48xf32> to vector<1x16xf32>
    %1273 = arith.mulf %1272, %1264 : vector<1x16xf32>
    %1274 = arith.addf %1271, %1273 : vector<1x16xf32>
    %1275 = vector.extract_strided_slice %1254 {offsets = [0, 32], sizes = [1, 16], strides = [1, 1]} : vector<1x48xf32> to vector<1x16xf32>
    %1276 = math.tanh %1269 : vector<1x16xf32>
    %1277 = arith.mulf %1275, %1276 : vector<1x16xf32>
    %1278 = vector.extract_strided_slice %1260 {offsets = [0, 32], sizes = [1, 16], strides = [1, 1]} : vector<1x48xf32> to vector<1x16xf32>
    %1279 = math.tanh %1274 : vector<1x16xf32>
    %1280 = arith.mulf %1278, %1279 : vector<1x16xf32>
    %c7_i32_184 = arith.constant 7 : i32
    %1281 = vector.broadcast %c7_i32_184 : i32 to vector<8x1xi32>
    %1282 = arith.cmpi eq, %0, %1281 : vector<8x1xi32>
    %1283 = vector.shape_cast %1282 : vector<8x1xi1> to vector<8x1xi1>
    %1284 = vector.broadcast %1283 : vector<8x1xi1> to vector<8x16xi1>
    %1285 = vector.shape_cast %1277 : vector<1x16xf32> to vector<1x16xf32>
    %1286 = vector.broadcast %1285 : vector<1x16xf32> to vector<8x16xf32>
    %1287 = arith.select %1284, %1286, %1235 : vector<8x16xi1>, vector<8x16xf32>
    %c0_i32_185 = arith.constant 0 : i32
    %1288 = vector.broadcast %c0_i32_185 : i32 to vector<8x1xi32>
    %1289 = arith.cmpi eq, %0, %1288 : vector<8x1xi32>
    %1290 = vector.shape_cast %1289 : vector<8x1xi1> to vector<8x1xi1>
    %1291 = vector.broadcast %1290 : vector<8x1xi1> to vector<8x16xi1>
    %1292 = vector.shape_cast %1280 : vector<1x16xf32> to vector<1x16xf32>
    %1293 = vector.broadcast %1292 : vector<1x16xf32> to vector<8x16xf32>
    %1294 = arith.select %1291, %1293, %1242 : vector<8x16xi1>, vector<8x16xf32>
    %c0_186 = arith.constant 0 : index
    %c0_187 = arith.constant 0 : index
    %1295 = vector.load %arg14[%c0_186, %c0_187] : memref<32x64xf32, #tpu.memory_space<vmem>>, vector<16x64xf32>
    %cst_188 = arith.constant dense<0.000000e+00> : vector<8x64xf32>
    %1296 = tpu.matmul %1287, %1295, %cst_188 {dimension_numbers = #tpu.dot_dimension_numbers<[1], [0], [0], [1], [0, 0, 1, 1], [], []>} : vector<8x16xf32>, vector<16x64xf32>, vector<8x64xf32> -> vector<8x64xf32>
    %c16_189 = arith.constant 16 : index
    %c0_190 = arith.constant 0 : index
    %1297 = vector.load %arg14[%c16_189, %c0_190] : memref<32x64xf32, #tpu.memory_space<vmem>>, vector<16x64xf32>
    %cst_191 = arith.constant dense<0.000000e+00> : vector<8x64xf32>
    %1298 = tpu.matmul %1294, %1297, %cst_191 {dimension_numbers = #tpu.dot_dimension_numbers<[1], [0], [0], [1], [0, 0, 1, 1], [], []>} : vector<8x16xf32>, vector<16x64xf32>, vector<8x64xf32> -> vector<8x64xf32>
    %1299 = arith.addf %1296, %1298 : vector<8x64xf32>
    %c0_192 = arith.constant 0 : index
    %c0_193 = arith.constant 0 : index
    %1300 = vector.load %arg15[%c0_192, %c0_193] : memref<1x64xf32, #tpu.memory_space<vmem>>, vector<1x64xf32>
    %1301 = vector.broadcast %1300 : vector<1x64xf32> to vector<8x64xf32>
    %1302 = arith.addf %1299, %1301 : vector<8x64xf32>
    %cst_194 = arith.constant 0.000000e+00 : f32
    %1303 = vector.broadcast %cst_194 : f32 to vector<8x64xf32>
    %1304 = arith.maximumf %1302, %1303 : vector<8x64xf32>
    %1305 = vector.extract_strided_slice %1304 {offsets = [0, 0], sizes = [8, 32], strides = [1, 1]} : vector<8x64xf32> to vector<8x32xf32>
    %1306 = vector.extract_strided_slice %1304 {offsets = [0, 32], sizes = [8, 32], strides = [1, 1]} : vector<8x64xf32> to vector<8x32xf32>
    %c0_195 = arith.constant 0 : index
    %c0_196 = arith.constant 0 : index
    %1307 = vector.load %arg16[%c0_195, %c0_196] : memref<32x32xf32, #tpu.memory_space<vmem>>, vector<32x32xf32>
    %cst_197 = arith.constant dense<0.000000e+00> : vector<8x32xf32>
    %1308 = tpu.matmul %1305, %1307, %cst_197 {dimension_numbers = #tpu.dot_dimension_numbers<[1], [0], [0], [1], [0, 0, 1, 1], [], []>} : vector<8x32xf32>, vector<32x32xf32>, vector<8x32xf32> -> vector<8x32xf32>
    %cst_198 = arith.constant dense<0.000000e+00> : vector<8x8xf32>
    %1309 = tpu.matmul %1306, %1308, %cst_198 {dimension_numbers = #tpu.dot_dimension_numbers<[1], [1], [0], [0], [0, 0, 1, 0], [], []>} : vector<8x32xf32>, vector<8x32xf32>, vector<8x8xf32> -> vector<8x8xf32>
    %c0_199 = arith.constant 0 : index
    %c0_200 = arith.constant 0 : index
    %1310 = vector.load %arg17[%c0_199, %c0_200] : memref<1x32xf32, #tpu.memory_space<vmem>>, vector<1x32xf32>
    %cst_201 = arith.constant dense<0.000000e+00> : vector<1x8xf32>
    %1311 = tpu.matmul %1310, %1305, %cst_201 {dimension_numbers = #tpu.dot_dimension_numbers<[1], [1], [0], [0], [0, 0, 1, 0], [], []>} : vector<1x32xf32>, vector<8x32xf32>, vector<1x8xf32> -> vector<1x8xf32>
    %1312 = vector.broadcast %1311 : vector<1x8xf32> to vector<8x8xf32>
    %1313 = arith.addf %1309, %1312 : vector<8x8xf32>
    %c0_202 = arith.constant 0 : index
    %c0_203 = arith.constant 0 : index
    %1314 = vector.load %arg18[%c0_202, %c0_203] : memref<8x8xf32, #tpu.memory_space<vmem>>, vector<8x8xf32>
    tpu.vector_store %arg18[%c0_202, %c0_203], %1313 {strides = array<i32>} : memref<8x8xf32, #tpu.memory_space<vmem>>, vector<8x8xf32>,
    return
  }
  func.func @transform_0(%arg0: i32) -> (i32, i32) {
    %c0_i32 = arith.constant 0 : i32
    %c0_i32_0 = arith.constant 0 : i32
    %c0_i32_1 = arith.constant 0 : i32
    return %c0_i32, %c0_i32_0 : i32, i32
  }
  func.func @transform_1(%arg0: i32) -> (i32, i32) {
    %c0_i32 = arith.constant 0 : i32
    %c0_i32_0 = arith.constant 0 : i32
    %c0_i32_1 = arith.constant 0 : i32
    return %c0_i32, %c0_i32_0 : i32, i32
  }
  func.func @transform_2(%arg0: i32) -> (i32, i32) {
    %c0_i32 = arith.constant 0 : i32
    %c0_i32_0 = arith.constant 0 : i32
    %c0_i32_1 = arith.constant 0 : i32
    return %c0_i32, %c0_i32_0 : i32, i32
  }
  func.func @transform_3(%arg0: i32) -> (i32, i32) {
    %c0_i32 = arith.constant 0 : i32
    %c0_i32_0 = arith.constant 0 : i32
    %c0_i32_1 = arith.constant 0 : i32
    return %c0_i32, %c0_i32_0 : i32, i32
  }
  func.func @transform_4(%arg0: i32) -> (i32, i32) {
    %c0_i32 = arith.constant 0 : i32
    %c0_i32_0 = arith.constant 0 : i32
    %c0_i32_1 = arith.constant 0 : i32
    return %c0_i32, %c0_i32_0 : i32, i32
  }
  func.func @transform_5(%arg0: i32) -> (i32, i32) {
    %c0_i32 = arith.constant 0 : i32
    %c0_i32_0 = arith.constant 0 : i32
    %c0_i32_1 = arith.constant 0 : i32
    return %c0_i32, %c0_i32_0 : i32, i32
  }
  func.func @transform_6(%arg0: i32) -> (i32, i32) {
    %c0_i32 = arith.constant 0 : i32
    %c0_i32_0 = arith.constant 0 : i32
    %c0_i32_1 = arith.constant 0 : i32
    return %c0_i32, %c0_i32_0 : i32, i32
  }
  func.func @transform_7(%arg0: i32) -> (i32, i32) {
    %c0_i32 = arith.constant 0 : i32
    %c0_i32_0 = arith.constant 0 : i32
    %c0_i32_1 = arith.constant 0 : i32
    return %c0_i32, %c0_i32_0 : i32, i32
  }
  func.func @transform_8(%arg0: i32) -> (i32, i32) {
    %c0_i32 = arith.constant 0 : i32
    %c0_i32_0 = arith.constant 0 : i32
    %c0_i32_1 = arith.constant 0 : i32
    return %c0_i32, %c0_i32_0 : i32, i32
  }
  func.func @transform_9(%arg0: i32) -> (i32, i32) {
    %c0_i32 = arith.constant 0 : i32
    %c0_i32_0 = arith.constant 0 : i32
    %c0_i32_1 = arith.constant 0 : i32
    return %c0_i32, %c0_i32_0 : i32, i32
  }
  func.func @transform_10(%arg0: i32) -> (i32, i32) {
    %c0_i32 = arith.constant 0 : i32
    %c0_i32_0 = arith.constant 0 : i32
    %c0_i32_1 = arith.constant 0 : i32
    return %c0_i32, %c0_i32_0 : i32, i32
  }
  func.func @transform_11(%arg0: i32) -> (i32, i32) {
    %c0_i32 = arith.constant 0 : i32
    %c0_i32_0 = arith.constant 0 : i32
    %c0_i32_1 = arith.constant 0 : i32
    return %c0_i32, %c0_i32_0 : i32, i32
  }
  func.func @transform_12(%arg0: i32) -> (i32, i32) {
    %c0_i32 = arith.constant 0 : i32
    %c0_i32_0 = arith.constant 0 : i32
    %c0_i32_1 = arith.constant 0 : i32
    return %c0_i32, %c0_i32_0 : i32, i32
  }
  func.func @transform_13(%arg0: i32) -> (i32, i32) {
    %c0_i32 = arith.constant 0 : i32
    %c0_i32_0 = arith.constant 0 : i32
    %c0_i32_1 = arith.constant 0 : i32
    return %c0_i32, %c0_i32_0 : i32, i32
  }
  func.func @transform_14(%arg0: i32) -> (i32, i32) {
    %c0_i32 = arith.constant 0 : i32
    %c0_i32_0 = arith.constant 0 : i32
    %c0_i32_1 = arith.constant 0 : i32
    return %c0_i32, %c0_i32_0 : i32, i32
  }
  func.func @transform_15(%arg0: i32) -> (i32, i32) {
    %c0_i32 = arith.constant 0 : i32
    %c0_i32_0 = arith.constant 0 : i32
    %c0_i32_1 = arith.constant 0 : i32
    return %c0_i32, %c0_i32_0 : i32, i32
  }
  func.func @transform_16(%arg0: i32) -> (i32, i32) {
    %c0_i32 = arith.constant 0 : i32
    %c0_i32_0 = arith.constant 0 : i32
    %c0_i32_1 = arith.constant 0 : i32
    return %c0_i32, %c0_i32_0 : i32, i32
  }
  func.func @transform_17(%arg0: i32) -> (i32, i32) {
    %c0_i32 = arith.constant 0 : i32
    %c0_i32_0 = arith.constant 0 : i32
    %c0_i32_1 = arith.constant 0 : i32
    return %c0_i32, %c0_i32_0 : i32, i32
  }
}

</mosaic_0001>

<llo_original>
// kernel: parser_forward.1
$region0: #{parser_forward.1}
  #allocation0 [shape = 'u32[]', space=smem, size = 0x4, offset = 0x4, fixed_abs, tag = 'smem constant byte address 0x4 - core index']
  #allocation1 [shape = 'u32[144,128]{1,0:T(1,128)}', space=vmem, size = 0x12000, scoped, tag = 'internal scratch']
  %s0 = inlined_call_operand.vmem [shape: f32[8,32], index: 0, kind: input, shape index: {}]
  %s1 = inlined_call_operand.vmem [shape: f32[32,128], index: 1, kind: input, shape index: {}]
  %s2 = inlined_call_operand.hbm [shape: f32[16,64], index: 2, kind: input, shape index: {}]
  %s3 = inlined_call_operand.hbm [shape: f32[16,64], index: 3, kind: input, shape index: {}]
  %s4 = inlined_call_operand.hbm [shape: f32[1,128], index: 4, kind: input, shape index: {}]
  %s5 = inlined_call_operand.vmem [shape: f32[32,128], index: 5, kind: input, shape index: {}]
  %s6 = inlined_call_operand.vmem [shape: f32[16,64], index: 6, kind: input, shape index: {}]
  %s7 = inlined_call_operand.vmem [shape: f32[16,64], index: 7, kind: input, shape index: {}]
  %s8 = inlined_call_operand.hbm [shape: f32[1,128], index: 8, kind: input, shape index: {}]
  %s9 = inlined_call_operand.vmem [shape: f32[32,128], index: 9, kind: input, shape index: {}]
  %s10 = inlined_call_operand.vmem [shape: f32[16,64], index: 10, kind: input, shape index: {}]
  %s11 = inlined_call_operand.vmem [shape: f32[16,64], index: 11, kind: input, shape index: {}]
  %s12 = inlined_call_operand.vmem [shape: f32[1,128], index: 12, kind: input, shape index: {}]
  %s13 = inlined_call_operand.vmem [shape: f32[32,64], index: 13, kind: input, shape index: {}]
  %s14 = inlined_call_operand.vmem [shape: f32[1,64], index: 14, kind: input, shape index: {}]
  %s15 = inlined_call_operand.vmem [shape: f32[32,32], index: 15, kind: input, shape index: {}]
  %s16 = inlined_call_operand.vmem [shape: f32[1,32], index: 16, kind: input, shape index: {}]
  %s17 = inlined_call_operand.hbm [shape: f32[8,8], index: 17, kind: output, shape index: {}]
  %s18 = sld [smem:[#allocation0]]
  $region94: #{parser_forward.1} parent=0
    _
  %s20 = ssub.s32 1, %s18
  %s21 = scalar_select 0, %s20, %s18
  $region1: #{parser_forward.1} parent=0
    #allocation2 [shape = 'u8[8192]{0}', space=vmem, size = 0x2000, scoped, tag = 'input window, operand 2, single buffered']
    #allocation3 [shape = 's32[1]{0}', space=sflag, size = 0x4, scoped, tag = 'scoped memory for parser_forward.1']
    #allocation4 [shape = 's32[1]{0}', space=sflag, size = 0x4, scoped, tag = 'scoped memory for parser_forward.1']
    #allocation5 [shape = 'u8[8192]{0}', space=vmem, size = 0x2000, scoped, tag = 'input window, operand 3, single buffered']
    #allocation6 [shape = 's32[1]{0}', space=sflag, size = 0x4, scoped, tag = 'scoped memory for parser_forward.1']
    #allocation7 [shape = 'u8[512]{0}', space=vmem, size = 0x400, scoped, tag = 'input window, operand 4, single buffered']
    #allocation8 [shape = 'u8[512]{0}', space=vmem, size = 0x400, scoped, tag = 'input window, operand 8, single buffered']
    #allocation9 [shape = 's32[1]{0}', space=sflag, size = 0x4, scoped, tag = 'scoped memory for parser_forward.1']
    #allocation10 [shape = 'u8[4096]{0}', space=vmem, size = 0x1000, scoped, tag = 'output window, operand 0, single buffered']
    %22 = vsyncpa [#allocation3], 0
    %23 = vsyncpa [#allocation6], 0
    %24 = vsyncpa [#allocation9], 0
    %25 = vsyncpa [#allocation4], 0
    // Predicated region
    $region2: #{parser_forward.1} parent=1 // pred_check
      _
    $region3: #{parser_forward.1} parent=1 // pred_check_branch
      %27 = sbr.rel (0) target = $region5
    $region4: #{parser_forward.1} parent=1 // pred_region
      _
    $region5: #{parser_forward.1} parent=1 // pred_fallthru
      _
    // Predicated region
    $region6: #{parser_forward.1} parent=1 // pred_check
      _
    $region7: #{parser_forward.1} parent=1 // pred_check_branch
      %29 = sbr.rel (0) target = $region9
    $region8: #{parser_forward.1} parent=1 // pred_region
      _
    $region9: #{parser_forward.1} parent=1 // pred_fallthru
      _
    // Predicated region
    $region10: #{parser_forward.1} parent=1 // pred_check
      _
    $region11: #{parser_forward.1} parent=1 // pred_check_branch
      %31 = sbr.rel (0) target = $region13
    $region12: #{parser_forward.1} parent=1 // pred_region
      %s33 = ssub.s32 256, 256
      %34 = vsyncadd [#allocation3], %s33
      %s35 = sshll.u32 [#allocation2], 4
      %s36 = int_to_ptr.vmem [resolvable:$true] %s35
      %41 = dma.hbm_to_vmem [thread:$0]  %s2, 256, %s36, [#allocation3], 128, 128, 8
    $region13: #{parser_forward.1} parent=1 // pred_fallthru
      _
    // Predicated region
    $region14: #{parser_forward.1} parent=1 // pred_check
      _
    $region15: #{parser_forward.1} parent=1 // pred_check_branch
      %43 = sbr.rel (0) target = $region17
    $region16: #{parser_forward.1} parent=1 // pred_region
      %s45 = ssub.s32 256, 256
      %46 = vsyncadd [#allocation6], %s45
      %s47 = sshll.u32 [#allocation5], 4
      %s48 = int_to_ptr.vmem [resolvable:$true] %s47
      %53 = dma.hbm_to_vmem [thread:$0]  %s3, 256, %s48, [#allocation6], 128, 128, 8
    $region17: #{parser_forward.1} parent=1 // pred_fallthru
      _
    // Predicated region
    $region18: #{parser_forward.1} parent=1 // pred_check
      _
    $region19: #{parser_forward.1} parent=1 // pred_check_branch
      %55 = sbr.rel (0) target = $region21
    $region20: #{parser_forward.1} parent=1 // pred_region
      %s57 = ssub.s32 16, 16
      %58 = vsyncadd [#allocation6], %s57
      %s60 = sshll.u32 [#allocation7], 4
      %s61 = int_to_ptr.vmem [resolvable:$true] %s60
      %63 = dma.hbm_to_vmem [thread:$0]  %s4, 16, %s61, [#allocation6]
    $region21: #{parser_forward.1} parent=1 // pred_fallthru
      _
    // Predicated region
    $region22: #{parser_forward.1} parent=1 // pred_check
      _
    $region23: #{parser_forward.1} parent=1 // pred_check_branch
      %65 = sbr.rel (0) target = $region25
    $region24: #{parser_forward.1} parent=1 // pred_region
      _
    $region25: #{parser_forward.1} parent=1 // pred_fallthru
      _
    // Predicated region
    $region26: #{parser_forward.1} parent=1 // pred_check
      _
    $region27: #{parser_forward.1} parent=1 // pred_check_branch
      %67 = sbr.rel (0) target = $region29
    $region28: #{parser_forward.1} parent=1 // pred_region
      _
    $region29: #{parser_forward.1} parent=1 // pred_fallthru
      _
    // Predicated region
    $region30: #{parser_forward.1} parent=1 // pred_check
      _
    $region31: #{parser_forward.1} parent=1 // pred_check_branch
      %69 = sbr.rel (0) target = $region33
    $region32: #{parser_forward.1} parent=1 // pred_region
      _
    $region33: #{parser_forward.1} parent=1 // pred_fallthru
      _
    // Predicated region
    $region34: #{parser_forward.1} parent=1 // pred_check
      _
    $region35: #{parser_forward.1} parent=1 // pred_check_branch
      %71 = sbr.rel (0) target = $region37
    $region36: #{parser_forward.1} parent=1 // pred_region
      %s73 = ssub.s32 16, 16
      %74 = vsyncadd [#allocation9], %s73
      %s76 = sshll.u32 [#allocation8], 4
      %s77 = int_to_ptr.vmem [resolvable:$true] %s76
      %79 = dma.hbm_to_vmem [thread:$0]  %s8, 16, %s77, [#allocation9]
    $region37: #{parser_forward.1} parent=1 // pred_fallthru
      _
    // Predicated region
    $region38: #{parser_forward.1} parent=1 // pred_check
      _
    $region39: #{parser_forward.1} parent=1 // pred_check_branch
      %81 = sbr.rel (0) target = $region41
    $region40: #{parser_forward.1} parent=1 // pred_region
      _
    $region41: #{parser_forward.1} parent=1 // pred_fallthru
      _
    // Predicated region
    $region42: #{parser_forward.1} parent=1 // pred_check
      _
    $region43: #{parser_forward.1} parent=1 // pred_check_branch
      %83 = sbr.rel (0) target = $region45
    $region44: #{parser_forward.1} parent=1 // pred_region
      _
    $region45: #{parser_forward.1} parent=1 // pred_fallthru
      _
    // Predicated region
    $region46: #{parser_forward.1} parent=1 // pred_check
      _
    $region47: #{parser_forward.1} parent=1 // pred_check_branch
      %85 = sbr.rel (0) target = $region49
    $region48: #{parser_forward.1} parent=1 // pred_region
      _
    $region49: #{parser_forward.1} parent=1 // pred_fallthru
      _
    // Predicated region
    $region50: #{parser_forward.1} parent=1 // pred_check
      _
    $region51: #{parser_forward.1} parent=1 // pred_check_branch
      %87 = sbr.rel (0) target = $region53
    $region52: #{parser_forward.1} parent=1 // pred_region
      _
    $region53: #{parser_forward.1} parent=1 // pred_fallthru
      _
    // Predicated region
    $region54: #{parser_forward.1} parent=1 // pred_check
      _
    $region55: #{parser_forward.1} parent=1 // pred_check_branch
      %89 = sbr.rel (0) target = $region57
    $region56: #{parser_forward.1} parent=1 // pred_region
      _
    $region57: #{parser_forward.1} parent=1 // pred_fallthru
      _
    // Predicated region
    $region58: #{parser_forward.1} parent=1 // pred_check
      _
    $region59: #{parser_forward.1} parent=1 // pred_check_branch
      %91 = sbr.rel (0) target = $region61
    $region60: #{parser_forward.1} parent=1 // pred_region
      _
    $region61: #{parser_forward.1} parent=1 // pred_fallthru
      _
    // Predicated region
    $region62: #{parser_forward.1} parent=1 // pred_check
      _
    $region63: #{parser_forward.1} parent=1 // pred_check_branch
      %93 = sbr.rel (0) target = $region65
    $region64: #{parser_forward.1} parent=1 // pred_region
      _
    $region65: #{parser_forward.1} parent=1 // pred_fallthru
      _
    // Predicated region
    $region66: #{parser_forward.1} parent=1 // pred_check
      _
    $region67: #{parser_forward.1} parent=1 // pred_check_branch
      %95 = sbr.rel (0) target = $region69
    $region68: #{parser_forward.1} parent=1 // pred_region
      _
    $region69: #{parser_forward.1} parent=1 // pred_fallthru
      _
    // Predicated region
    $region70: #{parser_forward.1} parent=1 // pred_check
      _
    $region71: #{parser_forward.1} parent=1 // pred_check_branch
      %97 = sbr.rel (0) target = $region73
    $region72: #{parser_forward.1} parent=1 // pred_region
      %98 = dma.done [#allocation3], 256
    $region73: #{parser_forward.1} parent=1 // pred_fallthru
      _
    // Predicated region
    $region74: #{parser_forward.1} parent=1 // pred_check
      _
    $region75: #{parser_forward.1} parent=1 // pred_check_branch
      %100 = sbr.rel (0) target = $region77
    $region76: #{parser_forward.1} parent=1 // pred_region
      %101 = dma.done [#allocation6], 256
    $region77: #{parser_forward.1} parent=1 // pred_fallthru
      _
    // Predicated region
    $region78: #{parser_forward.1} parent=1 // pred_check
      _
    $region79: #{parser_forward.1} parent=1 // pred_check_branch
      %103 = sbr.rel (0) target = $region81
    $region80: #{parser_forward.1} parent=1 // pred_region
      %104 = dma.done [#allocation6], 16
    $region81: #{parser_forward.1} parent=1 // pred_fallthru
      _
    // Predicated region
    $region82: #{parser_forward.1} parent=1 // pred_check
      _
    $region83: #{parser_forward.1} parent=1 // pred_check_branch
      %106 = sbr.rel (0) target = $region85
    $region84: #{parser_forward.1} parent=1 // pred_region
      %107 = dma.done [#allocation9], 16
    $region85: #{parser_forward.1} parent=1 // pred_fallthru
      _
    %v108 = vlaneseq
    %v109 = vshrl.u32 %v108, 7
    %v110 = vld [vmem:[%s0] sm:$0xff]
    %v111 = vld [vmem:[%s1] sm:$0xff]
    %v112 = vld [vmem:[%s1 + $0x8] sm:$0xff]
    %v113 = vld [vmem:[%s1 + $0x10] sm:$0xff]
    %v114 = vld [vmem:[%s1 + $0x18] sm:$0xff]
    %v115 = vld [vmem:[#allocation7] sm:$0x1]
    %v117 = vlaneseq
    %v118 = vshrl.u32 %v117, 7
    %v119 = vsub.s32 0, %v118
    %v120 = vrot.slane %v115, %v119
    %vm122 = vcmask 261120
    %v124 = vsel %vm122, %v110, 0
    %126 = vmatprep.subr.mxu0 0.0
    %127 = vmatpush1.msra.mxu0 0.0
    %128 = vmatprep.subr.mxu0 0.0
    %129 = vmatpush1.msra.mxu0 0.0
    %130 = vmatprep.subr.mxu0 0.0
    %131 = vmatpush1.msra.mxu0 0.0
    %132 = vmatprep.subr.mxu0 0.0
    %133 = vmatpush1.msra.mxu0 0.0
    %134 = vmatprep.subr.mxu0 0.0
    %135 = vmatpush1.msra.mxu0 0.0
    %136 = vmatprep.subr.mxu0 0.0
    %137 = vmatpush1.msra.mxu0 0.0
    %138 = vmatprep.subr.mxu0 0.0
    %139 = vmatpush1.msra.mxu0 0.0
    %140 = vmatprep.subr.mxu0 0.0
    %141 = vmatpush1.msra.mxu0 0.0
    %142 = vmatprep.subr.mxu0 0.0
    %143 = vmatpush1.msra.mxu0 0.0
    %144 = vmatprep.subr.mxu0 0.0
    %145 = vmatpush1.msra.mxu0 0.0
    %146 = vmatprep.subr.mxu0 0.0
    %147 = vmatpush1.msra.mxu0 0.0
    %148 = vmatprep.subr.mxu0 0.0
    %149 = vmatpush1.msra.mxu0 0.0
    %150 = vmatprep.subr.mxu0 0.0
    %151 = vmatpush1.msra.mxu0 %v114
    %152 = vmatprep.subr.mxu0 0.0
    %153 = vmatpush1.msra.mxu0 %v113
    %154 = vmatprep.subr.mxu0 0.0
    %155 = vmatpush1.msra.mxu0 %v112
    %156 = vmatprep.subr.mxu0 0.0
    %157 = vmatpush1.msra.mxu0 %v111
    %158 = vmatprep.subr.mxu0 0.0
    %159 = vmatpush2.msra.mxu0 0.0
    %160 = vmatprep.subr.mxu0 0.0
    %161 = vmatpush2.msra.mxu0 0.0
    %162 = vmatprep.subr.mxu0 0.0
    %163 = vmatpush2.msra.mxu0 0.0
    %164 = vmatprep.subr.mxu0 0.0
    %165 = vmatpush2.msra.mxu0 0.0
    %166 = vmatprep.subr.mxu0 0.0
    %167 = vmatpush2.msra.mxu0 0.0
    %168 = vmatprep.subr.mxu0 0.0
    %169 = vmatpush2.msra.mxu0 0.0
    %170 = vmatprep.subr.mxu0 0.0
    %171 = vmatpush2.msra.mxu0 0.0
    %172 = vmatprep.subr.mxu0 0.0
    %173 = vmatpush2.msra.mxu0 0.0
    %174 = vmatprep.subr.mxu0 0.0
    %175 = vmatpush2.msra.mxu0 0.0
    %176 = vmatprep.subr.mxu0 0.0
    %177 = vmatpush2.msra.mxu0 0.0
    %178 = vmatprep.subr.mxu0 0.0
    %179 = vmatpush2.msra.mxu0 0.0
    %180 = vmatprep.subr.mxu0 0.0
    %181 = vmatpush2.msra.mxu0 0.0
    %182 = vmatprep.subr.mxu0 0.0
    %183 = vmatpush2.msra.mxu0 0.0
    %184 = vmatprep.subr.mxu0 0.0
    %185 = vmatpush2.msra.mxu0 0.0
    %186 = vmatprep.subr.mxu0 0.0
    %187 = vmatpush2.msra.mxu0 0.0
    %188 = vmatprep.subr.mxu0 0.0
    %189 = vmatpush2.msra.mxu0 0.0
    %190 = vmatprep.mubr.f32.mxu0 0.0
    %191 = vmatmul.mubr.f32.gmra.mxu0 %v124
    %v192 = vpop.f32.mrf.mxu0
    %v193 = vadd.f32 %v120, %v192
    %v194 = vpop.f32.mrf.mxu0
    %195 = vdwg.mxu0
    %v196 = vld [vmem:[#allocation2] sm:$0xff]
    %v197 = vld [vmem:[#allocation2 + $0x8] sm:$0xff]
    %v198 = vld [vmem:[#allocation5] sm:$0xff]
    %v199 = vld [vmem:[#allocation5 + $0x8] sm:$0xff]
    %vm200 = vcmask 130048
    %v202 = vsel %vm200, 0.0, 0
    %204 = vmatprep.subr.mxu0 0.0
    %205 = vmatpush1.msra.mxu0 0.0
    %206 = vmatprep.subr.mxu0 0.0
    %207 = vmatpush1.msra.mxu0 0.0
    %208 = vmatprep.subr.mxu0 0.0
    %209 = vmatpush1.msra.mxu0 0.0
    %210 = vmatprep.subr.mxu0 0.0
    %211 = vmatpush1.msra.mxu0 0.0
    %212 = vmatprep.subr.mxu0 0.0
    %213 = vmatpush1.msra.mxu0 0.0
    %214 = vmatprep.subr.mxu0 0.0
    %215 = vmatpush1.msra.mxu0 0.0
    %216 = vmatprep.subr.mxu0 0.0
    %217 = vmatpush1.msra.mxu0 0.0
    %218 = vmatprep.subr.mxu0 0.0
    %219 = vmatpush1.msra.mxu0 0.0
    %220 = vmatprep.subr.mxu0 0.0
    %221 = vmatpush1.msra.mxu0 0.0
    %222 = vmatprep.subr.mxu0 0.0
    %223 = vmatpush1.msra.mxu0 0.0
    %224 = vmatprep.subr.mxu0 0.0
    %225 = vmatpush1.msra.mxu0 0.0
    %226 = vmatprep.subr.mxu0 0.0
    %227 = vmatpush1.msra.mxu0 0.0
    %228 = vmatprep.subr.mxu0 0.0
    %229 = vmatpush1.msra.mxu0 0.0
    %230 = vmatprep.subr.mxu0 0.0
    %231 = vmatpush1.msra.mxu0 0.0
    %232 = vmatprep.subr.mxu0 0.0
    %233 = vmatpush1.msra.mxu0 %v197
    %234 = vmatprep.subr.mxu0 0.0
    %235 = vmatpush1.msra.mxu0 %v196
    %236 = vmatprep.subr.mxu0 0.0
    %237 = vmatpush2.msra.mxu0 0.0
    %238 = vmatprep.subr.mxu0 0.0
    %239 = vmatpush2.msra.mxu0 0.0
    %240 = vmatprep.subr.mxu0 0.0
    %241 = vmatpush2.msra.mxu0 0.0
    %242 = vmatprep.subr.mxu0 0.0
    %243 = vmatpush2.msra.mxu0 0.0
    %244 = vmatprep.subr.mxu0 0.0
    %245 = vmatpush2.msra.mxu0 0.0
    %246 = vmatprep.subr.mxu0 0.0
    %247 = vmatpush2.msra.mxu0 0.0
    %248 = vmatprep.subr.mxu0 0.0
    %249 = vmatpush2.msra.mxu0 0.0
    %250 = vmatprep.subr.mxu0 0.0
    %251 = vmatpush2.msra.mxu0 0.0
    %252 = vmatprep.subr.mxu0 0.0
    %253 = vmatpush2.msra.mxu0 0.0
    %254 = vmatprep.subr.mxu0 0.0
    %255 = vmatpush2.msra.mxu0 0.0
    %256 = vmatprep.subr.mxu0 0.0
    %257 = vmatpush2.msra.mxu0 0.0
    %258 = vmatprep.subr.mxu0 0.0
    %259 = vmatpush2.msra.mxu0 0.0
    %260 = vmatprep.subr.mxu0 0.0
    %261 = vmatpush2.msra.mxu0 0.0
    %262 = vmatprep.subr.mxu0 0.0
    %263 = vmatpush2.msra.mxu0 0.0
    %264 = vmatprep.subr.mxu0 0.0
    %265 = vmatpush2.msra.mxu0 0.0
    %266 = vmatprep.subr.mxu0 0.0
    %267 = vmatpush2.msra.mxu0 0.0
    %268 = vmatprep.mubr.f32.mxu0 0.0
    %269 = vmatmul.mubr.f32.gmra.mxu0 %v202
    %v270 = vpop.f32.mrf.mxu0
    %v271 = vadd.f32 0.0, %v270
    %v272 = vpop.f32.mrf.mxu0
    %273 = vdwg.mxu0
    %v274 = vadd.f32 %v193, %v271
    %275 = vmatprep.subr.mxu0 0.0
    %276 = vmatpush1.msra.mxu0 0.0
    %277 = vmatprep.subr.mxu0 0.0
    %278 = vmatpush1.msra.mxu0 0.0
    %279 = vmatprep.subr.mxu0 0.0
    %280 = vmatpush1.msra.mxu0 0.0
    %281 = vmatprep.subr.mxu0 0.0
    %282 = vmatpush1.msra.mxu0 0.0
    %283 = vmatprep.subr.mxu0 0.0
    %284 = vmatpush1.msra.mxu0 0.0
    %285 = vmatprep.subr.mxu0 0.0
    %286 = vmatpush1.msra.mxu0 0.0
    %287 = vmatprep.subr.mxu0 0.0
    %288 = vmatpush1.msra.mxu0 0.0
    %289 = vmatprep.subr.mxu0 0.0
    %290 = vmatpush1.msra.mxu0 0.0
    %291 = vmatprep.subr.mxu0 0.0
    %292 = vmatpush1.msra.mxu0 0.0
    %293 = vmatprep.subr.mxu0 0.0
    %294 = vmatpush1.msra.mxu0 0.0
    %295 = vmatprep.subr.mxu0 0.0
    %296 = vmatpush1.msra.mxu0 0.0
    %297 = vmatprep.subr.mxu0 0.0
    %298 = vmatpush1.msra.mxu0 0.0
    %299 = vmatprep.subr.mxu0 0.0
    %300 = vmatpush1.msra.mxu0 0.0
    %301 = vmatprep.subr.mxu0 0.0
    %302 = vmatpush1.msra.mxu0 0.0
    %303 = vmatprep.subr.mxu0 0.0
    %304 = vmatpush1.msra.mxu0 %v199
    %305 = vmatprep.subr.mxu0 0.0
    %306 = vmatpush1.msra.mxu0 %v198
    %307 = vmatprep.subr.mxu0 0.0
    %308 = vmatpush2.msra.mxu0 0.0
    %309 = vmatprep.subr.mxu0 0.0
    %310 = vmatpush2.msra.mxu0 0.0
    %311 = vmatprep.subr.mxu0 0.0
    %312 = vmatpush2.msra.mxu0 0.0
    %313 = vmatprep.subr.mxu0 0.0
    %314 = vmatpush2.msra.mxu0 0.0
    %315 = vmatprep.subr.mxu0 0.0
    %316 = vmatpush2.msra.mxu0 0.0
    %317 = vmatprep.subr.mxu0 0.0
    %318 = vmatpush2.msra.mxu0 0.0
    %319 = vmatprep.subr.mxu0 0.0
    %320 = vmatpush2.msra.mxu0 0.0
    %321 = vmatprep.subr.mxu0 0.0
    %322 = vmatpush2.msra.mxu0 0.0
    %323 = vmatprep.subr.mxu0 0.0
    %324 = vmatpush2.msra.mxu0 0.0
    %325 = vmatprep.subr.mxu0 0.0
    %326 = vmatpush2.msra.mxu0 0.0
    %327 = vmatprep.subr.mxu0 0.0
    %328 = vmatpush2.msra.mxu0 0.0
    %329 = vmatprep.subr.mxu0 0.0
    %330 = vmatpush2.msra.mxu0 0.0
    %331 = vmatprep.subr.mxu0 0.0
    %332 = vmatpush2.msra.mxu0 0.0
    %333 = vmatprep.subr.mxu0 0.0
    %334 = vmatpush2.msra.mxu0 0.0
    %335 = vmatprep.subr.mxu0 0.0
    %336 = vmatpush2.msra.mxu0 0.0
    %337 = vmatprep.subr.mxu0 0.0
    %338 = vmatpush2.msra.mxu0 0.0
    %339 = vmatprep.mubr.f32.mxu0 0.0
    %340 = vmatmul.mubr.f32.gmra.mxu0 %v202
    %v341 = vpop.f32.mrf.mxu0
    %v342 = vadd.f32 0.0, %v341
    %v343 = vpop.f32.mrf.mxu0
    %344 = vdwg.mxu0
    %v346 = vrot.slane %v342, 1
    %347 = vrot.lane.b32.xlu0 %v346, 64
    %v348 = vpop.permute.xlu0 %347
    %v350 = vadd.f32 %v193, %v348
    %v351 = vxor.u32 %v274, 2147483648
    %v352 = vmul.f32 %v351, 1.442695
    %v353 = vpow.pop %v352
    %v354 = vadd.f32 %v353, 1.0
    %v355 = vrcp.pop %v354
    %v356 = vmul.f32 1.0, %v355
    %v357 = vxor.u32 %v350, 2147483648
    %v358 = vmul.f32 %v357, 1.442695
    %v359 = vpow.pop %v358
    %v360 = vadd.f32 %v359, 1.0
    %v361 = vrcp.pop %v360
    %v362 = vmul.f32 1.0, %v361
    %v363 = vtanh.pop %v274
    %v364 = vtanh.pop %v350
    %v365 = vmul.f32 %v356, 0.0
    %367 = vrot.lane.b32.xlu0 %v363, 80
    %v368 = vpop.permute.xlu0 %367
    %v370 = vmul.f32 %v356, %v368
    %372 = vrot.lane.b32.xlu0 %v370, 16
    %v373 = vpop.permute.xlu0 %372
    %v375 = vadd.f32 %v365, %v373
    %v376 = vmul.f32 %v362, 0.0
    %378 = vrot.lane.b32.xlu0 %v364, 80
    %v379 = vpop.permute.xlu0 %378
    %v381 = vmul.f32 %v362, %v379
    %383 = vrot.lane.b32.xlu0 %v381, 16
    %v384 = vpop.permute.xlu0 %383
    %v386 = vadd.f32 %v376, %v384
    %v387 = vtanh.pop %v375
    %389 = vrot.lane.b32.xlu0 %v387, 16
    %v390 = vpop.permute.xlu0 %389
    %v392 = vmul.f32 %v356, %v390
    %v393 = vtanh.pop %v386
    %395 = vrot.lane.b32.xlu0 %v393, 16
    %v396 = vpop.permute.xlu0 %395
    %v398 = vmul.f32 %v362, %v396
    %vm399 = vcmp.eq.s32.totalorder %v109, 0
    %v400 = vsel %vm399, 1, 0
    %vm401 = vcmp.eq.s32.totalorder %v400, 1
    %v402 = vlaneseq
    %v403 = vshrl.u32 %v402, 7
    %v404 = vsub.s32 0, %v403
    %v405 = vrot.slane %v392, %v404
    %v406 = vsel %vm401, %v405, 0.0
    %vm407 = vcmp.eq.s32.totalorder %v109, 7
    %v408 = vsel %vm407, 1, 0
    %vm409 = vcmp.eq.s32.totalorder %v408, 1
    %v410 = vlaneseq
    %v411 = vshrl.u32 %v410, 7
    %v412 = vsub.s32 7, %v411
    %v413 = vrot.slane %v398, %v412
    %v414 = vsel %vm409, %v413, 0.0
    %416 = vrot.lane.b32.xlu0 %v392, 96
    %v417 = vpop.permute.xlu0 %416
    %v418 = vsel %vm200, %v417, 0
    %420 = vmatprep.subr.mxu0 0.0
    %421 = vmatpush1.msra.mxu0 0.0
    %422 = vmatprep.subr.mxu0 0.0
    %423 = vmatpush1.msra.mxu0 0.0
    %424 = vmatprep.subr.mxu0 0.0
    %425 = vmatpush1.msra.mxu0 0.0
    %426 = vmatprep.subr.mxu0 0.0
    %427 = vmatpush1.msra.mxu0 0.0
    %428 = vmatprep.subr.mxu0 0.0
    %429 = vmatpush1.msra.mxu0 0.0
    %430 = vmatprep.subr.mxu0 0.0
    %431 = vmatpush1.msra.mxu0 0.0
    %432 = vmatprep.subr.mxu0 0.0
    %433 = vmatpush1.msra.mxu0 0.0
    %434 = vmatprep.subr.mxu0 0.0
    %435 = vmatpush1.msra.mxu0 0.0
    %436 = vmatprep.subr.mxu0 0.0
    %437 = vmatpush1.msra.mxu0 0.0
    %438 = vmatprep.subr.mxu0 0.0
    %439 = vmatpush1.msra.mxu0 0.0
    %440 = vmatprep.subr.mxu0 0.0
    %441 = vmatpush1.msra.mxu0 0.0
    %442 = vmatprep.subr.mxu0 0.0
    %443 = vmatpush1.msra.mxu0 0.0
    %444 = vmatprep.subr.mxu0 0.0
    %445 = vmatpush1.msra.mxu0 0.0
    %446 = vmatprep.subr.mxu0 0.0
    %447 = vmatpush1.msra.mxu0 0.0
    %448 = vmatprep.subr.mxu0 0.0
    %449 = vmatpush1.msra.mxu0 %v197
    %450 = vmatprep.subr.mxu0 0.0
    %451 = vmatpush1.msra.mxu0 %v196
    %452 = vmatprep.subr.mxu0 0.0
    %453 = vmatpush2.msra.mxu0 0.0
    %454 = vmatprep.subr.mxu0 0.0
    %455 = vmatpush2.msra.mxu0 0.0
    %456 = vmatprep.subr.mxu0 0.0
    %457 = vmatpush2.msra.mxu0 0.0
    %458 = vmatprep.subr.mxu0 0.0
    %459 = vmatpush2.msra.mxu0 0.0
    %460 = vmatprep.subr.mxu0 0.0
    %461 = vmatpush2.msra.mxu0 0.0
    %462 = vmatprep.subr.mxu0 0.0
    %463 = vmatpush2.msra.mxu0 0.0
    %464 = vmatprep.subr.mxu0 0.0
    %465 = vmatpush2.msra.mxu0 0.0
    %466 = vmatprep.subr.mxu0 0.0
    %467 = vmatpush2.msra.mxu0 0.0
    %468 = vmatprep.subr.mxu0 0.0
    %469 = vmatpush2.msra.mxu0 0.0
    %470 = vmatprep.subr.mxu0 0.0
    %471 = vmatpush2.msra.mxu0 0.0
    %472 = vmatprep.subr.mxu0 0.0
    %473 = vmatpush2.msra.mxu0 0.0
    %474 = vmatprep.subr.mxu0 0.0
    %475 = vmatpush2.msra.mxu0 0.0
    %476 = vmatprep.subr.mxu0 0.0
    %477 = vmatpush2.msra.mxu0 0.0
    %478 = vmatprep.subr.mxu0 0.0
    %479 = vmatpush2.msra.mxu0 0.0
    %480 = vmatprep.subr.mxu0 0.0
    %481 = vmatpush2.msra.mxu0 0.0
    %482 = vmatprep.subr.mxu0 0.0
    %483 = vmatpush2.msra.mxu0 0.0
    %484 = vmatprep.mubr.f32.mxu0 0.0
    %485 = vmatmul.mubr.f32.gmra.mxu0 %v418
    %v486 = vpop.f32.mrf.mxu0
    %v487 = vadd.f32 0.0, %v486
    %v488 = vpop.f32.mrf.mxu0
    %489 = vdwg.mxu0
    %v491 = vrot.slane %v487, 7
    %v493 = vadd.f32 %v193, %v491
    %v495 = vrot.slane %v398, 7
    %496 = vrot.lane.b32.xlu0 %v495, 32
    %v497 = vpop.permute.xlu0 %496
    %v498 = vsel %vm200, %v497, 0
    %500 = vmatprep.subr.mxu0 0.0
    %501 = vmatpush1.msra.mxu0 0.0
    %502 = vmatprep.subr.mxu0 0.0
    %503 = vmatpush1.msra.mxu0 0.0
    %504 = vmatprep.subr.mxu0 0.0
    %505 = vmatpush1.msra.mxu0 0.0
    %506 = vmatprep.subr.mxu0 0.0
    %507 = vmatpush1.msra.mxu0 0.0
    %508 = vmatprep.subr.mxu0 0.0
    %509 = vmatpush1.msra.mxu0 0.0
    %510 = vmatprep.subr.mxu0 0.0
    %511 = vmatpush1.msra.mxu0 0.0
    %512 = vmatprep.subr.mxu0 0.0
    %513 = vmatpush1.msra.mxu0 0.0
    %514 = vmatprep.subr.mxu0 0.0
    %515 = vmatpush1.msra.mxu0 0.0
    %516 = vmatprep.subr.mxu0 0.0
    %517 = vmatpush1.msra.mxu0 0.0
    %518 = vmatprep.subr.mxu0 0.0
    %519 = vmatpush1.msra.mxu0 0.0
    %520 = vmatprep.subr.mxu0 0.0
    %521 = vmatpush1.msra.mxu0 0.0
    %522 = vmatprep.subr.mxu0 0.0
    %523 = vmatpush1.msra.mxu0 0.0
    %524 = vmatprep.subr.mxu0 0.0
    %525 = vmatpush1.msra.mxu0 0.0
    %526 = vmatprep.subr.mxu0 0.0
    %527 = vmatpush1.msra.mxu0 0.0
    %528 = vmatprep.subr.mxu0 0.0
    %529 = vmatpush1.msra.mxu0 %v199
    %530 = vmatprep.subr.mxu0 0.0
    %531 = vmatpush1.msra.mxu0 %v198
    %532 = vmatprep.subr.mxu0 0.0
    %533 = vmatpush2.msra.mxu0 0.0
    %534 = vmatprep.subr.mxu0 0.0
    %535 = vmatpush2.msra.mxu0 0.0
    %536 = vmatprep.subr.mxu0 0.0
    %537 = vmatpush2.msra.mxu0 0.0
    %538 = vmatprep.subr.mxu0 0.0
    %539 = vmatpush2.msra.mxu0 0.0
    %540 = vmatprep.subr.mxu0 0.0
    %541 = vmatpush2.msra.mxu0 0.0
    %542 = vmatprep.subr.mxu0 0.0
    %543 = vmatpush2.msra.mxu0 0.0
    %544 = vmatprep.subr.mxu0 0.0
    %545 = vmatpush2.msra.mxu0 0.0
    %546 = vmatprep.subr.mxu0 0.0
    %547 = vmatpush2.msra.mxu0 0.0
    %548 = vmatprep.subr.mxu0 0.0
    %549 = vmatpush2.msra.mxu0 0.0
    %550 = vmatprep.subr.mxu0 0.0
    %551 = vmatpush2.msra.mxu0 0.0
    %552 = vmatprep.subr.mxu0 0.0
    %553 = vmatpush2.msra.mxu0 0.0
    %554 = vmatprep.subr.mxu0 0.0
    %555 = vmatpush2.msra.mxu0 0.0
    %556 = vmatprep.subr.mxu0 0.0
    %557 = vmatpush2.msra.mxu0 0.0
    %558 = vmatprep.subr.mxu0 0.0
    %559 = vmatpush2.msra.mxu0 0.0
    %560 = vmatprep.subr.mxu0 0.0
    %561 = vmatpush2.msra.mxu0 0.0
    %562 = vmatprep.subr.mxu0 0.0
    %563 = vmatpush2.msra.mxu0 0.0
    %564 = vmatprep.mubr.f32.mxu0 0.0
    %565 = vmatmul.mubr.f32.gmra.mxu0 %v498
    %v566 = vpop.f32.mrf.mxu0
    %v567 = vadd.f32 0.0, %v566
    %v568 = vpop.f32.mrf.mxu0
    %569 = vdwg.mxu0
    %v571 = vrot.slane %v567, 2
    %572 = vrot.lane.b32.xlu0 %v571, 64
    %v573 = vpop.permute.xlu0 %572
    %v575 = vadd.f32 %v193, %v573
    %v576 = vxor.u32 %v493, 2147483648
    %v577 = vmul.f32 %v576, 1.442695
    %v578 = vpow.pop %v577
    %v579 = vadd.f32 %v578, 1.0
    %v580 = vrcp.pop %v579
    %v581 = vmul.f32 1.0, %v580
    %v582 = vxor.u32 %v575, 2147483648
    %v583 = vmul.f32 %v582, 1.442695
    %v584 = vpow.pop %v583
    %v585 = vadd.f32 %v584, 1.0
    %v586 = vrcp.pop %v585
    %v587 = vmul.f32 1.0, %v586
    %v588 = vtanh.pop %v493
    %v589 = vtanh.pop %v575
    %v591 = vrot.slane %v375, 7
    %v593 = vmul.f32 %v581, %v591
    %595 = vrot.lane.b32.xlu0 %v588, 80
    %v596 = vpop.permute.xlu0 %595
    %v598 = vmul.f32 %v581, %v596
    %600 = vrot.lane.b32.xlu0 %v598, 16
    %v601 = vpop.permute.xlu0 %600
    %v603 = vadd.f32 %v593, %v601
    %v605 = vrot.slane %v386, 1
    %v607 = vmul.f32 %v587, %v605
    %609 = vrot.lane.b32.xlu0 %v589, 80
    %v610 = vpop.permute.xlu0 %609
    %v612 = vmul.f32 %v587, %v610
    %614 = vrot.lane.b32.xlu0 %v612, 16
    %v615 = vpop.permute.xlu0 %614
    %v617 = vadd.f32 %v607, %v615
    %v618 = vtanh.pop %v603
    %620 = vrot.lane.b32.xlu0 %v618, 16
    %v621 = vpop.permute.xlu0 %620
    %v623 = vmul.f32 %v581, %v621
    %v624 = vtanh.pop %v617
    %626 = vrot.lane.b32.xlu0 %v624, 16
    %v627 = vpop.permute.xlu0 %626
    %v629 = vmul.f32 %v587, %v627
    %vm630 = vcmp.eq.s32.totalorder %v109, 1
    %v631 = vsel %vm630, 1, 0
    %vm632 = vcmp.eq.s32.totalorder %v631, 1
    %v633 = vlaneseq
    %v634 = vshrl.u32 %v633, 7
    %v635 = vsub.s32 1, %v634
    %v636 = vrot.slane %v623, %v635
    %v637 = vsel %vm632, %v636, %v406
    %vm638 = vcmp.eq.s32.totalorder %v109, 6
    %v639 = vsel %vm638, 1, 0
    %vm640 = vcmp.eq.s32.totalorder %v639, 1
    %v641 = vlaneseq
    %v642 = vshrl.u32 %v641, 7
    %v643 = vsub.s32 6, %v642
    %v644 = vrot.slane %v629, %v643
    %v645 = vsel %vm640, %v644, %v414
    %v647 = vrot.slane %v623, 1
    %648 = vrot.lane.b32.xlu0 %v647, 96
    %v649 = vpop.permute.xlu0 %648
    %v650 = vsel %vm200, %v649, 0
    %652 = vmatprep.subr.mxu0 0.0
    %653 = vmatpush1.msra.mxu0 0.0
    %654 = vmatprep.subr.mxu0 0.0
    %655 = vmatpush1.msra.mxu0 0.0
    %656 = vmatprep.subr.mxu0 0.0
    %657 = vmatpush1.msra.mxu0 0.0
    %658 = vmatprep.subr.mxu0 0.0
    %659 = vmatpush1.msra.mxu0 0.0
    %660 = vmatprep.subr.mxu0 0.0
    %661 = vmatpush1.msra.mxu0 0.0
    %662 = vmatprep.subr.mxu0 0.0
    %663 = vmatpush1.msra.mxu0 0.0
    %664 = vmatprep.subr.mxu0 0.0
    %665 = vmatpush1.msra.mxu0 0.0
    %666 = vmatprep.subr.mxu0 0.0
    %667 = vmatpush1.msra.mxu0 0.0
    %668 = vmatprep.subr.mxu0 0.0
    %669 = vmatpush1.msra.mxu0 0.0
    %670 = vmatprep.subr.mxu0 0.0
    %671 = vmatpush1.msra.mxu0 0.0
    %672 = vmatprep.subr.mxu0 0.0
    %673 = vmatpush1.msra.mxu0 0.0
    %674 = vmatprep.subr.mxu0 0.0
    %675 = vmatpush1.msra.mxu0 0.0
    %676 = vmatprep.subr.mxu0 0.0
    %677 = vmatpush1.msra.mxu0 0.0
    %678 = vmatprep.subr.mxu0 0.0
    %679 = vmatpush1.msra.mxu0 0.0
    %680 = vmatprep.subr.mxu0 0.0
    %681 = vmatpush1.msra.mxu0 %v197
    %682 = vmatprep.subr.mxu0 0.0
    %683 = vmatpush1.msra.mxu0 %v196
    %684 = vmatprep.subr.mxu0 0.0
    %685 = vmatpush2.msra.mxu0 0.0
    %686 = vmatprep.subr.mxu0 0.0
    %687 = vmatpush2.msra.mxu0 0.0
    %688 = vmatprep.subr.mxu0 0.0
    %689 = vmatpush2.msra.mxu0 0.0
    %690 = vmatprep.subr.mxu0 0.0
    %691 = vmatpush2.msra.mxu0 0.0
    %692 = vmatprep.subr.mxu0 0.0
    %693 = vmatpush2.msra.mxu0 0.0
    %694 = vmatprep.subr.mxu0 0.0
    %695 = vmatpush2.msra.mxu0 0.0
    %696 = vmatprep.subr.mxu0 0.0
    %697 = vmatpush2.msra.mxu0 0.0
    %698 = vmatprep.subr.mxu0 0.0
    %699 = vmatpush2.msra.mxu0 0.0
    %700 = vmatprep.subr.mxu0 0.0
    %701 = vmatpush2.msra.mxu0 0.0
    %702 = vmatprep.subr.mxu0 0.0
    %703 = vmatpush2.msra.mxu0 0.0
    %704 = vmatprep.subr.mxu0 0.0
    %705 = vmatpush2.msra.mxu0 0.0
    %706 = vmatprep.subr.mxu0 0.0
    %707 = vmatpush2.msra.mxu0 0.0
    %708 = vmatprep.subr.mxu0 0.0
    %709 = vmatpush2.msra.mxu0 0.0
    %710 = vmatprep.subr.mxu0 0.0
    %711 = vmatpush2.msra.mxu0 0.0
    %712 = vmatprep.subr.mxu0 0.0
    %713 = vmatpush2.msra.mxu0 0.0
    %714 = vmatprep.subr.mxu0 0.0
    %715 = vmatpush2.msra.mxu0 0.0
    %716 = vmatprep.mubr.f32.mxu0 0.0
    %717 = vmatmul.mubr.f32.gmra.mxu0 %v650
    %v718 = vpop.f32.mrf.mxu0
    %v719 = vadd.f32 0.0, %v718
    %v720 = vpop.f32.mrf.mxu0
    %721 = vdwg.mxu0
    %v723 = vrot.slane %v719, 6
    %v725 = vadd.f32 %v193, %v723
    %v727 = vrot.slane %v629, 6
    %728 = vrot.lane.b32.xlu0 %v727, 32
    %v729 = vpop.permute.xlu0 %728
    %v730 = vsel %vm200, %v729, 0
    %732 = vmatprep.subr.mxu0 0.0
    %733 = vmatpush1.msra.mxu0 0.0
    %734 = vmatprep.subr.mxu0 0.0
    %735 = vmatpush1.msra.mxu0 0.0
    %736 = vmatprep.subr.mxu0 0.0
    %737 = vmatpush1.msra.mxu0 0.0
    %738 = vmatprep.subr.mxu0 0.0
    %739 = vmatpush1.msra.mxu0 0.0
    %740 = vmatprep.subr.mxu0 0.0
    %741 = vmatpush1.msra.mxu0 0.0
    %742 = vmatprep.subr.mxu0 0.0
    %743 = vmatpush1.msra.mxu0 0.0
    %744 = vmatprep.subr.mxu0 0.0
    %745 = vmatpush1.msra.mxu0 0.0
    %746 = vmatprep.subr.mxu0 0.0
    %747 = vmatpush1.msra.mxu0 0.0
    %748 = vmatprep.subr.mxu0 0.0
    %749 = vmatpush1.msra.mxu0 0.0
    %750 = vmatprep.subr.mxu0 0.0
    %751 = vmatpush1.msra.mxu0 0.0
    %752 = vmatprep.subr.mxu0 0.0
    %753 = vmatpush1.msra.mxu0 0.0
    %754 = vmatprep.subr.mxu0 0.0
    %755 = vmatpush1.msra.mxu0 0.0
    %756 = vmatprep.subr.mxu0 0.0
    %757 = vmatpush1.msra.mxu0 0.0
    %758 = vmatprep.subr.mxu0 0.0
    %759 = vmatpush1.msra.mxu0 0.0
    %760 = vmatprep.subr.mxu0 0.0
    %761 = vmatpush1.msra.mxu0 %v199
    %762 = vmatprep.subr.mxu0 0.0
    %763 = vmatpush1.msra.mxu0 %v198
    %764 = vmatprep.subr.mxu0 0.0
    %765 = vmatpush2.msra.mxu0 0.0
    %766 = vmatprep.subr.mxu0 0.0
    %767 = vmatpush2.msra.mxu0 0.0
    %768 = vmatprep.subr.mxu0 0.0
    %769 = vmatpush2.msra.mxu0 0.0
    %770 = vmatprep.subr.mxu0 0.0
    %771 = vmatpush2.msra.mxu0 0.0
    %772 = vmatprep.subr.mxu0 0.0
    %773 = vmatpush2.msra.mxu0 0.0
    %774 = vmatprep.subr.mxu0 0.0
    %775 = vmatpush2.msra.mxu0 0.0
    %776 = vmatprep.subr.mxu0 0.0
    %777 = vmatpush2.msra.mxu0 0.0
    %778 = vmatprep.subr.mxu0 0.0
    %779 = vmatpush2.msra.mxu0 0.0
    %780 = vmatprep.subr.mxu0 0.0
    %781 = vmatpush2.msra.mxu0 0.0
    %782 = vmatprep.subr.mxu0 0.0
    %783 = vmatpush2.msra.mxu0 0.0
    %784 = vmatprep.subr.mxu0 0.0
    %785 = vmatpush2.msra.mxu0 0.0
    %786 = vmatprep.subr.mxu0 0.0
    %787 = vmatpush2.msra.mxu0 0.0
    %788 = vmatprep.subr.mxu0 0.0
    %789 = vmatpush2.msra.mxu0 0.0
    %790 = vmatprep.subr.mxu0 0.0
    %791 = vmatpush2.msra.mxu0 0.0
    %792 = vmatprep.subr.mxu0 0.0
    %793 = vmatpush2.msra.mxu0 0.0
    %794 = vmatprep.subr.mxu0 0.0
    %795 = vmatpush2.msra.mxu0 0.0
    %796 = vmatprep.mubr.f32.mxu0 0.0
    %797 = vmatmul.mubr.f32.gmra.mxu0 %v730
    %v798 = vpop.f32.mrf.mxu0
    %v799 = vadd.f32 0.0, %v798
    %v800 = vpop.f32.mrf.mxu0
    %801 = vdwg.mxu0
    %v803 = vrot.slane %v799, 3
    %804 = vrot.lane.b32.xlu0 %v803, 64
    %v805 = vpop.permute.xlu0 %804
    %v807 = vadd.f32 %v193, %v805
    %v808 = vxor.u32 %v725, 2147483648
    %v809 = vmul.f32 %v808, 1.442695
    %v810 = vpow.pop %v809
    %v811 = vadd.f32 %v810, 1.0
    %v812 = vrcp.pop %v811
    %v813 = vmul.f32 1.0, %v812
    %v814 = vxor.u32 %v807, 2147483648
    %v815 = vmul.f32 %v814, 1.442695
    %v816 = vpow.pop %v815
    %v817 = vadd.f32 %v816, 1.0
    %v818 = vrcp.pop %v817
    %v819 = vmul.f32 1.0, %v818
    %v820 = vtanh.pop %v725
    %v821 = vtanh.pop %v807
    %v823 = vrot.slane %v603, 7
    %v825 = vmul.f32 %v813, %v823
    %827 = vrot.lane.b32.xlu0 %v820, 80
    %v828 = vpop.permute.xlu0 %827
    %v830 = vmul.f32 %v813, %v828
    %832 = vrot.lane.b32.xlu0 %v830, 16
    %v833 = vpop.permute.xlu0 %832
    %v835 = vadd.f32 %v825, %v833
    %v837 = vrot.slane %v617, 1
    %v839 = vmul.f32 %v819, %v837
    %841 = vrot.lane.b32.xlu0 %v821, 80
    %v842 = vpop.permute.xlu0 %841
    %v844 = vmul.f32 %v819, %v842
    %846 = vrot.lane.b32.xlu0 %v844, 16
    %v847 = vpop.permute.xlu0 %846
    %v849 = vadd.f32 %v839, %v847
    %v850 = vtanh.pop %v835
    %852 = vrot.lane.b32.xlu0 %v850, 16
    %v853 = vpop.permute.xlu0 %852
    %v855 = vmul.f32 %v813, %v853
    %v856 = vtanh.pop %v849
    %858 = vrot.lane.b32.xlu0 %v856, 16
    %v859 = vpop.permute.xlu0 %858
    %v861 = vmul.f32 %v819, %v859
    %vm862 = vcmp.eq.s32.totalorder %v109, 2
    %v863 = vsel %vm862, 1, 0
    %vm864 = vcmp.eq.s32.totalorder %v863, 1
    %v865 = vlaneseq
    %v866 = vshrl.u32 %v865, 7
    %v867 = vsub.s32 2, %v866
    %v868 = vrot.slane %v855, %v867
    %v869 = vsel %vm864, %v868, %v637
    %vm870 = vcmp.eq.s32.totalorder %v109, 5
    %v871 = vsel %vm870, 1, 0
    %vm872 = vcmp.eq.s32.totalorder %v871, 1
    %v873 = vlaneseq
    %v874 = vshrl.u32 %v873, 7
    %v875 = vsub.s32 5, %v874
    %v876 = vrot.slane %v861, %v875
    %v877 = vsel %vm872, %v876, %v645
    %v879 = vrot.slane %v855, 2
    %880 = vrot.lane.b32.xlu0 %v879, 96
    %v881 = vpop.permute.xlu0 %880
    %v882 = vsel %vm200, %v881, 0
    %884 = vmatprep.subr.mxu0 0.0
    %885 = vmatpush1.msra.mxu0 0.0
    %886 = vmatprep.subr.mxu0 0.0
    %887 = vmatpush1.msra.mxu0 0.0
    %888 = vmatprep.subr.mxu0 0.0
    %889 = vmatpush1.msra.mxu0 0.0
    %890 = vmatprep.subr.mxu0 0.0
    %891 = vmatpush1.msra.mxu0 0.0
    %892 = vmatprep.subr.mxu0 0.0
    %893 = vmatpush1.msra.mxu0 0.0
    %894 = vmatprep.subr.mxu0 0.0
    %895 = vmatpush1.msra.mxu0 0.0
    %896 = vmatprep.subr.mxu0 0.0
    %897 = vmatpush1.msra.mxu0 0.0
    %898 = vmatprep.subr.mxu0 0.0
    %899 = vmatpush1.msra.mxu0 0.0
    %900 = vmatprep.subr.mxu0 0.0
    %901 = vmatpush1.msra.mxu0 0.0
    %902 = vmatprep.subr.mxu0 0.0
    %903 = vmatpush1.msra.mxu0 0.0
    %904 = vmatprep.subr.mxu0 0.0
    %905 = vmatpush1.msra.mxu0 0.0
    %906 = vmatprep.subr.mxu0 0.0
    %907 = vmatpush1.msra.mxu0 0.0
    %908 = vmatprep.subr.mxu0 0.0
    %909 = vmatpush1.msra.mxu0 0.0
    %910 = vmatprep.subr.mxu0 0.0
    %911 = vmatpush1.msra.mxu0 0.0
    %912 = vmatprep.subr.mxu0 0.0
    %913 = vmatpush1.msra.mxu0 %v197
    %914 = vmatprep.subr.mxu0 0.0
    %915 = vmatpush1.msra.mxu0 %v196
    %916 = vmatprep.subr.mxu0 0.0
    %917 = vmatpush2.msra.mxu0 0.0
    %918 = vmatprep.subr.mxu0 0.0
    %919 = vmatpush2.msra.mxu0 0.0
    %920 = vmatprep.subr.mxu0 0.0
    %921 = vmatpush2.msra.mxu0 0.0
    %922 = vmatprep.subr.mxu0 0.0
    %923 = vmatpush2.msra.mxu0 0.0
    %924 = vmatprep.subr.mxu0 0.0
    %925 = vmatpush2.msra.mxu0 0.0
    %926 = vmatprep.subr.mxu0 0.0
    %927 = vmatpush2.msra.mxu0 0.0
    %928 = vmatprep.subr.mxu0 0.0
    %929 = vmatpush2.msra.mxu0 0.0
    %930 = vmatprep.subr.mxu0 0.0
    %931 = vmatpush2.msra.mxu0 0.0
    %932 = vmatprep.subr.mxu0 0.0
    %933 = vmatpush2.msra.mxu0 0.0
    %934 = vmatprep.subr.mxu0 0.0
    %935 = vmatpush2.msra.mxu0 0.0
    %936 = vmatprep.subr.mxu0 0.0
    %937 = vmatpush2.msra.mxu0 0.0
    %938 = vmatprep.subr.mxu0 0.0
    %939 = vmatpush2.msra.mxu0 0.0
    %940 = vmatprep.subr.mxu0 0.0
    %941 = vmatpush2.msra.mxu0 0.0
    %942 = vmatprep.subr.mxu0 0.0
    %943 = vmatpush2.msra.mxu0 0.0
    %944 = vmatprep.subr.mxu0 0.0
    %945 = vmatpush2.msra.mxu0 0.0
    %946 = vmatprep.subr.mxu0 0.0
    %947 = vmatpush2.msra.mxu0 0.0
    %948 = vmatprep.mubr.f32.mxu0 0.0
    %949 = vmatmul.mubr.f32.gmra.mxu0 %v882
    %v950 = vpop.f32.mrf.mxu0
    %v951 = vadd.f32 0.0, %v950
    %v952 = vpop.f32.mrf.mxu0
    %953 = vdwg.mxu0
    %v955 = vrot.slane %v951, 5
    %v957 = vadd.f32 %v193, %v955
    %v959 = vrot.slane %v861, 5
    %960 = vrot.lane.b32.xlu0 %v959, 32
    %v961 = vpop.permute.xlu0 %960
    %v962 = vsel %vm200, %v961, 0
    %964 = vmatprep.subr.mxu0 0.0
    %965 = vmatpush1.msra.mxu0 0.0
    %966 = vmatprep.subr.mxu0 0.0
    %967 = vmatpush1.msra.mxu0 0.0
    %968 = vmatprep.subr.mxu0 0.0
    %969 = vmatpush1.msra.mxu0 0.0
    %970 = vmatprep.subr.mxu0 0.0
    %971 = vmatpush1.msra.mxu0 0.0
    %972 = vmatprep.subr.mxu0 0.0
    %973 = vmatpush1.msra.mxu0 0.0
    %974 = vmatprep.subr.mxu0 0.0
    %975 = vmatpush1.msra.mxu0 0.0
    %976 = vmatprep.subr.mxu0 0.0
    %977 = vmatpush1.msra.mxu0 0.0
    %978 = vmatprep.subr.mxu0 0.0
    %979 = vmatpush1.msra.mxu0 0.0
    %980 = vmatprep.subr.mxu0 0.0
    %981 = vmatpush1.msra.mxu0 0.0
    %982 = vmatprep.subr.mxu0 0.0
    %983 = vmatpush1.msra.mxu0 0.0
    %984 = vmatprep.subr.mxu0 0.0
    %985 = vmatpush1.msra.mxu0 0.0
    %986 = vmatprep.subr.mxu0 0.0
    %987 = vmatpush1.msra.mxu0 0.0
    %988 = vmatprep.subr.mxu0 0.0
    %989 = vmatpush1.msra.mxu0 0.0
    %990 = vmatprep.subr.mxu0 0.0
    %991 = vmatpush1.msra.mxu0 0.0
    %992 = vmatprep.subr.mxu0 0.0
    %993 = vmatpush1.msra.mxu0 %v199
    %994 = vmatprep.subr.mxu0 0.0
    %995 = vmatpush1.msra.mxu0 %v198
    %996 = vmatprep.subr.mxu0 0.0
    %997 = vmatpush2.msra.mxu0 0.0
    %998 = vmatprep.subr.mxu0 0.0
    %999 = vmatpush2.msra.mxu0 0.0
    %1000 = vmatprep.subr.mxu0 0.0
    %1001 = vmatpush2.msra.mxu0 0.0
    %1002 = vmatprep.subr.mxu0 0.0
    %1003 = vmatpush2.msra.mxu0 0.0
    %1004 = vmatprep.subr.mxu0 0.0
    %1005 = vmatpush2.msra.mxu0 0.0
    %1006 = vmatprep.subr.mxu0 0.0
    %1007 = vmatpush2.msra.mxu0 0.0
    %1008 = vmatprep.subr.mxu0 0.0
    %1009 = vmatpush2.msra.mxu0 0.0
    %1010 = vmatprep.subr.mxu0 0.0
    %1011 = vmatpush2.msra.mxu0 0.0
    %1012 = vmatprep.subr.mxu0 0.0
    %1013 = vmatpush2.msra.mxu0 0.0
    %1014 = vmatprep.subr.mxu0 0.0
    %1015 = vmatpush2.msra.mxu0 0.0
    %1016 = vmatprep.subr.mxu0 0.0
    %1017 = vmatpush2.msra.mxu0 0.0
    %1018 = vmatprep.subr.mxu0 0.0
    %1019 = vmatpush2.msra.mxu0 0.0
    %1020 = vmatprep.subr.mxu0 0.0
    %1021 = vmatpush2.msra.mxu0 0.0
    %1022 = vmatprep.subr.mxu0 0.0
    %1023 = vmatpush2.msra.mxu0 0.0
    %1024 = vmatprep.subr.mxu0 0.0
    %1025 = vmatpush2.msra.mxu0 0.0
    %1026 = vmatprep.subr.mxu0 0.0
    %1027 = vmatpush2.msra.mxu0 0.0
    %1028 = vmatprep.mubr.f32.mxu0 0.0
    %1029 = vmatmul.mubr.f32.gmra.mxu0 %v962
    %v1030 = vpop.f32.mrf.mxu0
    %v1031 = vadd.f32 0.0, %v1030
    %v1032 = vpop.f32.mrf.mxu0
    %1033 = vdwg.mxu0
    %v1035 = vrot.slane %v1031, 4
    %1036 = vrot.lane.b32.xlu0 %v1035, 64
    %v1037 = vpop.permute.xlu0 %1036
    %v1039 = vadd.f32 %v193, %v1037
    %v1040 = vxor.u32 %v957, 2147483648
    %v1041 = vmul.f32 %v1040, 1.442695
    %v1042 = vpow.pop %v1041
    %v1043 = vadd.f32 %v1042, 1.0
    %v1044 = vrcp.pop %v1043
    %v1045 = vmul.f32 1.0, %v1044
    %v1046 = vxor.u32 %v1039, 2147483648
    %v1047 = vmul.f32 %v1046, 1.442695
    %v1048 = vpow.pop %v1047
    %v1049 = vadd.f32 %v1048, 1.0
    %v1050 = vrcp.pop %v1049
    %v1051 = vmul.f32 1.0, %v1050
    %v1052 = vtanh.pop %v957
    %v1053 = vtanh.pop %v1039
    %v1055 = vrot.slane %v835, 7
    %v1057 = vmul.f32 %v1045, %v1055
    %1059 = vrot.lane.b32.xlu0 %v1052, 80
    %v1060 = vpop.permute.xlu0 %1059
    %v1062 = vmul.f32 %v1045, %v1060
    %1064 = vrot.lane.b32.xlu0 %v1062, 16
    %v1065 = vpop.permute.xlu0 %1064
    %v1067 = vadd.f32 %v1057, %v1065
    %v1069 = vrot.slane %v849, 1
    %v1071 = vmul.f32 %v1051, %v1069
    %1073 = vrot.lane.b32.xlu0 %v1053, 80
    %v1074 = vpop.permute.xlu0 %1073
    %v1076 = vmul.f32 %v1051, %v1074
    %1078 = vrot.lane.b32.xlu0 %v1076, 16
    %v1079 = vpop.permute.xlu0 %1078
    %v1081 = vadd.f32 %v1071, %v1079
    %v1082 = vtanh.pop %v1067
    %1084 = vrot.lane.b32.xlu0 %v1082, 16
    %v1085 = vpop.permute.xlu0 %1084
    %v1087 = vmul.f32 %v1045, %v1085
    %v1088 = vtanh.pop %v1081
    %1090 = vrot.lane.b32.xlu0 %v1088, 16
    %v1091 = vpop.permute.xlu0 %1090
    %v1093 = vmul.f32 %v1051, %v1091
    %vm1094 = vcmp.eq.s32.totalorder %v109, 3
    %v1095 = vsel %vm1094, 1, 0
    %vm1096 = vcmp.eq.s32.totalorder %v1095, 1
    %v1097 = vlaneseq
    %v1098 = vshrl.u32 %v1097, 7
    %v1099 = vsub.s32 3, %v1098
    %v1100 = vrot.slane %v1087, %v1099
    %v1101 = vsel %vm1096, %v1100, %v869
    %vm1102 = vcmp.eq.s32.totalorder %v109, 4
    %v1103 = vsel %vm1102, 1, 0
    %vm1104 = vcmp.eq.s32.totalorder %v1103, 1
    %v1105 = vlaneseq
    %v1106 = vshrl.u32 %v1105, 7
    %v1107 = vsub.s32 4, %v1106
    %v1108 = vrot.slane %v1093, %v1107
    %v1109 = vsel %vm1104, %v1108, %v877
    %v1111 = vrot.slane %v1087, 3
    %1112 = vrot.lane.b32.xlu0 %v1111, 96
    %v1113 = vpop.permute.xlu0 %1112
    %v1114 = vsel %vm200, %v1113, 0
    %1116 = vmatprep.subr.mxu0 0.0
    %1117 = vmatpush1.msra.mxu0 0.0
    %1118 = vmatprep.subr.mxu0 0.0
    %1119 = vmatpush1.msra.mxu0 0.0
    %1120 = vmatprep.subr.mxu0 0.0
    %1121 = vmatpush1.msra.mxu0 0.0
    %1122 = vmatprep.subr.mxu0 0.0
    %1123 = vmatpush1.msra.mxu0 0.0
    %1124 = vmatprep.subr.mxu0 0.0
    %1125 = vmatpush1.msra.mxu0 0.0
    %1126 = vmatprep.subr.mxu0 0.0
    %1127 = vmatpush1.msra.mxu0 0.0
    %1128 = vmatprep.subr.mxu0 0.0
    %1129 = vmatpush1.msra.mxu0 0.0
    %1130 = vmatprep.subr.mxu0 0.0
    %1131 = vmatpush1.msra.mxu0 0.0
    %1132 = vmatprep.subr.mxu0 0.0
    %1133 = vmatpush1.msra.mxu0 0.0
    %1134 = vmatprep.subr.mxu0 0.0
    %1135 = vmatpush1.msra.mxu0 0.0
    %1136 = vmatprep.subr.mxu0 0.0
    %1137 = vmatpush1.msra.mxu0 0.0
    %1138 = vmatprep.subr.mxu0 0.0
    %1139 = vmatpush1.msra.mxu0 0.0
    %1140 = vmatprep.subr.mxu0 0.0
    %1141 = vmatpush1.msra.mxu0 0.0
    %1142 = vmatprep.subr.mxu0 0.0
    %1143 = vmatpush1.msra.mxu0 0.0
    %1144 = vmatprep.subr.mxu0 0.0
    %1145 = vmatpush1.msra.mxu0 %v197
    %1146 = vmatprep.subr.mxu0 0.0
    %1147 = vmatpush1.msra.mxu0 %v196
    %1148 = vmatprep.subr.mxu0 0.0
    %1149 = vmatpush2.msra.mxu0 0.0
    %1150 = vmatprep.subr.mxu0 0.0
    %1151 = vmatpush2.msra.mxu0 0.0
    %1152 = vmatprep.subr.mxu0 0.0
    %1153 = vmatpush2.msra.mxu0 0.0
    %1154 = vmatprep.subr.mxu0 0.0
    %1155 = vmatpush2.msra.mxu0 0.0
    %1156 = vmatprep.subr.mxu0 0.0
    %1157 = vmatpush2.msra.mxu0 0.0
    %1158 = vmatprep.subr.mxu0 0.0
    %1159 = vmatpush2.msra.mxu0 0.0
    %1160 = vmatprep.subr.mxu0 0.0
    %1161 = vmatpush2.msra.mxu0 0.0
    %1162 = vmatprep.subr.mxu0 0.0
    %1163 = vmatpush2.msra.mxu0 0.0
    %1164 = vmatprep.subr.mxu0 0.0
    %1165 = vmatpush2.msra.mxu0 0.0
    %1166 = vmatprep.subr.mxu0 0.0
    %1167 = vmatpush2.msra.mxu0 0.0
    %1168 = vmatprep.subr.mxu0 0.0
    %1169 = vmatpush2.msra.mxu0 0.0
    %1170 = vmatprep.subr.mxu0 0.0
    %1171 = vmatpush2.msra.mxu0 0.0
    %1172 = vmatprep.subr.mxu0 0.0
    %1173 = vmatpush2.msra.mxu0 0.0
    %1174 = vmatprep.subr.mxu0 0.0
    %1175 = vmatpush2.msra.mxu0 0.0
    %1176 = vmatprep.subr.mxu0 0.0
    %1177 = vmatpush2.msra.mxu0 0.0
    %1178 = vmatprep.subr.mxu0 0.0
    %1179 = vmatpush2.msra.mxu0 0.0
    %1180 = vmatprep.mubr.f32.mxu0 0.0
    %1181 = vmatmul.mubr.f32.gmra.mxu0 %v1114
    %v1182 = vpop.f32.mrf.mxu0
    %v1183 = vadd.f32 0.0, %v1182
    %v1184 = vpop.f32.mrf.mxu0
    %1185 = vdwg.mxu0
    %v1187 = vrot.slane %v1183, 4
    %v1189 = vadd.f32 %v193, %v1187
    %v1191 = vrot.slane %v1093, 4
    %1192 = vrot.lane.b32.xlu0 %v1191, 32
    %v1193 = vpop.permute.xlu0 %1192
    %v1194 = vsel %vm200, %v1193, 0
    %1196 = vmatprep.subr.mxu0 0.0
    %1197 = vmatpush1.msra.mxu0 0.0
    %1198 = vmatprep.subr.mxu0 0.0
    %1199 = vmatpush1.msra.mxu0 0.0
    %1200 = vmatprep.subr.mxu0 0.0
    %1201 = vmatpush1.msra.mxu0 0.0
    %1202 = vmatprep.subr.mxu0 0.0
    %1203 = vmatpush1.msra.mxu0 0.0
    %1204 = vmatprep.subr.mxu0 0.0
    %1205 = vmatpush1.msra.mxu0 0.0
    %1206 = vmatprep.subr.mxu0 0.0
    %1207 = vmatpush1.msra.mxu0 0.0
    %1208 = vmatprep.subr.mxu0 0.0
    %1209 = vmatpush1.msra.mxu0 0.0
    %1210 = vmatprep.subr.mxu0 0.0
    %1211 = vmatpush1.msra.mxu0 0.0
    %1212 = vmatprep.subr.mxu0 0.0
    %1213 = vmatpush1.msra.mxu0 0.0
    %1214 = vmatprep.subr.mxu0 0.0
    %1215 = vmatpush1.msra.mxu0 0.0
    %1216 = vmatprep.subr.mxu0 0.0
    %1217 = vmatpush1.msra.mxu0 0.0
    %1218 = vmatprep.subr.mxu0 0.0
    %1219 = vmatpush1.msra.mxu0 0.0
    %1220 = vmatprep.subr.mxu0 0.0
    %1221 = vmatpush1.msra.mxu0 0.0
    %1222 = vmatprep.subr.mxu0 0.0
    %1223 = vmatpush1.msra.mxu0 0.0
    %1224 = vmatprep.subr.mxu0 0.0
    %1225 = vmatpush1.msra.mxu0 %v199
    %1226 = vmatprep.subr.mxu0 0.0
    %1227 = vmatpush1.msra.mxu0 %v198
    %1228 = vmatprep.subr.mxu0 0.0
    %1229 = vmatpush2.msra.mxu0 0.0
    %1230 = vmatprep.subr.mxu0 0.0
    %1231 = vmatpush2.msra.mxu0 0.0
    %1232 = vmatprep.subr.mxu0 0.0
    %1233 = vmatpush2.msra.mxu0 0.0
    %1234 = vmatprep.subr.mxu0 0.0
    %1235 = vmatpush2.msra.mxu0 0.0
    %1236 = vmatprep.subr.mxu0 0.0
    %1237 = vmatpush2.msra.mxu0 0.0
    %1238 = vmatprep.subr.mxu0 0.0
    %1239 = vmatpush2.msra.mxu0 0.0
    %1240 = vmatprep.subr.mxu0 0.0
    %1241 = vmatpush2.msra.mxu0 0.0
    %1242 = vmatprep.subr.mxu0 0.0
    %1243 = vmatpush2.msra.mxu0 0.0
    %1244 = vmatprep.subr.mxu0 0.0
    %1245 = vmatpush2.msra.mxu0 0.0
    %1246 = vmatprep.subr.mxu0 0.0
    %1247 = vmatpush2.msra.mxu0 0.0
    %1248 = vmatprep.subr.mxu0 0.0
    %1249 = vmatpush2.msra.mxu0 0.0
    %1250 = vmatprep.subr.mxu0 0.0
    %1251 = vmatpush2.msra.mxu0 0.0
    %1252 = vmatprep.subr.mxu0 0.0
    %1253 = vmatpush2.msra.mxu0 0.0
    %1254 = vmatprep.subr.mxu0 0.0
    %1255 = vmatpush2.msra.mxu0 0.0
    %1256 = vmatprep.subr.mxu0 0.0
    %1257 = vmatpush2.msra.mxu0 0.0
    %1258 = vmatprep.subr.mxu0 0.0
    %1259 = vmatpush2.msra.mxu0 0.0
    %1260 = vmatprep.mubr.f32.mxu0 0.0
    %1261 = vmatmul.mubr.f32.gmra.mxu0 %v1194
    %v1262 = vpop.f32.mrf.mxu0
    %v1263 = vadd.f32 0.0, %v1262
    %v1264 = vpop.f32.mrf.mxu0
    %1265 = vdwg.mxu0
    %v1267 = vrot.slane %v1263, 5
    %1268 = vrot.lane.b32.xlu0 %v1267, 64
    %v1269 = vpop.permute.xlu0 %1268
    %v1271 = vadd.f32 %v193, %v1269
    %v1272 = vxor.u32 %v1189, 2147483648
    %v1273 = vmul.f32 %v1272, 1.442695
    %v1274 = vpow.pop %v1273
    %v1275 = vadd.f32 %v1274, 1.0
    %v1276 = vrcp.pop %v1275
    %v1277 = vmul.f32 1.0, %v1276
    %v1278 = vxor.u32 %v1271, 2147483648
    %v1279 = vmul.f32 %v1278, 1.442695
    %v1280 = vpow.pop %v1279
    %v1281 = vadd.f32 %v1280, 1.0
    %v1282 = vrcp.pop %v1281
    %v1283 = vmul.f32 1.0, %v1282
    %v1284 = vtanh.pop %v1189
    %v1285 = vtanh.pop %v1271
    %v1287 = vrot.slane %v1067, 7
    %v1289 = vmul.f32 %v1277, %v1287
    %1291 = vrot.lane.b32.xlu0 %v1284, 80
    %v1292 = vpop.permute.xlu0 %1291
    %v1294 = vmul.f32 %v1277, %v1292
    %1296 = vrot.lane.b32.xlu0 %v1294, 16
    %v1297 = vpop.permute.xlu0 %1296
    %v1299 = vadd.f32 %v1289, %v1297
    %v1301 = vrot.slane %v1081, 1
    %v1303 = vmul.f32 %v1283, %v1301
    %1305 = vrot.lane.b32.xlu0 %v1285, 80
    %v1306 = vpop.permute.xlu0 %1305
    %v1308 = vmul.f32 %v1283, %v1306
    %1310 = vrot.lane.b32.xlu0 %v1308, 16
    %v1311 = vpop.permute.xlu0 %1310
    %v1313 = vadd.f32 %v1303, %v1311
    %v1314 = vtanh.pop %v1299
    %1316 = vrot.lane.b32.xlu0 %v1314, 16
    %v1317 = vpop.permute.xlu0 %1316
    %v1319 = vmul.f32 %v1277, %v1317
    %v1320 = vtanh.pop %v1313
    %1322 = vrot.lane.b32.xlu0 %v1320, 16
    %v1323 = vpop.permute.xlu0 %1322
    %v1325 = vmul.f32 %v1283, %v1323
    %v1326 = vlaneseq
    %v1327 = vshrl.u32 %v1326, 7
    %v1328 = vsub.s32 4, %v1327
    %v1329 = vrot.slane %v1319, %v1328
    %v1330 = vsel %vm1104, %v1329, %v1101
    %v1331 = vlaneseq
    %v1332 = vshrl.u32 %v1331, 7
    %v1333 = vsub.s32 3, %v1332
    %v1334 = vrot.slane %v1325, %v1333
    %v1335 = vsel %vm1096, %v1334, %v1109
    %v1337 = vrot.slane %v1319, 4
    %1338 = vrot.lane.b32.xlu0 %v1337, 96
    %v1339 = vpop.permute.xlu0 %1338
    %v1340 = vsel %vm200, %v1339, 0
    %1342 = vmatprep.subr.mxu0 0.0
    %1343 = vmatpush1.msra.mxu0 0.0
    %1344 = vmatprep.subr.mxu0 0.0
    %1345 = vmatpush1.msra.mxu0 0.0
    %1346 = vmatprep.subr.mxu0 0.0
    %1347 = vmatpush1.msra.mxu0 0.0
    %1348 = vmatprep.subr.mxu0 0.0
    %1349 = vmatpush1.msra.mxu0 0.0
    %1350 = vmatprep.subr.mxu0 0.0
    %1351 = vmatpush1.msra.mxu0 0.0
    %1352 = vmatprep.subr.mxu0 0.0
    %1353 = vmatpush1.msra.mxu0 0.0
    %1354 = vmatprep.subr.mxu0 0.0
    %1355 = vmatpush1.msra.mxu0 0.0
    %1356 = vmatprep.subr.mxu0 0.0
    %1357 = vmatpush1.msra.mxu0 0.0
    %1358 = vmatprep.subr.mxu0 0.0
    %1359 = vmatpush1.msra.mxu0 0.0
    %1360 = vmatprep.subr.mxu0 0.0
    %1361 = vmatpush1.msra.mxu0 0.0
    %1362 = vmatprep.subr.mxu0 0.0
    %1363 = vmatpush1.msra.mxu0 0.0
    %1364 = vmatprep.subr.mxu0 0.0
    %1365 = vmatpush1.msra.mxu0 0.0
    %1366 = vmatprep.subr.mxu0 0.0
    %1367 = vmatpush1.msra.mxu0 0.0
    %1368 = vmatprep.subr.mxu0 0.0
    %1369 = vmatpush1.msra.mxu0 0.0
    %1370 = vmatprep.subr.mxu0 0.0
    %1371 = vmatpush1.msra.mxu0 %v197
    %1372 = vmatprep.subr.mxu0 0.0
    %1373 = vmatpush1.msra.mxu0 %v196
    %1374 = vmatprep.subr.mxu0 0.0
    %1375 = vmatpush2.msra.mxu0 0.0
    %1376 = vmatprep.subr.mxu0 0.0
    %1377 = vmatpush2.msra.mxu0 0.0
    %1378 = vmatprep.subr.mxu0 0.0
    %1379 = vmatpush2.msra.mxu0 0.0
    %1380 = vmatprep.subr.mxu0 0.0
    %1381 = vmatpush2.msra.mxu0 0.0
    %1382 = vmatprep.subr.mxu0 0.0
    %1383 = vmatpush2.msra.mxu0 0.0
    %1384 = vmatprep.subr.mxu0 0.0
    %1385 = vmatpush2.msra.mxu0 0.0
    %1386 = vmatprep.subr.mxu0 0.0
    %1387 = vmatpush2.msra.mxu0 0.0
    %1388 = vmatprep.subr.mxu0 0.0
    %1389 = vmatpush2.msra.mxu0 0.0
    %1390 = vmatprep.subr.mxu0 0.0
    %1391 = vmatpush2.msra.mxu0 0.0
    %1392 = vmatprep.subr.mxu0 0.0
    %1393 = vmatpush2.msra.mxu0 0.0
    %1394 = vmatprep.subr.mxu0 0.0
    %1395 = vmatpush2.msra.mxu0 0.0
    %1396 = vmatprep.subr.mxu0 0.0
    %1397 = vmatpush2.msra.mxu0 0.0
    %1398 = vmatprep.subr.mxu0 0.0
    %1399 = vmatpush2.msra.mxu0 0.0
    %1400 = vmatprep.subr.mxu0 0.0
    %1401 = vmatpush2.msra.mxu0 0.0
    %1402 = vmatprep.subr.mxu0 0.0
    %1403 = vmatpush2.msra.mxu0 0.0
    %1404 = vmatprep.subr.mxu0 0.0
    %1405 = vmatpush2.msra.mxu0 0.0
    %1406 = vmatprep.mubr.f32.mxu0 0.0
    %1407 = vmatmul.mubr.f32.gmra.mxu0 %v1340
    %v1408 = vpop.f32.mrf.mxu0
    %v1409 = vadd.f32 0.0, %v1408
    %v1410 = vpop.f32.mrf.mxu0
    %1411 = vdwg.mxu0
    %v1413 = vrot.slane %v1409, 3
    %v1415 = vadd.f32 %v193, %v1413
    %v1417 = vrot.slane %v1325, 3
    %1418 = vrot.lane.b32.xlu0 %v1417, 32
    %v1419 = vpop.permute.xlu0 %1418
    %v1420 = vsel %vm200, %v1419, 0
    %1422 = vmatprep.subr.mxu0 0.0
    %1423 = vmatpush1.msra.mxu0 0.0
    %1424 = vmatprep.subr.mxu0 0.0
    %1425 = vmatpush1.msra.mxu0 0.0
    %1426 = vmatprep.subr.mxu0 0.0
    %1427 = vmatpush1.msra.mxu0 0.0
    %1428 = vmatprep.subr.mxu0 0.0
    %1429 = vmatpush1.msra.mxu0 0.0
    %1430 = vmatprep.subr.mxu0 0.0
    %1431 = vmatpush1.msra.mxu0 0.0
    %1432 = vmatprep.subr.mxu0 0.0
    %1433 = vmatpush1.msra.mxu0 0.0
    %1434 = vmatprep.subr.mxu0 0.0
    %1435 = vmatpush1.msra.mxu0 0.0
    %1436 = vmatprep.subr.mxu0 0.0
    %1437 = vmatpush1.msra.mxu0 0.0
    %1438 = vmatprep.subr.mxu0 0.0
    %1439 = vmatpush1.msra.mxu0 0.0
    %1440 = vmatprep.subr.mxu0 0.0
    %1441 = vmatpush1.msra.mxu0 0.0
    %1442 = vmatprep.subr.mxu0 0.0
    %1443 = vmatpush1.msra.mxu0 0.0
    %1444 = vmatprep.subr.mxu0 0.0
    %1445 = vmatpush1.msra.mxu0 0.0
    %1446 = vmatprep.subr.mxu0 0.0
    %1447 = vmatpush1.msra.mxu0 0.0
    %1448 = vmatprep.subr.mxu0 0.0
    %1449 = vmatpush1.msra.mxu0 0.0
    %1450 = vmatprep.subr.mxu0 0.0
    %1451 = vmatpush1.msra.mxu0 %v199
    %1452 = vmatprep.subr.mxu0 0.0
    %1453 = vmatpush1.msra.mxu0 %v198
    %1454 = vmatprep.subr.mxu0 0.0
    %1455 = vmatpush2.msra.mxu0 0.0
    %1456 = vmatprep.subr.mxu0 0.0
    %1457 = vmatpush2.msra.mxu0 0.0
    %1458 = vmatprep.subr.mxu0 0.0
    %1459 = vmatpush2.msra.mxu0 0.0
    %1460 = vmatprep.subr.mxu0 0.0
    %1461 = vmatpush2.msra.mxu0 0.0
    %1462 = vmatprep.subr.mxu0 0.0
    %1463 = vmatpush2.msra.mxu0 0.0
    %1464 = vmatprep.subr.mxu0 0.0
    %1465 = vmatpush2.msra.mxu0 0.0
    %1466 = vmatprep.subr.mxu0 0.0
    %1467 = vmatpush2.msra.mxu0 0.0
    %1468 = vmatprep.subr.mxu0 0.0
    %1469 = vmatpush2.msra.mxu0 0.0
    %1470 = vmatprep.subr.mxu0 0.0
    %1471 = vmatpush2.msra.mxu0 0.0
    %1472 = vmatprep.subr.mxu0 0.0
    %1473 = vmatpush2.msra.mxu0 0.0
    %1474 = vmatprep.subr.mxu0 0.0
    %1475 = vmatpush2.msra.mxu0 0.0
    %1476 = vmatprep.subr.mxu0 0.0
    %1477 = vmatpush2.msra.mxu0 0.0
    %1478 = vmatprep.subr.mxu0 0.0
    %1479 = vmatpush2.msra.mxu0 0.0
    %1480 = vmatprep.subr.mxu0 0.0
    %1481 = vmatpush2.msra.mxu0 0.0
    %1482 = vmatprep.subr.mxu0 0.0
    %1483 = vmatpush2.msra.mxu0 0.0
    %1484 = vmatprep.subr.mxu0 0.0
    %1485 = vmatpush2.msra.mxu0 0.0
    %1486 = vmatprep.mubr.f32.mxu0 0.0
    %1487 = vmatmul.mubr.f32.gmra.mxu0 %v1420
    %v1488 = vpop.f32.mrf.mxu0
    %v1489 = vadd.f32 0.0, %v1488
    %v1490 = vpop.f32.mrf.mxu0
    %1491 = vdwg.mxu0
    %v1493 = vrot.slane %v1489, 6
    %1494 = vrot.lane.b32.xlu0 %v1493, 64
    %v1495 = vpop.permute.xlu0 %1494
    %v1497 = vadd.f32 %v193, %v1495
    %v1498 = vxor.u32 %v1415, 2147483648
    %v1499 = vmul.f32 %v1498, 1.442695
    %v1500 = vpow.pop %v1499
    %v1501 = vadd.f32 %v1500, 1.0
    %v1502 = vrcp.pop %v1501
    %v1503 = vmul.f32 1.0, %v1502
    %v1504 = vxor.u32 %v1497, 2147483648
    %v1505 = vmul.f32 %v1504, 1.442695
    %v1506 = vpow.pop %v1505
    %v1507 = vadd.f32 %v1506, 1.0
    %v1508 = vrcp.pop %v1507
    %v1509 = vmul.f32 1.0, %v1508
    %v1510 = vtanh.pop %v1415
    %v1511 = vtanh.pop %v1497
    %v1513 = vrot.slane %v1299, 7
    %v1515 = vmul.f32 %v1503, %v1513
    %1517 = vrot.lane.b32.xlu0 %v1510, 80
    %v1518 = vpop.permute.xlu0 %1517
    %v1520 = vmul.f32 %v1503, %v1518
    %1522 = vrot.lane.b32.xlu0 %v1520, 16
    %v1523 = vpop.permute.xlu0 %1522
    %v1525 = vadd.f32 %v1515, %v1523
    %v1527 = vrot.slane %v1313, 1
    %v1529 = vmul.f32 %v1509, %v1527
    %1531 = vrot.lane.b32.xlu0 %v1511, 80
    %v1532 = vpop.permute.xlu0 %1531
    %v1534 = vmul.f32 %v1509, %v1532
    %1536 = vrot.lane.b32.xlu0 %v1534, 16
    %v1537 = vpop.permute.xlu0 %1536
    %v1539 = vadd.f32 %v1529, %v1537
    %v1540 = vtanh.pop %v1525
    %1542 = vrot.lane.b32.xlu0 %v1540, 16
    %v1543 = vpop.permute.xlu0 %1542
    %v1545 = vmul.f32 %v1503, %v1543
    %v1546 = vtanh.pop %v1539
    %1548 = vrot.lane.b32.xlu0 %v1546, 16
    %v1549 = vpop.permute.xlu0 %1548
    %v1551 = vmul.f32 %v1509, %v1549
    %v1552 = vlaneseq
    %v1553 = vshrl.u32 %v1552, 7
    %v1554 = vsub.s32 5, %v1553
    %v1555 = vrot.slane %v1545, %v1554
    %v1556 = vsel %vm872, %v1555, %v1330
    %v1557 = vlaneseq
    %v1558 = vshrl.u32 %v1557, 7
    %v1559 = vsub.s32 2, %v1558
    %v1560 = vrot.slane %v1551, %v1559
    %v1561 = vsel %vm864, %v1560, %v1335
    %v1563 = vrot.slane %v1545, 5
    %1564 = vrot.lane.b32.xlu0 %v1563, 96
    %v1565 = vpop.permute.xlu0 %1564
    %v1566 = vsel %vm200, %v1565, 0
    %1568 = vmatprep.subr.mxu0 0.0
    %1569 = vmatpush1.msra.mxu0 0.0
    %1570 = vmatprep.subr.mxu0 0.0
    %1571 = vmatpush1.msra.mxu0 0.0
    %1572 = vmatprep.subr.mxu0 0.0
    %1573 = vmatpush1.msra.mxu0 0.0
    %1574 = vmatprep.subr.mxu0 0.0
    %1575 = vmatpush1.msra.mxu0 0.0
    %1576 = vmatprep.subr.mxu0 0.0
    %1577 = vmatpush1.msra.mxu0 0.0
    %1578 = vmatprep.subr.mxu0 0.0
    %1579 = vmatpush1.msra.mxu0 0.0
    %1580 = vmatprep.subr.mxu0 0.0
    %1581 = vmatpush1.msra.mxu0 0.0
    %1582 = vmatprep.subr.mxu0 0.0
    %1583 = vmatpush1.msra.mxu0 0.0
    %1584 = vmatprep.subr.mxu0 0.0
    %1585 = vmatpush1.msra.mxu0 0.0
    %1586 = vmatprep.subr.mxu0 0.0
    %1587 = vmatpush1.msra.mxu0 0.0
    %1588 = vmatprep.subr.mxu0 0.0
    %1589 = vmatpush1.msra.mxu0 0.0
    %1590 = vmatprep.subr.mxu0 0.0
    %1591 = vmatpush1.msra.mxu0 0.0
    %1592 = vmatprep.subr.mxu0 0.0
    %1593 = vmatpush1.msra.mxu0 0.0
    %1594 = vmatprep.subr.mxu0 0.0
    %1595 = vmatpush1.msra.mxu0 0.0
    %1596 = vmatprep.subr.mxu0 0.0
    %1597 = vmatpush1.msra.mxu0 %v197
    %1598 = vmatprep.subr.mxu0 0.0
    %1599 = vmatpush1.msra.mxu0 %v196
    %1600 = vmatprep.subr.mxu0 0.0
    %1601 = vmatpush2.msra.mxu0 0.0
    %1602 = vmatprep.subr.mxu0 0.0
    %1603 = vmatpush2.msra.mxu0 0.0
    %1604 = vmatprep.subr.mxu0 0.0
    %1605 = vmatpush2.msra.mxu0 0.0
    %1606 = vmatprep.subr.mxu0 0.0
    %1607 = vmatpush2.msra.mxu0 0.0
    %1608 = vmatprep.subr.mxu0 0.0
    %1609 = vmatpush2.msra.mxu0 0.0
    %1610 = vmatprep.subr.mxu0 0.0
    %1611 = vmatpush2.msra.mxu0 0.0
    %1612 = vmatprep.subr.mxu0 0.0
    %1613 = vmatpush2.msra.mxu0 0.0
    %1614 = vmatprep.subr.mxu0 0.0
    %1615 = vmatpush2.msra.mxu0 0.0
    %1616 = vmatprep.subr.mxu0 0.0
    %1617 = vmatpush2.msra.mxu0 0.0
    %1618 = vmatprep.subr.mxu0 0.0
    %1619 = vmatpush2.msra.mxu0 0.0
    %1620 = vmatprep.subr.mxu0 0.0
    %1621 = vmatpush2.msra.mxu0 0.0
    %1622 = vmatprep.subr.mxu0 0.0
    %1623 = vmatpush2.msra.mxu0 0.0
    %1624 = vmatprep.subr.mxu0 0.0
    %1625 = vmatpush2.msra.mxu0 0.0
    %1626 = vmatprep.subr.mxu0 0.0
    %1627 = vmatpush2.msra.mxu0 0.0
    %1628 = vmatprep.subr.mxu0 0.0
    %1629 = vmatpush2.msra.mxu0 0.0
    %1630 = vmatprep.subr.mxu0 0.0
    %1631 = vmatpush2.msra.mxu0 0.0
    %1632 = vmatprep.mubr.f32.mxu0 0.0
    %1633 = vmatmul.mubr.f32.gmra.mxu0 %v1566
    %v1634 = vpop.f32.mrf.mxu0
    %v1635 = vadd.f32 0.0, %v1634
    %v1636 = vpop.f32.mrf.mxu0
    %1637 = vdwg.mxu0
    %v1639 = vrot.slane %v1635, 2
    %v1641 = vadd.f32 %v193, %v1639
    %v1643 = vrot.slane %v1551, 2
    %1644 = vrot.lane.b32.xlu0 %v1643, 32
    %v1645 = vpop.permute.xlu0 %1644
    %v1646 = vsel %vm200, %v1645, 0
    %1648 = vmatprep.subr.mxu0 0.0
    %1649 = vmatpush1.msra.mxu0 0.0
    %1650 = vmatprep.subr.mxu0 0.0
    %1651 = vmatpush1.msra.mxu0 0.0
    %1652 = vmatprep.subr.mxu0 0.0
    %1653 = vmatpush1.msra.mxu0 0.0
    %1654 = vmatprep.subr.mxu0 0.0
    %1655 = vmatpush1.msra.mxu0 0.0
    %1656 = vmatprep.subr.mxu0 0.0
    %1657 = vmatpush1.msra.mxu0 0.0
    %1658 = vmatprep.subr.mxu0 0.0
    %1659 = vmatpush1.msra.mxu0 0.0
    %1660 = vmatprep.subr.mxu0 0.0
    %1661 = vmatpush1.msra.mxu0 0.0
    %1662 = vmatprep.subr.mxu0 0.0
    %1663 = vmatpush1.msra.mxu0 0.0
    %1664 = vmatprep.subr.mxu0 0.0
    %1665 = vmatpush1.msra.mxu0 0.0
    %1666 = vmatprep.subr.mxu0 0.0
    %1667 = vmatpush1.msra.mxu0 0.0
    %1668 = vmatprep.subr.mxu0 0.0
    %1669 = vmatpush1.msra.mxu0 0.0
    %1670 = vmatprep.subr.mxu0 0.0
    %1671 = vmatpush1.msra.mxu0 0.0
    %1672 = vmatprep.subr.mxu0 0.0
    %1673 = vmatpush1.msra.mxu0 0.0
    %1674 = vmatprep.subr.mxu0 0.0
    %1675 = vmatpush1.msra.mxu0 0.0
    %1676 = vmatprep.subr.mxu0 0.0
    %1677 = vmatpush1.msra.mxu0 %v199
    %1678 = vmatprep.subr.mxu0 0.0
    %1679 = vmatpush1.msra.mxu0 %v198
    %1680 = vmatprep.subr.mxu0 0.0
    %1681 = vmatpush2.msra.mxu0 0.0
    %1682 = vmatprep.subr.mxu0 0.0
    %1683 = vmatpush2.msra.mxu0 0.0
    %1684 = vmatprep.subr.mxu0 0.0
    %1685 = vmatpush2.msra.mxu0 0.0
    %1686 = vmatprep.subr.mxu0 0.0
    %1687 = vmatpush2.msra.mxu0 0.0
    %1688 = vmatprep.subr.mxu0 0.0
    %1689 = vmatpush2.msra.mxu0 0.0
    %1690 = vmatprep.subr.mxu0 0.0
    %1691 = vmatpush2.msra.mxu0 0.0
    %1692 = vmatprep.subr.mxu0 0.0
    %1693 = vmatpush2.msra.mxu0 0.0
    %1694 = vmatprep.subr.mxu0 0.0
    %1695 = vmatpush2.msra.mxu0 0.0
    %1696 = vmatprep.subr.mxu0 0.0
    %1697 = vmatpush2.msra.mxu0 0.0
    %1698 = vmatprep.subr.mxu0 0.0
    %1699 = vmatpush2.msra.mxu0 0.0
    %1700 = vmatprep.subr.mxu0 0.0
    %1701 = vmatpush2.msra.mxu0 0.0
    %1702 = vmatprep.subr.mxu0 0.0
    %1703 = vmatpush2.msra.mxu0 0.0
    %1704 = vmatprep.subr.mxu0 0.0
    %1705 = vmatpush2.msra.mxu0 0.0
    %1706 = vmatprep.subr.mxu0 0.0
    %1707 = vmatpush2.msra.mxu0 0.0
    %1708 = vmatprep.subr.mxu0 0.0
    %1709 = vmatpush2.msra.mxu0 0.0
    %1710 = vmatprep.subr.mxu0 0.0
    %1711 = vmatpush2.msra.mxu0 0.0
    %1712 = vmatprep.mubr.f32.mxu0 0.0
    %1713 = vmatmul.mubr.f32.gmra.mxu0 %v1646
    %v1714 = vpop.f32.mrf.mxu0
    %v1715 = vadd.f32 0.0, %v1714
    %v1716 = vpop.f32.mrf.mxu0
    %1717 = vdwg.mxu0
    %v1719 = vrot.slane %v1715, 7
    %1720 = vrot.lane.b32.xlu0 %v1719, 64
    %v1721 = vpop.permute.xlu0 %1720
    %v1723 = vadd.f32 %v193, %v1721
    %v1724 = vxor.u32 %v1641, 2147483648
    %v1725 = vmul.f32 %v1724, 1.442695
    %v1726 = vpow.pop %v1725
    %v1727 = vadd.f32 %v1726, 1.0
    %v1728 = vrcp.pop %v1727
    %v1729 = vmul.f32 1.0, %v1728
    %v1730 = vxor.u32 %v1723, 2147483648
    %v1731 = vmul.f32 %v1730, 1.442695
    %v1732 = vpow.pop %v1731
    %v1733 = vadd.f32 %v1732, 1.0
    %v1734 = vrcp.pop %v1733
    %v1735 = vmul.f32 1.0, %v1734
    %v1736 = vtanh.pop %v1641
    %v1737 = vtanh.pop %v1723
    %v1739 = vrot.slane %v1525, 7
    %v1741 = vmul.f32 %v1729, %v1739
    %1743 = vrot.lane.b32.xlu0 %v1736, 80
    %v1744 = vpop.permute.xlu0 %1743
    %v1746 = vmul.f32 %v1729, %v1744
    %1748 = vrot.lane.b32.xlu0 %v1746, 16
    %v1749 = vpop.permute.xlu0 %1748
    %v1751 = vadd.f32 %v1741, %v1749
    %v1753 = vrot.slane %v1539, 1
    %v1755 = vmul.f32 %v1735, %v1753
    %1757 = vrot.lane.b32.xlu0 %v1737, 80
    %v1758 = vpop.permute.xlu0 %1757
    %v1760 = vmul.f32 %v1735, %v1758
    %1762 = vrot.lane.b32.xlu0 %v1760, 16
    %v1763 = vpop.permute.xlu0 %1762
    %v1765 = vadd.f32 %v1755, %v1763
    %v1766 = vtanh.pop %v1751
    %1768 = vrot.lane.b32.xlu0 %v1766, 16
    %v1769 = vpop.permute.xlu0 %1768
    %v1771 = vmul.f32 %v1729, %v1769
    %v1772 = vtanh.pop %v1765
    %1774 = vrot.lane.b32.xlu0 %v1772, 16
    %v1775 = vpop.permute.xlu0 %1774
    %v1777 = vmul.f32 %v1735, %v1775
    %v1778 = vlaneseq
    %v1779 = vshrl.u32 %v1778, 7
    %v1780 = vsub.s32 6, %v1779
    %v1781 = vrot.slane %v1771, %v1780
    %v1782 = vsel %vm640, %v1781, %v1556
    %v1783 = vlaneseq
    %v1784 = vshrl.u32 %v1783, 7
    %v1785 = vsub.s32 1, %v1784
    %v1786 = vrot.slane %v1777, %v1785
    %v1787 = vsel %vm632, %v1786, %v1561
    %v1789 = vrot.slane %v1771, 6
    %1790 = vrot.lane.b32.xlu0 %v1789, 96
    %v1791 = vpop.permute.xlu0 %1790
    %v1792 = vsel %vm200, %v1791, 0
    %1794 = vmatprep.subr.mxu0 0.0
    %1795 = vmatpush1.msra.mxu0 0.0
    %1796 = vmatprep.subr.mxu0 0.0
    %1797 = vmatpush1.msra.mxu0 0.0
    %1798 = vmatprep.subr.mxu0 0.0
    %1799 = vmatpush1.msra.mxu0 0.0
    %1800 = vmatprep.subr.mxu0 0.0
    %1801 = vmatpush1.msra.mxu0 0.0
    %1802 = vmatprep.subr.mxu0 0.0
    %1803 = vmatpush1.msra.mxu0 0.0
    %1804 = vmatprep.subr.mxu0 0.0
    %1805 = vmatpush1.msra.mxu0 0.0
    %1806 = vmatprep.subr.mxu0 0.0
    %1807 = vmatpush1.msra.mxu0 0.0
    %1808 = vmatprep.subr.mxu0 0.0
    %1809 = vmatpush1.msra.mxu0 0.0
    %1810 = vmatprep.subr.mxu0 0.0
    %1811 = vmatpush1.msra.mxu0 0.0
    %1812 = vmatprep.subr.mxu0 0.0
    %1813 = vmatpush1.msra.mxu0 0.0
    %1814 = vmatprep.subr.mxu0 0.0
    %1815 = vmatpush1.msra.mxu0 0.0
    %1816 = vmatprep.subr.mxu0 0.0
    %1817 = vmatpush1.msra.mxu0 0.0
    %1818 = vmatprep.subr.mxu0 0.0
    %1819 = vmatpush1.msra.mxu0 0.0
    %1820 = vmatprep.subr.mxu0 0.0
    %1821 = vmatpush1.msra.mxu0 0.0
    %1822 = vmatprep.subr.mxu0 0.0
    %1823 = vmatpush1.msra.mxu0 %v197
    %1824 = vmatprep.subr.mxu0 0.0
    %1825 = vmatpush1.msra.mxu0 %v196
    %1826 = vmatprep.subr.mxu0 0.0
    %1827 = vmatpush2.msra.mxu0 0.0
    %1828 = vmatprep.subr.mxu0 0.0
    %1829 = vmatpush2.msra.mxu0 0.0
    %1830 = vmatprep.subr.mxu0 0.0
    %1831 = vmatpush2.msra.mxu0 0.0
    %1832 = vmatprep.subr.mxu0 0.0
    %1833 = vmatpush2.msra.mxu0 0.0
    %1834 = vmatprep.subr.mxu0 0.0
    %1835 = vmatpush2.msra.mxu0 0.0
    %1836 = vmatprep.subr.mxu0 0.0
    %1837 = vmatpush2.msra.mxu0 0.0
    %1838 = vmatprep.subr.mxu0 0.0
    %1839 = vmatpush2.msra.mxu0 0.0
    %1840 = vmatprep.subr.mxu0 0.0
    %1841 = vmatpush2.msra.mxu0 0.0
    %1842 = vmatprep.subr.mxu0 0.0
    %1843 = vmatpush2.msra.mxu0 0.0
    %1844 = vmatprep.subr.mxu0 0.0
    %1845 = vmatpush2.msra.mxu0 0.0
    %1846 = vmatprep.subr.mxu0 0.0
    %1847 = vmatpush2.msra.mxu0 0.0
    %1848 = vmatprep.subr.mxu0 0.0
    %1849 = vmatpush2.msra.mxu0 0.0
    %1850 = vmatprep.subr.mxu0 0.0
    %1851 = vmatpush2.msra.mxu0 0.0
    %1852 = vmatprep.subr.mxu0 0.0
    %1853 = vmatpush2.msra.mxu0 0.0
    %1854 = vmatprep.subr.mxu0 0.0
    %1855 = vmatpush2.msra.mxu0 0.0
    %1856 = vmatprep.subr.mxu0 0.0
    %1857 = vmatpush2.msra.mxu0 0.0
    %1858 = vmatprep.mubr.f32.mxu0 0.0
    %1859 = vmatmul.mubr.f32.gmra.mxu0 %v1792
    %v1860 = vpop.f32.mrf.mxu0
    %v1861 = vadd.f32 0.0, %v1860
    %v1862 = vpop.f32.mrf.mxu0
    %1863 = vdwg.mxu0
    %v1865 = vrot.slane %v1861, 1
    %v1867 = vadd.f32 %v193, %v1865
    %v1869 = vrot.slane %v1777, 1
    %1870 = vrot.lane.b32.xlu0 %v1869, 32
    %v1871 = vpop.permute.xlu0 %1870
    %v1872 = vsel %vm200, %v1871, 0
    %1874 = vmatprep.subr.mxu0 0.0
    %1875 = vmatpush1.msra.mxu0 0.0
    %1876 = vmatprep.subr.mxu0 0.0
    %1877 = vmatpush1.msra.mxu0 0.0
    %1878 = vmatprep.subr.mxu0 0.0
    %1879 = vmatpush1.msra.mxu0 0.0
    %1880 = vmatprep.subr.mxu0 0.0
    %1881 = vmatpush1.msra.mxu0 0.0
    %1882 = vmatprep.subr.mxu0 0.0
    %1883 = vmatpush1.msra.mxu0 0.0
    %1884 = vmatprep.subr.mxu0 0.0
    %1885 = vmatpush1.msra.mxu0 0.0
    %1886 = vmatprep.subr.mxu0 0.0
    %1887 = vmatpush1.msra.mxu0 0.0
    %1888 = vmatprep.subr.mxu0 0.0
    %1889 = vmatpush1.msra.mxu0 0.0
    %1890 = vmatprep.subr.mxu0 0.0
    %1891 = vmatpush1.msra.mxu0 0.0
    %1892 = vmatprep.subr.mxu0 0.0
    %1893 = vmatpush1.msra.mxu0 0.0
    %1894 = vmatprep.subr.mxu0 0.0
    %1895 = vmatpush1.msra.mxu0 0.0
    %1896 = vmatprep.subr.mxu0 0.0
    %1897 = vmatpush1.msra.mxu0 0.0
    %1898 = vmatprep.subr.mxu0 0.0
    %1899 = vmatpush1.msra.mxu0 0.0
    %1900 = vmatprep.subr.mxu0 0.0
    %1901 = vmatpush1.msra.mxu0 0.0
    %1902 = vmatprep.subr.mxu0 0.0
    %1903 = vmatpush1.msra.mxu0 %v199
    %1904 = vmatprep.subr.mxu0 0.0
    %1905 = vmatpush1.msra.mxu0 %v198
    %1906 = vmatprep.subr.mxu0 0.0
    %1907 = vmatpush2.msra.mxu0 0.0
    %1908 = vmatprep.subr.mxu0 0.0
    %1909 = vmatpush2.msra.mxu0 0.0
    %1910 = vmatprep.subr.mxu0 0.0
    %1911 = vmatpush2.msra.mxu0 0.0
    %1912 = vmatprep.subr.mxu0 0.0
    %1913 = vmatpush2.msra.mxu0 0.0
    %1914 = vmatprep.subr.mxu0 0.0
    %1915 = vmatpush2.msra.mxu0 0.0
    %1916 = vmatprep.subr.mxu0 0.0
    %1917 = vmatpush2.msra.mxu0 0.0
    %1918 = vmatprep.subr.mxu0 0.0
    %1919 = vmatpush2.msra.mxu0 0.0
    %1920 = vmatprep.subr.mxu0 0.0
    %1921 = vmatpush2.msra.mxu0 0.0
    %1922 = vmatprep.subr.mxu0 0.0
    %1923 = vmatpush2.msra.mxu0 0.0
    %1924 = vmatprep.subr.mxu0 0.0
    %1925 = vmatpush2.msra.mxu0 0.0
    %1926 = vmatprep.subr.mxu0 0.0
    %1927 = vmatpush2.msra.mxu0 0.0
    %1928 = vmatprep.subr.mxu0 0.0
    %1929 = vmatpush2.msra.mxu0 0.0
    %1930 = vmatprep.subr.mxu0 0.0
    %1931 = vmatpush2.msra.mxu0 0.0
    %1932 = vmatprep.subr.mxu0 0.0
    %1933 = vmatpush2.msra.mxu0 0.0
    %1934 = vmatprep.subr.mxu0 0.0
    %1935 = vmatpush2.msra.mxu0 0.0
    %1936 = vmatprep.subr.mxu0 0.0
    %1937 = vmatpush2.msra.mxu0 0.0
    %1938 = vmatprep.mubr.f32.mxu0 0.0
    %1939 = vmatmul.mubr.f32.gmra.mxu0 %v1872
    %v1940 = vpop.f32.mrf.mxu0
    %v1941 = vadd.f32 0.0, %v1940
    %v1942 = vpop.f32.mrf.mxu0
    %1943 = vdwg.mxu0
    %1945 = vrot.lane.b32.xlu0 %v1941, 64
    %v1946 = vpop.permute.xlu0 %1945
    %v1948 = vadd.f32 %v193, %v1946
    %v1949 = vxor.u32 %v1867, 2147483648
    %v1950 = vmul.f32 %v1949, 1.442695
    %v1951 = vpow.pop %v1950
    %v1952 = vadd.f32 %v1951, 1.0
    %v1953 = vrcp.pop %v1952
    %v1954 = vmul.f32 1.0, %v1953
    %v1955 = vxor.u32 %v1948, 2147483648
    %v1956 = vmul.f32 %v1955, 1.442695
    %v1957 = vpow.pop %v1956
    %v1958 = vadd.f32 %v1957, 1.0
    %v1959 = vrcp.pop %v1958
    %v1960 = vmul.f32 1.0, %v1959
    %v1961 = vtanh.pop %v1867
    %v1962 = vtanh.pop %v1948
    %v1964 = vrot.slane %v1751, 7
    %v1966 = vmul.f32 %v1954, %v1964
    %1968 = vrot.lane.b32.xlu0 %v1961, 80
    %v1969 = vpop.permute.xlu0 %1968
    %v1971 = vmul.f32 %v1954, %v1969
    %1973 = vrot.lane.b32.xlu0 %v1971, 16
    %v1974 = vpop.permute.xlu0 %1973
    %v1976 = vadd.f32 %v1966, %v1974
    %v1978 = vrot.slane %v1765, 1
    %v1980 = vmul.f32 %v1960, %v1978
    %1982 = vrot.lane.b32.xlu0 %v1962, 80
    %v1983 = vpop.permute.xlu0 %1982
    %v1985 = vmul.f32 %v1960, %v1983
    %1987 = vrot.lane.b32.xlu0 %v1985, 16
    %v1988 = vpop.permute.xlu0 %1987
    %v1990 = vadd.f32 %v1980, %v1988
    %v1991 = vtanh.pop %v1976
    %1993 = vrot.lane.b32.xlu0 %v1991, 16
    %v1994 = vpop.permute.xlu0 %1993
    %v1996 = vmul.f32 %v1954, %v1994
    %v1997 = vtanh.pop %v1990
    %1999 = vrot.lane.b32.xlu0 %v1997, 16
    %v2000 = vpop.permute.xlu0 %1999
    %v2002 = vmul.f32 %v1960, %v2000
    %v2003 = vlaneseq
    %v2004 = vshrl.u32 %v2003, 7
    %v2005 = vsub.s32 7, %v2004
    %v2006 = vrot.slane %v1996, %v2005
    %v2007 = vsel %vm409, %v2006, %v1782
    %v2008 = vlaneseq
    %v2009 = vshrl.u32 %v2008, 7
    %v2010 = vsub.s32 0, %v2009
    %v2011 = vrot.slane %v2002, %v2010
    %v2012 = vsel %vm401, %v2011, %v1787
    %v2013 = vld [vmem:[%s5] sm:$0xff]
    %v2014 = vld [vmem:[%s5 + $0x8] sm:$0xff]
    %v2015 = vld [vmem:[%s5 + $0x10] sm:$0xff]
    %v2016 = vld [vmem:[%s5 + $0x18] sm:$0xff]
    %2018 = vrot.lane.b32.xlu0 %v2012, 32
    %v2019 = vpop.permute.xlu0 %2018
    %v2020 = vsel %vm200, %v2019, 0
    %2022 = vmatprep.subr.mxu0 0.0
    %2023 = vmatpush1.msra.mxu0 0.0
    %2024 = vmatprep.subr.mxu0 0.0
    %2025 = vmatpush1.msra.mxu0 0.0
    %2026 = vmatprep.subr.mxu0 0.0
    %2027 = vmatpush1.msra.mxu0 0.0
    %2028 = vmatprep.subr.mxu0 0.0
    %2029 = vmatpush1.msra.mxu0 0.0
    %2030 = vmatprep.subr.mxu0 0.0
    %2031 = vmatpush1.msra.mxu0 0.0
    %2032 = vmatprep.subr.mxu0 0.0
    %2033 = vmatpush1.msra.mxu0 0.0
    %2034 = vmatprep.subr.mxu0 0.0
    %2035 = vmatpush1.msra.mxu0 0.0
    %2036 = vmatprep.subr.mxu0 0.0
    %2037 = vmatpush1.msra.mxu0 0.0
    %2038 = vmatprep.subr.mxu0 0.0
    %2039 = vmatpush1.msra.mxu0 0.0
    %2040 = vmatprep.subr.mxu0 0.0
    %2041 = vmatpush1.msra.mxu0 0.0
    %2042 = vmatprep.subr.mxu0 0.0
    %2043 = vmatpush1.msra.mxu0 0.0
    %2044 = vmatprep.subr.mxu0 0.0
    %2045 = vmatpush1.msra.mxu0 0.0
    %2046 = vmatprep.subr.mxu0 0.0
    %2047 = vmatpush1.msra.mxu0 0.0
    %2048 = vmatprep.subr.mxu0 0.0
    %2049 = vmatpush1.msra.mxu0 0.0
    %2050 = vmatprep.subr.mxu0 0.0
    %2051 = vmatpush1.msra.mxu0 %v2016
    %2052 = vmatprep.subr.mxu0 0.0
    %2053 = vmatpush1.msra.mxu0 %v2015
    %2054 = vmatprep.subr.mxu0 0.0
    %2055 = vmatpush2.msra.mxu0 0.0
    %2056 = vmatprep.subr.mxu0 0.0
    %2057 = vmatpush2.msra.mxu0 0.0
    %2058 = vmatprep.subr.mxu0 0.0
    %2059 = vmatpush2.msra.mxu0 0.0
    %2060 = vmatprep.subr.mxu0 0.0
    %2061 = vmatpush2.msra.mxu0 0.0
    %2062 = vmatprep.subr.mxu0 0.0
    %2063 = vmatpush2.msra.mxu0 0.0
    %2064 = vmatprep.subr.mxu0 0.0
    %2065 = vmatpush2.msra.mxu0 0.0
    %2066 = vmatprep.subr.mxu0 0.0
    %2067 = vmatpush2.msra.mxu0 0.0
    %2068 = vmatprep.subr.mxu0 0.0
    %2069 = vmatpush2.msra.mxu0 0.0
    %2070 = vmatprep.subr.mxu0 0.0
    %2071 = vmatpush2.msra.mxu0 0.0
    %2072 = vmatprep.subr.mxu0 0.0
    %2073 = vmatpush2.msra.mxu0 0.0
    %2074 = vmatprep.subr.mxu0 0.0
    %2075 = vmatpush2.msra.mxu0 0.0
    %2076 = vmatprep.subr.mxu0 0.0
    %2077 = vmatpush2.msra.mxu0 0.0
    %2078 = vmatprep.subr.mxu0 0.0
    %2079 = vmatpush2.msra.mxu0 0.0
    %2080 = vmatprep.subr.mxu0 0.0
    %2081 = vmatpush2.msra.mxu0 0.0
    %2082 = vmatprep.subr.mxu0 0.0
    %2083 = vmatpush2.msra.mxu0 0.0
    %2084 = vmatprep.subr.mxu0 0.0
    %2085 = vmatpush2.msra.mxu0 0.0
    %2086 = vmatprep.mubr.f32.mxu0 0.0
    %2087 = vmatmul.mubr.f32.gmra.mxu0 %v2020
    %v2088 = vpop.f32.mrf.mxu0
    %v2089 = vadd.f32 0.0, %v2088
    %v2090 = vpop.f32.mrf.mxu0
    %2091 = vdwg.mxu0
    %2093 = vrot.lane.b32.xlu0 %v2007, 96
    %v2094 = vpop.permute.xlu0 %2093
    %v2095 = vsel %vm200, %v2094, 0
    %2097 = vmatprep.subr.mxu0 0.0
    %2098 = vmatpush1.msra.mxu0 0.0
    %2099 = vmatprep.subr.mxu0 0.0
    %2100 = vmatpush1.msra.mxu0 0.0
    %2101 = vmatprep.subr.mxu0 0.0
    %2102 = vmatpush1.msra.mxu0 0.0
    %2103 = vmatprep.subr.mxu0 0.0
    %2104 = vmatpush1.msra.mxu0 0.0
    %2105 = vmatprep.subr.mxu0 0.0
    %2106 = vmatpush1.msra.mxu0 0.0
    %2107 = vmatprep.subr.mxu0 0.0
    %2108 = vmatpush1.msra.mxu0 0.0
    %2109 = vmatprep.subr.mxu0 0.0
    %2110 = vmatpush1.msra.mxu0 0.0
    %2111 = vmatprep.subr.mxu0 0.0
    %2112 = vmatpush1.msra.mxu0 0.0
    %2113 = vmatprep.subr.mxu0 0.0
    %2114 = vmatpush1.msra.mxu0 0.0
    %2115 = vmatprep.subr.mxu0 0.0
    %2116 = vmatpush1.msra.mxu0 0.0
    %2117 = vmatprep.subr.mxu0 0.0
    %2118 = vmatpush1.msra.mxu0 0.0
    %2119 = vmatprep.subr.mxu0 0.0
    %2120 = vmatpush1.msra.mxu0 0.0
    %2121 = vmatprep.subr.mxu0 0.0
    %2122 = vmatpush1.msra.mxu0 0.0
    %2123 = vmatprep.subr.mxu0 0.0
    %2124 = vmatpush1.msra.mxu0 0.0
    %2125 = vmatprep.subr.mxu0 0.0
    %2126 = vmatpush1.msra.mxu0 %v2014
    %2127 = vmatprep.subr.mxu0 0.0
    %2128 = vmatpush1.msra.mxu0 %v2013
    %2129 = vmatprep.subr.mxu0 0.0
    %2130 = vmatpush2.msra.mxu0 0.0
    %2131 = vmatprep.subr.mxu0 0.0
    %2132 = vmatpush2.msra.mxu0 0.0
    %2133 = vmatprep.subr.mxu0 0.0
    %2134 = vmatpush2.msra.mxu0 0.0
    %2135 = vmatprep.subr.mxu0 0.0
    %2136 = vmatpush2.msra.mxu0 0.0
    %2137 = vmatprep.subr.mxu0 0.0
    %2138 = vmatpush2.msra.mxu0 0.0
    %2139 = vmatprep.subr.mxu0 0.0
    %2140 = vmatpush2.msra.mxu0 0.0
    %2141 = vmatprep.subr.mxu0 0.0
    %2142 = vmatpush2.msra.mxu0 0.0
    %2143 = vmatprep.subr.mxu0 0.0
    %2144 = vmatpush2.msra.mxu0 0.0
    %2145 = vmatprep.subr.mxu0 0.0
    %2146 = vmatpush2.msra.mxu0 0.0
    %2147 = vmatprep.subr.mxu0 0.0
    %2148 = vmatpush2.msra.mxu0 0.0
    %2149 = vmatprep.subr.mxu0 0.0
    %2150 = vmatpush2.msra.mxu0 0.0
    %2151 = vmatprep.subr.mxu0 0.0
    %2152 = vmatpush2.msra.mxu0 0.0
    %2153 = vmatprep.subr.mxu0 0.0
    %2154 = vmatpush2.msra.mxu0 0.0
    %2155 = vmatprep.subr.mxu0 0.0
    %2156 = vmatpush2.msra.mxu0 0.0
    %2157 = vmatprep.subr.mxu0 0.0
    %2158 = vmatpush2.msra.mxu0 0.0
    %2159 = vmatprep.subr.mxu0 0.0
    %2160 = vmatpush2.msra.mxu0 0.0
    %2161 = vmatprep.mubr.f32.mxu0 0.0
    %2162 = vmatmul.mubr.f32.gmra.mxu0 %v2095
    %v2163 = vpop.f32.mrf.mxu0
    %v2164 = vadd.f32 %v2089, %v2163
    %v2165 = vpop.f32.mrf.mxu0
    %2166 = vdwg.mxu0
    %v2167 = vld [vmem:[#allocation8] sm:$0x1]
    %v2169 = vlaneseq
    %v2170 = vshrl.u32 %v2169, 7
    %v2171 = vsub.s32 0, %v2170
    %v2172 = vrot.slane %v2167, %v2171
    %v2174 = vadd.f32 %v2164, %v2172
    %v2175 = vld [vmem:[%s6] sm:$0xff]
    %v2176 = vld [vmem:[%s6 + $0x8] sm:$0xff]
    %v2177 = vld [vmem:[%s7] sm:$0xff]
    %v2178 = vld [vmem:[%s7 + $0x8] sm:$0xff]
    %2179 = vmatprep.subr.mxu0 0.0
    %2180 = vmatpush1.msra.mxu0 0.0
    %2181 = vmatprep.subr.mxu0 0.0
    %2182 = vmatpush1.msra.mxu0 0.0
    %2183 = vmatprep.subr.mxu0 0.0
    %2184 = vmatpush1.msra.mxu0 0.0
    %2185 = vmatprep.subr.mxu0 0.0
    %2186 = vmatpush1.msra.mxu0 0.0
    %2187 = vmatprep.subr.mxu0 0.0
    %2188 = vmatpush1.msra.mxu0 0.0
    %2189 = vmatprep.subr.mxu0 0.0
    %2190 = vmatpush1.msra.mxu0 0.0
    %2191 = vmatprep.subr.mxu0 0.0
    %2192 = vmatpush1.msra.mxu0 0.0
    %2193 = vmatprep.subr.mxu0 0.0
    %2194 = vmatpush1.msra.mxu0 0.0
    %2195 = vmatprep.subr.mxu0 0.0
    %2196 = vmatpush1.msra.mxu0 0.0
    %2197 = vmatprep.subr.mxu0 0.0
    %2198 = vmatpush1.msra.mxu0 0.0
    %2199 = vmatprep.subr.mxu0 0.0
    %2200 = vmatpush1.msra.mxu0 0.0
    %2201 = vmatprep.subr.mxu0 0.0
    %2202 = vmatpush1.msra.mxu0 0.0
    %2203 = vmatprep.subr.mxu0 0.0
    %2204 = vmatpush1.msra.mxu0 0.0
    %2205 = vmatprep.subr.mxu0 0.0
    %2206 = vmatpush1.msra.mxu0 0.0
    %2207 = vmatprep.subr.mxu0 0.0
    %2208 = vmatpush1.msra.mxu0 %v2176
    %2209 = vmatprep.subr.mxu0 0.0
    %2210 = vmatpush1.msra.mxu0 %v2175
    %2211 = vmatprep.subr.mxu0 0.0
    %2212 = vmatpush2.msra.mxu0 0.0
    %2213 = vmatprep.subr.mxu0 0.0
    %2214 = vmatpush2.msra.mxu0 0.0
    %2215 = vmatprep.subr.mxu0 0.0
    %2216 = vmatpush2.msra.mxu0 0.0
    %2217 = vmatprep.subr.mxu0 0.0
    %2218 = vmatpush2.msra.mxu0 0.0
    %2219 = vmatprep.subr.mxu0 0.0
    %2220 = vmatpush2.msra.mxu0 0.0
    %2221 = vmatprep.subr.mxu0 0.0
    %2222 = vmatpush2.msra.mxu0 0.0
    %2223 = vmatprep.subr.mxu0 0.0
    %2224 = vmatpush2.msra.mxu0 0.0
    %2225 = vmatprep.subr.mxu0 0.0
    %2226 = vmatpush2.msra.mxu0 0.0
    %2227 = vmatprep.subr.mxu0 0.0
    %2228 = vmatpush2.msra.mxu0 0.0
    %2229 = vmatprep.subr.mxu0 0.0
    %2230 = vmatpush2.msra.mxu0 0.0
    %2231 = vmatprep.subr.mxu0 0.0
    %2232 = vmatpush2.msra.mxu0 0.0
    %2233 = vmatprep.subr.mxu0 0.0
    %2234 = vmatpush2.msra.mxu0 0.0
    %2235 = vmatprep.subr.mxu0 0.0
    %2236 = vmatpush2.msra.mxu0 0.0
    %2237 = vmatprep.subr.mxu0 0.0
    %2238 = vmatpush2.msra.mxu0 0.0
    %2239 = vmatprep.subr.mxu0 0.0
    %2240 = vmatpush2.msra.mxu0 0.0
    %2241 = vmatprep.subr.mxu0 0.0
    %2242 = vmatpush2.msra.mxu0 0.0
    %2243 = vmatprep.mubr.f32.mxu0 0.0
    %2244 = vmatmul.mubr.f32.gmra.mxu0 %v202
    %v2245 = vpop.f32.mrf.mxu0
    %v2246 = vadd.f32 0.0, %v2245
    %v2247 = vpop.f32.mrf.mxu0
    %2248 = vdwg.mxu0
    %v2249 = vadd.f32 %v2174, %v2246
    %2250 = vmatprep.subr.mxu0 0.0
    %2251 = vmatpush1.msra.mxu0 0.0
    %2252 = vmatprep.subr.mxu0 0.0
    %2253 = vmatpush1.msra.mxu0 0.0
    %2254 = vmatprep.subr.mxu0 0.0
    %2255 = vmatpush1.msra.mxu0 0.0
    %2256 = vmatprep.subr.mxu0 0.0
    %2257 = vmatpush1.msra.mxu0 0.0
    %2258 = vmatprep.subr.mxu0 0.0
    %2259 = vmatpush1.msra.mxu0 0.0
    %2260 = vmatprep.subr.mxu0 0.0
    %2261 = vmatpush1.msra.mxu0 0.0
    %2262 = vmatprep.subr.mxu0 0.0
    %2263 = vmatpush1.msra.mxu0 0.0
    %2264 = vmatprep.subr.mxu0 0.0
    %2265 = vmatpush1.msra.mxu0 0.0
    %2266 = vmatprep.subr.mxu0 0.0
    %2267 = vmatpush1.msra.mxu0 0.0
    %2268 = vmatprep.subr.mxu0 0.0
    %2269 = vmatpush1.msra.mxu0 0.0
    %2270 = vmatprep.subr.mxu0 0.0
    %2271 = vmatpush1.msra.mxu0 0.0
    %2272 = vmatprep.subr.mxu0 0.0
    %2273 = vmatpush1.msra.mxu0 0.0
    %2274 = vmatprep.subr.mxu0 0.0
    %2275 = vmatpush1.msra.mxu0 0.0
    %2276 = vmatprep.subr.mxu0 0.0
    %2277 = vmatpush1.msra.mxu0 0.0
    %2278 = vmatprep.subr.mxu0 0.0
    %2279 = vmatpush1.msra.mxu0 %v2178
    %2280 = vmatprep.subr.mxu0 0.0
    %2281 = vmatpush1.msra.mxu0 %v2177
    %2282 = vmatprep.subr.mxu0 0.0
    %2283 = vmatpush2.msra.mxu0 0.0
    %2284 = vmatprep.subr.mxu0 0.0
    %2285 = vmatpush2.msra.mxu0 0.0
    %2286 = vmatprep.subr.mxu0 0.0
    %2287 = vmatpush2.msra.mxu0 0.0
    %2288 = vmatprep.subr.mxu0 0.0
    %2289 = vmatpush2.msra.mxu0 0.0
    %2290 = vmatprep.subr.mxu0 0.0
    %2291 = vmatpush2.msra.mxu0 0.0
    %2292 = vmatprep.subr.mxu0 0.0
    %2293 = vmatpush2.msra.mxu0 0.0
    %2294 = vmatprep.subr.mxu0 0.0
    %2295 = vmatpush2.msra.mxu0 0.0
    %2296 = vmatprep.subr.mxu0 0.0
    %2297 = vmatpush2.msra.mxu0 0.0
    %2298 = vmatprep.subr.mxu0 0.0
    %2299 = vmatpush2.msra.mxu0 0.0
    %2300 = vmatprep.subr.mxu0 0.0
    %2301 = vmatpush2.msra.mxu0 0.0
    %2302 = vmatprep.subr.mxu0 0.0
    %2303 = vmatpush2.msra.mxu0 0.0
    %2304 = vmatprep.subr.mxu0 0.0
    %2305 = vmatpush2.msra.mxu0 0.0
    %2306 = vmatprep.subr.mxu0 0.0
    %2307 = vmatpush2.msra.mxu0 0.0
    %2308 = vmatprep.subr.mxu0 0.0
    %2309 = vmatpush2.msra.mxu0 0.0
    %2310 = vmatprep.subr.mxu0 0.0
    %2311 = vmatpush2.msra.mxu0 0.0
    %2312 = vmatprep.subr.mxu0 0.0
    %2313 = vmatpush2.msra.mxu0 0.0
    %2314 = vmatprep.mubr.f32.mxu0 0.0
    %2315 = vmatmul.mubr.f32.gmra.mxu0 %v202
    %v2316 = vpop.f32.mrf.mxu0
    %v2317 = vadd.f32 0.0, %v2316
    %v2318 = vpop.f32.mrf.mxu0
    %2319 = vdwg.mxu0
    %v2321 = vrot.slane %v2317, 1
    %2322 = vrot.lane.b32.xlu0 %v2321, 64
    %v2323 = vpop.permute.xlu0 %2322
    %v2325 = vadd.f32 %v2174, %v2323
    %v2326 = vxor.u32 %v2249, 2147483648
    %v2327 = vmul.f32 %v2326, 1.442695
    %v2328 = vpow.pop %v2327
    %v2329 = vadd.f32 %v2328, 1.0
    %v2330 = vrcp.pop %v2329
    %v2331 = vmul.f32 1.0, %v2330
    %v2332 = vxor.u32 %v2325, 2147483648
    %v2333 = vmul.f32 %v2332, 1.442695
    %v2334 = vpow.pop %v2333
    %v2335 = vadd.f32 %v2334, 1.0
    %v2336 = vrcp.pop %v2335
    %v2337 = vmul.f32 1.0, %v2336
    %v2338 = vtanh.pop %v2249
    %v2339 = vtanh.pop %v2325
    %v2340 = vmul.f32 %v2331, 0.0
    %2342 = vrot.lane.b32.xlu0 %v2338, 80
    %v2343 = vpop.permute.xlu0 %2342
    %v2345 = vmul.f32 %v2331, %v2343
    %2347 = vrot.lane.b32.xlu0 %v2345, 16
    %v2348 = vpop.permute.xlu0 %2347
    %v2350 = vadd.f32 %v2340, %v2348
    %v2351 = vmul.f32 %v2337, 0.0
    %2353 = vrot.lane.b32.xlu0 %v2339, 80
    %v2354 = vpop.permute.xlu0 %2353
    %v2356 = vmul.f32 %v2337, %v2354
    %2358 = vrot.lane.b32.xlu0 %v2356, 16
    %v2359 = vpop.permute.xlu0 %2358
    %v2361 = vadd.f32 %v2351, %v2359
    %v2362 = vtanh.pop %v2350
    %2364 = vrot.lane.b32.xlu0 %v2362, 16
    %v2365 = vpop.permute.xlu0 %2364
    %v2367 = vmul.f32 %v2331, %v2365
    %v2368 = vtanh.pop %v2361
    %2370 = vrot.lane.b32.xlu0 %v2368, 16
    %v2371 = vpop.permute.xlu0 %2370
    %v2373 = vmul.f32 %v2337, %v2371
    %v2374 = vlaneseq
    %v2375 = vshrl.u32 %v2374, 7
    %v2376 = vsub.s32 0, %v2375
    %v2377 = vrot.slane %v2367, %v2376
    %v2378 = vsel %vm401, %v2377, 0.0
    %v2379 = vlaneseq
    %v2380 = vshrl.u32 %v2379, 7
    %v2381 = vsub.s32 7, %v2380
    %v2382 = vrot.slane %v2373, %v2381
    %v2383 = vsel %vm409, %v2382, 0.0
    %2385 = vrot.lane.b32.xlu0 %v2367, 96
    %v2386 = vpop.permute.xlu0 %2385
    %v2387 = vsel %vm200, %v2386, 0
    %2389 = vmatprep.subr.mxu0 0.0
    %2390 = vmatpush1.msra.mxu0 0.0
    %2391 = vmatprep.subr.mxu0 0.0
    %2392 = vmatpush1.msra.mxu0 0.0
    %2393 = vmatprep.subr.mxu0 0.0
    %2394 = vmatpush1.msra.mxu0 0.0
    %2395 = vmatprep.subr.mxu0 0.0
    %2396 = vmatpush1.msra.mxu0 0.0
    %2397 = vmatprep.subr.mxu0 0.0
    %2398 = vmatpush1.msra.mxu0 0.0
    %2399 = vmatprep.subr.mxu0 0.0
    %2400 = vmatpush1.msra.mxu0 0.0
    %2401 = vmatprep.subr.mxu0 0.0
    %2402 = vmatpush1.msra.mxu0 0.0
    %2403 = vmatprep.subr.mxu0 0.0
    %2404 = vmatpush1.msra.mxu0 0.0
    %2405 = vmatprep.subr.mxu0 0.0
    %2406 = vmatpush1.msra.mxu0 0.0
    %2407 = vmatprep.subr.mxu0 0.0
    %2408 = vmatpush1.msra.mxu0 0.0
    %2409 = vmatprep.subr.mxu0 0.0
    %2410 = vmatpush1.msra.mxu0 0.0
    %2411 = vmatprep.subr.mxu0 0.0
    %2412 = vmatpush1.msra.mxu0 0.0
    %2413 = vmatprep.subr.mxu0 0.0
    %2414 = vmatpush1.msra.mxu0 0.0
    %2415 = vmatprep.subr.mxu0 0.0
    %2416 = vmatpush1.msra.mxu0 0.0
    %2417 = vmatprep.subr.mxu0 0.0
    %2418 = vmatpush1.msra.mxu0 %v2176
    %2419 = vmatprep.subr.mxu0 0.0
    %2420 = vmatpush1.msra.mxu0 %v2175
    %2421 = vmatprep.subr.mxu0 0.0
    %2422 = vmatpush2.msra.mxu0 0.0
    %2423 = vmatprep.subr.mxu0 0.0
    %2424 = vmatpush2.msra.mxu0 0.0
    %2425 = vmatprep.subr.mxu0 0.0
    %2426 = vmatpush2.msra.mxu0 0.0
    %2427 = vmatprep.subr.mxu0 0.0
    %2428 = vmatpush2.msra.mxu0 0.0
    %2429 = vmatprep.subr.mxu0 0.0
    %2430 = vmatpush2.msra.mxu0 0.0
    %2431 = vmatprep.subr.mxu0 0.0
    %2432 = vmatpush2.msra.mxu0 0.0
    %2433 = vmatprep.subr.mxu0 0.0
    %2434 = vmatpush2.msra.mxu0 0.0
    %2435 = vmatprep.subr.mxu0 0.0
    %2436 = vmatpush2.msra.mxu0 0.0
    %2437 = vmatprep.subr.mxu0 0.0
    %2438 = vmatpush2.msra.mxu0 0.0
    %2439 = vmatprep.subr.mxu0 0.0
    %2440 = vmatpush2.msra.mxu0 0.0
    %2441 = vmatprep.subr.mxu0 0.0
    %2442 = vmatpush2.msra.mxu0 0.0
    %2443 = vmatprep.subr.mxu0 0.0
    %2444 = vmatpush2.msra.mxu0 0.0
    %2445 = vmatprep.subr.mxu0 0.0
    %2446 = vmatpush2.msra.mxu0 0.0
    %2447 = vmatprep.subr.mxu0 0.0
    %2448 = vmatpush2.msra.mxu0 0.0
    %2449 = vmatprep.subr.mxu0 0.0
    %2450 = vmatpush2.msra.mxu0 0.0
    %2451 = vmatprep.subr.mxu0 0.0
    %2452 = vmatpush2.msra.mxu0 0.0
    %2453 = vmatprep.mubr.f32.mxu0 0.0
    %2454 = vmatmul.mubr.f32.gmra.mxu0 %v2387
    %v2455 = vpop.f32.mrf.mxu0
    %v2456 = vadd.f32 0.0, %v2455
    %v2457 = vpop.f32.mrf.mxu0
    %2458 = vdwg.mxu0
    %v2460 = vrot.slane %v2456, 7
    %v2462 = vadd.f32 %v2174, %v2460
    %v2464 = vrot.slane %v2373, 7
    %2465 = vrot.lane.b32.xlu0 %v2464, 32
    %v2466 = vpop.permute.xlu0 %2465
    %v2467 = vsel %vm200, %v2466, 0
    %2469 = vmatprep.subr.mxu0 0.0
    %2470 = vmatpush1.msra.mxu0 0.0
    %2471 = vmatprep.subr.mxu0 0.0
    %2472 = vmatpush1.msra.mxu0 0.0
    %2473 = vmatprep.subr.mxu0 0.0
    %2474 = vmatpush1.msra.mxu0 0.0
    %2475 = vmatprep.subr.mxu0 0.0
    %2476 = vmatpush1.msra.mxu0 0.0
    %2477 = vmatprep.subr.mxu0 0.0
    %2478 = vmatpush1.msra.mxu0 0.0
    %2479 = vmatprep.subr.mxu0 0.0
    %2480 = vmatpush1.msra.mxu0 0.0
    %2481 = vmatprep.subr.mxu0 0.0
    %2482 = vmatpush1.msra.mxu0 0.0
    %2483 = vmatprep.subr.mxu0 0.0
    %2484 = vmatpush1.msra.mxu0 0.0
    %2485 = vmatprep.subr.mxu0 0.0
    %2486 = vmatpush1.msra.mxu0 0.0
    %2487 = vmatprep.subr.mxu0 0.0
    %2488 = vmatpush1.msra.mxu0 0.0
    %2489 = vmatprep.subr.mxu0 0.0
    %2490 = vmatpush1.msra.mxu0 0.0
    %2491 = vmatprep.subr.mxu0 0.0
    %2492 = vmatpush1.msra.mxu0 0.0
    %2493 = vmatprep.subr.mxu0 0.0
    %2494 = vmatpush1.msra.mxu0 0.0
    %2495 = vmatprep.subr.mxu0 0.0
    %2496 = vmatpush1.msra.mxu0 0.0
    %2497 = vmatprep.subr.mxu0 0.0
    %2498 = vmatpush1.msra.mxu0 %v2178
    %2499 = vmatprep.subr.mxu0 0.0
    %2500 = vmatpush1.msra.mxu0 %v2177
    %2501 = vmatprep.subr.mxu0 0.0
    %2502 = vmatpush2.msra.mxu0 0.0
    %2503 = vmatprep.subr.mxu0 0.0
    %2504 = vmatpush2.msra.mxu0 0.0
    %2505 = vmatprep.subr.mxu0 0.0
    %2506 = vmatpush2.msra.mxu0 0.0
    %2507 = vmatprep.subr.mxu0 0.0
    %2508 = vmatpush2.msra.mxu0 0.0
    %2509 = vmatprep.subr.mxu0 0.0
    %2510 = vmatpush2.msra.mxu0 0.0
    %2511 = vmatprep.subr.mxu0 0.0
    %2512 = vmatpush2.msra.mxu0 0.0
    %2513 = vmatprep.subr.mxu0 0.0
    %2514 = vmatpush2.msra.mxu0 0.0
    %2515 = vmatprep.subr.mxu0 0.0
    %2516 = vmatpush2.msra.mxu0 0.0
    %2517 = vmatprep.subr.mxu0 0.0
    %2518 = vmatpush2.msra.mxu0 0.0
    %2519 = vmatprep.subr.mxu0 0.0
    %2520 = vmatpush2.msra.mxu0 0.0
    %2521 = vmatprep.subr.mxu0 0.0
    %2522 = vmatpush2.msra.mxu0 0.0
    %2523 = vmatprep.subr.mxu0 0.0
    %2524 = vmatpush2.msra.mxu0 0.0
    %2525 = vmatprep.subr.mxu0 0.0
    %2526 = vmatpush2.msra.mxu0 0.0
    %2527 = vmatprep.subr.mxu0 0.0
    %2528 = vmatpush2.msra.mxu0 0.0
    %2529 = vmatprep.subr.mxu0 0.0
    %2530 = vmatpush2.msra.mxu0 0.0
    %2531 = vmatprep.subr.mxu0 0.0
    %2532 = vmatpush2.msra.mxu0 0.0
    %2533 = vmatprep.mubr.f32.mxu0 0.0
    %2534 = vmatmul.mubr.f32.gmra.mxu0 %v2467
    %v2535 = vpop.f32.mrf.mxu0
    %v2536 = vadd.f32 0.0, %v2535
    %v2537 = vpop.f32.mrf.mxu0
    %2538 = vdwg.mxu0
    %v2540 = vrot.slane %v2536, 2
    %2541 = vrot.lane.b32.xlu0 %v2540, 64
    %v2542 = vpop.permute.xlu0 %2541
    %v2544 = vadd.f32 %v2174, %v2542
    %v2545 = vxor.u32 %v2462, 2147483648
    %v2546 = vmul.f32 %v2545, 1.442695
    %v2547 = vpow.pop %v2546
    %v2548 = vadd.f32 %v2547, 1.0
    %v2549 = vrcp.pop %v2548
    %v2550 = vmul.f32 1.0, %v2549
    %v2551 = vxor.u32 %v2544, 2147483648
    %v2552 = vmul.f32 %v2551, 1.442695
    %v2553 = vpow.pop %v2552
    %v2554 = vadd.f32 %v2553, 1.0
    %v2555 = vrcp.pop %v2554
    %v2556 = vmul.f32 1.0, %v2555
    %v2557 = vtanh.pop %v2462
    %v2558 = vtanh.pop %v2544
    %v2560 = vrot.slane %v2350, 7
    %v2562 = vmul.f32 %v2550, %v2560
    %2564 = vrot.lane.b32.xlu0 %v2557, 80
    %v2565 = vpop.permute.xlu0 %2564
    %v2567 = vmul.f32 %v2550, %v2565
    %2569 = vrot.lane.b32.xlu0 %v2567, 16
    %v2570 = vpop.permute.xlu0 %2569
    %v2572 = vadd.f32 %v2562, %v2570
    %v2574 = vrot.slane %v2361, 1
    %v2576 = vmul.f32 %v2556, %v2574
    %2578 = vrot.lane.b32.xlu0 %v2558, 80
    %v2579 = vpop.permute.xlu0 %2578
    %v2581 = vmul.f32 %v2556, %v2579
    %2583 = vrot.lane.b32.xlu0 %v2581, 16
    %v2584 = vpop.permute.xlu0 %2583
    %v2586 = vadd.f32 %v2576, %v2584
    %v2587 = vtanh.pop %v2572
    %2589 = vrot.lane.b32.xlu0 %v2587, 16
    %v2590 = vpop.permute.xlu0 %2589
    %v2592 = vmul.f32 %v2550, %v2590
    %v2593 = vtanh.pop %v2586
    %2595 = vrot.lane.b32.xlu0 %v2593, 16
    %v2596 = vpop.permute.xlu0 %2595
    %v2598 = vmul.f32 %v2556, %v2596
    %v2599 = vlaneseq
    %v2600 = vshrl.u32 %v2599, 7
    %v2601 = vsub.s32 1, %v2600
    %v2602 = vrot.slane %v2592, %v2601
    %v2603 = vsel %vm632, %v2602, %v2378
    %v2604 = vlaneseq
    %v2605 = vshrl.u32 %v2604, 7
    %v2606 = vsub.s32 6, %v2605
    %v2607 = vrot.slane %v2598, %v2606
    %v2608 = vsel %vm640, %v2607, %v2383
    %v2610 = vrot.slane %v2592, 1
    %2611 = vrot.lane.b32.xlu0 %v2610, 96
    %v2612 = vpop.permute.xlu0 %2611
    %v2613 = vsel %vm200, %v2612, 0
    %2615 = vmatprep.subr.mxu0 0.0
    %2616 = vmatpush1.msra.mxu0 0.0
    %2617 = vmatprep.subr.mxu0 0.0
    %2618 = vmatpush1.msra.mxu0 0.0
    %2619 = vmatprep.subr.mxu0 0.0
    %2620 = vmatpush1.msra.mxu0 0.0
    %2621 = vmatprep.subr.mxu0 0.0
    %2622 = vmatpush1.msra.mxu0 0.0
    %2623 = vmatprep.subr.mxu0 0.0
    %2624 = vmatpush1.msra.mxu0 0.0
    %2625 = vmatprep.subr.mxu0 0.0
    %2626 = vmatpush1.msra.mxu0 0.0
    %2627 = vmatprep.subr.mxu0 0.0
    %2628 = vmatpush1.msra.mxu0 0.0
    %2629 = vmatprep.subr.mxu0 0.0
    %2630 = vmatpush1.msra.mxu0 0.0
    %2631 = vmatprep.subr.mxu0 0.0
    %2632 = vmatpush1.msra.mxu0 0.0
    %2633 = vmatprep.subr.mxu0 0.0
    %2634 = vmatpush1.msra.mxu0 0.0
    %2635 = vmatprep.subr.mxu0 0.0
    %2636 = vmatpush1.msra.mxu0 0.0
    %2637 = vmatprep.subr.mxu0 0.0
    %2638 = vmatpush1.msra.mxu0 0.0
    %2639 = vmatprep.subr.mxu0 0.0
    %2640 = vmatpush1.msra.mxu0 0.0
    %2641 = vmatprep.subr.mxu0 0.0
    %2642 = vmatpush1.msra.mxu0 0.0
    %2643 = vmatprep.subr.mxu0 0.0
    %2644 = vmatpush1.msra.mxu0 %v2176
    %2645 = vmatprep.subr.mxu0 0.0
    %2646 = vmatpush1.msra.mxu0 %v2175
    %2647 = vmatprep.subr.mxu0 0.0
    %2648 = vmatpush2.msra.mxu0 0.0
    %2649 = vmatprep.subr.mxu0 0.0
    %2650 = vmatpush2.msra.mxu0 0.0
    %2651 = vmatprep.subr.mxu0 0.0
    %2652 = vmatpush2.msra.mxu0 0.0
    %2653 = vmatprep.subr.mxu0 0.0
    %2654 = vmatpush2.msra.mxu0 0.0
    %2655 = vmatprep.subr.mxu0 0.0
    %2656 = vmatpush2.msra.mxu0 0.0
    %2657 = vmatprep.subr.mxu0 0.0
    %2658 = vmatpush2.msra.mxu0 0.0
    %2659 = vmatprep.subr.mxu0 0.0
    %2660 = vmatpush2.msra.mxu0 0.0
    %2661 = vmatprep.subr.mxu0 0.0
    %2662 = vmatpush2.msra.mxu0 0.0
    %2663 = vmatprep.subr.mxu0 0.0
    %2664 = vmatpush2.msra.mxu0 0.0
    %2665 = vmatprep.subr.mxu0 0.0
    %2666 = vmatpush2.msra.mxu0 0.0
    %2667 = vmatprep.subr.mxu0 0.0
    %2668 = vmatpush2.msra.mxu0 0.0
    %2669 = vmatprep.subr.mxu0 0.0
    %2670 = vmatpush2.msra.mxu0 0.0
    %2671 = vmatprep.subr.mxu0 0.0
    %2672 = vmatpush2.msra.mxu0 0.0
    %2673 = vmatprep.subr.mxu0 0.0
    %2674 = vmatpush2.msra.mxu0 0.0
    %2675 = vmatprep.subr.mxu0 0.0
    %2676 = vmatpush2.msra.mxu0 0.0
    %2677 = vmatprep.subr.mxu0 0.0
    %2678 = vmatpush2.msra.mxu0 0.0
    %2679 = vmatprep.mubr.f32.mxu0 0.0
    %2680 = vmatmul.mubr.f32.gmra.mxu0 %v2613
    %v2681 = vpop.f32.mrf.mxu0
    %v2682 = vadd.f32 0.0, %v2681
    %v2683 = vpop.f32.mrf.mxu0
    %2684 = vdwg.mxu0
    %v2686 = vrot.slane %v2682, 6
    %v2688 = vadd.f32 %v2174, %v2686
    %v2690 = vrot.slane %v2598, 6
    %2691 = vrot.lane.b32.xlu0 %v2690, 32
    %v2692 = vpop.permute.xlu0 %2691
    %v2693 = vsel %vm200, %v2692, 0
    %2695 = vmatprep.subr.mxu0 0.0
    %2696 = vmatpush1.msra.mxu0 0.0
    %2697 = vmatprep.subr.mxu0 0.0
    %2698 = vmatpush1.msra.mxu0 0.0
    %2699 = vmatprep.subr.mxu0 0.0
    %2700 = vmatpush1.msra.mxu0 0.0
    %2701 = vmatprep.subr.mxu0 0.0
    %2702 = vmatpush1.msra.mxu0 0.0
    %2703 = vmatprep.subr.mxu0 0.0
    %2704 = vmatpush1.msra.mxu0 0.0
    %2705 = vmatprep.subr.mxu0 0.0
    %2706 = vmatpush1.msra.mxu0 0.0
    %2707 = vmatprep.subr.mxu0 0.0
    %2708 = vmatpush1.msra.mxu0 0.0
    %2709 = vmatprep.subr.mxu0 0.0
    %2710 = vmatpush1.msra.mxu0 0.0
    %2711 = vmatprep.subr.mxu0 0.0
    %2712 = vmatpush1.msra.mxu0 0.0
    %2713 = vmatprep.subr.mxu0 0.0
    %2714 = vmatpush1.msra.mxu0 0.0
    %2715 = vmatprep.subr.mxu0 0.0
    %2716 = vmatpush1.msra.mxu0 0.0
    %2717 = vmatprep.subr.mxu0 0.0
    %2718 = vmatpush1.msra.mxu0 0.0
    %2719 = vmatprep.subr.mxu0 0.0
    %2720 = vmatpush1.msra.mxu0 0.0
    %2721 = vmatprep.subr.mxu0 0.0
    %2722 = vmatpush1.msra.mxu0 0.0
    %2723 = vmatprep.subr.mxu0 0.0
    %2724 = vmatpush1.msra.mxu0 %v2178
    %2725 = vmatprep.subr.mxu0 0.0
    %2726 = vmatpush1.msra.mxu0 %v2177
    %2727 = vmatprep.subr.mxu0 0.0
    %2728 = vmatpush2.msra.mxu0 0.0
    %2729 = vmatprep.subr.mxu0 0.0
    %2730 = vmatpush2.msra.mxu0 0.0
    %2731 = vmatprep.subr.mxu0 0.0
    %2732 = vmatpush2.msra.mxu0 0.0
    %2733 = vmatprep.subr.mxu0 0.0
    %2734 = vmatpush2.msra.mxu0 0.0
    %2735 = vmatprep.subr.mxu0 0.0
    %2736 = vmatpush2.msra.mxu0 0.0
    %2737 = vmatprep.subr.mxu0 0.0
    %2738 = vmatpush2.msra.mxu0 0.0
    %2739 = vmatprep.subr.mxu0 0.0
    %2740 = vmatpush2.msra.mxu0 0.0
    %2741 = vmatprep.subr.mxu0 0.0
    %2742 = vmatpush2.msra.mxu0 0.0
    %2743 = vmatprep.subr.mxu0 0.0
    %2744 = vmatpush2.msra.mxu0 0.0
    %2745 = vmatprep.subr.mxu0 0.0
    %2746 = vmatpush2.msra.mxu0 0.0
    %2747 = vmatprep.subr.mxu0 0.0
    %2748 = vmatpush2.msra.mxu0 0.0
    %2749 = vmatprep.subr.mxu0 0.0
    %2750 = vmatpush2.msra.mxu0 0.0
    %2751 = vmatprep.subr.mxu0 0.0
    %2752 = vmatpush2.msra.mxu0 0.0
    %2753 = vmatprep.subr.mxu0 0.0
    %2754 = vmatpush2.msra.mxu0 0.0
    %2755 = vmatprep.subr.mxu0 0.0
    %2756 = vmatpush2.msra.mxu0 0.0
    %2757 = vmatprep.subr.mxu0 0.0
    %2758 = vmatpush2.msra.mxu0 0.0
    %2759 = vmatprep.mubr.f32.mxu0 0.0
    %2760 = vmatmul.mubr.f32.gmra.mxu0 %v2693
    %v2761 = vpop.f32.mrf.mxu0
    %v2762 = vadd.f32 0.0, %v2761
    %v2763 = vpop.f32.mrf.mxu0
    %2764 = vdwg.mxu0
    %v2766 = vrot.slane %v2762, 3
    %2767 = vrot.lane.b32.xlu0 %v2766, 64
    %v2768 = vpop.permute.xlu0 %2767
    %v2770 = vadd.f32 %v2174, %v2768
    %v2771 = vxor.u32 %v2688, 2147483648
    %v2772 = vmul.f32 %v2771, 1.442695
    %v2773 = vpow.pop %v2772
    %v2774 = vadd.f32 %v2773, 1.0
    %v2775 = vrcp.pop %v2774
    %v2776 = vmul.f32 1.0, %v2775
    %v2777 = vxor.u32 %v2770, 2147483648
    %v2778 = vmul.f32 %v2777, 1.442695
    %v2779 = vpow.pop %v2778
    %v2780 = vadd.f32 %v2779, 1.0
    %v2781 = vrcp.pop %v2780
    %v2782 = vmul.f32 1.0, %v2781
    %v2783 = vtanh.pop %v2688
    %v2784 = vtanh.pop %v2770
    %v2786 = vrot.slane %v2572, 7
    %v2788 = vmul.f32 %v2776, %v2786
    %2790 = vrot.lane.b32.xlu0 %v2783, 80
    %v2791 = vpop.permute.xlu0 %2790
    %v2793 = vmul.f32 %v2776, %v2791
    %2795 = vrot.lane.b32.xlu0 %v2793, 16
    %v2796 = vpop.permute.xlu0 %2795
    %v2798 = vadd.f32 %v2788, %v2796
    %v2800 = vrot.slane %v2586, 1
    %v2802 = vmul.f32 %v2782, %v2800
    %2804 = vrot.lane.b32.xlu0 %v2784, 80
    %v2805 = vpop.permute.xlu0 %2804
    %v2807 = vmul.f32 %v2782, %v2805
    %2809 = vrot.lane.b32.xlu0 %v2807, 16
    %v2810 = vpop.permute.xlu0 %2809
    %v2812 = vadd.f32 %v2802, %v2810
    %v2813 = vtanh.pop %v2798
    %2815 = vrot.lane.b32.xlu0 %v2813, 16
    %v2816 = vpop.permute.xlu0 %2815
    %v2818 = vmul.f32 %v2776, %v2816
    %v2819 = vtanh.pop %v2812
    %2821 = vrot.lane.b32.xlu0 %v2819, 16
    %v2822 = vpop.permute.xlu0 %2821
    %v2824 = vmul.f32 %v2782, %v2822
    %v2825 = vlaneseq
    %v2826 = vshrl.u32 %v2825, 7
    %v2827 = vsub.s32 2, %v2826
    %v2828 = vrot.slane %v2818, %v2827
    %v2829 = vsel %vm864, %v2828, %v2603
    %v2830 = vlaneseq
    %v2831 = vshrl.u32 %v2830, 7
    %v2832 = vsub.s32 5, %v2831
    %v2833 = vrot.slane %v2824, %v2832
    %v2834 = vsel %vm872, %v2833, %v2608
    %v2836 = vrot.slane %v2818, 2
    %2837 = vrot.lane.b32.xlu0 %v2836, 96
    %v2838 = vpop.permute.xlu0 %2837
    %v2839 = vsel %vm200, %v2838, 0
    %2841 = vmatprep.subr.mxu0 0.0
    %2842 = vmatpush1.msra.mxu0 0.0
    %2843 = vmatprep.subr.mxu0 0.0
    %2844 = vmatpush1.msra.mxu0 0.0
    %2845 = vmatprep.subr.mxu0 0.0
    %2846 = vmatpush1.msra.mxu0 0.0
    %2847 = vmatprep.subr.mxu0 0.0
    %2848 = vmatpush1.msra.mxu0 0.0
    %2849 = vmatprep.subr.mxu0 0.0
    %2850 = vmatpush1.msra.mxu0 0.0
    %2851 = vmatprep.subr.mxu0 0.0
    %2852 = vmatpush1.msra.mxu0 0.0
    %2853 = vmatprep.subr.mxu0 0.0
    %2854 = vmatpush1.msra.mxu0 0.0
    %2855 = vmatprep.subr.mxu0 0.0
    %2856 = vmatpush1.msra.mxu0 0.0
    %2857 = vmatprep.subr.mxu0 0.0
    %2858 = vmatpush1.msra.mxu0 0.0
    %2859 = vmatprep.subr.mxu0 0.0
    %2860 = vmatpush1.msra.mxu0 0.0
    %2861 = vmatprep.subr.mxu0 0.0
    %2862 = vmatpush1.msra.mxu0 0.0
    %2863 = vmatprep.subr.mxu0 0.0
    %2864 = vmatpush1.msra.mxu0 0.0
    %2865 = vmatprep.subr.mxu0 0.0
    %2866 = vmatpush1.msra.mxu0 0.0
    %2867 = vmatprep.subr.mxu0 0.0
    %2868 = vmatpush1.msra.mxu0 0.0
    %2869 = vmatprep.subr.mxu0 0.0
    %2870 = vmatpush1.msra.mxu0 %v2176
    %2871 = vmatprep.subr.mxu0 0.0
    %2872 = vmatpush1.msra.mxu0 %v2175
    %2873 = vmatprep.subr.mxu0 0.0
    %2874 = vmatpush2.msra.mxu0 0.0
    %2875 = vmatprep.subr.mxu0 0.0
    %2876 = vmatpush2.msra.mxu0 0.0
    %2877 = vmatprep.subr.mxu0 0.0
    %2878 = vmatpush2.msra.mxu0 0.0
    %2879 = vmatprep.subr.mxu0 0.0
    %2880 = vmatpush2.msra.mxu0 0.0
    %2881 = vmatprep.subr.mxu0 0.0
    %2882 = vmatpush2.msra.mxu0 0.0
    %2883 = vmatprep.subr.mxu0 0.0
    %2884 = vmatpush2.msra.mxu0 0.0
    %2885 = vmatprep.subr.mxu0 0.0
    %2886 = vmatpush2.msra.mxu0 0.0
    %2887 = vmatprep.subr.mxu0 0.0
    %2888 = vmatpush2.msra.mxu0 0.0
    %2889 = vmatprep.subr.mxu0 0.0
    %2890 = vmatpush2.msra.mxu0 0.0
    %2891 = vmatprep.subr.mxu0 0.0
    %2892 = vmatpush2.msra.mxu0 0.0
    %2893 = vmatprep.subr.mxu0 0.0
    %2894 = vmatpush2.msra.mxu0 0.0
    %2895 = vmatprep.subr.mxu0 0.0
    %2896 = vmatpush2.msra.mxu0 0.0
    %2897 = vmatprep.subr.mxu0 0.0
    %2898 = vmatpush2.msra.mxu0 0.0
    %2899 = vmatprep.subr.mxu0 0.0
    %2900 = vmatpush2.msra.mxu0 0.0
    %2901 = vmatprep.subr.mxu0 0.0
    %2902 = vmatpush2.msra.mxu0 0.0
    %2903 = vmatprep.subr.mxu0 0.0
    %2904 = vmatpush2.msra.mxu0 0.0
    %2905 = vmatprep.mubr.f32.mxu0 0.0
    %2906 = vmatmul.mubr.f32.gmra.mxu0 %v2839
    %v2907 = vpop.f32.mrf.mxu0
    %v2908 = vadd.f32 0.0, %v2907
    %v2909 = vpop.f32.mrf.mxu0
    %2910 = vdwg.mxu0
    %v2912 = vrot.slane %v2908, 5
    %v2914 = vadd.f32 %v2174, %v2912
    %v2916 = vrot.slane %v2824, 5
    %2917 = vrot.lane.b32.xlu0 %v2916, 32
    %v2918 = vpop.permute.xlu0 %2917
    %v2919 = vsel %vm200, %v2918, 0
    %2921 = vmatprep.subr.mxu0 0.0
    %2922 = vmatpush1.msra.mxu0 0.0
    %2923 = vmatprep.subr.mxu0 0.0
    %2924 = vmatpush1.msra.mxu0 0.0
    %2925 = vmatprep.subr.mxu0 0.0
    %2926 = vmatpush1.msra.mxu0 0.0
    %2927 = vmatprep.subr.mxu0 0.0
    %2928 = vmatpush1.msra.mxu0 0.0
    %2929 = vmatprep.subr.mxu0 0.0
    %2930 = vmatpush1.msra.mxu0 0.0
    %2931 = vmatprep.subr.mxu0 0.0
    %2932 = vmatpush1.msra.mxu0 0.0
    %2933 = vmatprep.subr.mxu0 0.0
    %2934 = vmatpush1.msra.mxu0 0.0
    %2935 = vmatprep.subr.mxu0 0.0
    %2936 = vmatpush1.msra.mxu0 0.0
    %2937 = vmatprep.subr.mxu0 0.0
    %2938 = vmatpush1.msra.mxu0 0.0
    %2939 = vmatprep.subr.mxu0 0.0
    %2940 = vmatpush1.msra.mxu0 0.0
    %2941 = vmatprep.subr.mxu0 0.0
    %2942 = vmatpush1.msra.mxu0 0.0
    %2943 = vmatprep.subr.mxu0 0.0
    %2944 = vmatpush1.msra.mxu0 0.0
    %2945 = vmatprep.subr.mxu0 0.0
    %2946 = vmatpush1.msra.mxu0 0.0
    %2947 = vmatprep.subr.mxu0 0.0
    %2948 = vmatpush1.msra.mxu0 0.0
    %2949 = vmatprep.subr.mxu0 0.0
    %2950 = vmatpush1.msra.mxu0 %v2178
    %2951 = vmatprep.subr.mxu0 0.0
    %2952 = vmatpush1.msra.mxu0 %v2177
    %2953 = vmatprep.subr.mxu0 0.0
    %2954 = vmatpush2.msra.mxu0 0.0
    %2955 = vmatprep.subr.mxu0 0.0
    %2956 = vmatpush2.msra.mxu0 0.0
    %2957 = vmatprep.subr.mxu0 0.0
    %2958 = vmatpush2.msra.mxu0 0.0
    %2959 = vmatprep.subr.mxu0 0.0
    %2960 = vmatpush2.msra.mxu0 0.0
    %2961 = vmatprep.subr.mxu0 0.0
    %2962 = vmatpush2.msra.mxu0 0.0
    %2963 = vmatprep.subr.mxu0 0.0
    %2964 = vmatpush2.msra.mxu0 0.0
    %2965 = vmatprep.subr.mxu0 0.0
    %2966 = vmatpush2.msra.mxu0 0.0
    %2967 = vmatprep.subr.mxu0 0.0
    %2968 = vmatpush2.msra.mxu0 0.0
    %2969 = vmatprep.subr.mxu0 0.0
    %2970 = vmatpush2.msra.mxu0 0.0
    %2971 = vmatprep.subr.mxu0 0.0
    %2972 = vmatpush2.msra.mxu0 0.0
    %2973 = vmatprep.subr.mxu0 0.0
    %2974 = vmatpush2.msra.mxu0 0.0
    %2975 = vmatprep.subr.mxu0 0.0
    %2976 = vmatpush2.msra.mxu0 0.0
    %2977 = vmatprep.subr.mxu0 0.0
    %2978 = vmatpush2.msra.mxu0 0.0
    %2979 = vmatprep.subr.mxu0 0.0
    %2980 = vmatpush2.msra.mxu0 0.0
    %2981 = vmatprep.subr.mxu0 0.0
    %2982 = vmatpush2.msra.mxu0 0.0
    %2983 = vmatprep.subr.mxu0 0.0
    %2984 = vmatpush2.msra.mxu0 0.0
    %2985 = vmatprep.mubr.f32.mxu0 0.0
    %2986 = vmatmul.mubr.f32.gmra.mxu0 %v2919
    %v2987 = vpop.f32.mrf.mxu0
    %v2988 = vadd.f32 0.0, %v2987
    %v2989 = vpop.f32.mrf.mxu0
    %2990 = vdwg.mxu0
    %v2992 = vrot.slane %v2988, 4
    %2993 = vrot.lane.b32.xlu0 %v2992, 64
    %v2994 = vpop.permute.xlu0 %2993
    %v2996 = vadd.f32 %v2174, %v2994
    %v2997 = vxor.u32 %v2914, 2147483648
    %v2998 = vmul.f32 %v2997, 1.442695
    %v2999 = vpow.pop %v2998
    %v3000 = vadd.f32 %v2999, 1.0
    %v3001 = vrcp.pop %v3000
    %v3002 = vmul.f32 1.0, %v3001
    %v3003 = vxor.u32 %v2996, 2147483648
    %v3004 = vmul.f32 %v3003, 1.442695
    %v3005 = vpow.pop %v3004
    %v3006 = vadd.f32 %v3005, 1.0
    %v3007 = vrcp.pop %v3006
    %v3008 = vmul.f32 1.0, %v3007
    %v3009 = vtanh.pop %v2914
    %v3010 = vtanh.pop %v2996
    %v3012 = vrot.slane %v2798, 7
    %v3014 = vmul.f32 %v3002, %v3012
    %3016 = vrot.lane.b32.xlu0 %v3009, 80
    %v3017 = vpop.permute.xlu0 %3016
    %v3019 = vmul.f32 %v3002, %v3017
    %3021 = vrot.lane.b32.xlu0 %v3019, 16
    %v3022 = vpop.permute.xlu0 %3021
    %v3024 = vadd.f32 %v3014, %v3022
    %v3026 = vrot.slane %v2812, 1
    %v3028 = vmul.f32 %v3008, %v3026
    %3030 = vrot.lane.b32.xlu0 %v3010, 80
    %v3031 = vpop.permute.xlu0 %3030
    %v3033 = vmul.f32 %v3008, %v3031
    %3035 = vrot.lane.b32.xlu0 %v3033, 16
    %v3036 = vpop.permute.xlu0 %3035
    %v3038 = vadd.f32 %v3028, %v3036
    %v3039 = vtanh.pop %v3024
    %3041 = vrot.lane.b32.xlu0 %v3039, 16
    %v3042 = vpop.permute.xlu0 %3041
    %v3044 = vmul.f32 %v3002, %v3042
    %v3045 = vtanh.pop %v3038
    %3047 = vrot.lane.b32.xlu0 %v3045, 16
    %v3048 = vpop.permute.xlu0 %3047
    %v3050 = vmul.f32 %v3008, %v3048
    %v3051 = vlaneseq
    %v3052 = vshrl.u32 %v3051, 7
    %v3053 = vsub.s32 3, %v3052
    %v3054 = vrot.slane %v3044, %v3053
    %v3055 = vsel %vm1096, %v3054, %v2829
    %v3056 = vlaneseq
    %v3057 = vshrl.u32 %v3056, 7
    %v3058 = vsub.s32 4, %v3057
    %v3059 = vrot.slane %v3050, %v3058
    %v3060 = vsel %vm1104, %v3059, %v2834
    %v3062 = vrot.slane %v3044, 3
    %3063 = vrot.lane.b32.xlu0 %v3062, 96
    %v3064 = vpop.permute.xlu0 %3063
    %v3065 = vsel %vm200, %v3064, 0
    %3067 = vmatprep.subr.mxu0 0.0
    %3068 = vmatpush1.msra.mxu0 0.0
    %3069 = vmatprep.subr.mxu0 0.0
    %3070 = vmatpush1.msra.mxu0 0.0
    %3071 = vmatprep.subr.mxu0 0.0
    %3072 = vmatpush1.msra.mxu0 0.0
    %3073 = vmatprep.subr.mxu0 0.0
    %3074 = vmatpush1.msra.mxu0 0.0
    %3075 = vmatprep.subr.mxu0 0.0
    %3076 = vmatpush1.msra.mxu0 0.0
    %3077 = vmatprep.subr.mxu0 0.0
    %3078 = vmatpush1.msra.mxu0 0.0
    %3079 = vmatprep.subr.mxu0 0.0
    %3080 = vmatpush1.msra.mxu0 0.0
    %3081 = vmatprep.subr.mxu0 0.0
    %3082 = vmatpush1.msra.mxu0 0.0
    %3083 = vmatprep.subr.mxu0 0.0
    %3084 = vmatpush1.msra.mxu0 0.0
    %3085 = vmatprep.subr.mxu0 0.0
    %3086 = vmatpush1.msra.mxu0 0.0
    %3087 = vmatprep.subr.mxu0 0.0
    %3088 = vmatpush1.msra.mxu0 0.0
    %3089 = vmatprep.subr.mxu0 0.0
    %3090 = vmatpush1.msra.mxu0 0.0
    %3091 = vmatprep.subr.mxu0 0.0
    %3092 = vmatpush1.msra.mxu0 0.0
    %3093 = vmatprep.subr.mxu0 0.0
    %3094 = vmatpush1.msra.mxu0 0.0
    %3095 = vmatprep.subr.mxu0 0.0
    %3096 = vmatpush1.msra.mxu0 %v2176
    %3097 = vmatprep.subr.mxu0 0.0
    %3098 = vmatpush1.msra.mxu0 %v2175
    %3099 = vmatprep.subr.mxu0 0.0
    %3100 = vmatpush2.msra.mxu0 0.0
    %3101 = vmatprep.subr.mxu0 0.0
    %3102 = vmatpush2.msra.mxu0 0.0
    %3103 = vmatprep.subr.mxu0 0.0
    %3104 = vmatpush2.msra.mxu0 0.0
    %3105 = vmatprep.subr.mxu0 0.0
    %3106 = vmatpush2.msra.mxu0 0.0
    %3107 = vmatprep.subr.mxu0 0.0
    %3108 = vmatpush2.msra.mxu0 0.0
    %3109 = vmatprep.subr.mxu0 0.0
    %3110 = vmatpush2.msra.mxu0 0.0
    %3111 = vmatprep.subr.mxu0 0.0
    %3112 = vmatpush2.msra.mxu0 0.0
    %3113 = vmatprep.subr.mxu0 0.0
    %3114 = vmatpush2.msra.mxu0 0.0
    %3115 = vmatprep.subr.mxu0 0.0
    %3116 = vmatpush2.msra.mxu0 0.0
    %3117 = vmatprep.subr.mxu0 0.0
    %3118 = vmatpush2.msra.mxu0 0.0
    %3119 = vmatprep.subr.mxu0 0.0
    %3120 = vmatpush2.msra.mxu0 0.0
    %3121 = vmatprep.subr.mxu0 0.0
    %3122 = vmatpush2.msra.mxu0 0.0
    %3123 = vmatprep.subr.mxu0 0.0
    %3124 = vmatpush2.msra.mxu0 0.0
    %3125 = vmatprep.subr.mxu0 0.0
    %3126 = vmatpush2.msra.mxu0 0.0
    %3127 = vmatprep.subr.mxu0 0.0
    %3128 = vmatpush2.msra.mxu0 0.0
    %3129 = vmatprep.subr.mxu0 0.0
    %3130 = vmatpush2.msra.mxu0 0.0
    %3131 = vmatprep.mubr.f32.mxu0 0.0
    %3132 = vmatmul.mubr.f32.gmra.mxu0 %v3065
    %v3133 = vpop.f32.mrf.mxu0
    %v3134 = vadd.f32 0.0, %v3133
    %v3135 = vpop.f32.mrf.mxu0
    %3136 = vdwg.mxu0
    %v3138 = vrot.slane %v3134, 4
    %v3140 = vadd.f32 %v2174, %v3138
    %v3142 = vrot.slane %v3050, 4
    %3143 = vrot.lane.b32.xlu0 %v3142, 32
    %v3144 = vpop.permute.xlu0 %3143
    %v3145 = vsel %vm200, %v3144, 0
    %3147 = vmatprep.subr.mxu0 0.0
    %3148 = vmatpush1.msra.mxu0 0.0
    %3149 = vmatprep.subr.mxu0 0.0
    %3150 = vmatpush1.msra.mxu0 0.0
    %3151 = vmatprep.subr.mxu0 0.0
    %3152 = vmatpush1.msra.mxu0 0.0
    %3153 = vmatprep.subr.mxu0 0.0
    %3154 = vmatpush1.msra.mxu0 0.0
    %3155 = vmatprep.subr.mxu0 0.0
    %3156 = vmatpush1.msra.mxu0 0.0
    %3157 = vmatprep.subr.mxu0 0.0
    %3158 = vmatpush1.msra.mxu0 0.0
    %3159 = vmatprep.subr.mxu0 0.0
    %3160 = vmatpush1.msra.mxu0 0.0
    %3161 = vmatprep.subr.mxu0 0.0
    %3162 = vmatpush1.msra.mxu0 0.0
    %3163 = vmatprep.subr.mxu0 0.0
    %3164 = vmatpush1.msra.mxu0 0.0
    %3165 = vmatprep.subr.mxu0 0.0
    %3166 = vmatpush1.msra.mxu0 0.0
    %3167 = vmatprep.subr.mxu0 0.0
    %3168 = vmatpush1.msra.mxu0 0.0
    %3169 = vmatprep.subr.mxu0 0.0
    %3170 = vmatpush1.msra.mxu0 0.0
    %3171 = vmatprep.subr.mxu0 0.0
    %3172 = vmatpush1.msra.mxu0 0.0
    %3173 = vmatprep.subr.mxu0 0.0
    %3174 = vmatpush1.msra.mxu0 0.0
    %3175 = vmatprep.subr.mxu0 0.0
    %3176 = vmatpush1.msra.mxu0 %v2178
    %3177 = vmatprep.subr.mxu0 0.0
    %3178 = vmatpush1.msra.mxu0 %v2177
    %3179 = vmatprep.subr.mxu0 0.0
    %3180 = vmatpush2.msra.mxu0 0.0
    %3181 = vmatprep.subr.mxu0 0.0
    %3182 = vmatpush2.msra.mxu0 0.0
    %3183 = vmatprep.subr.mxu0 0.0
    %3184 = vmatpush2.msra.mxu0 0.0
    %3185 = vmatprep.subr.mxu0 0.0
    %3186 = vmatpush2.msra.mxu0 0.0
    %3187 = vmatprep.subr.mxu0 0.0
    %3188 = vmatpush2.msra.mxu0 0.0
    %3189 = vmatprep.subr.mxu0 0.0
    %3190 = vmatpush2.msra.mxu0 0.0
    %3191 = vmatprep.subr.mxu0 0.0
    %3192 = vmatpush2.msra.mxu0 0.0
    %3193 = vmatprep.subr.mxu0 0.0
    %3194 = vmatpush2.msra.mxu0 0.0
    %3195 = vmatprep.subr.mxu0 0.0
    %3196 = vmatpush2.msra.mxu0 0.0
    %3197 = vmatprep.subr.mxu0 0.0
    %3198 = vmatpush2.msra.mxu0 0.0
    %3199 = vmatprep.subr.mxu0 0.0
    %3200 = vmatpush2.msra.mxu0 0.0
    %3201 = vmatprep.subr.mxu0 0.0
    %3202 = vmatpush2.msra.mxu0 0.0
    %3203 = vmatprep.subr.mxu0 0.0
    %3204 = vmatpush2.msra.mxu0 0.0
    %3205 = vmatprep.subr.mxu0 0.0
    %3206 = vmatpush2.msra.mxu0 0.0
    %3207 = vmatprep.subr.mxu0 0.0
    %3208 = vmatpush2.msra.mxu0 0.0
    %3209 = vmatprep.subr.mxu0 0.0
    %3210 = vmatpush2.msra.mxu0 0.0
    %3211 = vmatprep.mubr.f32.mxu0 0.0
    %3212 = vmatmul.mubr.f32.gmra.mxu0 %v3145
    %v3213 = vpop.f32.mrf.mxu0
    %v3214 = vadd.f32 0.0, %v3213
    %v3215 = vpop.f32.mrf.mxu0
    %3216 = vdwg.mxu0
    %v3218 = vrot.slane %v3214, 5
    %3219 = vrot.lane.b32.xlu0 %v3218, 64
    %v3220 = vpop.permute.xlu0 %3219
    %v3222 = vadd.f32 %v2174, %v3220
    %v3223 = vxor.u32 %v3140, 2147483648
    %v3224 = vmul.f32 %v3223, 1.442695
    %v3225 = vpow.pop %v3224
    %v3226 = vadd.f32 %v3225, 1.0
    %v3227 = vrcp.pop %v3226
    %v3228 = vmul.f32 1.0, %v3227
    %v3229 = vxor.u32 %v3222, 2147483648
    %v3230 = vmul.f32 %v3229, 1.442695
    %v3231 = vpow.pop %v3230
    %v3232 = vadd.f32 %v3231, 1.0
    %v3233 = vrcp.pop %v3232
    %v3234 = vmul.f32 1.0, %v3233
    %v3235 = vtanh.pop %v3140
    %v3236 = vtanh.pop %v3222
    %v3238 = vrot.slane %v3024, 7
    %v3240 = vmul.f32 %v3228, %v3238
    %3242 = vrot.lane.b32.xlu0 %v3235, 80
    %v3243 = vpop.permute.xlu0 %3242
    %v3245 = vmul.f32 %v3228, %v3243
    %3247 = vrot.lane.b32.xlu0 %v3245, 16
    %v3248 = vpop.permute.xlu0 %3247
    %v3250 = vadd.f32 %v3240, %v3248
    %v3252 = vrot.slane %v3038, 1
    %v3254 = vmul.f32 %v3234, %v3252
    %3256 = vrot.lane.b32.xlu0 %v3236, 80
    %v3257 = vpop.permute.xlu0 %3256
    %v3259 = vmul.f32 %v3234, %v3257
    %3261 = vrot.lane.b32.xlu0 %v3259, 16
    %v3262 = vpop.permute.xlu0 %3261
    %v3264 = vadd.f32 %v3254, %v3262
    %v3265 = vtanh.pop %v3250
    %3267 = vrot.lane.b32.xlu0 %v3265, 16
    %v3268 = vpop.permute.xlu0 %3267
    %v3270 = vmul.f32 %v3228, %v3268
    %v3271 = vtanh.pop %v3264
    %3273 = vrot.lane.b32.xlu0 %v3271, 16
    %v3274 = vpop.permute.xlu0 %3273
    %v3276 = vmul.f32 %v3234, %v3274
    %v3277 = vlaneseq
    %v3278 = vshrl.u32 %v3277, 7
    %v3279 = vsub.s32 4, %v3278
    %v3280 = vrot.slane %v3270, %v3279
    %v3281 = vsel %vm1104, %v3280, %v3055
    %v3282 = vlaneseq
    %v3283 = vshrl.u32 %v3282, 7
    %v3284 = vsub.s32 3, %v3283
    %v3285 = vrot.slane %v3276, %v3284
    %v3286 = vsel %vm1096, %v3285, %v3060
    %v3288 = vrot.slane %v3270, 4
    %3289 = vrot.lane.b32.xlu0 %v3288, 96
    %v3290 = vpop.permute.xlu0 %3289
    %v3291 = vsel %vm200, %v3290, 0
    %3293 = vmatprep.subr.mxu0 0.0
    %3294 = vmatpush1.msra.mxu0 0.0
    %3295 = vmatprep.subr.mxu0 0.0
    %3296 = vmatpush1.msra.mxu0 0.0
    %3297 = vmatprep.subr.mxu0 0.0
    %3298 = vmatpush1.msra.mxu0 0.0
    %3299 = vmatprep.subr.mxu0 0.0
    %3300 = vmatpush1.msra.mxu0 0.0
    %3301 = vmatprep.subr.mxu0 0.0
    %3302 = vmatpush1.msra.mxu0 0.0
    %3303 = vmatprep.subr.mxu0 0.0
    %3304 = vmatpush1.msra.mxu0 0.0
    %3305 = vmatprep.subr.mxu0 0.0
    %3306 = vmatpush1.msra.mxu0 0.0
    %3307 = vmatprep.subr.mxu0 0.0
    %3308 = vmatpush1.msra.mxu0 0.0
    %3309 = vmatprep.subr.mxu0 0.0
    %3310 = vmatpush1.msra.mxu0 0.0
    %3311 = vmatprep.subr.mxu0 0.0
    %3312 = vmatpush1.msra.mxu0 0.0
    %3313 = vmatprep.subr.mxu0 0.0
    %3314 = vmatpush1.msra.mxu0 0.0
    %3315 = vmatprep.subr.mxu0 0.0
    %3316 = vmatpush1.msra.mxu0 0.0
    %3317 = vmatprep.subr.mxu0 0.0
    %3318 = vmatpush1.msra.mxu0 0.0
    %3319 = vmatprep.subr.mxu0 0.0
    %3320 = vmatpush1.msra.mxu0 0.0
    %3321 = vmatprep.subr.mxu0 0.0
    %3322 = vmatpush1.msra.mxu0 %v2176
    %3323 = vmatprep.subr.mxu0 0.0
    %3324 = vmatpush1.msra.mxu0 %v2175
    %3325 = vmatprep.subr.mxu0 0.0
    %3326 = vmatpush2.msra.mxu0 0.0
    %3327 = vmatprep.subr.mxu0 0.0
    %3328 = vmatpush2.msra.mxu0 0.0
    %3329 = vmatprep.subr.mxu0 0.0
    %3330 = vmatpush2.msra.mxu0 0.0
    %3331 = vmatprep.subr.mxu0 0.0
    %3332 = vmatpush2.msra.mxu0 0.0
    %3333 = vmatprep.subr.mxu0 0.0
    %3334 = vmatpush2.msra.mxu0 0.0
    %3335 = vmatprep.subr.mxu0 0.0
    %3336 = vmatpush2.msra.mxu0 0.0
    %3337 = vmatprep.subr.mxu0 0.0
    %3338 = vmatpush2.msra.mxu0 0.0
    %3339 = vmatprep.subr.mxu0 0.0
    %3340 = vmatpush2.msra.mxu0 0.0
    %3341 = vmatprep.subr.mxu0 0.0
    %3342 = vmatpush2.msra.mxu0 0.0
    %3343 = vmatprep.subr.mxu0 0.0
    %3344 = vmatpush2.msra.mxu0 0.0
    %3345 = vmatprep.subr.mxu0 0.0
    %3346 = vmatpush2.msra.mxu0 0.0
    %3347 = vmatprep.subr.mxu0 0.0
    %3348 = vmatpush2.msra.mxu0 0.0
    %3349 = vmatprep.subr.mxu0 0.0
    %3350 = vmatpush2.msra.mxu0 0.0
    %3351 = vmatprep.subr.mxu0 0.0
    %3352 = vmatpush2.msra.mxu0 0.0
    %3353 = vmatprep.subr.mxu0 0.0
    %3354 = vmatpush2.msra.mxu0 0.0
    %3355 = vmatprep.subr.mxu0 0.0
    %3356 = vmatpush2.msra.mxu0 0.0
    %3357 = vmatprep.mubr.f32.mxu0 0.0
    %3358 = vmatmul.mubr.f32.gmra.mxu0 %v3291
    %v3359 = vpop.f32.mrf.mxu0
    %v3360 = vadd.f32 0.0, %v3359
    %v3361 = vpop.f32.mrf.mxu0
    %3362 = vdwg.mxu0
    %v3364 = vrot.slane %v3360, 3
    %v3366 = vadd.f32 %v2174, %v3364
    %v3368 = vrot.slane %v3276, 3
    %3369 = vrot.lane.b32.xlu0 %v3368, 32
    %v3370 = vpop.permute.xlu0 %3369
    %v3371 = vsel %vm200, %v3370, 0
    %3373 = vmatprep.subr.mxu0 0.0
    %3374 = vmatpush1.msra.mxu0 0.0
    %3375 = vmatprep.subr.mxu0 0.0
    %3376 = vmatpush1.msra.mxu0 0.0
    %3377 = vmatprep.subr.mxu0 0.0
    %3378 = vmatpush1.msra.mxu0 0.0
    %3379 = vmatprep.subr.mxu0 0.0
    %3380 = vmatpush1.msra.mxu0 0.0
    %3381 = vmatprep.subr.mxu0 0.0
    %3382 = vmatpush1.msra.mxu0 0.0
    %3383 = vmatprep.subr.mxu0 0.0
    %3384 = vmatpush1.msra.mxu0 0.0
    %3385 = vmatprep.subr.mxu0 0.0
    %3386 = vmatpush1.msra.mxu0 0.0
    %3387 = vmatprep.subr.mxu0 0.0
    %3388 = vmatpush1.msra.mxu0 0.0
    %3389 = vmatprep.subr.mxu0 0.0
    %3390 = vmatpush1.msra.mxu0 0.0
    %3391 = vmatprep.subr.mxu0 0.0
    %3392 = vmatpush1.msra.mxu0 0.0
    %3393 = vmatprep.subr.mxu0 0.0
    %3394 = vmatpush1.msra.mxu0 0.0
    %3395 = vmatprep.subr.mxu0 0.0
    %3396 = vmatpush1.msra.mxu0 0.0
    %3397 = vmatprep.subr.mxu0 0.0
    %3398 = vmatpush1.msra.mxu0 0.0
    %3399 = vmatprep.subr.mxu0 0.0
    %3400 = vmatpush1.msra.mxu0 0.0
    %3401 = vmatprep.subr.mxu0 0.0
    %3402 = vmatpush1.msra.mxu0 %v2178
    %3403 = vmatprep.subr.mxu0 0.0
    %3404 = vmatpush1.msra.mxu0 %v2177
    %3405 = vmatprep.subr.mxu0 0.0
    %3406 = vmatpush2.msra.mxu0 0.0
    %3407 = vmatprep.subr.mxu0 0.0
    %3408 = vmatpush2.msra.mxu0 0.0
    %3409 = vmatprep.subr.mxu0 0.0
    %3410 = vmatpush2.msra.mxu0 0.0
    %3411 = vmatprep.subr.mxu0 0.0
    %3412 = vmatpush2.msra.mxu0 0.0
    %3413 = vmatprep.subr.mxu0 0.0
    %3414 = vmatpush2.msra.mxu0 0.0
    %3415 = vmatprep.subr.mxu0 0.0
    %3416 = vmatpush2.msra.mxu0 0.0
    %3417 = vmatprep.subr.mxu0 0.0
    %3418 = vmatpush2.msra.mxu0 0.0
    %3419 = vmatprep.subr.mxu0 0.0
    %3420 = vmatpush2.msra.mxu0 0.0
    %3421 = vmatprep.subr.mxu0 0.0
    %3422 = vmatpush2.msra.mxu0 0.0
    %3423 = vmatprep.subr.mxu0 0.0
    %3424 = vmatpush2.msra.mxu0 0.0
    %3425 = vmatprep.subr.mxu0 0.0
    %3426 = vmatpush2.msra.mxu0 0.0
    %3427 = vmatprep.subr.mxu0 0.0
    %3428 = vmatpush2.msra.mxu0 0.0
    %3429 = vmatprep.subr.mxu0 0.0
    %3430 = vmatpush2.msra.mxu0 0.0
    %3431 = vmatprep.subr.mxu0 0.0
    %3432 = vmatpush2.msra.mxu0 0.0
    %3433 = vmatprep.subr.mxu0 0.0
    %3434 = vmatpush2.msra.mxu0 0.0
    %3435 = vmatprep.subr.mxu0 0.0
    %3436 = vmatpush2.msra.mxu0 0.0
    %3437 = vmatprep.mubr.f32.mxu0 0.0
    %3438 = vmatmul.mubr.f32.gmra.mxu0 %v3371
    %v3439 = vpop.f32.mrf.mxu0
    %v3440 = vadd.f32 0.0, %v3439
    %v3441 = vpop.f32.mrf.mxu0
    %3442 = vdwg.mxu0
    %v3444 = vrot.slane %v3440, 6
    %3445 = vrot.lane.b32.xlu0 %v3444, 64
    %v3446 = vpop.permute.xlu0 %3445
    %v3448 = vadd.f32 %v2174, %v3446
    %v3449 = vxor.u32 %v3366, 2147483648
    %v3450 = vmul.f32 %v3449, 1.442695
    %v3451 = vpow.pop %v3450
    %v3452 = vadd.f32 %v3451, 1.0
    %v3453 = vrcp.pop %v3452
    %v3454 = vmul.f32 1.0, %v3453
    %v3455 = vxor.u32 %v3448, 2147483648
    %v3456 = vmul.f32 %v3455, 1.442695
    %v3457 = vpow.pop %v3456
    %v3458 = vadd.f32 %v3457, 1.0
    %v3459 = vrcp.pop %v3458
    %v3460 = vmul.f32 1.0, %v3459
    %v3461 = vtanh.pop %v3366
    %v3462 = vtanh.pop %v3448
    %v3464 = vrot.slane %v3250, 7
    %v3466 = vmul.f32 %v3454, %v3464
    %3468 = vrot.lane.b32.xlu0 %v3461, 80
    %v3469 = vpop.permute.xlu0 %3468
    %v3471 = vmul.f32 %v3454, %v3469
    %3473 = vrot.lane.b32.xlu0 %v3471, 16
    %v3474 = vpop.permute.xlu0 %3473
    %v3476 = vadd.f32 %v3466, %v3474
    %v3478 = vrot.slane %v3264, 1
    %v3480 = vmul.f32 %v3460, %v3478
    %3482 = vrot.lane.b32.xlu0 %v3462, 80
    %v3483 = vpop.permute.xlu0 %3482
    %v3485 = vmul.f32 %v3460, %v3483
    %3487 = vrot.lane.b32.xlu0 %v3485, 16
    %v3488 = vpop.permute.xlu0 %3487
    %v3490 = vadd.f32 %v3480, %v3488
    %v3491 = vtanh.pop %v3476
    %3493 = vrot.lane.b32.xlu0 %v3491, 16
    %v3494 = vpop.permute.xlu0 %3493
    %v3496 = vmul.f32 %v3454, %v3494
    %v3497 = vtanh.pop %v3490
    %3499 = vrot.lane.b32.xlu0 %v3497, 16
    %v3500 = vpop.permute.xlu0 %3499
    %v3502 = vmul.f32 %v3460, %v3500
    %v3503 = vlaneseq
    %v3504 = vshrl.u32 %v3503, 7
    %v3505 = vsub.s32 5, %v3504
    %v3506 = vrot.slane %v3496, %v3505
    %v3507 = vsel %vm872, %v3506, %v3281
    %v3508 = vlaneseq
    %v3509 = vshrl.u32 %v3508, 7
    %v3510 = vsub.s32 2, %v3509
    %v3511 = vrot.slane %v3502, %v3510
    %v3512 = vsel %vm864, %v3511, %v3286
    %v3514 = vrot.slane %v3496, 5
    %3515 = vrot.lane.b32.xlu0 %v3514, 96
    %v3516 = vpop.permute.xlu0 %3515
    %v3517 = vsel %vm200, %v3516, 0
    %3519 = vmatprep.subr.mxu0 0.0
    %3520 = vmatpush1.msra.mxu0 0.0
    %3521 = vmatprep.subr.mxu0 0.0
    %3522 = vmatpush1.msra.mxu0 0.0
    %3523 = vmatprep.subr.mxu0 0.0
    %3524 = vmatpush1.msra.mxu0 0.0
    %3525 = vmatprep.subr.mxu0 0.0
    %3526 = vmatpush1.msra.mxu0 0.0
    %3527 = vmatprep.subr.mxu0 0.0
    %3528 = vmatpush1.msra.mxu0 0.0
    %3529 = vmatprep.subr.mxu0 0.0
    %3530 = vmatpush1.msra.mxu0 0.0
    %3531 = vmatprep.subr.mxu0 0.0
    %3532 = vmatpush1.msra.mxu0 0.0
    %3533 = vmatprep.subr.mxu0 0.0
    %3534 = vmatpush1.msra.mxu0 0.0
    %3535 = vmatprep.subr.mxu0 0.0
    %3536 = vmatpush1.msra.mxu0 0.0
    %3537 = vmatprep.subr.mxu0 0.0
    %3538 = vmatpush1.msra.mxu0 0.0
    %3539 = vmatprep.subr.mxu0 0.0
    %3540 = vmatpush1.msra.mxu0 0.0
    %3541 = vmatprep.subr.mxu0 0.0
    %3542 = vmatpush1.msra.mxu0 0.0
    %3543 = vmatprep.subr.mxu0 0.0
    %3544 = vmatpush1.msra.mxu0 0.0
    %3545 = vmatprep.subr.mxu0 0.0
    %3546 = vmatpush1.msra.mxu0 0.0
    %3547 = vmatprep.subr.mxu0 0.0
    %3548 = vmatpush1.msra.mxu0 %v2176
    %3549 = vmatprep.subr.mxu0 0.0
    %3550 = vmatpush1.msra.mxu0 %v2175
    %3551 = vmatprep.subr.mxu0 0.0
    %3552 = vmatpush2.msra.mxu0 0.0
    %3553 = vmatprep.subr.mxu0 0.0
    %3554 = vmatpush2.msra.mxu0 0.0
    %3555 = vmatprep.subr.mxu0 0.0
    %3556 = vmatpush2.msra.mxu0 0.0
    %3557 = vmatprep.subr.mxu0 0.0
    %3558 = vmatpush2.msra.mxu0 0.0
    %3559 = vmatprep.subr.mxu0 0.0
    %3560 = vmatpush2.msra.mxu0 0.0
    %3561 = vmatprep.subr.mxu0 0.0
    %3562 = vmatpush2.msra.mxu0 0.0
    %3563 = vmatprep.subr.mxu0 0.0
    %3564 = vmatpush2.msra.mxu0 0.0
    %3565 = vmatprep.subr.mxu0 0.0
    %3566 = vmatpush2.msra.mxu0 0.0
    %3567 = vmatprep.subr.mxu0 0.0
    %3568 = vmatpush2.msra.mxu0 0.0
    %3569 = vmatprep.subr.mxu0 0.0
    %3570 = vmatpush2.msra.mxu0 0.0
    %3571 = vmatprep.subr.mxu0 0.0
    %3572 = vmatpush2.msra.mxu0 0.0
    %3573 = vmatprep.subr.mxu0 0.0
    %3574 = vmatpush2.msra.mxu0 0.0
    %3575 = vmatprep.subr.mxu0 0.0
    %3576 = vmatpush2.msra.mxu0 0.0
    %3577 = vmatprep.subr.mxu0 0.0
    %3578 = vmatpush2.msra.mxu0 0.0
    %3579 = vmatprep.subr.mxu0 0.0
    %3580 = vmatpush2.msra.mxu0 0.0
    %3581 = vmatprep.subr.mxu0 0.0
    %3582 = vmatpush2.msra.mxu0 0.0
    %3583 = vmatprep.mubr.f32.mxu0 0.0
    %3584 = vmatmul.mubr.f32.gmra.mxu0 %v3517
    %v3585 = vpop.f32.mrf.mxu0
    %v3586 = vadd.f32 0.0, %v3585
    %v3587 = vpop.f32.mrf.mxu0
    %3588 = vdwg.mxu0
    %v3590 = vrot.slane %v3586, 2
    %v3592 = vadd.f32 %v2174, %v3590
    %v3594 = vrot.slane %v3502, 2
    %3595 = vrot.lane.b32.xlu0 %v3594, 32
    %v3596 = vpop.permute.xlu0 %3595
    %v3597 = vsel %vm200, %v3596, 0
    %3599 = vmatprep.subr.mxu0 0.0
    %3600 = vmatpush1.msra.mxu0 0.0
    %3601 = vmatprep.subr.mxu0 0.0
    %3602 = vmatpush1.msra.mxu0 0.0
    %3603 = vmatprep.subr.mxu0 0.0
    %3604 = vmatpush1.msra.mxu0 0.0
    %3605 = vmatprep.subr.mxu0 0.0
    %3606 = vmatpush1.msra.mxu0 0.0
    %3607 = vmatprep.subr.mxu0 0.0
    %3608 = vmatpush1.msra.mxu0 0.0
    %3609 = vmatprep.subr.mxu0 0.0
    %3610 = vmatpush1.msra.mxu0 0.0
    %3611 = vmatprep.subr.mxu0 0.0
    %3612 = vmatpush1.msra.mxu0 0.0
    %3613 = vmatprep.subr.mxu0 0.0
    %3614 = vmatpush1.msra.mxu0 0.0
    %3615 = vmatprep.subr.mxu0 0.0
    %3616 = vmatpush1.msra.mxu0 0.0
    %3617 = vmatprep.subr.mxu0 0.0
    %3618 = vmatpush1.msra.mxu0 0.0
    %3619 = vmatprep.subr.mxu0 0.0
    %3620 = vmatpush1.msra.mxu0 0.0
    %3621 = vmatprep.subr.mxu0 0.0
    %3622 = vmatpush1.msra.mxu0 0.0
    %3623 = vmatprep.subr.mxu0 0.0
    %3624 = vmatpush1.msra.mxu0 0.0
    %3625 = vmatprep.subr.mxu0 0.0
    %3626 = vmatpush1.msra.mxu0 0.0
    %3627 = vmatprep.subr.mxu0 0.0
    %3628 = vmatpush1.msra.mxu0 %v2178
    %3629 = vmatprep.subr.mxu0 0.0
    %3630 = vmatpush1.msra.mxu0 %v2177
    %3631 = vmatprep.subr.mxu0 0.0
    %3632 = vmatpush2.msra.mxu0 0.0
    %3633 = vmatprep.subr.mxu0 0.0
    %3634 = vmatpush2.msra.mxu0 0.0
    %3635 = vmatprep.subr.mxu0 0.0
    %3636 = vmatpush2.msra.mxu0 0.0
    %3637 = vmatprep.subr.mxu0 0.0
    %3638 = vmatpush2.msra.mxu0 0.0
    %3639 = vmatprep.subr.mxu0 0.0
    %3640 = vmatpush2.msra.mxu0 0.0
    %3641 = vmatprep.subr.mxu0 0.0
    %3642 = vmatpush2.msra.mxu0 0.0
    %3643 = vmatprep.subr.mxu0 0.0
    %3644 = vmatpush2.msra.mxu0 0.0
    %3645 = vmatprep.subr.mxu0 0.0
    %3646 = vmatpush2.msra.mxu0 0.0
    %3647 = vmatprep.subr.mxu0 0.0
    %3648 = vmatpush2.msra.mxu0 0.0
    %3649 = vmatprep.subr.mxu0 0.0
    %3650 = vmatpush2.msra.mxu0 0.0
    %3651 = vmatprep.subr.mxu0 0.0
    %3652 = vmatpush2.msra.mxu0 0.0
    %3653 = vmatprep.subr.mxu0 0.0
    %3654 = vmatpush2.msra.mxu0 0.0
    %3655 = vmatprep.subr.mxu0 0.0
    %3656 = vmatpush2.msra.mxu0 0.0
    %3657 = vmatprep.subr.mxu0 0.0
    %3658 = vmatpush2.msra.mxu0 0.0
    %3659 = vmatprep.subr.mxu0 0.0
    %3660 = vmatpush2.msra.mxu0 0.0
    %3661 = vmatprep.subr.mxu0 0.0
    %3662 = vmatpush2.msra.mxu0 0.0
    %3663 = vmatprep.mubr.f32.mxu0 0.0
    %3664 = vmatmul.mubr.f32.gmra.mxu0 %v3597
    %v3665 = vpop.f32.mrf.mxu0
    %v3666 = vadd.f32 0.0, %v3665
    %v3667 = vpop.f32.mrf.mxu0
    %3668 = vdwg.mxu0
    %v3670 = vrot.slane %v3666, 7
    %3671 = vrot.lane.b32.xlu0 %v3670, 64
    %v3672 = vpop.permute.xlu0 %3671
    %v3674 = vadd.f32 %v2174, %v3672
    %v3675 = vxor.u32 %v3592, 2147483648
    %v3676 = vmul.f32 %v3675, 1.442695
    %v3677 = vpow.pop %v3676
    %v3678 = vadd.f32 %v3677, 1.0
    %v3679 = vrcp.pop %v3678
    %v3680 = vmul.f32 1.0, %v3679
    %v3681 = vxor.u32 %v3674, 2147483648
    %v3682 = vmul.f32 %v3681, 1.442695
    %v3683 = vpow.pop %v3682
    %v3684 = vadd.f32 %v3683, 1.0
    %v3685 = vrcp.pop %v3684
    %v3686 = vmul.f32 1.0, %v3685
    %v3687 = vtanh.pop %v3592
    %v3688 = vtanh.pop %v3674
    %v3690 = vrot.slane %v3476, 7
    %v3692 = vmul.f32 %v3680, %v3690
    %3694 = vrot.lane.b32.xlu0 %v3687, 80
    %v3695 = vpop.permute.xlu0 %3694
    %v3697 = vmul.f32 %v3680, %v3695
    %3699 = vrot.lane.b32.xlu0 %v3697, 16
    %v3700 = vpop.permute.xlu0 %3699
    %v3702 = vadd.f32 %v3692, %v3700
    %v3704 = vrot.slane %v3490, 1
    %v3706 = vmul.f32 %v3686, %v3704
    %3708 = vrot.lane.b32.xlu0 %v3688, 80
    %v3709 = vpop.permute.xlu0 %3708
    %v3711 = vmul.f32 %v3686, %v3709
    %3713 = vrot.lane.b32.xlu0 %v3711, 16
    %v3714 = vpop.permute.xlu0 %3713
    %v3716 = vadd.f32 %v3706, %v3714
    %v3717 = vtanh.pop %v3702
    %3719 = vrot.lane.b32.xlu0 %v3717, 16
    %v3720 = vpop.permute.xlu0 %3719
    %v3722 = vmul.f32 %v3680, %v3720
    %v3723 = vtanh.pop %v3716
    %3725 = vrot.lane.b32.xlu0 %v3723, 16
    %v3726 = vpop.permute.xlu0 %3725
    %v3728 = vmul.f32 %v3686, %v3726
    %v3729 = vlaneseq
    %v3730 = vshrl.u32 %v3729, 7
    %v3731 = vsub.s32 6, %v3730
    %v3732 = vrot.slane %v3722, %v3731
    %v3733 = vsel %vm640, %v3732, %v3507
    %v3734 = vlaneseq
    %v3735 = vshrl.u32 %v3734, 7
    %v3736 = vsub.s32 1, %v3735
    %v3737 = vrot.slane %v3728, %v3736
    %v3738 = vsel %vm632, %v3737, %v3512
    %v3740 = vrot.slane %v3722, 6
    %3741 = vrot.lane.b32.xlu0 %v3740, 96
    %v3742 = vpop.permute.xlu0 %3741
    %v3743 = vsel %vm200, %v3742, 0
    %3745 = vmatprep.subr.mxu0 0.0
    %3746 = vmatpush1.msra.mxu0 0.0
    %3747 = vmatprep.subr.mxu0 0.0
    %3748 = vmatpush1.msra.mxu0 0.0
    %3749 = vmatprep.subr.mxu0 0.0
    %3750 = vmatpush1.msra.mxu0 0.0
    %3751 = vmatprep.subr.mxu0 0.0
    %3752 = vmatpush1.msra.mxu0 0.0
    %3753 = vmatprep.subr.mxu0 0.0
    %3754 = vmatpush1.msra.mxu0 0.0
    %3755 = vmatprep.subr.mxu0 0.0
    %3756 = vmatpush1.msra.mxu0 0.0
    %3757 = vmatprep.subr.mxu0 0.0
    %3758 = vmatpush1.msra.mxu0 0.0
    %3759 = vmatprep.subr.mxu0 0.0
    %3760 = vmatpush1.msra.mxu0 0.0
    %3761 = vmatprep.subr.mxu0 0.0
    %3762 = vmatpush1.msra.mxu0 0.0
    %3763 = vmatprep.subr.mxu0 0.0
    %3764 = vmatpush1.msra.mxu0 0.0
    %3765 = vmatprep.subr.mxu0 0.0
    %3766 = vmatpush1.msra.mxu0 0.0
    %3767 = vmatprep.subr.mxu0 0.0
    %3768 = vmatpush1.msra.mxu0 0.0
    %3769 = vmatprep.subr.mxu0 0.0
    %3770 = vmatpush1.msra.mxu0 0.0
    %3771 = vmatprep.subr.mxu0 0.0
    %3772 = vmatpush1.msra.mxu0 0.0
    %3773 = vmatprep.subr.mxu0 0.0
    %3774 = vmatpush1.msra.mxu0 %v2176
    %3775 = vmatprep.subr.mxu0 0.0
    %3776 = vmatpush1.msra.mxu0 %v2175
    %3777 = vmatprep.subr.mxu0 0.0
    %3778 = vmatpush2.msra.mxu0 0.0
    %3779 = vmatprep.subr.mxu0 0.0
    %3780 = vmatpush2.msra.mxu0 0.0
    %3781 = vmatprep.subr.mxu0 0.0
    %3782 = vmatpush2.msra.mxu0 0.0
    %3783 = vmatprep.subr.mxu0 0.0
    %3784 = vmatpush2.msra.mxu0 0.0
    %3785 = vmatprep.subr.mxu0 0.0
    %3786 = vmatpush2.msra.mxu0 0.0
    %3787 = vmatprep.subr.mxu0 0.0
    %3788 = vmatpush2.msra.mxu0 0.0
    %3789 = vmatprep.subr.mxu0 0.0
    %3790 = vmatpush2.msra.mxu0 0.0
    %3791 = vmatprep.subr.mxu0 0.0
    %3792 = vmatpush2.msra.mxu0 0.0
    %3793 = vmatprep.subr.mxu0 0.0
    %3794 = vmatpush2.msra.mxu0 0.0
    %3795 = vmatprep.subr.mxu0 0.0
    %3796 = vmatpush2.msra.mxu0 0.0
    %3797 = vmatprep.subr.mxu0 0.0
    %3798 = vmatpush2.msra.mxu0 0.0
    %3799 = vmatprep.subr.mxu0 0.0
    %3800 = vmatpush2.msra.mxu0 0.0
    %3801 = vmatprep.subr.mxu0 0.0
    %3802 = vmatpush2.msra.mxu0 0.0
    %3803 = vmatprep.subr.mxu0 0.0
    %3804 = vmatpush2.msra.mxu0 0.0
    %3805 = vmatprep.subr.mxu0 0.0
    %3806 = vmatpush2.msra.mxu0 0.0
    %3807 = vmatprep.subr.mxu0 0.0
    %3808 = vmatpush2.msra.mxu0 0.0
    %3809 = vmatprep.mubr.f32.mxu0 0.0
    %3810 = vmatmul.mubr.f32.gmra.mxu0 %v3743
    %v3811 = vpop.f32.mrf.mxu0
    %v3812 = vadd.f32 0.0, %v3811
    %v3813 = vpop.f32.mrf.mxu0
    %3814 = vdwg.mxu0
    %v3816 = vrot.slane %v3812, 1
    %v3818 = vadd.f32 %v2174, %v3816
    %v3820 = vrot.slane %v3728, 1
    %3821 = vrot.lane.b32.xlu0 %v3820, 32
    %v3822 = vpop.permute.xlu0 %3821
    %v3823 = vsel %vm200, %v3822, 0
    %3825 = vmatprep.subr.mxu0 0.0
    %3826 = vmatpush1.msra.mxu0 0.0
    %3827 = vmatprep.subr.mxu0 0.0
    %3828 = vmatpush1.msra.mxu0 0.0
    %3829 = vmatprep.subr.mxu0 0.0
    %3830 = vmatpush1.msra.mxu0 0.0
    %3831 = vmatprep.subr.mxu0 0.0
    %3832 = vmatpush1.msra.mxu0 0.0
    %3833 = vmatprep.subr.mxu0 0.0
    %3834 = vmatpush1.msra.mxu0 0.0
    %3835 = vmatprep.subr.mxu0 0.0
    %3836 = vmatpush1.msra.mxu0 0.0
    %3837 = vmatprep.subr.mxu0 0.0
    %3838 = vmatpush1.msra.mxu0 0.0
    %3839 = vmatprep.subr.mxu0 0.0
    %3840 = vmatpush1.msra.mxu0 0.0
    %3841 = vmatprep.subr.mxu0 0.0
    %3842 = vmatpush1.msra.mxu0 0.0
    %3843 = vmatprep.subr.mxu0 0.0
    %3844 = vmatpush1.msra.mxu0 0.0
    %3845 = vmatprep.subr.mxu0 0.0
    %3846 = vmatpush1.msra.mxu0 0.0
    %3847 = vmatprep.subr.mxu0 0.0
    %3848 = vmatpush1.msra.mxu0 0.0
    %3849 = vmatprep.subr.mxu0 0.0
    %3850 = vmatpush1.msra.mxu0 0.0
    %3851 = vmatprep.subr.mxu0 0.0
    %3852 = vmatpush1.msra.mxu0 0.0
    %3853 = vmatprep.subr.mxu0 0.0
    %3854 = vmatpush1.msra.mxu0 %v2178
    %3855 = vmatprep.subr.mxu0 0.0
    %3856 = vmatpush1.msra.mxu0 %v2177
    %3857 = vmatprep.subr.mxu0 0.0
    %3858 = vmatpush2.msra.mxu0 0.0
    %3859 = vmatprep.subr.mxu0 0.0
    %3860 = vmatpush2.msra.mxu0 0.0
    %3861 = vmatprep.subr.mxu0 0.0
    %3862 = vmatpush2.msra.mxu0 0.0
    %3863 = vmatprep.subr.mxu0 0.0
    %3864 = vmatpush2.msra.mxu0 0.0
    %3865 = vmatprep.subr.mxu0 0.0
    %3866 = vmatpush2.msra.mxu0 0.0
    %3867 = vmatprep.subr.mxu0 0.0
    %3868 = vmatpush2.msra.mxu0 0.0
    %3869 = vmatprep.subr.mxu0 0.0
    %3870 = vmatpush2.msra.mxu0 0.0
    %3871 = vmatprep.subr.mxu0 0.0
    %3872 = vmatpush2.msra.mxu0 0.0
    %3873 = vmatprep.subr.mxu0 0.0
    %3874 = vmatpush2.msra.mxu0 0.0
    %3875 = vmatprep.subr.mxu0 0.0
    %3876 = vmatpush2.msra.mxu0 0.0
    %3877 = vmatprep.subr.mxu0 0.0
    %3878 = vmatpush2.msra.mxu0 0.0
    %3879 = vmatprep.subr.mxu0 0.0
    %3880 = vmatpush2.msra.mxu0 0.0
    %3881 = vmatprep.subr.mxu0 0.0
    %3882 = vmatpush2.msra.mxu0 0.0
    %3883 = vmatprep.subr.mxu0 0.0
    %3884 = vmatpush2.msra.mxu0 0.0
    %3885 = vmatprep.subr.mxu0 0.0
    %3886 = vmatpush2.msra.mxu0 0.0
    %3887 = vmatprep.subr.mxu0 0.0
    %3888 = vmatpush2.msra.mxu0 0.0
    %3889 = vmatprep.mubr.f32.mxu0 0.0
    %3890 = vmatmul.mubr.f32.gmra.mxu0 %v3823
    %v3891 = vpop.f32.mrf.mxu0
    %v3892 = vadd.f32 0.0, %v3891
    %v3893 = vpop.f32.mrf.mxu0
    %3894 = vdwg.mxu0
    %3896 = vrot.lane.b32.xlu0 %v3892, 64
    %v3897 = vpop.permute.xlu0 %3896
    %v3899 = vadd.f32 %v2174, %v3897
    %v3900 = vxor.u32 %v3818, 2147483648
    %v3901 = vmul.f32 %v3900, 1.442695
    %v3902 = vpow.pop %v3901
    %v3903 = vadd.f32 %v3902, 1.0
    %v3904 = vrcp.pop %v3903
    %v3905 = vmul.f32 1.0, %v3904
    %v3906 = vxor.u32 %v3899, 2147483648
    %v3907 = vmul.f32 %v3906, 1.442695
    %v3908 = vpow.pop %v3907
    %v3909 = vadd.f32 %v3908, 1.0
    %v3910 = vrcp.pop %v3909
    %v3911 = vmul.f32 1.0, %v3910
    %v3912 = vtanh.pop %v3818
    %v3913 = vtanh.pop %v3899
    %v3915 = vrot.slane %v3702, 7
    %v3917 = vmul.f32 %v3905, %v3915
    %3919 = vrot.lane.b32.xlu0 %v3912, 80
    %v3920 = vpop.permute.xlu0 %3919
    %v3922 = vmul.f32 %v3905, %v3920
    %3924 = vrot.lane.b32.xlu0 %v3922, 16
    %v3925 = vpop.permute.xlu0 %3924
    %v3927 = vadd.f32 %v3917, %v3925
    %v3929 = vrot.slane %v3716, 1
    %v3931 = vmul.f32 %v3911, %v3929
    %3933 = vrot.lane.b32.xlu0 %v3913, 80
    %v3934 = vpop.permute.xlu0 %3933
    %v3936 = vmul.f32 %v3911, %v3934
    %3938 = vrot.lane.b32.xlu0 %v3936, 16
    %v3939 = vpop.permute.xlu0 %3938
    %v3941 = vadd.f32 %v3931, %v3939
    %v3942 = vtanh.pop %v3927
    %3944 = vrot.lane.b32.xlu0 %v3942, 16
    %v3945 = vpop.permute.xlu0 %3944
    %v3947 = vmul.f32 %v3905, %v3945
    %v3948 = vtanh.pop %v3941
    %3950 = vrot.lane.b32.xlu0 %v3948, 16
    %v3951 = vpop.permute.xlu0 %3950
    %v3953 = vmul.f32 %v3911, %v3951
    %v3954 = vlaneseq
    %v3955 = vshrl.u32 %v3954, 7
    %v3956 = vsub.s32 7, %v3955
    %v3957 = vrot.slane %v3947, %v3956
    %v3958 = vsel %vm409, %v3957, %v3733
    %v3959 = vlaneseq
    %v3960 = vshrl.u32 %v3959, 7
    %v3961 = vsub.s32 0, %v3960
    %v3962 = vrot.slane %v3953, %v3961
    %v3963 = vsel %vm401, %v3962, %v3738
    %v3964 = vld [vmem:[%s9] sm:$0xff]
    %v3965 = vld [vmem:[%s9 + $0x8] sm:$0xff]
    %v3966 = vld [vmem:[%s9 + $0x10] sm:$0xff]
    %v3967 = vld [vmem:[%s9 + $0x18] sm:$0xff]
    %3969 = vrot.lane.b32.xlu0 %v3963, 32
    %v3970 = vpop.permute.xlu0 %3969
    %v3971 = vsel %vm200, %v3970, 0
    %3973 = vmatprep.subr.mxu0 0.0
    %3974 = vmatpush1.msra.mxu0 0.0
    %3975 = vmatprep.subr.mxu0 0.0
    %3976 = vmatpush1.msra.mxu0 0.0
    %3977 = vmatprep.subr.mxu0 0.0
    %3978 = vmatpush1.msra.mxu0 0.0
    %3979 = vmatprep.subr.mxu0 0.0
    %3980 = vmatpush1.msra.mxu0 0.0
    %3981 = vmatprep.subr.mxu0 0.0
    %3982 = vmatpush1.msra.mxu0 0.0
    %3983 = vmatprep.subr.mxu0 0.0
    %3984 = vmatpush1.msra.mxu0 0.0
    %3985 = vmatprep.subr.mxu0 0.0
    %3986 = vmatpush1.msra.mxu0 0.0
    %3987 = vmatprep.subr.mxu0 0.0
    %3988 = vmatpush1.msra.mxu0 0.0
    %3989 = vmatprep.subr.mxu0 0.0
    %3990 = vmatpush1.msra.mxu0 0.0
    %3991 = vmatprep.subr.mxu0 0.0
    %3992 = vmatpush1.msra.mxu0 0.0
    %3993 = vmatprep.subr.mxu0 0.0
    %3994 = vmatpush1.msra.mxu0 0.0
    %3995 = vmatprep.subr.mxu0 0.0
    %3996 = vmatpush1.msra.mxu0 0.0
    %3997 = vmatprep.subr.mxu0 0.0
    %3998 = vmatpush1.msra.mxu0 0.0
    %3999 = vmatprep.subr.mxu0 0.0
    %4000 = vmatpush1.msra.mxu0 0.0
    %4001 = vmatprep.subr.mxu0 0.0
    %4002 = vmatpush1.msra.mxu0 %v3967
    %4003 = vmatprep.subr.mxu0 0.0
    %4004 = vmatpush1.msra.mxu0 %v3966
    %4005 = vmatprep.subr.mxu0 0.0
    %4006 = vmatpush2.msra.mxu0 0.0
    %4007 = vmatprep.subr.mxu0 0.0
    %4008 = vmatpush2.msra.mxu0 0.0
    %4009 = vmatprep.subr.mxu0 0.0
    %4010 = vmatpush2.msra.mxu0 0.0
    %4011 = vmatprep.subr.mxu0 0.0
    %4012 = vmatpush2.msra.mxu0 0.0
    %4013 = vmatprep.subr.mxu0 0.0
    %4014 = vmatpush2.msra.mxu0 0.0
    %4015 = vmatprep.subr.mxu0 0.0
    %4016 = vmatpush2.msra.mxu0 0.0
    %4017 = vmatprep.subr.mxu0 0.0
    %4018 = vmatpush2.msra.mxu0 0.0
    %4019 = vmatprep.subr.mxu0 0.0
    %4020 = vmatpush2.msra.mxu0 0.0
    %4021 = vmatprep.subr.mxu0 0.0
    %4022 = vmatpush2.msra.mxu0 0.0
    %4023 = vmatprep.subr.mxu0 0.0
    %4024 = vmatpush2.msra.mxu0 0.0
    %4025 = vmatprep.subr.mxu0 0.0
    %4026 = vmatpush2.msra.mxu0 0.0
    %4027 = vmatprep.subr.mxu0 0.0
    %4028 = vmatpush2.msra.mxu0 0.0
    %4029 = vmatprep.subr.mxu0 0.0
    %4030 = vmatpush2.msra.mxu0 0.0
    %4031 = vmatprep.subr.mxu0 0.0
    %4032 = vmatpush2.msra.mxu0 0.0
    %4033 = vmatprep.subr.mxu0 0.0
    %4034 = vmatpush2.msra.mxu0 0.0
    %4035 = vmatprep.subr.mxu0 0.0
    %4036 = vmatpush2.msra.mxu0 0.0
    %4037 = vmatprep.mubr.f32.mxu0 0.0
    %4038 = vmatmul.mubr.f32.gmra.mxu0 %v3971
    %v4039 = vpop.f32.mrf.mxu0
    %v4040 = vadd.f32 0.0, %v4039
    %v4041 = vpop.f32.mrf.mxu0
    %4042 = vdwg.mxu0
    %4044 = vrot.lane.b32.xlu0 %v3958, 96
    %v4045 = vpop.permute.xlu0 %4044
    %v4046 = vsel %vm200, %v4045, 0
    %4048 = vmatprep.subr.mxu0 0.0
    %4049 = vmatpush1.msra.mxu0 0.0
    %4050 = vmatprep.subr.mxu0 0.0
    %4051 = vmatpush1.msra.mxu0 0.0
    %4052 = vmatprep.subr.mxu0 0.0
    %4053 = vmatpush1.msra.mxu0 0.0
    %4054 = vmatprep.subr.mxu0 0.0
    %4055 = vmatpush1.msra.mxu0 0.0
    %4056 = vmatprep.subr.mxu0 0.0
    %4057 = vmatpush1.msra.mxu0 0.0
    %4058 = vmatprep.subr.mxu0 0.0
    %4059 = vmatpush1.msra.mxu0 0.0
    %4060 = vmatprep.subr.mxu0 0.0
    %4061 = vmatpush1.msra.mxu0 0.0
    %4062 = vmatprep.subr.mxu0 0.0
    %4063 = vmatpush1.msra.mxu0 0.0
    %4064 = vmatprep.subr.mxu0 0.0
    %4065 = vmatpush1.msra.mxu0 0.0
    %4066 = vmatprep.subr.mxu0 0.0
    %4067 = vmatpush1.msra.mxu0 0.0
    %4068 = vmatprep.subr.mxu0 0.0
    %4069 = vmatpush1.msra.mxu0 0.0
    %4070 = vmatprep.subr.mxu0 0.0
    %4071 = vmatpush1.msra.mxu0 0.0
    %4072 = vmatprep.subr.mxu0 0.0
    %4073 = vmatpush1.msra.mxu0 0.0
    %4074 = vmatprep.subr.mxu0 0.0
    %4075 = vmatpush1.msra.mxu0 0.0
    %4076 = vmatprep.subr.mxu0 0.0
    %4077 = vmatpush1.msra.mxu0 %v3965
    %4078 = vmatprep.subr.mxu0 0.0
    %4079 = vmatpush1.msra.mxu0 %v3964
    %4080 = vmatprep.subr.mxu0 0.0
    %4081 = vmatpush2.msra.mxu0 0.0
    %4082 = vmatprep.subr.mxu0 0.0
    %4083 = vmatpush2.msra.mxu0 0.0
    %4084 = vmatprep.subr.mxu0 0.0
    %4085 = vmatpush2.msra.mxu0 0.0
    %4086 = vmatprep.subr.mxu0 0.0
    %4087 = vmatpush2.msra.mxu0 0.0
    %4088 = vmatprep.subr.mxu0 0.0
    %4089 = vmatpush2.msra.mxu0 0.0
    %4090 = vmatprep.subr.mxu0 0.0
    %4091 = vmatpush2.msra.mxu0 0.0
    %4092 = vmatprep.subr.mxu0 0.0
    %4093 = vmatpush2.msra.mxu0 0.0
    %4094 = vmatprep.subr.mxu0 0.0
    %4095 = vmatpush2.msra.mxu0 0.0
    %4096 = vmatprep.subr.mxu0 0.0
    %4097 = vmatpush2.msra.mxu0 0.0
    %4098 = vmatprep.subr.mxu0 0.0
    %4099 = vmatpush2.msra.mxu0 0.0
    %4100 = vmatprep.subr.mxu0 0.0
    %4101 = vmatpush2.msra.mxu0 0.0
    %4102 = vmatprep.subr.mxu0 0.0
    %4103 = vmatpush2.msra.mxu0 0.0
    %4104 = vmatprep.subr.mxu0 0.0
    %4105 = vmatpush2.msra.mxu0 0.0
    %4106 = vmatprep.subr.mxu0 0.0
    %4107 = vmatpush2.msra.mxu0 0.0
    %4108 = vmatprep.subr.mxu0 0.0
    %4109 = vmatpush2.msra.mxu0 0.0
    %4110 = vmatprep.subr.mxu0 0.0
    %4111 = vmatpush2.msra.mxu0 0.0
    %4112 = vmatprep.mubr.f32.mxu0 0.0
    %4113 = vmatmul.mubr.f32.gmra.mxu0 %v4046
    %v4114 = vpop.f32.mrf.mxu0
    %v4115 = vadd.f32 %v4040, %v4114
    %v4116 = vpop.f32.mrf.mxu0
    %4117 = vdwg.mxu0
    %v4118 = vld [vmem:[%s12] sm:$0x1]
    %v4120 = vlaneseq
    %v4121 = vshrl.u32 %v4120, 7
    %v4122 = vsub.s32 0, %v4121
    %v4123 = vrot.slane %v4118, %v4122
    %v4125 = vadd.f32 %v4115, %v4123
    %v4126 = vld [vmem:[%s10] sm:$0xff]
    %v4127 = vld [vmem:[%s10 + $0x8] sm:$0xff]
    %v4128 = vld [vmem:[%s11] sm:$0xff]
    %v4129 = vld [vmem:[%s11 + $0x8] sm:$0xff]
    %4130 = vmatprep.subr.mxu0 0.0
    %4131 = vmatpush1.msra.mxu0 0.0
    %4132 = vmatprep.subr.mxu0 0.0
    %4133 = vmatpush1.msra.mxu0 0.0
    %4134 = vmatprep.subr.mxu0 0.0
    %4135 = vmatpush1.msra.mxu0 0.0
    %4136 = vmatprep.subr.mxu0 0.0
    %4137 = vmatpush1.msra.mxu0 0.0
    %4138 = vmatprep.subr.mxu0 0.0
    %4139 = vmatpush1.msra.mxu0 0.0
    %4140 = vmatprep.subr.mxu0 0.0
    %4141 = vmatpush1.msra.mxu0 0.0
    %4142 = vmatprep.subr.mxu0 0.0
    %4143 = vmatpush1.msra.mxu0 0.0
    %4144 = vmatprep.subr.mxu0 0.0
    %4145 = vmatpush1.msra.mxu0 0.0
    %4146 = vmatprep.subr.mxu0 0.0
    %4147 = vmatpush1.msra.mxu0 0.0
    %4148 = vmatprep.subr.mxu0 0.0
    %4149 = vmatpush1.msra.mxu0 0.0
    %4150 = vmatprep.subr.mxu0 0.0
    %4151 = vmatpush1.msra.mxu0 0.0
    %4152 = vmatprep.subr.mxu0 0.0
    %4153 = vmatpush1.msra.mxu0 0.0
    %4154 = vmatprep.subr.mxu0 0.0
    %4155 = vmatpush1.msra.mxu0 0.0
    %4156 = vmatprep.subr.mxu0 0.0
    %4157 = vmatpush1.msra.mxu0 0.0
    %4158 = vmatprep.subr.mxu0 0.0
    %4159 = vmatpush1.msra.mxu0 %v4127
    %4160 = vmatprep.subr.mxu0 0.0
    %4161 = vmatpush1.msra.mxu0 %v4126
    %4162 = vmatprep.subr.mxu0 0.0
    %4163 = vmatpush2.msra.mxu0 0.0
    %4164 = vmatprep.subr.mxu0 0.0
    %4165 = vmatpush2.msra.mxu0 0.0
    %4166 = vmatprep.subr.mxu0 0.0
    %4167 = vmatpush2.msra.mxu0 0.0
    %4168 = vmatprep.subr.mxu0 0.0
    %4169 = vmatpush2.msra.mxu0 0.0
    %4170 = vmatprep.subr.mxu0 0.0
    %4171 = vmatpush2.msra.mxu0 0.0
    %4172 = vmatprep.subr.mxu0 0.0
    %4173 = vmatpush2.msra.mxu0 0.0
    %4174 = vmatprep.subr.mxu0 0.0
    %4175 = vmatpush2.msra.mxu0 0.0
    %4176 = vmatprep.subr.mxu0 0.0
    %4177 = vmatpush2.msra.mxu0 0.0
    %4178 = vmatprep.subr.mxu0 0.0
    %4179 = vmatpush2.msra.mxu0 0.0
    %4180 = vmatprep.subr.mxu0 0.0
    %4181 = vmatpush2.msra.mxu0 0.0
    %4182 = vmatprep.subr.mxu0 0.0
    %4183 = vmatpush2.msra.mxu0 0.0
    %4184 = vmatprep.subr.mxu0 0.0
    %4185 = vmatpush2.msra.mxu0 0.0
    %4186 = vmatprep.subr.mxu0 0.0
    %4187 = vmatpush2.msra.mxu0 0.0
    %4188 = vmatprep.subr.mxu0 0.0
    %4189 = vmatpush2.msra.mxu0 0.0
    %4190 = vmatprep.subr.mxu0 0.0
    %4191 = vmatpush2.msra.mxu0 0.0
    %4192 = vmatprep.subr.mxu0 0.0
    %4193 = vmatpush2.msra.mxu0 0.0
    %4194 = vmatprep.mubr.f32.mxu0 0.0
    %4195 = vmatmul.mubr.f32.gmra.mxu0 %v202
    %v4196 = vpop.f32.mrf.mxu0
    %v4197 = vadd.f32 0.0, %v4196
    %v4198 = vpop.f32.mrf.mxu0
    %4199 = vdwg.mxu0
    %v4200 = vadd.f32 %v4125, %v4197
    %4201 = vmatprep.subr.mxu0 0.0
    %4202 = vmatpush1.msra.mxu0 0.0
    %4203 = vmatprep.subr.mxu0 0.0
    %4204 = vmatpush1.msra.mxu0 0.0
    %4205 = vmatprep.subr.mxu0 0.0
    %4206 = vmatpush1.msra.mxu0 0.0
    %4207 = vmatprep.subr.mxu0 0.0
    %4208 = vmatpush1.msra.mxu0 0.0
    %4209 = vmatprep.subr.mxu0 0.0
    %4210 = vmatpush1.msra.mxu0 0.0
    %4211 = vmatprep.subr.mxu0 0.0
    %4212 = vmatpush1.msra.mxu0 0.0
    %4213 = vmatprep.subr.mxu0 0.0
    %4214 = vmatpush1.msra.mxu0 0.0
    %4215 = vmatprep.subr.mxu0 0.0
    %4216 = vmatpush1.msra.mxu0 0.0
    %4217 = vmatprep.subr.mxu0 0.0
    %4218 = vmatpush1.msra.mxu0 0.0
    %4219 = vmatprep.subr.mxu0 0.0
    %4220 = vmatpush1.msra.mxu0 0.0
    %4221 = vmatprep.subr.mxu0 0.0
    %4222 = vmatpush1.msra.mxu0 0.0
    %4223 = vmatprep.subr.mxu0 0.0
    %4224 = vmatpush1.msra.mxu0 0.0
    %4225 = vmatprep.subr.mxu0 0.0
    %4226 = vmatpush1.msra.mxu0 0.0
    %4227 = vmatprep.subr.mxu0 0.0
    %4228 = vmatpush1.msra.mxu0 0.0
    %4229 = vmatprep.subr.mxu0 0.0
    %4230 = vmatpush1.msra.mxu0 %v4129
    %4231 = vmatprep.subr.mxu0 0.0
    %4232 = vmatpush1.msra.mxu0 %v4128
    %4233 = vmatprep.subr.mxu0 0.0
    %4234 = vmatpush2.msra.mxu0 0.0
    %4235 = vmatprep.subr.mxu0 0.0
    %4236 = vmatpush2.msra.mxu0 0.0
    %4237 = vmatprep.subr.mxu0 0.0
    %4238 = vmatpush2.msra.mxu0 0.0
    %4239 = vmatprep.subr.mxu0 0.0
    %4240 = vmatpush2.msra.mxu0 0.0
    %4241 = vmatprep.subr.mxu0 0.0
    %4242 = vmatpush2.msra.mxu0 0.0
    %4243 = vmatprep.subr.mxu0 0.0
    %4244 = vmatpush2.msra.mxu0 0.0
    %4245 = vmatprep.subr.mxu0 0.0
    %4246 = vmatpush2.msra.mxu0 0.0
    %4247 = vmatprep.subr.mxu0 0.0
    %4248 = vmatpush2.msra.mxu0 0.0
    %4249 = vmatprep.subr.mxu0 0.0
    %4250 = vmatpush2.msra.mxu0 0.0
    %4251 = vmatprep.subr.mxu0 0.0
    %4252 = vmatpush2.msra.mxu0 0.0
    %4253 = vmatprep.subr.mxu0 0.0
    %4254 = vmatpush2.msra.mxu0 0.0
    %4255 = vmatprep.subr.mxu0 0.0
    %4256 = vmatpush2.msra.mxu0 0.0
    %4257 = vmatprep.subr.mxu0 0.0
    %4258 = vmatpush2.msra.mxu0 0.0
    %4259 = vmatprep.subr.mxu0 0.0
    %4260 = vmatpush2.msra.mxu0 0.0
    %4261 = vmatprep.subr.mxu0 0.0
    %4262 = vmatpush2.msra.mxu0 0.0
    %4263 = vmatprep.subr.mxu0 0.0
    %4264 = vmatpush2.msra.mxu0 0.0
    %4265 = vmatprep.mubr.f32.mxu0 0.0
    %4266 = vmatmul.mubr.f32.gmra.mxu0 %v202
    %v4267 = vpop.f32.mrf.mxu0
    %v4268 = vadd.f32 0.0, %v4267
    %v4269 = vpop.f32.mrf.mxu0
    %4270 = vdwg.mxu0
    %v4272 = vrot.slane %v4268, 1
    %4273 = vrot.lane.b32.xlu0 %v4272, 64
    %v4274 = vpop.permute.xlu0 %4273
    %v4276 = vadd.f32 %v4125, %v4274
    %v4277 = vxor.u32 %v4200, 2147483648
    %v4278 = vmul.f32 %v4277, 1.442695
    %v4279 = vpow.pop %v4278
    %v4280 = vadd.f32 %v4279, 1.0
    %v4281 = vrcp.pop %v4280
    %v4282 = vmul.f32 1.0, %v4281
    %v4283 = vxor.u32 %v4276, 2147483648
    %v4284 = vmul.f32 %v4283, 1.442695
    %v4285 = vpow.pop %v4284
    %v4286 = vadd.f32 %v4285, 1.0
    %v4287 = vrcp.pop %v4286
    %v4288 = vmul.f32 1.0, %v4287
    %v4289 = vtanh.pop %v4200
    %v4290 = vtanh.pop %v4276
    %v4291 = vmul.f32 %v4282, 0.0
    %4293 = vrot.lane.b32.xlu0 %v4289, 80
    %v4294 = vpop.permute.xlu0 %4293
    %v4296 = vmul.f32 %v4282, %v4294
    %4298 = vrot.lane.b32.xlu0 %v4296, 16
    %v4299 = vpop.permute.xlu0 %4298
    %v4301 = vadd.f32 %v4291, %v4299
    %v4302 = vmul.f32 %v4288, 0.0
    %4304 = vrot.lane.b32.xlu0 %v4290, 80
    %v4305 = vpop.permute.xlu0 %4304
    %v4307 = vmul.f32 %v4288, %v4305
    %4309 = vrot.lane.b32.xlu0 %v4307, 16
    %v4310 = vpop.permute.xlu0 %4309
    %v4312 = vadd.f32 %v4302, %v4310
    %v4313 = vtanh.pop %v4301
    %4315 = vrot.lane.b32.xlu0 %v4313, 16
    %v4316 = vpop.permute.xlu0 %4315
    %v4318 = vmul.f32 %v4282, %v4316
    %v4319 = vtanh.pop %v4312
    %4321 = vrot.lane.b32.xlu0 %v4319, 16
    %v4322 = vpop.permute.xlu0 %4321
    %v4324 = vmul.f32 %v4288, %v4322
    %v4325 = vlaneseq
    %v4326 = vshrl.u32 %v4325, 7
    %v4327 = vsub.s32 0, %v4326
    %v4328 = vrot.slane %v4318, %v4327
    %v4329 = vsel %vm401, %v4328, 0.0
    %v4330 = vlaneseq
    %v4331 = vshrl.u32 %v4330, 7
    %v4332 = vsub.s32 7, %v4331
    %v4333 = vrot.slane %v4324, %v4332
    %v4334 = vsel %vm409, %v4333, 0.0
    %4336 = vrot.lane.b32.xlu0 %v4318, 96
    %v4337 = vpop.permute.xlu0 %4336
    %v4338 = vsel %vm200, %v4337, 0
    %4340 = vmatprep.subr.mxu0 0.0
    %4341 = vmatpush1.msra.mxu0 0.0
    %4342 = vmatprep.subr.mxu0 0.0
    %4343 = vmatpush1.msra.mxu0 0.0
    %4344 = vmatprep.subr.mxu0 0.0
    %4345 = vmatpush1.msra.mxu0 0.0
    %4346 = vmatprep.subr.mxu0 0.0
    %4347 = vmatpush1.msra.mxu0 0.0
    %4348 = vmatprep.subr.mxu0 0.0
    %4349 = vmatpush1.msra.mxu0 0.0
    %4350 = vmatprep.subr.mxu0 0.0
    %4351 = vmatpush1.msra.mxu0 0.0
    %4352 = vmatprep.subr.mxu0 0.0
    %4353 = vmatpush1.msra.mxu0 0.0
    %4354 = vmatprep.subr.mxu0 0.0
    %4355 = vmatpush1.msra.mxu0 0.0
    %4356 = vmatprep.subr.mxu0 0.0
    %4357 = vmatpush1.msra.mxu0 0.0
    %4358 = vmatprep.subr.mxu0 0.0
    %4359 = vmatpush1.msra.mxu0 0.0
    %4360 = vmatprep.subr.mxu0 0.0
    %4361 = vmatpush1.msra.mxu0 0.0
    %4362 = vmatprep.subr.mxu0 0.0
    %4363 = vmatpush1.msra.mxu0 0.0
    %4364 = vmatprep.subr.mxu0 0.0
    %4365 = vmatpush1.msra.mxu0 0.0
    %4366 = vmatprep.subr.mxu0 0.0
    %4367 = vmatpush1.msra.mxu0 0.0
    %4368 = vmatprep.subr.mxu0 0.0
    %4369 = vmatpush1.msra.mxu0 %v4127
    %4370 = vmatprep.subr.mxu0 0.0
    %4371 = vmatpush1.msra.mxu0 %v4126
    %4372 = vmatprep.subr.mxu0 0.0
    %4373 = vmatpush2.msra.mxu0 0.0
    %4374 = vmatprep.subr.mxu0 0.0
    %4375 = vmatpush2.msra.mxu0 0.0
    %4376 = vmatprep.subr.mxu0 0.0
    %4377 = vmatpush2.msra.mxu0 0.0
    %4378 = vmatprep.subr.mxu0 0.0
    %4379 = vmatpush2.msra.mxu0 0.0
    %4380 = vmatprep.subr.mxu0 0.0
    %4381 = vmatpush2.msra.mxu0 0.0
    %4382 = vmatprep.subr.mxu0 0.0
    %4383 = vmatpush2.msra.mxu0 0.0
    %4384 = vmatprep.subr.mxu0 0.0
    %4385 = vmatpush2.msra.mxu0 0.0
    %4386 = vmatprep.subr.mxu0 0.0
    %4387 = vmatpush2.msra.mxu0 0.0
    %4388 = vmatprep.subr.mxu0 0.0
    %4389 = vmatpush2.msra.mxu0 0.0
    %4390 = vmatprep.subr.mxu0 0.0
    %4391 = vmatpush2.msra.mxu0 0.0
    %4392 = vmatprep.subr.mxu0 0.0
    %4393 = vmatpush2.msra.mxu0 0.0
    %4394 = vmatprep.subr.mxu0 0.0
    %4395 = vmatpush2.msra.mxu0 0.0
    %4396 = vmatprep.subr.mxu0 0.0
    %4397 = vmatpush2.msra.mxu0 0.0
    %4398 = vmatprep.subr.mxu0 0.0
    %4399 = vmatpush2.msra.mxu0 0.0
    %4400 = vmatprep.subr.mxu0 0.0
    %4401 = vmatpush2.msra.mxu0 0.0
    %4402 = vmatprep.subr.mxu0 0.0
    %4403 = vmatpush2.msra.mxu0 0.0
    %4404 = vmatprep.mubr.f32.mxu0 0.0
    %4405 = vmatmul.mubr.f32.gmra.mxu0 %v4338
    %v4406 = vpop.f32.mrf.mxu0
    %v4407 = vadd.f32 0.0, %v4406
    %v4408 = vpop.f32.mrf.mxu0
    %4409 = vdwg.mxu0
    %v4411 = vrot.slane %v4407, 7
    %v4413 = vadd.f32 %v4125, %v4411
    %v4415 = vrot.slane %v4324, 7
    %4416 = vrot.lane.b32.xlu0 %v4415, 32
    %v4417 = vpop.permute.xlu0 %4416
    %v4418 = vsel %vm200, %v4417, 0
    %4420 = vmatprep.subr.mxu0 0.0
    %4421 = vmatpush1.msra.mxu0 0.0
    %4422 = vmatprep.subr.mxu0 0.0
    %4423 = vmatpush1.msra.mxu0 0.0
    %4424 = vmatprep.subr.mxu0 0.0
    %4425 = vmatpush1.msra.mxu0 0.0
    %4426 = vmatprep.subr.mxu0 0.0
    %4427 = vmatpush1.msra.mxu0 0.0
    %4428 = vmatprep.subr.mxu0 0.0
    %4429 = vmatpush1.msra.mxu0 0.0
    %4430 = vmatprep.subr.mxu0 0.0
    %4431 = vmatpush1.msra.mxu0 0.0
    %4432 = vmatprep.subr.mxu0 0.0
    %4433 = vmatpush1.msra.mxu0 0.0
    %4434 = vmatprep.subr.mxu0 0.0
    %4435 = vmatpush1.msra.mxu0 0.0
    %4436 = vmatprep.subr.mxu0 0.0
    %4437 = vmatpush1.msra.mxu0 0.0
    %4438 = vmatprep.subr.mxu0 0.0
    %4439 = vmatpush1.msra.mxu0 0.0
    %4440 = vmatprep.subr.mxu0 0.0
    %4441 = vmatpush1.msra.mxu0 0.0
    %4442 = vmatprep.subr.mxu0 0.0
    %4443 = vmatpush1.msra.mxu0 0.0
    %4444 = vmatprep.subr.mxu0 0.0
    %4445 = vmatpush1.msra.mxu0 0.0
    %4446 = vmatprep.subr.mxu0 0.0
    %4447 = vmatpush1.msra.mxu0 0.0
    %4448 = vmatprep.subr.mxu0 0.0
    %4449 = vmatpush1.msra.mxu0 %v4129
    %4450 = vmatprep.subr.mxu0 0.0
    %4451 = vmatpush1.msra.mxu0 %v4128
    %4452 = vmatprep.subr.mxu0 0.0
    %4453 = vmatpush2.msra.mxu0 0.0
    %4454 = vmatprep.subr.mxu0 0.0
    %4455 = vmatpush2.msra.mxu0 0.0
    %4456 = vmatprep.subr.mxu0 0.0
    %4457 = vmatpush2.msra.mxu0 0.0
    %4458 = vmatprep.subr.mxu0 0.0
    %4459 = vmatpush2.msra.mxu0 0.0
    %4460 = vmatprep.subr.mxu0 0.0
    %4461 = vmatpush2.msra.mxu0 0.0
    %4462 = vmatprep.subr.mxu0 0.0
    %4463 = vmatpush2.msra.mxu0 0.0
    %4464 = vmatprep.subr.mxu0 0.0
    %4465 = vmatpush2.msra.mxu0 0.0
    %4466 = vmatprep.subr.mxu0 0.0
    %4467 = vmatpush2.msra.mxu0 0.0
    %4468 = vmatprep.subr.mxu0 0.0
    %4469 = vmatpush2.msra.mxu0 0.0
    %4470 = vmatprep.subr.mxu0 0.0
    %4471 = vmatpush2.msra.mxu0 0.0
    %4472 = vmatprep.subr.mxu0 0.0
    %4473 = vmatpush2.msra.mxu0 0.0
    %4474 = vmatprep.subr.mxu0 0.0
    %4475 = vmatpush2.msra.mxu0 0.0
    %4476 = vmatprep.subr.mxu0 0.0
    %4477 = vmatpush2.msra.mxu0 0.0
    %4478 = vmatprep.subr.mxu0 0.0
    %4479 = vmatpush2.msra.mxu0 0.0
    %4480 = vmatprep.subr.mxu0 0.0
    %4481 = vmatpush2.msra.mxu0 0.0
    %4482 = vmatprep.subr.mxu0 0.0
    %4483 = vmatpush2.msra.mxu0 0.0
    %4484 = vmatprep.mubr.f32.mxu0 0.0
    %4485 = vmatmul.mubr.f32.gmra.mxu0 %v4418
    %v4486 = vpop.f32.mrf.mxu0
    %v4487 = vadd.f32 0.0, %v4486
    %v4488 = vpop.f32.mrf.mxu0
    %4489 = vdwg.mxu0
    %v4491 = vrot.slane %v4487, 2
    %4492 = vrot.lane.b32.xlu0 %v4491, 64
    %v4493 = vpop.permute.xlu0 %4492
    %v4495 = vadd.f32 %v4125, %v4493
    %v4496 = vxor.u32 %v4413, 2147483648
    %v4497 = vmul.f32 %v4496, 1.442695
    %v4498 = vpow.pop %v4497
    %v4499 = vadd.f32 %v4498, 1.0
    %v4500 = vrcp.pop %v4499
    %v4501 = vmul.f32 1.0, %v4500
    %v4502 = vxor.u32 %v4495, 2147483648
    %v4503 = vmul.f32 %v4502, 1.442695
    %v4504 = vpow.pop %v4503
    %v4505 = vadd.f32 %v4504, 1.0
    %v4506 = vrcp.pop %v4505
    %v4507 = vmul.f32 1.0, %v4506
    %v4508 = vtanh.pop %v4413
    %v4509 = vtanh.pop %v4495
    %v4511 = vrot.slane %v4301, 7
    %v4513 = vmul.f32 %v4501, %v4511
    %4515 = vrot.lane.b32.xlu0 %v4508, 80
    %v4516 = vpop.permute.xlu0 %4515
    %v4518 = vmul.f32 %v4501, %v4516
    %4520 = vrot.lane.b32.xlu0 %v4518, 16
    %v4521 = vpop.permute.xlu0 %4520
    %v4523 = vadd.f32 %v4513, %v4521
    %v4525 = vrot.slane %v4312, 1
    %v4527 = vmul.f32 %v4507, %v4525
    %4529 = vrot.lane.b32.xlu0 %v4509, 80
    %v4530 = vpop.permute.xlu0 %4529
    %v4532 = vmul.f32 %v4507, %v4530
    %4534 = vrot.lane.b32.xlu0 %v4532, 16
    %v4535 = vpop.permute.xlu0 %4534
    %v4537 = vadd.f32 %v4527, %v4535
    %v4538 = vtanh.pop %v4523
    %4540 = vrot.lane.b32.xlu0 %v4538, 16
    %v4541 = vpop.permute.xlu0 %4540
    %v4543 = vmul.f32 %v4501, %v4541
    %v4544 = vtanh.pop %v4537
    %4546 = vrot.lane.b32.xlu0 %v4544, 16
    %v4547 = vpop.permute.xlu0 %4546
    %v4549 = vmul.f32 %v4507, %v4547
    %v4550 = vlaneseq
    %v4551 = vshrl.u32 %v4550, 7
    %v4552 = vsub.s32 1, %v4551
    %v4553 = vrot.slane %v4543, %v4552
    %v4554 = vsel %vm632, %v4553, %v4329
    %v4555 = vlaneseq
    %v4556 = vshrl.u32 %v4555, 7
    %v4557 = vsub.s32 6, %v4556
    %v4558 = vrot.slane %v4549, %v4557
    %v4559 = vsel %vm640, %v4558, %v4334
    %v4561 = vrot.slane %v4543, 1
    %4562 = vrot.lane.b32.xlu0 %v4561, 96
    %v4563 = vpop.permute.xlu0 %4562
    %v4564 = vsel %vm200, %v4563, 0
    %4566 = vmatprep.subr.mxu0 0.0
    %4567 = vmatpush1.msra.mxu0 0.0
    %4568 = vmatprep.subr.mxu0 0.0
    %4569 = vmatpush1.msra.mxu0 0.0
    %4570 = vmatprep.subr.mxu0 0.0
    %4571 = vmatpush1.msra.mxu0 0.0
    %4572 = vmatprep.subr.mxu0 0.0
    %4573 = vmatpush1.msra.mxu0 0.0
    %4574 = vmatprep.subr.mxu0 0.0
    %4575 = vmatpush1.msra.mxu0 0.0
    %4576 = vmatprep.subr.mxu0 0.0
    %4577 = vmatpush1.msra.mxu0 0.0
    %4578 = vmatprep.subr.mxu0 0.0
    %4579 = vmatpush1.msra.mxu0 0.0
    %4580 = vmatprep.subr.mxu0 0.0
    %4581 = vmatpush1.msra.mxu0 0.0
    %4582 = vmatprep.subr.mxu0 0.0
    %4583 = vmatpush1.msra.mxu0 0.0
    %4584 = vmatprep.subr.mxu0 0.0
    %4585 = vmatpush1.msra.mxu0 0.0
    %4586 = vmatprep.subr.mxu0 0.0
    %4587 = vmatpush1.msra.mxu0 0.0
    %4588 = vmatprep.subr.mxu0 0.0
    %4589 = vmatpush1.msra.mxu0 0.0
    %4590 = vmatprep.subr.mxu0 0.0
    %4591 = vmatpush1.msra.mxu0 0.0
    %4592 = vmatprep.subr.mxu0 0.0
    %4593 = vmatpush1.msra.mxu0 0.0
    %4594 = vmatprep.subr.mxu0 0.0
    %4595 = vmatpush1.msra.mxu0 %v4127
    %4596 = vmatprep.subr.mxu0 0.0
    %4597 = vmatpush1.msra.mxu0 %v4126
    %4598 = vmatprep.subr.mxu0 0.0
    %4599 = vmatpush2.msra.mxu0 0.0
    %4600 = vmatprep.subr.mxu0 0.0
    %4601 = vmatpush2.msra.mxu0 0.0
    %4602 = vmatprep.subr.mxu0 0.0
    %4603 = vmatpush2.msra.mxu0 0.0
    %4604 = vmatprep.subr.mxu0 0.0
    %4605 = vmatpush2.msra.mxu0 0.0
    %4606 = vmatprep.subr.mxu0 0.0
    %4607 = vmatpush2.msra.mxu0 0.0
    %4608 = vmatprep.subr.mxu0 0.0
    %4609 = vmatpush2.msra.mxu0 0.0
    %4610 = vmatprep.subr.mxu0 0.0
    %4611 = vmatpush2.msra.mxu0 0.0
    %4612 = vmatprep.subr.mxu0 0.0
    %4613 = vmatpush2.msra.mxu0 0.0
    %4614 = vmatprep.subr.mxu0 0.0
    %4615 = vmatpush2.msra.mxu0 0.0
    %4616 = vmatprep.subr.mxu0 0.0
    %4617 = vmatpush2.msra.mxu0 0.0
    %4618 = vmatprep.subr.mxu0 0.0
    %4619 = vmatpush2.msra.mxu0 0.0
    %4620 = vmatprep.subr.mxu0 0.0
    %4621 = vmatpush2.msra.mxu0 0.0
    %4622 = vmatprep.subr.mxu0 0.0
    %4623 = vmatpush2.msra.mxu0 0.0
    %4624 = vmatprep.subr.mxu0 0.0
    %4625 = vmatpush2.msra.mxu0 0.0
    %4626 = vmatprep.subr.mxu0 0.0
    %4627 = vmatpush2.msra.mxu0 0.0
    %4628 = vmatprep.subr.mxu0 0.0
    %4629 = vmatpush2.msra.mxu0 0.0
    %4630 = vmatprep.mubr.f32.mxu0 0.0
    %4631 = vmatmul.mubr.f32.gmra.mxu0 %v4564
    %v4632 = vpop.f32.mrf.mxu0
    %v4633 = vadd.f32 0.0, %v4632
    %v4634 = vpop.f32.mrf.mxu0
    %4635 = vdwg.mxu0
    %v4637 = vrot.slane %v4633, 6
    %v4639 = vadd.f32 %v4125, %v4637
    %v4641 = vrot.slane %v4549, 6
    %4642 = vrot.lane.b32.xlu0 %v4641, 32
    %v4643 = vpop.permute.xlu0 %4642
    %v4644 = vsel %vm200, %v4643, 0
    %4646 = vmatprep.subr.mxu0 0.0
    %4647 = vmatpush1.msra.mxu0 0.0
    %4648 = vmatprep.subr.mxu0 0.0
    %4649 = vmatpush1.msra.mxu0 0.0
    %4650 = vmatprep.subr.mxu0 0.0
    %4651 = vmatpush1.msra.mxu0 0.0
    %4652 = vmatprep.subr.mxu0 0.0
    %4653 = vmatpush1.msra.mxu0 0.0
    %4654 = vmatprep.subr.mxu0 0.0
    %4655 = vmatpush1.msra.mxu0 0.0
    %4656 = vmatprep.subr.mxu0 0.0
    %4657 = vmatpush1.msra.mxu0 0.0
    %4658 = vmatprep.subr.mxu0 0.0
    %4659 = vmatpush1.msra.mxu0 0.0
    %4660 = vmatprep.subr.mxu0 0.0
    %4661 = vmatpush1.msra.mxu0 0.0
    %4662 = vmatprep.subr.mxu0 0.0
    %4663 = vmatpush1.msra.mxu0 0.0
    %4664 = vmatprep.subr.mxu0 0.0
    %4665 = vmatpush1.msra.mxu0 0.0
    %4666 = vmatprep.subr.mxu0 0.0
    %4667 = vmatpush1.msra.mxu0 0.0
    %4668 = vmatprep.subr.mxu0 0.0
    %4669 = vmatpush1.msra.mxu0 0.0
    %4670 = vmatprep.subr.mxu0 0.0
    %4671 = vmatpush1.msra.mxu0 0.0
    %4672 = vmatprep.subr.mxu0 0.0
    %4673 = vmatpush1.msra.mxu0 0.0
    %4674 = vmatprep.subr.mxu0 0.0
    %4675 = vmatpush1.msra.mxu0 %v4129
    %4676 = vmatprep.subr.mxu0 0.0
    %4677 = vmatpush1.msra.mxu0 %v4128
    %4678 = vmatprep.subr.mxu0 0.0
    %4679 = vmatpush2.msra.mxu0 0.0
    %4680 = vmatprep.subr.mxu0 0.0
    %4681 = vmatpush2.msra.mxu0 0.0
    %4682 = vmatprep.subr.mxu0 0.0
    %4683 = vmatpush2.msra.mxu0 0.0
    %4684 = vmatprep.subr.mxu0 0.0
    %4685 = vmatpush2.msra.mxu0 0.0
    %4686 = vmatprep.subr.mxu0 0.0
    %4687 = vmatpush2.msra.mxu0 0.0
    %4688 = vmatprep.subr.mxu0 0.0
    %4689 = vmatpush2.msra.mxu0 0.0
    %4690 = vmatprep.subr.mxu0 0.0
    %4691 = vmatpush2.msra.mxu0 0.0
    %4692 = vmatprep.subr.mxu0 0.0
    %4693 = vmatpush2.msra.mxu0 0.0
    %4694 = vmatprep.subr.mxu0 0.0
    %4695 = vmatpush2.msra.mxu0 0.0
    %4696 = vmatprep.subr.mxu0 0.0
    %4697 = vmatpush2.msra.mxu0 0.0
    %4698 = vmatprep.subr.mxu0 0.0
    %4699 = vmatpush2.msra.mxu0 0.0
    %4700 = vmatprep.subr.mxu0 0.0
    %4701 = vmatpush2.msra.mxu0 0.0
    %4702 = vmatprep.subr.mxu0 0.0
    %4703 = vmatpush2.msra.mxu0 0.0
    %4704 = vmatprep.subr.mxu0 0.0
    %4705 = vmatpush2.msra.mxu0 0.0
    %4706 = vmatprep.subr.mxu0 0.0
    %4707 = vmatpush2.msra.mxu0 0.0
    %4708 = vmatprep.subr.mxu0 0.0
    %4709 = vmatpush2.msra.mxu0 0.0
    %4710 = vmatprep.mubr.f32.mxu0 0.0
    %4711 = vmatmul.mubr.f32.gmra.mxu0 %v4644
    %v4712 = vpop.f32.mrf.mxu0
    %v4713 = vadd.f32 0.0, %v4712
    %v4714 = vpop.f32.mrf.mxu0
    %4715 = vdwg.mxu0
    %v4717 = vrot.slane %v4713, 3
    %4718 = vrot.lane.b32.xlu0 %v4717, 64
    %v4719 = vpop.permute.xlu0 %4718
    %v4721 = vadd.f32 %v4125, %v4719
    %v4722 = vxor.u32 %v4639, 2147483648
    %v4723 = vmul.f32 %v4722, 1.442695
    %v4724 = vpow.pop %v4723
    %v4725 = vadd.f32 %v4724, 1.0
    %v4726 = vrcp.pop %v4725
    %v4727 = vmul.f32 1.0, %v4726
    %v4728 = vxor.u32 %v4721, 2147483648
    %v4729 = vmul.f32 %v4728, 1.442695
    %v4730 = vpow.pop %v4729
    %v4731 = vadd.f32 %v4730, 1.0
    %v4732 = vrcp.pop %v4731
    %v4733 = vmul.f32 1.0, %v4732
    %v4734 = vtanh.pop %v4639
    %v4735 = vtanh.pop %v4721
    %v4737 = vrot.slane %v4523, 7
    %v4739 = vmul.f32 %v4727, %v4737
    %4741 = vrot.lane.b32.xlu0 %v4734, 80
    %v4742 = vpop.permute.xlu0 %4741
    %v4744 = vmul.f32 %v4727, %v4742
    %4746 = vrot.lane.b32.xlu0 %v4744, 16
    %v4747 = vpop.permute.xlu0 %4746
    %v4749 = vadd.f32 %v4739, %v4747
    %v4751 = vrot.slane %v4537, 1
    %v4753 = vmul.f32 %v4733, %v4751
    %4755 = vrot.lane.b32.xlu0 %v4735, 80
    %v4756 = vpop.permute.xlu0 %4755
    %v4758 = vmul.f32 %v4733, %v4756
    %4760 = vrot.lane.b32.xlu0 %v4758, 16
    %v4761 = vpop.permute.xlu0 %4760
    %v4763 = vadd.f32 %v4753, %v4761
    %v4764 = vtanh.pop %v4749
    %4766 = vrot.lane.b32.xlu0 %v4764, 16
    %v4767 = vpop.permute.xlu0 %4766
    %v4769 = vmul.f32 %v4727, %v4767
    %v4770 = vtanh.pop %v4763
    %4772 = vrot.lane.b32.xlu0 %v4770, 16
    %v4773 = vpop.permute.xlu0 %4772
    %v4775 = vmul.f32 %v4733, %v4773
    %v4776 = vlaneseq
    %v4777 = vshrl.u32 %v4776, 7
    %v4778 = vsub.s32 2, %v4777
    %v4779 = vrot.slane %v4769, %v4778
    %v4780 = vsel %vm864, %v4779, %v4554
    %v4781 = vlaneseq
    %v4782 = vshrl.u32 %v4781, 7
    %v4783 = vsub.s32 5, %v4782
    %v4784 = vrot.slane %v4775, %v4783
    %v4785 = vsel %vm872, %v4784, %v4559
    %v4787 = vrot.slane %v4769, 2
    %4788 = vrot.lane.b32.xlu0 %v4787, 96
    %v4789 = vpop.permute.xlu0 %4788
    %v4790 = vsel %vm200, %v4789, 0
    %4792 = vmatprep.subr.mxu0 0.0
    %4793 = vmatpush1.msra.mxu0 0.0
    %4794 = vmatprep.subr.mxu0 0.0
    %4795 = vmatpush1.msra.mxu0 0.0
    %4796 = vmatprep.subr.mxu0 0.0
    %4797 = vmatpush1.msra.mxu0 0.0
    %4798 = vmatprep.subr.mxu0 0.0
    %4799 = vmatpush1.msra.mxu0 0.0
    %4800 = vmatprep.subr.mxu0 0.0
    %4801 = vmatpush1.msra.mxu0 0.0
    %4802 = vmatprep.subr.mxu0 0.0
    %4803 = vmatpush1.msra.mxu0 0.0
    %4804 = vmatprep.subr.mxu0 0.0
    %4805 = vmatpush1.msra.mxu0 0.0
    %4806 = vmatprep.subr.mxu0 0.0
    %4807 = vmatpush1.msra.mxu0 0.0
    %4808 = vmatprep.subr.mxu0 0.0
    %4809 = vmatpush1.msra.mxu0 0.0
    %4810 = vmatprep.subr.mxu0 0.0
    %4811 = vmatpush1.msra.mxu0 0.0
    %4812 = vmatprep.subr.mxu0 0.0
    %4813 = vmatpush1.msra.mxu0 0.0
    %4814 = vmatprep.subr.mxu0 0.0
    %4815 = vmatpush1.msra.mxu0 0.0
    %4816 = vmatprep.subr.mxu0 0.0
    %4817 = vmatpush1.msra.mxu0 0.0
    %4818 = vmatprep.subr.mxu0 0.0
    %4819 = vmatpush1.msra.mxu0 0.0
    %4820 = vmatprep.subr.mxu0 0.0
    %4821 = vmatpush1.msra.mxu0 %v4127
    %4822 = vmatprep.subr.mxu0 0.0
    %4823 = vmatpush1.msra.mxu0 %v4126
    %4824 = vmatprep.subr.mxu0 0.0
    %4825 = vmatpush2.msra.mxu0 0.0
    %4826 = vmatprep.subr.mxu0 0.0
    %4827 = vmatpush2.msra.mxu0 0.0
    %4828 = vmatprep.subr.mxu0 0.0
    %4829 = vmatpush2.msra.mxu0 0.0
    %4830 = vmatprep.subr.mxu0 0.0
    %4831 = vmatpush2.msra.mxu0 0.0
    %4832 = vmatprep.subr.mxu0 0.0
    %4833 = vmatpush2.msra.mxu0 0.0
    %4834 = vmatprep.subr.mxu0 0.0
    %4835 = vmatpush2.msra.mxu0 0.0
    %4836 = vmatprep.subr.mxu0 0.0
    %4837 = vmatpush2.msra.mxu0 0.0
    %4838 = vmatprep.subr.mxu0 0.0
    %4839 = vmatpush2.msra.mxu0 0.0
    %4840 = vmatprep.subr.mxu0 0.0
    %4841 = vmatpush2.msra.mxu0 0.0
    %4842 = vmatprep.subr.mxu0 0.0
    %4843 = vmatpush2.msra.mxu0 0.0
    %4844 = vmatprep.subr.mxu0 0.0
    %4845 = vmatpush2.msra.mxu0 0.0
    %4846 = vmatprep.subr.mxu0 0.0
    %4847 = vmatpush2.msra.mxu0 0.0
    %4848 = vmatprep.subr.mxu0 0.0
    %4849 = vmatpush2.msra.mxu0 0.0
    %4850 = vmatprep.subr.mxu0 0.0
    %4851 = vmatpush2.msra.mxu0 0.0
    %4852 = vmatprep.subr.mxu0 0.0
    %4853 = vmatpush2.msra.mxu0 0.0
    %4854 = vmatprep.subr.mxu0 0.0
    %4855 = vmatpush2.msra.mxu0 0.0
    %4856 = vmatprep.mubr.f32.mxu0 0.0
    %4857 = vmatmul.mubr.f32.gmra.mxu0 %v4790
    %v4858 = vpop.f32.mrf.mxu0
    %v4859 = vadd.f32 0.0, %v4858
    %v4860 = vpop.f32.mrf.mxu0
    %4861 = vdwg.mxu0
    %v4863 = vrot.slane %v4859, 5
    %v4865 = vadd.f32 %v4125, %v4863
    %v4867 = vrot.slane %v4775, 5
    %4868 = vrot.lane.b32.xlu0 %v4867, 32
    %v4869 = vpop.permute.xlu0 %4868
    %v4870 = vsel %vm200, %v4869, 0
    %4872 = vmatprep.subr.mxu0 0.0
    %4873 = vmatpush1.msra.mxu0 0.0
    %4874 = vmatprep.subr.mxu0 0.0
    %4875 = vmatpush1.msra.mxu0 0.0
    %4876 = vmatprep.subr.mxu0 0.0
    %4877 = vmatpush1.msra.mxu0 0.0
    %4878 = vmatprep.subr.mxu0 0.0
    %4879 = vmatpush1.msra.mxu0 0.0
    %4880 = vmatprep.subr.mxu0 0.0
    %4881 = vmatpush1.msra.mxu0 0.0
    %4882 = vmatprep.subr.mxu0 0.0
    %4883 = vmatpush1.msra.mxu0 0.0
    %4884 = vmatprep.subr.mxu0 0.0
    %4885 = vmatpush1.msra.mxu0 0.0
    %4886 = vmatprep.subr.mxu0 0.0
    %4887 = vmatpush1.msra.mxu0 0.0
    %4888 = vmatprep.subr.mxu0 0.0
    %4889 = vmatpush1.msra.mxu0 0.0
    %4890 = vmatprep.subr.mxu0 0.0
    %4891 = vmatpush1.msra.mxu0 0.0
    %4892 = vmatprep.subr.mxu0 0.0
    %4893 = vmatpush1.msra.mxu0 0.0
    %4894 = vmatprep.subr.mxu0 0.0
    %4895 = vmatpush1.msra.mxu0 0.0
    %4896 = vmatprep.subr.mxu0 0.0
    %4897 = vmatpush1.msra.mxu0 0.0
    %4898 = vmatprep.subr.mxu0 0.0
    %4899 = vmatpush1.msra.mxu0 0.0
    %4900 = vmatprep.subr.mxu0 0.0
    %4901 = vmatpush1.msra.mxu0 %v4129
    %4902 = vmatprep.subr.mxu0 0.0
    %4903 = vmatpush1.msra.mxu0 %v4128
    %4904 = vmatprep.subr.mxu0 0.0
    %4905 = vmatpush2.msra.mxu0 0.0
    %4906 = vmatprep.subr.mxu0 0.0
    %4907 = vmatpush2.msra.mxu0 0.0
    %4908 = vmatprep.subr.mxu0 0.0
    %4909 = vmatpush2.msra.mxu0 0.0
    %4910 = vmatprep.subr.mxu0 0.0
    %4911 = vmatpush2.msra.mxu0 0.0
    %4912 = vmatprep.subr.mxu0 0.0
    %4913 = vmatpush2.msra.mxu0 0.0
    %4914 = vmatprep.subr.mxu0 0.0
    %4915 = vmatpush2.msra.mxu0 0.0
    %4916 = vmatprep.subr.mxu0 0.0
    %4917 = vmatpush2.msra.mxu0 0.0
    %4918 = vmatprep.subr.mxu0 0.0
    %4919 = vmatpush2.msra.mxu0 0.0
    %4920 = vmatprep.subr.mxu0 0.0
    %4921 = vmatpush2.msra.mxu0 0.0
    %4922 = vmatprep.subr.mxu0 0.0
    %4923 = vmatpush2.msra.mxu0 0.0
    %4924 = vmatprep.subr.mxu0 0.0
    %4925 = vmatpush2.msra.mxu0 0.0
    %4926 = vmatprep.subr.mxu0 0.0
    %4927 = vmatpush2.msra.mxu0 0.0
    %4928 = vmatprep.subr.mxu0 0.0
    %4929 = vmatpush2.msra.mxu0 0.0
    %4930 = vmatprep.subr.mxu0 0.0
    %4931 = vmatpush2.msra.mxu0 0.0
    %4932 = vmatprep.subr.mxu0 0.0
    %4933 = vmatpush2.msra.mxu0 0.0
    %4934 = vmatprep.subr.mxu0 0.0
    %4935 = vmatpush2.msra.mxu0 0.0
    %4936 = vmatprep.mubr.f32.mxu0 0.0
    %4937 = vmatmul.mubr.f32.gmra.mxu0 %v4870
    %v4938 = vpop.f32.mrf.mxu0
    %v4939 = vadd.f32 0.0, %v4938
    %v4940 = vpop.f32.mrf.mxu0
    %4941 = vdwg.mxu0
    %v4943 = vrot.slane %v4939, 4
    %4944 = vrot.lane.b32.xlu0 %v4943, 64
    %v4945 = vpop.permute.xlu0 %4944
    %v4947 = vadd.f32 %v4125, %v4945
    %v4948 = vxor.u32 %v4865, 2147483648
    %v4949 = vmul.f32 %v4948, 1.442695
    %v4950 = vpow.pop %v4949
    %v4951 = vadd.f32 %v4950, 1.0
    %v4952 = vrcp.pop %v4951
    %v4953 = vmul.f32 1.0, %v4952
    %v4954 = vxor.u32 %v4947, 2147483648
    %v4955 = vmul.f32 %v4954, 1.442695
    %v4956 = vpow.pop %v4955
    %v4957 = vadd.f32 %v4956, 1.0
    %v4958 = vrcp.pop %v4957
    %v4959 = vmul.f32 1.0, %v4958
    %v4960 = vtanh.pop %v4865
    %v4961 = vtanh.pop %v4947
    %v4963 = vrot.slane %v4749, 7
    %v4965 = vmul.f32 %v4953, %v4963
    %4967 = vrot.lane.b32.xlu0 %v4960, 80
    %v4968 = vpop.permute.xlu0 %4967
    %v4970 = vmul.f32 %v4953, %v4968
    %4972 = vrot.lane.b32.xlu0 %v4970, 16
    %v4973 = vpop.permute.xlu0 %4972
    %v4975 = vadd.f32 %v4965, %v4973
    %v4977 = vrot.slane %v4763, 1
    %v4979 = vmul.f32 %v4959, %v4977
    %4981 = vrot.lane.b32.xlu0 %v4961, 80
    %v4982 = vpop.permute.xlu0 %4981
    %v4984 = vmul.f32 %v4959, %v4982
    %4986 = vrot.lane.b32.xlu0 %v4984, 16
    %v4987 = vpop.permute.xlu0 %4986
    %v4989 = vadd.f32 %v4979, %v4987
    %v4990 = vtanh.pop %v4975
    %4992 = vrot.lane.b32.xlu0 %v4990, 16
    %v4993 = vpop.permute.xlu0 %4992
    %v4995 = vmul.f32 %v4953, %v4993
    %v4996 = vtanh.pop %v4989
    %4998 = vrot.lane.b32.xlu0 %v4996, 16
    %v4999 = vpop.permute.xlu0 %4998
    %v5001 = vmul.f32 %v4959, %v4999
    %v5002 = vlaneseq
    %v5003 = vshrl.u32 %v5002, 7
    %v5004 = vsub.s32 3, %v5003
    %v5005 = vrot.slane %v4995, %v5004
    %v5006 = vsel %vm1096, %v5005, %v4780
    %v5007 = vlaneseq
    %v5008 = vshrl.u32 %v5007, 7
    %v5009 = vsub.s32 4, %v5008
    %v5010 = vrot.slane %v5001, %v5009
    %v5011 = vsel %vm1104, %v5010, %v4785
    %v5013 = vrot.slane %v4995, 3
    %5014 = vrot.lane.b32.xlu0 %v5013, 96
    %v5015 = vpop.permute.xlu0 %5014
    %v5016 = vsel %vm200, %v5015, 0
    %5018 = vmatprep.subr.mxu0 0.0
    %5019 = vmatpush1.msra.mxu0 0.0
    %5020 = vmatprep.subr.mxu0 0.0
    %5021 = vmatpush1.msra.mxu0 0.0
    %5022 = vmatprep.subr.mxu0 0.0
    %5023 = vmatpush1.msra.mxu0 0.0
    %5024 = vmatprep.subr.mxu0 0.0
    %5025 = vmatpush1.msra.mxu0 0.0
    %5026 = vmatprep.subr.mxu0 0.0
    %5027 = vmatpush1.msra.mxu0 0.0
    %5028 = vmatprep.subr.mxu0 0.0
    %5029 = vmatpush1.msra.mxu0 0.0
    %5030 = vmatprep.subr.mxu0 0.0
    %5031 = vmatpush1.msra.mxu0 0.0
    %5032 = vmatprep.subr.mxu0 0.0
    %5033 = vmatpush1.msra.mxu0 0.0
    %5034 = vmatprep.subr.mxu0 0.0
    %5035 = vmatpush1.msra.mxu0 0.0
    %5036 = vmatprep.subr.mxu0 0.0
    %5037 = vmatpush1.msra.mxu0 0.0
    %5038 = vmatprep.subr.mxu0 0.0
    %5039 = vmatpush1.msra.mxu0 0.0
    %5040 = vmatprep.subr.mxu0 0.0
    %5041 = vmatpush1.msra.mxu0 0.0
    %5042 = vmatprep.subr.mxu0 0.0
    %5043 = vmatpush1.msra.mxu0 0.0
    %5044 = vmatprep.subr.mxu0 0.0
    %5045 = vmatpush1.msra.mxu0 0.0
    %5046 = vmatprep.subr.mxu0 0.0
    %5047 = vmatpush1.msra.mxu0 %v4127
    %5048 = vmatprep.subr.mxu0 0.0
    %5049 = vmatpush1.msra.mxu0 %v4126
    %5050 = vmatprep.subr.mxu0 0.0
    %5051 = vmatpush2.msra.mxu0 0.0
    %5052 = vmatprep.subr.mxu0 0.0
    %5053 = vmatpush2.msra.mxu0 0.0
    %5054 = vmatprep.subr.mxu0 0.0
    %5055 = vmatpush2.msra.mxu0 0.0
    %5056 = vmatprep.subr.mxu0 0.0
    %5057 = vmatpush2.msra.mxu0 0.0
    %5058 = vmatprep.subr.mxu0 0.0
    %5059 = vmatpush2.msra.mxu0 0.0
    %5060 = vmatprep.subr.mxu0 0.0
    %5061 = vmatpush2.msra.mxu0 0.0
    %5062 = vmatprep.subr.mxu0 0.0
    %5063 = vmatpush2.msra.mxu0 0.0
    %5064 = vmatprep.subr.mxu0 0.0
    %5065 = vmatpush2.msra.mxu0 0.0
    %5066 = vmatprep.subr.mxu0 0.0
    %5067 = vmatpush2.msra.mxu0 0.0
    %5068 = vmatprep.subr.mxu0 0.0
    %5069 = vmatpush2.msra.mxu0 0.0
    %5070 = vmatprep.subr.mxu0 0.0
    %5071 = vmatpush2.msra.mxu0 0.0
    %5072 = vmatprep.subr.mxu0 0.0
    %5073 = vmatpush2.msra.mxu0 0.0
    %5074 = vmatprep.subr.mxu0 0.0
    %5075 = vmatpush2.msra.mxu0 0.0
    %5076 = vmatprep.subr.mxu0 0.0
    %5077 = vmatpush2.msra.mxu0 0.0
    %5078 = vmatprep.subr.mxu0 0.0
    %5079 = vmatpush2.msra.mxu0 0.0
    %5080 = vmatprep.subr.mxu0 0.0
    %5081 = vmatpush2.msra.mxu0 0.0
    %5082 = vmatprep.mubr.f32.mxu0 0.0
    %5083 = vmatmul.mubr.f32.gmra.mxu0 %v5016
    %v5084 = vpop.f32.mrf.mxu0
    %v5085 = vadd.f32 0.0, %v5084
    %v5086 = vpop.f32.mrf.mxu0
    %5087 = vdwg.mxu0
    %v5089 = vrot.slane %v5085, 4
    %v5091 = vadd.f32 %v4125, %v5089
    %v5093 = vrot.slane %v5001, 4
    %5094 = vrot.lane.b32.xlu0 %v5093, 32
    %v5095 = vpop.permute.xlu0 %5094
    %v5096 = vsel %vm200, %v5095, 0
    %5098 = vmatprep.subr.mxu0 0.0
    %5099 = vmatpush1.msra.mxu0 0.0
    %5100 = vmatprep.subr.mxu0 0.0
    %5101 = vmatpush1.msra.mxu0 0.0
    %5102 = vmatprep.subr.mxu0 0.0
    %5103 = vmatpush1.msra.mxu0 0.0
    %5104 = vmatprep.subr.mxu0 0.0
    %5105 = vmatpush1.msra.mxu0 0.0
    %5106 = vmatprep.subr.mxu0 0.0
    %5107 = vmatpush1.msra.mxu0 0.0
    %5108 = vmatprep.subr.mxu0 0.0
    %5109 = vmatpush1.msra.mxu0 0.0
    %5110 = vmatprep.subr.mxu0 0.0
    %5111 = vmatpush1.msra.mxu0 0.0
    %5112 = vmatprep.subr.mxu0 0.0
    %5113 = vmatpush1.msra.mxu0 0.0
    %5114 = vmatprep.subr.mxu0 0.0
    %5115 = vmatpush1.msra.mxu0 0.0
    %5116 = vmatprep.subr.mxu0 0.0
    %5117 = vmatpush1.msra.mxu0 0.0
    %5118 = vmatprep.subr.mxu0 0.0
    %5119 = vmatpush1.msra.mxu0 0.0
    %5120 = vmatprep.subr.mxu0 0.0
    %5121 = vmatpush1.msra.mxu0 0.0
    %5122 = vmatprep.subr.mxu0 0.0
    %5123 = vmatpush1.msra.mxu0 0.0
    %5124 = vmatprep.subr.mxu0 0.0
    %5125 = vmatpush1.msra.mxu0 0.0
    %5126 = vmatprep.subr.mxu0 0.0
    %5127 = vmatpush1.msra.mxu0 %v4129
    %5128 = vmatprep.subr.mxu0 0.0
    %5129 = vmatpush1.msra.mxu0 %v4128
    %5130 = vmatprep.subr.mxu0 0.0
    %5131 = vmatpush2.msra.mxu0 0.0
    %5132 = vmatprep.subr.mxu0 0.0
    %5133 = vmatpush2.msra.mxu0 0.0
    %5134 = vmatprep.subr.mxu0 0.0
    %5135 = vmatpush2.msra.mxu0 0.0
    %5136 = vmatprep.subr.mxu0 0.0
    %5137 = vmatpush2.msra.mxu0 0.0
    %5138 = vmatprep.subr.mxu0 0.0
    %5139 = vmatpush2.msra.mxu0 0.0
    %5140 = vmatprep.subr.mxu0 0.0
    %5141 = vmatpush2.msra.mxu0 0.0
    %5142 = vmatprep.subr.mxu0 0.0
    %5143 = vmatpush2.msra.mxu0 0.0
    %5144 = vmatprep.subr.mxu0 0.0
    %5145 = vmatpush2.msra.mxu0 0.0
    %5146 = vmatprep.subr.mxu0 0.0
    %5147 = vmatpush2.msra.mxu0 0.0
    %5148 = vmatprep.subr.mxu0 0.0
    %5149 = vmatpush2.msra.mxu0 0.0
    %5150 = vmatprep.subr.mxu0 0.0
    %5151 = vmatpush2.msra.mxu0 0.0
    %5152 = vmatprep.subr.mxu0 0.0
    %5153 = vmatpush2.msra.mxu0 0.0
    %5154 = vmatprep.subr.mxu0 0.0
    %5155 = vmatpush2.msra.mxu0 0.0
    %5156 = vmatprep.subr.mxu0 0.0
    %5157 = vmatpush2.msra.mxu0 0.0
    %5158 = vmatprep.subr.mxu0 0.0
    %5159 = vmatpush2.msra.mxu0 0.0
    %5160 = vmatprep.subr.mxu0 0.0
    %5161 = vmatpush2.msra.mxu0 0.0
    %5162 = vmatprep.mubr.f32.mxu0 0.0
    %5163 = vmatmul.mubr.f32.gmra.mxu0 %v5096
    %v5164 = vpop.f32.mrf.mxu0
    %v5165 = vadd.f32 0.0, %v5164
    %v5166 = vpop.f32.mrf.mxu0
    %5167 = vdwg.mxu0
    %v5169 = vrot.slane %v5165, 5
    %5170 = vrot.lane.b32.xlu0 %v5169, 64
    %v5171 = vpop.permute.xlu0 %5170
    %v5173 = vadd.f32 %v4125, %v5171
    %v5174 = vxor.u32 %v5091, 2147483648
    %v5175 = vmul.f32 %v5174, 1.442695
    %v5176 = vpow.pop %v5175
    %v5177 = vadd.f32 %v5176, 1.0
    %v5178 = vrcp.pop %v5177
    %v5179 = vmul.f32 1.0, %v5178
    %v5180 = vxor.u32 %v5173, 2147483648
    %v5181 = vmul.f32 %v5180, 1.442695
    %v5182 = vpow.pop %v5181
    %v5183 = vadd.f32 %v5182, 1.0
    %v5184 = vrcp.pop %v5183
    %v5185 = vmul.f32 1.0, %v5184
    %v5186 = vtanh.pop %v5091
    %v5187 = vtanh.pop %v5173
    %v5189 = vrot.slane %v4975, 7
    %v5191 = vmul.f32 %v5179, %v5189
    %5193 = vrot.lane.b32.xlu0 %v5186, 80
    %v5194 = vpop.permute.xlu0 %5193
    %v5196 = vmul.f32 %v5179, %v5194
    %5198 = vrot.lane.b32.xlu0 %v5196, 16
    %v5199 = vpop.permute.xlu0 %5198
    %v5201 = vadd.f32 %v5191, %v5199
    %v5203 = vrot.slane %v4989, 1
    %v5205 = vmul.f32 %v5185, %v5203
    %5207 = vrot.lane.b32.xlu0 %v5187, 80
    %v5208 = vpop.permute.xlu0 %5207
    %v5210 = vmul.f32 %v5185, %v5208
    %5212 = vrot.lane.b32.xlu0 %v5210, 16
    %v5213 = vpop.permute.xlu0 %5212
    %v5215 = vadd.f32 %v5205, %v5213
    %v5216 = vtanh.pop %v5201
    %5218 = vrot.lane.b32.xlu0 %v5216, 16
    %v5219 = vpop.permute.xlu0 %5218
    %v5221 = vmul.f32 %v5179, %v5219
    %v5222 = vtanh.pop %v5215
    %5224 = vrot.lane.b32.xlu0 %v5222, 16
    %v5225 = vpop.permute.xlu0 %5224
    %v5227 = vmul.f32 %v5185, %v5225
    %v5228 = vlaneseq
    %v5229 = vshrl.u32 %v5228, 7
    %v5230 = vsub.s32 4, %v5229
    %v5231 = vrot.slane %v5221, %v5230
    %v5232 = vsel %vm1104, %v5231, %v5006
    %v5233 = vlaneseq
    %v5234 = vshrl.u32 %v5233, 7
    %v5235 = vsub.s32 3, %v5234
    %v5236 = vrot.slane %v5227, %v5235
    %v5237 = vsel %vm1096, %v5236, %v5011
    %v5239 = vrot.slane %v5221, 4
    %5240 = vrot.lane.b32.xlu0 %v5239, 96
    %v5241 = vpop.permute.xlu0 %5240
    %v5242 = vsel %vm200, %v5241, 0
    %5244 = vmatprep.subr.mxu0 0.0
    %5245 = vmatpush1.msra.mxu0 0.0
    %5246 = vmatprep.subr.mxu0 0.0
    %5247 = vmatpush1.msra.mxu0 0.0
    %5248 = vmatprep.subr.mxu0 0.0
    %5249 = vmatpush1.msra.mxu0 0.0
    %5250 = vmatprep.subr.mxu0 0.0
    %5251 = vmatpush1.msra.mxu0 0.0
    %5252 = vmatprep.subr.mxu0 0.0
    %5253 = vmatpush1.msra.mxu0 0.0
    %5254 = vmatprep.subr.mxu0 0.0
    %5255 = vmatpush1.msra.mxu0 0.0
    %5256 = vmatprep.subr.mxu0 0.0
    %5257 = vmatpush1.msra.mxu0 0.0
    %5258 = vmatprep.subr.mxu0 0.0
    %5259 = vmatpush1.msra.mxu0 0.0
    %5260 = vmatprep.subr.mxu0 0.0
    %5261 = vmatpush1.msra.mxu0 0.0
    %5262 = vmatprep.subr.mxu0 0.0
    %5263 = vmatpush1.msra.mxu0 0.0
    %5264 = vmatprep.subr.mxu0 0.0
    %5265 = vmatpush1.msra.mxu0 0.0
    %5266 = vmatprep.subr.mxu0 0.0
    %5267 = vmatpush1.msra.mxu0 0.0
    %5268 = vmatprep.subr.mxu0 0.0
    %5269 = vmatpush1.msra.mxu0 0.0
    %5270 = vmatprep.subr.mxu0 0.0
    %5271 = vmatpush1.msra.mxu0 0.0
    %5272 = vmatprep.subr.mxu0 0.0
    %5273 = vmatpush1.msra.mxu0 %v4127
    %5274 = vmatprep.subr.mxu0 0.0
    %5275 = vmatpush1.msra.mxu0 %v4126
    %5276 = vmatprep.subr.mxu0 0.0
    %5277 = vmatpush2.msra.mxu0 0.0
    %5278 = vmatprep.subr.mxu0 0.0
    %5279 = vmatpush2.msra.mxu0 0.0
    %5280 = vmatprep.subr.mxu0 0.0
    %5281 = vmatpush2.msra.mxu0 0.0
    %5282 = vmatprep.subr.mxu0 0.0
    %5283 = vmatpush2.msra.mxu0 0.0
    %5284 = vmatprep.subr.mxu0 0.0
    %5285 = vmatpush2.msra.mxu0 0.0
    %5286 = vmatprep.subr.mxu0 0.0
    %5287 = vmatpush2.msra.mxu0 0.0
    %5288 = vmatprep.subr.mxu0 0.0
    %5289 = vmatpush2.msra.mxu0 0.0
    %5290 = vmatprep.subr.mxu0 0.0
    %5291 = vmatpush2.msra.mxu0 0.0
    %5292 = vmatprep.subr.mxu0 0.0
    %5293 = vmatpush2.msra.mxu0 0.0
    %5294 = vmatprep.subr.mxu0 0.0
    %5295 = vmatpush2.msra.mxu0 0.0
    %5296 = vmatprep.subr.mxu0 0.0
    %5297 = vmatpush2.msra.mxu0 0.0
    %5298 = vmatprep.subr.mxu0 0.0
    %5299 = vmatpush2.msra.mxu0 0.0
    %5300 = vmatprep.subr.mxu0 0.0
    %5301 = vmatpush2.msra.mxu0 0.0
    %5302 = vmatprep.subr.mxu0 0.0
    %5303 = vmatpush2.msra.mxu0 0.0
    %5304 = vmatprep.subr.mxu0 0.0
    %5305 = vmatpush2.msra.mxu0 0.0
    %5306 = vmatprep.subr.mxu0 0.0
    %5307 = vmatpush2.msra.mxu0 0.0
    %5308 = vmatprep.mubr.f32.mxu0 0.0
    %5309 = vmatmul.mubr.f32.gmra.mxu0 %v5242
    %v5310 = vpop.f32.mrf.mxu0
    %v5311 = vadd.f32 0.0, %v5310
    %v5312 = vpop.f32.mrf.mxu0
    %5313 = vdwg.mxu0
    %v5315 = vrot.slane %v5311, 3
    %v5317 = vadd.f32 %v4125, %v5315
    %v5319 = vrot.slane %v5227, 3
    %5320 = vrot.lane.b32.xlu0 %v5319, 32
    %v5321 = vpop.permute.xlu0 %5320
    %v5322 = vsel %vm200, %v5321, 0
    %5324 = vmatprep.subr.mxu0 0.0
    %5325 = vmatpush1.msra.mxu0 0.0
    %5326 = vmatprep.subr.mxu0 0.0
    %5327 = vmatpush1.msra.mxu0 0.0
    %5328 = vmatprep.subr.mxu0 0.0
    %5329 = vmatpush1.msra.mxu0 0.0
    %5330 = vmatprep.subr.mxu0 0.0
    %5331 = vmatpush1.msra.mxu0 0.0
    %5332 = vmatprep.subr.mxu0 0.0
    %5333 = vmatpush1.msra.mxu0 0.0
    %5334 = vmatprep.subr.mxu0 0.0
    %5335 = vmatpush1.msra.mxu0 0.0
    %5336 = vmatprep.subr.mxu0 0.0
    %5337 = vmatpush1.msra.mxu0 0.0
    %5338 = vmatprep.subr.mxu0 0.0
    %5339 = vmatpush1.msra.mxu0 0.0
    %5340 = vmatprep.subr.mxu0 0.0
    %5341 = vmatpush1.msra.mxu0 0.0
    %5342 = vmatprep.subr.mxu0 0.0
    %5343 = vmatpush1.msra.mxu0 0.0
    %5344 = vmatprep.subr.mxu0 0.0
    %5345 = vmatpush1.msra.mxu0 0.0
    %5346 = vmatprep.subr.mxu0 0.0
    %5347 = vmatpush1.msra.mxu0 0.0
    %5348 = vmatprep.subr.mxu0 0.0
    %5349 = vmatpush1.msra.mxu0 0.0
    %5350 = vmatprep.subr.mxu0 0.0
    %5351 = vmatpush1.msra.mxu0 0.0
    %5352 = vmatprep.subr.mxu0 0.0
    %5353 = vmatpush1.msra.mxu0 %v4129
    %5354 = vmatprep.subr.mxu0 0.0
    %5355 = vmatpush1.msra.mxu0 %v4128
    %5356 = vmatprep.subr.mxu0 0.0
    %5357 = vmatpush2.msra.mxu0 0.0
    %5358 = vmatprep.subr.mxu0 0.0
    %5359 = vmatpush2.msra.mxu0 0.0
    %5360 = vmatprep.subr.mxu0 0.0
    %5361 = vmatpush2.msra.mxu0 0.0
    %5362 = vmatprep.subr.mxu0 0.0
    %5363 = vmatpush2.msra.mxu0 0.0
    %5364 = vmatprep.subr.mxu0 0.0
    %5365 = vmatpush2.msra.mxu0 0.0
    %5366 = vmatprep.subr.mxu0 0.0
    %5367 = vmatpush2.msra.mxu0 0.0
    %5368 = vmatprep.subr.mxu0 0.0
    %5369 = vmatpush2.msra.mxu0 0.0
    %5370 = vmatprep.subr.mxu0 0.0
    %5371 = vmatpush2.msra.mxu0 0.0
    %5372 = vmatprep.subr.mxu0 0.0
    %5373 = vmatpush2.msra.mxu0 0.0
    %5374 = vmatprep.subr.mxu0 0.0
    %5375 = vmatpush2.msra.mxu0 0.0
    %5376 = vmatprep.subr.mxu0 0.0
    %5377 = vmatpush2.msra.mxu0 0.0
    %5378 = vmatprep.subr.mxu0 0.0
    %5379 = vmatpush2.msra.mxu0 0.0
    %5380 = vmatprep.subr.mxu0 0.0
    %5381 = vmatpush2.msra.mxu0 0.0
    %5382 = vmatprep.subr.mxu0 0.0
    %5383 = vmatpush2.msra.mxu0 0.0
    %5384 = vmatprep.subr.mxu0 0.0
    %5385 = vmatpush2.msra.mxu0 0.0
    %5386 = vmatprep.subr.mxu0 0.0
    %5387 = vmatpush2.msra.mxu0 0.0
    %5388 = vmatprep.mubr.f32.mxu0 0.0
    %5389 = vmatmul.mubr.f32.gmra.mxu0 %v5322
    %v5390 = vpop.f32.mrf.mxu0
    %v5391 = vadd.f32 0.0, %v5390
    %v5392 = vpop.f32.mrf.mxu0
    %5393 = vdwg.mxu0
    %v5395 = vrot.slane %v5391, 6
    %5396 = vrot.lane.b32.xlu0 %v5395, 64
    %v5397 = vpop.permute.xlu0 %5396
    %v5399 = vadd.f32 %v4125, %v5397
    %v5400 = vxor.u32 %v5317, 2147483648
    %v5401 = vmul.f32 %v5400, 1.442695
    %v5402 = vpow.pop %v5401
    %v5403 = vadd.f32 %v5402, 1.0
    %v5404 = vrcp.pop %v5403
    %v5405 = vmul.f32 1.0, %v5404
    %v5406 = vxor.u32 %v5399, 2147483648
    %v5407 = vmul.f32 %v5406, 1.442695
    %v5408 = vpow.pop %v5407
    %v5409 = vadd.f32 %v5408, 1.0
    %v5410 = vrcp.pop %v5409
    %v5411 = vmul.f32 1.0, %v5410
    %v5412 = vtanh.pop %v5317
    %v5413 = vtanh.pop %v5399
    %v5415 = vrot.slane %v5201, 7
    %v5417 = vmul.f32 %v5405, %v5415
    %5419 = vrot.lane.b32.xlu0 %v5412, 80
    %v5420 = vpop.permute.xlu0 %5419
    %v5422 = vmul.f32 %v5405, %v5420
    %5424 = vrot.lane.b32.xlu0 %v5422, 16
    %v5425 = vpop.permute.xlu0 %5424
    %v5427 = vadd.f32 %v5417, %v5425
    %v5429 = vrot.slane %v5215, 1
    %v5431 = vmul.f32 %v5411, %v5429
    %5433 = vrot.lane.b32.xlu0 %v5413, 80
    %v5434 = vpop.permute.xlu0 %5433
    %v5436 = vmul.f32 %v5411, %v5434
    %5438 = vrot.lane.b32.xlu0 %v5436, 16
    %v5439 = vpop.permute.xlu0 %5438
    %v5441 = vadd.f32 %v5431, %v5439
    %v5442 = vtanh.pop %v5427
    %5444 = vrot.lane.b32.xlu0 %v5442, 16
    %v5445 = vpop.permute.xlu0 %5444
    %v5447 = vmul.f32 %v5405, %v5445
    %v5448 = vtanh.pop %v5441
    %5450 = vrot.lane.b32.xlu0 %v5448, 16
    %v5451 = vpop.permute.xlu0 %5450
    %v5453 = vmul.f32 %v5411, %v5451
    %v5454 = vlaneseq
    %v5455 = vshrl.u32 %v5454, 7
    %v5456 = vsub.s32 5, %v5455
    %v5457 = vrot.slane %v5447, %v5456
    %v5458 = vsel %vm872, %v5457, %v5232
    %v5459 = vlaneseq
    %v5460 = vshrl.u32 %v5459, 7
    %v5461 = vsub.s32 2, %v5460
    %v5462 = vrot.slane %v5453, %v5461
    %v5463 = vsel %vm864, %v5462, %v5237
    %v5465 = vrot.slane %v5447, 5
    %5466 = vrot.lane.b32.xlu0 %v5465, 96
    %v5467 = vpop.permute.xlu0 %5466
    %v5468 = vsel %vm200, %v5467, 0
    %5470 = vmatprep.subr.mxu0 0.0
    %5471 = vmatpush1.msra.mxu0 0.0
    %5472 = vmatprep.subr.mxu0 0.0
    %5473 = vmatpush1.msra.mxu0 0.0
    %5474 = vmatprep.subr.mxu0 0.0
    %5475 = vmatpush1.msra.mxu0 0.0
    %5476 = vmatprep.subr.mxu0 0.0
    %5477 = vmatpush1.msra.mxu0 0.0
    %5478 = vmatprep.subr.mxu0 0.0
    %5479 = vmatpush1.msra.mxu0 0.0
    %5480 = vmatprep.subr.mxu0 0.0
    %5481 = vmatpush1.msra.mxu0 0.0
    %5482 = vmatprep.subr.mxu0 0.0
    %5483 = vmatpush1.msra.mxu0 0.0
    %5484 = vmatprep.subr.mxu0 0.0
    %5485 = vmatpush1.msra.mxu0 0.0
    %5486 = vmatprep.subr.mxu0 0.0
    %5487 = vmatpush1.msra.mxu0 0.0
    %5488 = vmatprep.subr.mxu0 0.0
    %5489 = vmatpush1.msra.mxu0 0.0
    %5490 = vmatprep.subr.mxu0 0.0
    %5491 = vmatpush1.msra.mxu0 0.0
    %5492 = vmatprep.subr.mxu0 0.0
    %5493 = vmatpush1.msra.mxu0 0.0
    %5494 = vmatprep.subr.mxu0 0.0
    %5495 = vmatpush1.msra.mxu0 0.0
    %5496 = vmatprep.subr.mxu0 0.0
    %5497 = vmatpush1.msra.mxu0 0.0
    %5498 = vmatprep.subr.mxu0 0.0
    %5499 = vmatpush1.msra.mxu0 %v4127
    %5500 = vmatprep.subr.mxu0 0.0
    %5501 = vmatpush1.msra.mxu0 %v4126
    %5502 = vmatprep.subr.mxu0 0.0
    %5503 = vmatpush2.msra.mxu0 0.0
    %5504 = vmatprep.subr.mxu0 0.0
    %5505 = vmatpush2.msra.mxu0 0.0
    %5506 = vmatprep.subr.mxu0 0.0
    %5507 = vmatpush2.msra.mxu0 0.0
    %5508 = vmatprep.subr.mxu0 0.0
    %5509 = vmatpush2.msra.mxu0 0.0
    %5510 = vmatprep.subr.mxu0 0.0
    %5511 = vmatpush2.msra.mxu0 0.0
    %5512 = vmatprep.subr.mxu0 0.0
    %5513 = vmatpush2.msra.mxu0 0.0
    %5514 = vmatprep.subr.mxu0 0.0
    %5515 = vmatpush2.msra.mxu0 0.0
    %5516 = vmatprep.subr.mxu0 0.0
    %5517 = vmatpush2.msra.mxu0 0.0
    %5518 = vmatprep.subr.mxu0 0.0
    %5519 = vmatpush2.msra.mxu0 0.0
    %5520 = vmatprep.subr.mxu0 0.0
    %5521 = vmatpush2.msra.mxu0 0.0
    %5522 = vmatprep.subr.mxu0 0.0
    %5523 = vmatpush2.msra.mxu0 0.0
    %5524 = vmatprep.subr.mxu0 0.0
    %5525 = vmatpush2.msra.mxu0 0.0
    %5526 = vmatprep.subr.mxu0 0.0
    %5527 = vmatpush2.msra.mxu0 0.0
    %5528 = vmatprep.subr.mxu0 0.0
    %5529 = vmatpush2.msra.mxu0 0.0
    %5530 = vmatprep.subr.mxu0 0.0
    %5531 = vmatpush2.msra.mxu0 0.0
    %5532 = vmatprep.subr.mxu0 0.0
    %5533 = vmatpush2.msra.mxu0 0.0
    %5534 = vmatprep.mubr.f32.mxu0 0.0
    %5535 = vmatmul.mubr.f32.gmra.mxu0 %v5468
    %v5536 = vpop.f32.mrf.mxu0
    %v5537 = vadd.f32 0.0, %v5536
    %v5538 = vpop.f32.mrf.mxu0
    %5539 = vdwg.mxu0
    %v5541 = vrot.slane %v5537, 2
    %v5543 = vadd.f32 %v4125, %v5541
    %v5545 = vrot.slane %v5453, 2
    %5546 = vrot.lane.b32.xlu0 %v5545, 32
    %v5547 = vpop.permute.xlu0 %5546
    %v5548 = vsel %vm200, %v5547, 0
    %5550 = vmatprep.subr.mxu0 0.0
    %5551 = vmatpush1.msra.mxu0 0.0
    %5552 = vmatprep.subr.mxu0 0.0
    %5553 = vmatpush1.msra.mxu0 0.0
    %5554 = vmatprep.subr.mxu0 0.0
    %5555 = vmatpush1.msra.mxu0 0.0
    %5556 = vmatprep.subr.mxu0 0.0
    %5557 = vmatpush1.msra.mxu0 0.0
    %5558 = vmatprep.subr.mxu0 0.0
    %5559 = vmatpush1.msra.mxu0 0.0
    %5560 = vmatprep.subr.mxu0 0.0
    %5561 = vmatpush1.msra.mxu0 0.0
    %5562 = vmatprep.subr.mxu0 0.0
    %5563 = vmatpush1.msra.mxu0 0.0
    %5564 = vmatprep.subr.mxu0 0.0
    %5565 = vmatpush1.msra.mxu0 0.0
    %5566 = vmatprep.subr.mxu0 0.0
    %5567 = vmatpush1.msra.mxu0 0.0
    %5568 = vmatprep.subr.mxu0 0.0
    %5569 = vmatpush1.msra.mxu0 0.0
    %5570 = vmatprep.subr.mxu0 0.0
    %5571 = vmatpush1.msra.mxu0 0.0
    %5572 = vmatprep.subr.mxu0 0.0
    %5573 = vmatpush1.msra.mxu0 0.0
    %5574 = vmatprep.subr.mxu0 0.0
    %5575 = vmatpush1.msra.mxu0 0.0
    %5576 = vmatprep.subr.mxu0 0.0
    %5577 = vmatpush1.msra.mxu0 0.0
    %5578 = vmatprep.subr.mxu0 0.0
    %5579 = vmatpush1.msra.mxu0 %v4129
    %5580 = vmatprep.subr.mxu0 0.0
    %5581 = vmatpush1.msra.mxu0 %v4128
    %5582 = vmatprep.subr.mxu0 0.0
    %5583 = vmatpush2.msra.mxu0 0.0
    %5584 = vmatprep.subr.mxu0 0.0
    %5585 = vmatpush2.msra.mxu0 0.0
    %5586 = vmatprep.subr.mxu0 0.0
    %5587 = vmatpush2.msra.mxu0 0.0
    %5588 = vmatprep.subr.mxu0 0.0
    %5589 = vmatpush2.msra.mxu0 0.0
    %5590 = vmatprep.subr.mxu0 0.0
    %5591 = vmatpush2.msra.mxu0 0.0
    %5592 = vmatprep.subr.mxu0 0.0
    %5593 = vmatpush2.msra.mxu0 0.0
    %5594 = vmatprep.subr.mxu0 0.0
    %5595 = vmatpush2.msra.mxu0 0.0
    %5596 = vmatprep.subr.mxu0 0.0
    %5597 = vmatpush2.msra.mxu0 0.0
    %5598 = vmatprep.subr.mxu0 0.0
    %5599 = vmatpush2.msra.mxu0 0.0
    %5600 = vmatprep.subr.mxu0 0.0
    %5601 = vmatpush2.msra.mxu0 0.0
    %5602 = vmatprep.subr.mxu0 0.0
    %5603 = vmatpush2.msra.mxu0 0.0
    %5604 = vmatprep.subr.mxu0 0.0
    %5605 = vmatpush2.msra.mxu0 0.0
    %5606 = vmatprep.subr.mxu0 0.0
    %5607 = vmatpush2.msra.mxu0 0.0
    %5608 = vmatprep.subr.mxu0 0.0
    %5609 = vmatpush2.msra.mxu0 0.0
    %5610 = vmatprep.subr.mxu0 0.0
    %5611 = vmatpush2.msra.mxu0 0.0
    %5612 = vmatprep.subr.mxu0 0.0
    %5613 = vmatpush2.msra.mxu0 0.0
    %5614 = vmatprep.mubr.f32.mxu0 0.0
    %5615 = vmatmul.mubr.f32.gmra.mxu0 %v5548
    %v5616 = vpop.f32.mrf.mxu0
    %v5617 = vadd.f32 0.0, %v5616
    %v5618 = vpop.f32.mrf.mxu0
    %5619 = vdwg.mxu0
    %v5621 = vrot.slane %v5617, 7
    %5622 = vrot.lane.b32.xlu0 %v5621, 64
    %v5623 = vpop.permute.xlu0 %5622
    %v5625 = vadd.f32 %v4125, %v5623
    %v5626 = vxor.u32 %v5543, 2147483648
    %v5627 = vmul.f32 %v5626, 1.442695
    %v5628 = vpow.pop %v5627
    %v5629 = vadd.f32 %v5628, 1.0
    %v5630 = vrcp.pop %v5629
    %v5631 = vmul.f32 1.0, %v5630
    %v5632 = vxor.u32 %v5625, 2147483648
    %v5633 = vmul.f32 %v5632, 1.442695
    %v5634 = vpow.pop %v5633
    %v5635 = vadd.f32 %v5634, 1.0
    %v5636 = vrcp.pop %v5635
    %v5637 = vmul.f32 1.0, %v5636
    %v5638 = vtanh.pop %v5543
    %v5639 = vtanh.pop %v5625
    %v5641 = vrot.slane %v5427, 7
    %v5643 = vmul.f32 %v5631, %v5641
    %5645 = vrot.lane.b32.xlu0 %v5638, 80
    %v5646 = vpop.permute.xlu0 %5645
    %v5648 = vmul.f32 %v5631, %v5646
    %5650 = vrot.lane.b32.xlu0 %v5648, 16
    %v5651 = vpop.permute.xlu0 %5650
    %v5653 = vadd.f32 %v5643, %v5651
    %v5655 = vrot.slane %v5441, 1
    %v5657 = vmul.f32 %v5637, %v5655
    %5659 = vrot.lane.b32.xlu0 %v5639, 80
    %v5660 = vpop.permute.xlu0 %5659
    %v5662 = vmul.f32 %v5637, %v5660
    %5664 = vrot.lane.b32.xlu0 %v5662, 16
    %v5665 = vpop.permute.xlu0 %5664
    %v5667 = vadd.f32 %v5657, %v5665
    %v5668 = vtanh.pop %v5653
    %5670 = vrot.lane.b32.xlu0 %v5668, 16
    %v5671 = vpop.permute.xlu0 %5670
    %v5673 = vmul.f32 %v5631, %v5671
    %v5674 = vtanh.pop %v5667
    %5676 = vrot.lane.b32.xlu0 %v5674, 16
    %v5677 = vpop.permute.xlu0 %5676
    %v5679 = vmul.f32 %v5637, %v5677
    %v5680 = vlaneseq
    %v5681 = vshrl.u32 %v5680, 7
    %v5682 = vsub.s32 6, %v5681
    %v5683 = vrot.slane %v5673, %v5682
    %v5684 = vsel %vm640, %v5683, %v5458
    %v5685 = vlaneseq
    %v5686 = vshrl.u32 %v5685, 7
    %v5687 = vsub.s32 1, %v5686
    %v5688 = vrot.slane %v5679, %v5687
    %v5689 = vsel %vm632, %v5688, %v5463
    %v5691 = vrot.slane %v5673, 6
    %5692 = vrot.lane.b32.xlu0 %v5691, 96
    %v5693 = vpop.permute.xlu0 %5692
    %v5694 = vsel %vm200, %v5693, 0
    %5696 = vmatprep.subr.mxu0 0.0
    %5697 = vmatpush1.msra.mxu0 0.0
    %5698 = vmatprep.subr.mxu0 0.0
    %5699 = vmatpush1.msra.mxu0 0.0
    %5700 = vmatprep.subr.mxu0 0.0
    %5701 = vmatpush1.msra.mxu0 0.0
    %5702 = vmatprep.subr.mxu0 0.0
    %5703 = vmatpush1.msra.mxu0 0.0
    %5704 = vmatprep.subr.mxu0 0.0
    %5705 = vmatpush1.msra.mxu0 0.0
    %5706 = vmatprep.subr.mxu0 0.0
    %5707 = vmatpush1.msra.mxu0 0.0
    %5708 = vmatprep.subr.mxu0 0.0
    %5709 = vmatpush1.msra.mxu0 0.0
    %5710 = vmatprep.subr.mxu0 0.0
    %5711 = vmatpush1.msra.mxu0 0.0
    %5712 = vmatprep.subr.mxu0 0.0
    %5713 = vmatpush1.msra.mxu0 0.0
    %5714 = vmatprep.subr.mxu0 0.0
    %5715 = vmatpush1.msra.mxu0 0.0
    %5716 = vmatprep.subr.mxu0 0.0
    %5717 = vmatpush1.msra.mxu0 0.0
    %5718 = vmatprep.subr.mxu0 0.0
    %5719 = vmatpush1.msra.mxu0 0.0
    %5720 = vmatprep.subr.mxu0 0.0
    %5721 = vmatpush1.msra.mxu0 0.0
    %5722 = vmatprep.subr.mxu0 0.0
    %5723 = vmatpush1.msra.mxu0 0.0
    %5724 = vmatprep.subr.mxu0 0.0
    %5725 = vmatpush1.msra.mxu0 %v4127
    %5726 = vmatprep.subr.mxu0 0.0
    %5727 = vmatpush1.msra.mxu0 %v4126
    %5728 = vmatprep.subr.mxu0 0.0
    %5729 = vmatpush2.msra.mxu0 0.0
    %5730 = vmatprep.subr.mxu0 0.0
    %5731 = vmatpush2.msra.mxu0 0.0
    %5732 = vmatprep.subr.mxu0 0.0
    %5733 = vmatpush2.msra.mxu0 0.0
    %5734 = vmatprep.subr.mxu0 0.0
    %5735 = vmatpush2.msra.mxu0 0.0
    %5736 = vmatprep.subr.mxu0 0.0
    %5737 = vmatpush2.msra.mxu0 0.0
    %5738 = vmatprep.subr.mxu0 0.0
    %5739 = vmatpush2.msra.mxu0 0.0
    %5740 = vmatprep.subr.mxu0 0.0
    %5741 = vmatpush2.msra.mxu0 0.0
    %5742 = vmatprep.subr.mxu0 0.0
    %5743 = vmatpush2.msra.mxu0 0.0
    %5744 = vmatprep.subr.mxu0 0.0
    %5745 = vmatpush2.msra.mxu0 0.0
    %5746 = vmatprep.subr.mxu0 0.0
    %5747 = vmatpush2.msra.mxu0 0.0
    %5748 = vmatprep.subr.mxu0 0.0
    %5749 = vmatpush2.msra.mxu0 0.0
    %5750 = vmatprep.subr.mxu0 0.0
    %5751 = vmatpush2.msra.mxu0 0.0
    %5752 = vmatprep.subr.mxu0 0.0
    %5753 = vmatpush2.msra.mxu0 0.0
    %5754 = vmatprep.subr.mxu0 0.0
    %5755 = vmatpush2.msra.mxu0 0.0
    %5756 = vmatprep.subr.mxu0 0.0
    %5757 = vmatpush2.msra.mxu0 0.0
    %5758 = vmatprep.subr.mxu0 0.0
    %5759 = vmatpush2.msra.mxu0 0.0
    %5760 = vmatprep.mubr.f32.mxu0 0.0
    %5761 = vmatmul.mubr.f32.gmra.mxu0 %v5694
    %v5762 = vpop.f32.mrf.mxu0
    %v5763 = vadd.f32 0.0, %v5762
    %v5764 = vpop.f32.mrf.mxu0
    %5765 = vdwg.mxu0
    %v5767 = vrot.slane %v5763, 1
    %v5769 = vadd.f32 %v4125, %v5767
    %v5771 = vrot.slane %v5679, 1
    %5772 = vrot.lane.b32.xlu0 %v5771, 32
    %v5773 = vpop.permute.xlu0 %5772
    %v5774 = vsel %vm200, %v5773, 0
    %5776 = vmatprep.subr.mxu0 0.0
    %5777 = vmatpush1.msra.mxu0 0.0
    %5778 = vmatprep.subr.mxu0 0.0
    %5779 = vmatpush1.msra.mxu0 0.0
    %5780 = vmatprep.subr.mxu0 0.0
    %5781 = vmatpush1.msra.mxu0 0.0
    %5782 = vmatprep.subr.mxu0 0.0
    %5783 = vmatpush1.msra.mxu0 0.0
    %5784 = vmatprep.subr.mxu0 0.0
    %5785 = vmatpush1.msra.mxu0 0.0
    %5786 = vmatprep.subr.mxu0 0.0
    %5787 = vmatpush1.msra.mxu0 0.0
    %5788 = vmatprep.subr.mxu0 0.0
    %5789 = vmatpush1.msra.mxu0 0.0
    %5790 = vmatprep.subr.mxu0 0.0
    %5791 = vmatpush1.msra.mxu0 0.0
    %5792 = vmatprep.subr.mxu0 0.0
    %5793 = vmatpush1.msra.mxu0 0.0
    %5794 = vmatprep.subr.mxu0 0.0
    %5795 = vmatpush1.msra.mxu0 0.0
    %5796 = vmatprep.subr.mxu0 0.0
    %5797 = vmatpush1.msra.mxu0 0.0
    %5798 = vmatprep.subr.mxu0 0.0
    %5799 = vmatpush1.msra.mxu0 0.0
    %5800 = vmatprep.subr.mxu0 0.0
    %5801 = vmatpush1.msra.mxu0 0.0
    %5802 = vmatprep.subr.mxu0 0.0
    %5803 = vmatpush1.msra.mxu0 0.0
    %5804 = vmatprep.subr.mxu0 0.0
    %5805 = vmatpush1.msra.mxu0 %v4129
    %5806 = vmatprep.subr.mxu0 0.0
    %5807 = vmatpush1.msra.mxu0 %v4128
    %5808 = vmatprep.subr.mxu0 0.0
    %5809 = vmatpush2.msra.mxu0 0.0
    %5810 = vmatprep.subr.mxu0 0.0
    %5811 = vmatpush2.msra.mxu0 0.0
    %5812 = vmatprep.subr.mxu0 0.0
    %5813 = vmatpush2.msra.mxu0 0.0
    %5814 = vmatprep.subr.mxu0 0.0
    %5815 = vmatpush2.msra.mxu0 0.0
    %5816 = vmatprep.subr.mxu0 0.0
    %5817 = vmatpush2.msra.mxu0 0.0
    %5818 = vmatprep.subr.mxu0 0.0
    %5819 = vmatpush2.msra.mxu0 0.0
    %5820 = vmatprep.subr.mxu0 0.0
    %5821 = vmatpush2.msra.mxu0 0.0
    %5822 = vmatprep.subr.mxu0 0.0
    %5823 = vmatpush2.msra.mxu0 0.0
    %5824 = vmatprep.subr.mxu0 0.0
    %5825 = vmatpush2.msra.mxu0 0.0
    %5826 = vmatprep.subr.mxu0 0.0
    %5827 = vmatpush2.msra.mxu0 0.0
    %5828 = vmatprep.subr.mxu0 0.0
    %5829 = vmatpush2.msra.mxu0 0.0
    %5830 = vmatprep.subr.mxu0 0.0
    %5831 = vmatpush2.msra.mxu0 0.0
    %5832 = vmatprep.subr.mxu0 0.0
    %5833 = vmatpush2.msra.mxu0 0.0
    %5834 = vmatprep.subr.mxu0 0.0
    %5835 = vmatpush2.msra.mxu0 0.0
    %5836 = vmatprep.subr.mxu0 0.0
    %5837 = vmatpush2.msra.mxu0 0.0
    %5838 = vmatprep.subr.mxu0 0.0
    %5839 = vmatpush2.msra.mxu0 0.0
    %5840 = vmatprep.mubr.f32.mxu0 0.0
    %5841 = vmatmul.mubr.f32.gmra.mxu0 %v5774
    %v5842 = vpop.f32.mrf.mxu0
    %v5843 = vadd.f32 0.0, %v5842
    %v5844 = vpop.f32.mrf.mxu0
    %5845 = vdwg.mxu0
    %5847 = vrot.lane.b32.xlu0 %v5843, 64
    %v5848 = vpop.permute.xlu0 %5847
    %v5850 = vadd.f32 %v4125, %v5848
    %v5851 = vxor.u32 %v5769, 2147483648
    %v5852 = vmul.f32 %v5851, 1.442695
    %v5853 = vpow.pop %v5852
    %v5854 = vadd.f32 %v5853, 1.0
    %v5855 = vrcp.pop %v5854
    %v5856 = vmul.f32 1.0, %v5855
    %v5857 = vxor.u32 %v5850, 2147483648
    %v5858 = vmul.f32 %v5857, 1.442695
    %v5859 = vpow.pop %v5858
    %v5860 = vadd.f32 %v5859, 1.0
    %v5861 = vrcp.pop %v5860
    %v5862 = vmul.f32 1.0, %v5861
    %v5863 = vtanh.pop %v5769
    %v5864 = vtanh.pop %v5850
    %v5866 = vrot.slane %v5653, 7
    %v5868 = vmul.f32 %v5856, %v5866
    %5870 = vrot.lane.b32.xlu0 %v5863, 80
    %v5871 = vpop.permute.xlu0 %5870
    %v5873 = vmul.f32 %v5856, %v5871
    %5875 = vrot.lane.b32.xlu0 %v5873, 16
    %v5876 = vpop.permute.xlu0 %5875
    %v5878 = vadd.f32 %v5868, %v5876
    %v5880 = vrot.slane %v5667, 1
    %v5882 = vmul.f32 %v5862, %v5880
    %5884 = vrot.lane.b32.xlu0 %v5864, 80
    %v5885 = vpop.permute.xlu0 %5884
    %v5887 = vmul.f32 %v5862, %v5885
    %5889 = vrot.lane.b32.xlu0 %v5887, 16
    %v5890 = vpop.permute.xlu0 %5889
    %v5892 = vadd.f32 %v5882, %v5890
    %v5893 = vtanh.pop %v5878
    %5895 = vrot.lane.b32.xlu0 %v5893, 16
    %v5896 = vpop.permute.xlu0 %5895
    %v5898 = vmul.f32 %v5856, %v5896
    %v5899 = vtanh.pop %v5892
    %5901 = vrot.lane.b32.xlu0 %v5899, 16
    %v5902 = vpop.permute.xlu0 %5901
    %v5904 = vmul.f32 %v5862, %v5902
    %v5905 = vlaneseq
    %v5906 = vshrl.u32 %v5905, 7
    %v5907 = vsub.s32 7, %v5906
    %v5908 = vrot.slane %v5898, %v5907
    %v5909 = vsel %vm409, %v5908, %v5684
    %v5910 = vlaneseq
    %v5911 = vshrl.u32 %v5910, 7
    %v5912 = vsub.s32 0, %v5911
    %v5913 = vrot.slane %v5904, %v5912
    %v5914 = vsel %vm401, %v5913, %v5689
    %v5915 = vld [vmem:[%s13] sm:$0xff]
    %v5916 = vld [vmem:[%s13 + $0x8] sm:$0xff]
    %v5917 = vld [vmem:[%s13 + $0x10] sm:$0xff]
    %v5918 = vld [vmem:[%s13 + $0x18] sm:$0xff]
    %5920 = vrot.lane.b32.xlu0 %v5914, 32
    %v5921 = vpop.permute.xlu0 %5920
    %v5922 = vsel %vm200, %v5921, 0
    %5924 = vmatprep.subr.mxu0 0.0
    %5925 = vmatpush1.msra.mxu0 0.0
    %5926 = vmatprep.subr.mxu0 0.0
    %5927 = vmatpush1.msra.mxu0 0.0
    %5928 = vmatprep.subr.mxu0 0.0
    %5929 = vmatpush1.msra.mxu0 0.0
    %5930 = vmatprep.subr.mxu0 0.0
    %5931 = vmatpush1.msra.mxu0 0.0
    %5932 = vmatprep.subr.mxu0 0.0
    %5933 = vmatpush1.msra.mxu0 0.0
    %5934 = vmatprep.subr.mxu0 0.0
    %5935 = vmatpush1.msra.mxu0 0.0
    %5936 = vmatprep.subr.mxu0 0.0
    %5937 = vmatpush1.msra.mxu0 0.0
    %5938 = vmatprep.subr.mxu0 0.0
    %5939 = vmatpush1.msra.mxu0 0.0
    %5940 = vmatprep.subr.mxu0 0.0
    %5941 = vmatpush1.msra.mxu0 0.0
    %5942 = vmatprep.subr.mxu0 0.0
    %5943 = vmatpush1.msra.mxu0 0.0
    %5944 = vmatprep.subr.mxu0 0.0
    %5945 = vmatpush1.msra.mxu0 0.0
    %5946 = vmatprep.subr.mxu0 0.0
    %5947 = vmatpush1.msra.mxu0 0.0
    %5948 = vmatprep.subr.mxu0 0.0
    %5949 = vmatpush1.msra.mxu0 0.0
    %5950 = vmatprep.subr.mxu0 0.0
    %5951 = vmatpush1.msra.mxu0 0.0
    %5952 = vmatprep.subr.mxu0 0.0
    %5953 = vmatpush1.msra.mxu0 %v5918
    %5954 = vmatprep.subr.mxu0 0.0
    %5955 = vmatpush1.msra.mxu0 %v5917
    %5956 = vmatprep.subr.mxu0 0.0
    %5957 = vmatpush2.msra.mxu0 0.0
    %5958 = vmatprep.subr.mxu0 0.0
    %5959 = vmatpush2.msra.mxu0 0.0
    %5960 = vmatprep.subr.mxu0 0.0
    %5961 = vmatpush2.msra.mxu0 0.0
    %5962 = vmatprep.subr.mxu0 0.0
    %5963 = vmatpush2.msra.mxu0 0.0
    %5964 = vmatprep.subr.mxu0 0.0
    %5965 = vmatpush2.msra.mxu0 0.0
    %5966 = vmatprep.subr.mxu0 0.0
    %5967 = vmatpush2.msra.mxu0 0.0
    %5968 = vmatprep.subr.mxu0 0.0
    %5969 = vmatpush2.msra.mxu0 0.0
    %5970 = vmatprep.subr.mxu0 0.0
    %5971 = vmatpush2.msra.mxu0 0.0
    %5972 = vmatprep.subr.mxu0 0.0
    %5973 = vmatpush2.msra.mxu0 0.0
    %5974 = vmatprep.subr.mxu0 0.0
    %5975 = vmatpush2.msra.mxu0 0.0
    %5976 = vmatprep.subr.mxu0 0.0
    %5977 = vmatpush2.msra.mxu0 0.0
    %5978 = vmatprep.subr.mxu0 0.0
    %5979 = vmatpush2.msra.mxu0 0.0
    %5980 = vmatprep.subr.mxu0 0.0
    %5981 = vmatpush2.msra.mxu0 0.0
    %5982 = vmatprep.subr.mxu0 0.0
    %5983 = vmatpush2.msra.mxu0 0.0
    %5984 = vmatprep.subr.mxu0 0.0
    %5985 = vmatpush2.msra.mxu0 0.0
    %5986 = vmatprep.subr.mxu0 0.0
    %5987 = vmatpush2.msra.mxu0 0.0
    %5988 = vmatprep.mubr.f32.mxu0 0.0
    %5989 = vmatmul.mubr.f32.gmra.mxu0 %v5922
    %v5990 = vpop.f32.mrf.mxu0
    %v5991 = vadd.f32 0.0, %v5990
    %v5992 = vpop.f32.mrf.mxu0
    %5993 = vdwg.mxu0
    %5995 = vrot.lane.b32.xlu0 %v5909, 96
    %v5996 = vpop.permute.xlu0 %5995
    %v5997 = vsel %vm200, %v5996, 0
    %5999 = vmatprep.subr.mxu0 0.0
    %6000 = vmatpush1.msra.mxu0 0.0
    %6001 = vmatprep.subr.mxu0 0.0
    %6002 = vmatpush1.msra.mxu0 0.0
    %6003 = vmatprep.subr.mxu0 0.0
    %6004 = vmatpush1.msra.mxu0 0.0
    %6005 = vmatprep.subr.mxu0 0.0
    %6006 = vmatpush1.msra.mxu0 0.0
    %6007 = vmatprep.subr.mxu0 0.0
    %6008 = vmatpush1.msra.mxu0 0.0
    %6009 = vmatprep.subr.mxu0 0.0
    %6010 = vmatpush1.msra.mxu0 0.0
    %6011 = vmatprep.subr.mxu0 0.0
    %6012 = vmatpush1.msra.mxu0 0.0
    %6013 = vmatprep.subr.mxu0 0.0
    %6014 = vmatpush1.msra.mxu0 0.0
    %6015 = vmatprep.subr.mxu0 0.0
    %6016 = vmatpush1.msra.mxu0 0.0
    %6017 = vmatprep.subr.mxu0 0.0
    %6018 = vmatpush1.msra.mxu0 0.0
    %6019 = vmatprep.subr.mxu0 0.0
    %6020 = vmatpush1.msra.mxu0 0.0
    %6021 = vmatprep.subr.mxu0 0.0
    %6022 = vmatpush1.msra.mxu0 0.0
    %6023 = vmatprep.subr.mxu0 0.0
    %6024 = vmatpush1.msra.mxu0 0.0
    %6025 = vmatprep.subr.mxu0 0.0
    %6026 = vmatpush1.msra.mxu0 0.0
    %6027 = vmatprep.subr.mxu0 0.0
    %6028 = vmatpush1.msra.mxu0 %v5916
    %6029 = vmatprep.subr.mxu0 0.0
    %6030 = vmatpush1.msra.mxu0 %v5915
    %6031 = vmatprep.subr.mxu0 0.0
    %6032 = vmatpush2.msra.mxu0 0.0
    %6033 = vmatprep.subr.mxu0 0.0
    %6034 = vmatpush2.msra.mxu0 0.0
    %6035 = vmatprep.subr.mxu0 0.0
    %6036 = vmatpush2.msra.mxu0 0.0
    %6037 = vmatprep.subr.mxu0 0.0
    %6038 = vmatpush2.msra.mxu0 0.0
    %6039 = vmatprep.subr.mxu0 0.0
    %6040 = vmatpush2.msra.mxu0 0.0
    %6041 = vmatprep.subr.mxu0 0.0
    %6042 = vmatpush2.msra.mxu0 0.0
    %6043 = vmatprep.subr.mxu0 0.0
    %6044 = vmatpush2.msra.mxu0 0.0
    %6045 = vmatprep.subr.mxu0 0.0
    %6046 = vmatpush2.msra.mxu0 0.0
    %6047 = vmatprep.subr.mxu0 0.0
    %6048 = vmatpush2.msra.mxu0 0.0
    %6049 = vmatprep.subr.mxu0 0.0
    %6050 = vmatpush2.msra.mxu0 0.0
    %6051 = vmatprep.subr.mxu0 0.0
    %6052 = vmatpush2.msra.mxu0 0.0
    %6053 = vmatprep.subr.mxu0 0.0
    %6054 = vmatpush2.msra.mxu0 0.0
    %6055 = vmatprep.subr.mxu0 0.0
    %6056 = vmatpush2.msra.mxu0 0.0
    %6057 = vmatprep.subr.mxu0 0.0
    %6058 = vmatpush2.msra.mxu0 0.0
    %6059 = vmatprep.subr.mxu0 0.0
    %6060 = vmatpush2.msra.mxu0 0.0
    %6061 = vmatprep.subr.mxu0 0.0
    %6062 = vmatpush2.msra.mxu0 0.0
    %6063 = vmatprep.mubr.f32.mxu0 0.0
    %6064 = vmatmul.mubr.f32.gmra.mxu0 %v5997
    %v6065 = vpop.f32.mrf.mxu0
    %v6066 = vadd.f32 %v5991, %v6065
    %v6067 = vpop.f32.mrf.mxu0
    %6068 = vdwg.mxu0
    %v6069 = vld [vmem:[%s14] sm:$0x1]
    %v6071 = vlaneseq
    %v6072 = vshrl.u32 %v6071, 7
    %v6073 = vsub.s32 0, %v6072
    %v6074 = vrot.slane %v6069, %v6073
    %v6076 = vadd.f32 %v6066, %v6074
    %v6077 = vmax.f32 %v6076, 0.0
    %v6078 = vld [vmem:[%s15] sm:$0xff]
    %v6079 = vld [vmem:[%s15 + $0x8] sm:$0xff]
    %v6080 = vld [vmem:[%s15 + $0x10] sm:$0xff]
    %v6081 = vld [vmem:[%s15 + $0x18] sm:$0xff]
    %v6083 = vsel %vm122, %v6077, 0
    %6085 = vmatprep.subr.mxu0 0.0
    %6086 = vmatpush1.msra.mxu0 0.0
    %6087 = vmatprep.subr.mxu0 0.0
    %6088 = vmatpush1.msra.mxu0 0.0
    %6089 = vmatprep.subr.mxu0 0.0
    %6090 = vmatpush1.msra.mxu0 0.0
    %6091 = vmatprep.subr.mxu0 0.0
    %6092 = vmatpush1.msra.mxu0 0.0
    %6093 = vmatprep.subr.mxu0 0.0
    %6094 = vmatpush1.msra.mxu0 0.0
    %6095 = vmatprep.subr.mxu0 0.0
    %6096 = vmatpush1.msra.mxu0 0.0
    %6097 = vmatprep.subr.mxu0 0.0
    %6098 = vmatpush1.msra.mxu0 0.0
    %6099 = vmatprep.subr.mxu0 0.0
    %6100 = vmatpush1.msra.mxu0 0.0
    %6101 = vmatprep.subr.mxu0 0.0
    %6102 = vmatpush1.msra.mxu0 0.0
    %6103 = vmatprep.subr.mxu0 0.0
    %6104 = vmatpush1.msra.mxu0 0.0
    %6105 = vmatprep.subr.mxu0 0.0
    %6106 = vmatpush1.msra.mxu0 0.0
    %6107 = vmatprep.subr.mxu0 0.0
    %6108 = vmatpush1.msra.mxu0 0.0
    %6109 = vmatprep.subr.mxu0 0.0
    %6110 = vmatpush1.msra.mxu0 %v6081
    %6111 = vmatprep.subr.mxu0 0.0
    %6112 = vmatpush1.msra.mxu0 %v6080
    %6113 = vmatprep.subr.mxu0 0.0
    %6114 = vmatpush1.msra.mxu0 %v6079
    %6115 = vmatprep.subr.mxu0 0.0
    %6116 = vmatpush1.msra.mxu0 %v6078
    %6117 = vmatprep.subr.mxu0 0.0
    %6118 = vmatpush2.msra.mxu0 0.0
    %6119 = vmatprep.subr.mxu0 0.0
    %6120 = vmatpush2.msra.mxu0 0.0
    %6121 = vmatprep.subr.mxu0 0.0
    %6122 = vmatpush2.msra.mxu0 0.0
    %6123 = vmatprep.subr.mxu0 0.0
    %6124 = vmatpush2.msra.mxu0 0.0
    %6125 = vmatprep.subr.mxu0 0.0
    %6126 = vmatpush2.msra.mxu0 0.0
    %6127 = vmatprep.subr.mxu0 0.0
    %6128 = vmatpush2.msra.mxu0 0.0
    %6129 = vmatprep.subr.mxu0 0.0
    %6130 = vmatpush2.msra.mxu0 0.0
    %6131 = vmatprep.subr.mxu0 0.0
    %6132 = vmatpush2.msra.mxu0 0.0
    %6133 = vmatprep.subr.mxu0 0.0
    %6134 = vmatpush2.msra.mxu0 0.0
    %6135 = vmatprep.subr.mxu0 0.0
    %6136 = vmatpush2.msra.mxu0 0.0
    %6137 = vmatprep.subr.mxu0 0.0
    %6138 = vmatpush2.msra.mxu0 0.0
    %6139 = vmatprep.subr.mxu0 0.0
    %6140 = vmatpush2.msra.mxu0 0.0
    %6141 = vmatprep.subr.mxu0 0.0
    %6142 = vmatpush2.msra.mxu0 0.0
    %6143 = vmatprep.subr.mxu0 0.0
    %6144 = vmatpush2.msra.mxu0 0.0
    %6145 = vmatprep.subr.mxu0 0.0
    %6146 = vmatpush2.msra.mxu0 0.0
    %6147 = vmatprep.subr.mxu0 0.0
    %6148 = vmatpush2.msra.mxu0 0.0
    %6149 = vmatprep.mubr.f32.mxu0 0.0
    %6150 = vmatmul.mubr.f32.gmra.mxu0 %v6083
    %v6151 = vpop.f32.mrf.mxu0
    %v6152 = vadd.f32 0.0, %v6151
    %v6153 = vpop.f32.mrf.mxu0
    %6154 = vdwg.mxu0
    %v6155 = vld [vmem:[%s16] sm:$0x1]
    %v6157 = vsel %vm122, %v6155, 0
    %6159 = vmatprep.subr.mxu0 0.0
    %6160 = vmatpush1.xpose.msra.mxu0 0.0
    %6161 = vmatprep.subr.mxu0 0.0
    %6162 = vmatpush1.xpose.msra.mxu0 0.0
    %6163 = vmatprep.subr.mxu0 0.0
    %6164 = vmatpush1.xpose.msra.mxu0 0.0
    %6165 = vmatprep.subr.mxu0 0.0
    %6166 = vmatpush1.xpose.msra.mxu0 0.0
    %6167 = vmatprep.subr.mxu0 0.0
    %6168 = vmatpush1.xpose.msra.mxu0 0.0
    %6169 = vmatprep.subr.mxu0 0.0
    %6170 = vmatpush1.xpose.msra.mxu0 0.0
    %6171 = vmatprep.subr.mxu0 0.0
    %6172 = vmatpush1.xpose.msra.mxu0 0.0
    %6173 = vmatprep.subr.mxu0 0.0
    %6174 = vmatpush1.xpose.msra.mxu0 0.0
    %6175 = vmatprep.subr.mxu0 0.0
    %6176 = vmatpush1.xpose.msra.mxu0 0.0
    %6177 = vmatprep.subr.mxu0 0.0
    %6178 = vmatpush1.xpose.msra.mxu0 0.0
    %6179 = vmatprep.subr.mxu0 0.0
    %6180 = vmatpush1.xpose.msra.mxu0 0.0
    %6181 = vmatprep.subr.mxu0 0.0
    %6182 = vmatpush1.xpose.msra.mxu0 0.0
    %6183 = vmatprep.subr.mxu0 0.0
    %6184 = vmatpush1.xpose.msra.mxu0 0.0
    %6185 = vmatprep.subr.mxu0 0.0
    %6186 = vmatpush1.xpose.msra.mxu0 0.0
    %6187 = vmatprep.subr.mxu0 0.0
    %6188 = vmatpush1.xpose.msra.mxu0 0.0
    %6189 = vmatprep.subr.mxu0 0.0
    %6190 = vmatpush1.xpose.msra.mxu0 %v6083
    %6191 = vmatprep.subr.mxu0 0.0
    %6192 = vmatpush2.xpose.msra.mxu0 0.0
    %6193 = vmatprep.subr.mxu0 0.0
    %6194 = vmatpush2.xpose.msra.mxu0 0.0
    %6195 = vmatprep.subr.mxu0 0.0
    %6196 = vmatpush2.xpose.msra.mxu0 0.0
    %6197 = vmatprep.subr.mxu0 0.0
    %6198 = vmatpush2.xpose.msra.mxu0 0.0
    %6199 = vmatprep.subr.mxu0 0.0
    %6200 = vmatpush2.xpose.msra.mxu0 0.0
    %6201 = vmatprep.subr.mxu0 0.0
    %6202 = vmatpush2.xpose.msra.mxu0 0.0
    %6203 = vmatprep.subr.mxu0 0.0
    %6204 = vmatpush2.xpose.msra.mxu0 0.0
    %6205 = vmatprep.subr.mxu0 0.0
    %6206 = vmatpush2.xpose.msra.mxu0 0.0
    %6207 = vmatprep.subr.mxu0 0.0
    %6208 = vmatpush2.xpose.msra.mxu0 0.0
    %6209 = vmatprep.subr.mxu0 0.0
    %6210 = vmatpush2.xpose.msra.mxu0 0.0
    %6211 = vmatprep.subr.mxu0 0.0
    %6212 = vmatpush2.xpose.msra.mxu0 0.0
    %6213 = vmatprep.subr.mxu0 0.0
    %6214 = vmatpush2.xpose.msra.mxu0 0.0
    %6215 = vmatprep.subr.mxu0 0.0
    %6216 = vmatpush2.xpose.msra.mxu0 0.0
    %6217 = vmatprep.subr.mxu0 0.0
    %6218 = vmatpush2.xpose.msra.mxu0 0.0
    %6219 = vmatprep.subr.mxu0 0.0
    %6220 = vmatpush2.xpose.msra.mxu0 0.0
    %6221 = vmatprep.subr.mxu0 0.0
    %6222 = vmatpush2.xpose.msra.mxu0 0.0
    %6223 = vmatprep.mubr.f32.mxu0 0.0
    %6224 = vmatmul.mubr.f32.gmra.mxu0 %v6157
    %v6225 = vpop.f32.mrf.mxu0
    %v6226 = vadd.f32 0.0, %v6225
    %v6227 = vpop.f32.mrf.mxu0
    %6228 = vdwg.mxu0
    %v6229 = vlaneseq
    %v6230 = vshrl.u32 %v6229, 7
    %v6231 = vsub.s32 0, %v6230
    %v6232 = vrot.slane %v6226, %v6231
    %6233 = vrot.lane.b32.xlu0 %v6077, 96
    %v6234 = vpop.permute.xlu0 %6233
    %v6235 = vsel %vm122, %v6234, 0
    %v6238 = vsel %vm122, %v6152, 0
    %6240 = vmatprep.subr.mxu0 0.0
    %6241 = vmatpush1.xpose.msra.mxu0 0.0
    %6242 = vmatprep.subr.mxu0 0.0
    %6243 = vmatpush1.xpose.msra.mxu0 0.0
    %6244 = vmatprep.subr.mxu0 0.0
    %6245 = vmatpush1.xpose.msra.mxu0 0.0
    %6246 = vmatprep.subr.mxu0 0.0
    %6247 = vmatpush1.xpose.msra.mxu0 0.0
    %6248 = vmatprep.subr.mxu0 0.0
    %6249 = vmatpush1.xpose.msra.mxu0 0.0
    %6250 = vmatprep.subr.mxu0 0.0
    %6251 = vmatpush1.xpose.msra.mxu0 0.0
    %6252 = vmatprep.subr.mxu0 0.0
    %6253 = vmatpush1.xpose.msra.mxu0 0.0
    %6254 = vmatprep.subr.mxu0 0.0
    %6255 = vmatpush1.xpose.msra.mxu0 0.0
    %6256 = vmatprep.subr.mxu0 0.0
    %6257 = vmatpush1.xpose.msra.mxu0 0.0
    %6258 = vmatprep.subr.mxu0 0.0
    %6259 = vmatpush1.xpose.msra.mxu0 0.0
    %6260 = vmatprep.subr.mxu0 0.0
    %6261 = vmatpush1.xpose.msra.mxu0 0.0
    %6262 = vmatprep.subr.mxu0 0.0
    %6263 = vmatpush1.xpose.msra.mxu0 0.0
    %6264 = vmatprep.subr.mxu0 0.0
    %6265 = vmatpush1.xpose.msra.mxu0 0.0
    %6266 = vmatprep.subr.mxu0 0.0
    %6267 = vmatpush1.xpose.msra.mxu0 0.0
    %6268 = vmatprep.subr.mxu0 0.0
    %6269 = vmatpush1.xpose.msra.mxu0 0.0
    %6270 = vmatprep.subr.mxu0 0.0
    %6271 = vmatpush1.xpose.msra.mxu0 %v6238
    %6272 = vmatprep.subr.mxu0 0.0
    %6273 = vmatpush2.xpose.msra.mxu0 0.0
    %6274 = vmatprep.subr.mxu0 0.0
    %6275 = vmatpush2.xpose.msra.mxu0 0.0
    %6276 = vmatprep.subr.mxu0 0.0
    %6277 = vmatpush2.xpose.msra.mxu0 0.0
    %6278 = vmatprep.subr.mxu0 0.0
    %6279 = vmatpush2.xpose.msra.mxu0 0.0
    %6280 = vmatprep.subr.mxu0 0.0
    %6281 = vmatpush2.xpose.msra.mxu0 0.0
    %6282 = vmatprep.subr.mxu0 0.0
    %6283 = vmatpush2.xpose.msra.mxu0 0.0
    %6284 = vmatprep.subr.mxu0 0.0
    %6285 = vmatpush2.xpose.msra.mxu0 0.0
    %6286 = vmatprep.subr.mxu0 0.0
    %6287 = vmatpush2.xpose.msra.mxu0 0.0
    %6288 = vmatprep.subr.mxu0 0.0
    %6289 = vmatpush2.xpose.msra.mxu0 0.0
    %6290 = vmatprep.subr.mxu0 0.0
    %6291 = vmatpush2.xpose.msra.mxu0 0.0
    %6292 = vmatprep.subr.mxu0 0.0
    %6293 = vmatpush2.xpose.msra.mxu0 0.0
    %6294 = vmatprep.subr.mxu0 0.0
    %6295 = vmatpush2.xpose.msra.mxu0 0.0
    %6296 = vmatprep.subr.mxu0 0.0
    %6297 = vmatpush2.xpose.msra.mxu0 0.0
    %6298 = vmatprep.subr.mxu0 0.0
    %6299 = vmatpush2.xpose.msra.mxu0 0.0
    %6300 = vmatprep.subr.mxu0 0.0
    %6301 = vmatpush2.xpose.msra.mxu0 0.0
    %6302 = vmatprep.subr.mxu0 0.0
    %6303 = vmatpush2.xpose.msra.mxu0 0.0
    %6304 = vmatprep.mubr.f32.mxu0 0.0
    %6305 = vmatmul.mubr.f32.gmra.mxu0 %v6235
    %v6306 = vpop.f32.mrf.mxu0
    %v6307 = vadd.f32 %v6232, %v6306
    %v6308 = vpop.f32.mrf.mxu0
    %6309 = vdwg.mxu0
    %vm6310 = vcmask 64512
    %6311 = vst.msk [vmem:[#allocation10] sm:$0xff] %vm6310, %v6307
    // Predicated region
    $region86: #{parser_forward.1} parent=1 // pred_check
      _
    $region87: #{parser_forward.1} parent=1 // pred_check_branch
      %6313 = sbr.rel (0) target = $region89
    $region88: #{parser_forward.1} parent=1 // pred_region
      %s6315 = ssub.s32 128, 128
      %6316 = vsyncadd [#allocation4], %s6315
      %s6318 = sshll.u32 [#allocation10], 4
      %s6319 = int_to_ptr.vmem [resolvable:$true] %s6318
      %6321 = dma.vmem_to_hbm [thread:$0]  %s6319, 128, %s17, [#allocation4]
    $region89: #{parser_forward.1} parent=1 // pred_fallthru
      _
    // Predicated region
    $region90: #{parser_forward.1} parent=1 // pred_check
      _
    $region91: #{parser_forward.1} parent=1 // pred_check_branch
      %6323 = sbr.rel (0) target = $region93
    $region92: #{parser_forward.1} parent=1 // pred_region
      %6324 = dma.done [#allocation4], 128
    $region93: #{parser_forward.1} parent=1 // pred_fallthru
      _
    %6325 = vsyncpa [#allocation3], 1
    %6326 = vsyncpa [#allocation6], 1
    %6327 = vsyncpa [#allocation9], 1
    %6328 = vsyncpa [#allocation4], 1

</llo_original>
